<compile_context>
chip_gen: v6e
topology: v6e:2x2x1
jax: 0.10.0
libtpu: 0.0.40
codegen_flags: <defaults>
</compile_context>

<pallas_src>
import functools

import jax
import jax.numpy as jnp
from jax.experimental import pallas as pl
from jax.experimental.pallas import tpu as pltpu


def _layer_norm(x, gamma, beta, eps=1e-5):
    mu = jnp.mean(x, axis=-1, keepdims=True)
    var = jnp.mean((x - mu) ** 2, axis=-1, keepdims=True)
    return (x - mu) * jax.lax.rsqrt(var + eps) * gamma + beta


def _prompt_gen_kernel(
    cls_ref, vid_ref,
    ln1g_ref, ln1b_ref, ln2g_ref, ln2b_ref, ln3g_ref, ln3b_ref,
    wq_ref, wkv_ref, wo_ref, bo_ref,
    w1_ref, b1_ref, w2_ref, b2_ref,
    out_ref,
    *, num_heads: int, scale: float, bt: int, n: int, m: int,
):
    f32 = jnp.float32
    bf16 = jnp.bfloat16

    x0 = cls_ref[...].astype(f32)        # (bt*n, C) -- query tokens, bt batches stacked
    kv0 = vid_ref[...].astype(f32)       # (bt*m, C) -- key/value tokens
    C = x0.shape[-1]
    hd = C // num_heads

    # --- norm1 / norm2 (f32 on the VPU) ---
    q_in = _layer_norm(x0, ln1g_ref[...], ln1b_ref[...])
    kv_in = _layer_norm(kv0, ln2g_ref[...], ln2b_ref[...])

    # --- Q projection + fused K/V projection: bf16 on the MXU, f32 accumulation ---
    q = jnp.dot(q_in.astype(bf16), wq_ref[...], preferred_element_type=f32)    # (bt*n, C)
    kv = jnp.dot(kv_in.astype(bf16), wkv_ref[...], preferred_element_type=f32)  # (bt*m, 2C)
    k = kv[:, :C]
    v = kv[:, C:]

    # Fold the softmax scale into q once (bt*n*C muls instead of H*bt*n*m).
    q = q * scale

    # --- multi-head attention: score/PV matmuls batched over the bt batch elements ---
    q3 = q.reshape(bt, n, C).astype(bf16)
    k3 = k.reshape(bt, m, C).astype(bf16)
    v3 = v.reshape(bt, m, C).astype(bf16)

    ctx = []
    for h in range(num_heads):           # static loop; hd < 128 so heads stay lane slices
        sl = slice(h * hd, (h + 1) * hd)
        s = jnp.einsum('bnd,bmd->bnm', q3[..., sl], k3[..., sl],
                       preferred_element_type=f32)                  # (bt, n, m)
        s = s - jnp.max(s, axis=-1, keepdims=True)
        p = jnp.exp(s)
        p = p * pl.reciprocal(jnp.sum(p, axis=-1, keepdims=True), approx=True)
        ctx.append(jnp.einsum('bnm,bmd->bnd', p.astype(bf16), v3[..., sl],
                              preferred_element_type=f32))          # (bt, n, hd)
    attn = jnp.concatenate(ctx, axis=-1).reshape(bt * n, C)         # (bt*n, C)

    # --- output projection (with bias) + residual ---
    attn = jnp.dot(attn.astype(bf16), wo_ref[...], preferred_element_type=f32)
    x = x0 + attn + bo_ref[...]                                     # (bt*n, C)

    # --- MLP branch: norm3 -> Linear(C,4C) -> QuickGELU -> Linear(4C,C) ---
    h3 = _layer_norm(x, ln3g_ref[...], ln3b_ref[...])
    mlp = jnp.dot(h3.astype(bf16), w1_ref[...], preferred_element_type=f32) + b1_ref[...]
    mlp = mlp * jax.nn.sigmoid(1.702 * mlp)                         # QuickGELU (f32)
    mlp = jnp.dot(mlp.astype(bf16), w2_ref[...], preferred_element_type=f32) + b2_ref[...]

    out_ref[...] = (x + mlp).astype(out_ref.dtype)


def prompt_generator_layer(cls_embs, vid_embs, params, *, num_heads,
                           block_b=8, single_buffer_params=True):
    B, N, C = cls_embs.shape
    _, M, _ = vid_embs.shape
    assert C % num_heads == 0
    scale = (C // num_heads) ** (-0.5)

    # Largest batch block that divides B (stacks batches onto the MXU row dim).
    bt = min(block_b, B)
    while B % bt:
        bt -= 1

    (l1g, l1b, l2g, l2b, l3g, l3b, wq, wk, wv, wo, bo, w1, b1, w2, b2) = params
    wkv = jnp.concatenate([wk, wv], axis=1)          # (C, 2C) fused K/V weight, bf16

    kernel = functools.partial(_prompt_gen_kernel, num_heads=num_heads,
                               scale=scale, bt=bt, n=N, m=M)

    # Parameters never change across grid steps -> request single buffering
    # (halves weight VMEM residency; block index is constant so no re-DMA either way).
    pm = pl.Buffered(1) if single_buffer_params else None
    par_spec = lambda shape: pl.BlockSpec(shape, lambda b: (0,) * len(shape),
                                          pipeline_mode=pm)
    row_spec = lambda rows: pl.BlockSpec((rows, C), lambda b: (b, 0))

    in_specs = [
        row_spec(bt * N),                            # cls (B*N, C) row slabs
        row_spec(bt * M),                            # vid (B*M, C) row slabs
        par_spec((1, C)), par_spec((1, C)),          # ln1 gamma/beta
        par_spec((1, C)), par_spec((1, C)),          # ln2 gamma/beta
        par_spec((1, C)), par_spec((1, C)),          # ln3 gamma/beta
        par_spec((C, C)),                            # Wq (bf16, no bias)
        par_spec((C, 2 * C)),                        # Wkv = [Wk | Wv] fused
        par_spec((C, C)),                            # Wo
        par_spec((1, C)),                            # bo
        par_spec((C, 4 * C)),                        # W1
        par_spec((1, 4 * C)),                        # b1
        par_spec((4 * C, C)),                        # W2
        par_spec((1, C)),                            # b2
    ]

    out2 = pl.pallas_call(
        kernel,
        out_shape=jax.ShapeDtypeStruct((B * N, C), cls_embs.dtype),
        grid=(B // bt,),
        in_specs=in_specs,
        out_specs=row_spec(bt * N),
        compiler_params=pltpu.CompilerParams(
            dimension_semantics=("parallel",),       # batch blocks split across TCs
            vmem_limit_bytes=32 * 1024 * 1024,       # safe on v5e/v6e/v7x
        ),
    )(cls_embs.reshape(B * N, C), vid_embs.reshape(B * M, C),
      l1g, l1b, l2g, l2b, l3g, l3b, wq, wkv, wo, bo, w1, b1, w2, b2)
    return out2.reshape(B, N, C)


def init_params(key, d_model):
    C = d_model
    ks = jax.random.split(key, 8)

    def lin(k, n_in, n_out):
        bound = 1.0 / (n_in ** 0.5)
        w = jax.random.uniform(k, (n_in, n_out), jnp.float32, -bound, bound)
        return w.astype(jnp.bfloat16)                # weights stored in bf16

    params = (
        jnp.ones((1, C), jnp.float32), jnp.zeros((1, C), jnp.float32),   # ln1
        jnp.ones((1, C), jnp.float32), jnp.zeros((1, C), jnp.float32),   # ln2
        jnp.ones((1, C), jnp.float32), jnp.zeros((1, C), jnp.float32),   # ln3
        lin(ks[0], C, C),                                                # Wq (no bias)
        lin(ks[1], C, C),                                                # Wk (no bias)
        lin(ks[2], C, C),                                                # Wv (no bias)
        lin(ks[3], C, C),                                                # Wo
        jax.random.uniform(ks[4], (1, C), jnp.float32, -1.0 / C**0.5, 1.0 / C**0.5),      # bo
        lin(ks[5], C, 4 * C),                                            # W1
        jax.random.uniform(ks[6], (1, 4 * C), jnp.float32, -1.0 / C**0.5, 1.0 / C**0.5),  # b1
        lin(ks[7], 4 * C, C),                                            # W2
        jnp.zeros((1, C), jnp.float32),                                  # b2
    )
    return params


def reference(cls_embs, vid_embs, params, num_heads):
    """Pure-f32 reference (weights upcast from bf16 storage)."""
    (l1g, l1b, l2g, l2b, l3g, l3b, wq, wk, wv, wo, bo, w1, b1, w2, b2) = params
    f32 = jnp.float32
    wq, wk, wv, wo, w1, w2 = (w.astype(f32) for w in (wq, wk, wv, wo, w1, w2))
    C = cls_embs.shape[-1]
    hd = C // num_heads
    scale = hd ** (-0.5)
    q_in = _layer_norm(cls_embs, l1g, l1b)
    kv_in = _layer_norm(vid_embs, l2g, l2b)
    B, N, _ = cls_embs.shape
    M = vid_embs.shape[1]
    q = (q_in @ wq).reshape(B, N, num_heads, hd).transpose(0, 2, 1, 3)
    k = (kv_in @ wk).reshape(B, M, num_heads, hd).transpose(0, 2, 1, 3)
    v = (kv_in @ wv).reshape(B, M, num_heads, hd).transpose(0, 2, 1, 3)
    attn = jax.nn.softmax(jnp.einsum("bhnd,bhmd->bhnm", q, k) * scale, axis=-1)
    o = jnp.einsum("bhnm,bhmd->bhnd", attn, v).transpose(0, 2, 1, 3).reshape(B, N, C)
    o = o @ wo + bo
    x = cls_embs + o
    h3 = _layer_norm(x, l3g, l3b)
    m = h3 @ w1 + b1
    m = m * jax.nn.sigmoid(1.702 * m)
    m = m @ w2 + b2
    return x + m


if __name__ == "__main__":
    key = jax.random.PRNGKey(0)
    B, N, M, C, H = 16, 8, 16, 32, 4
    k1, k2, k3 = jax.random.split(key, 3)
    cls_embs = jax.random.normal(k1, (B, N, C), jnp.float32)
    vid_embs = jax.random.normal(k2, (B, M, C), jnp.float32)
    params = init_params(k3, C)

    ref = reference(cls_embs, vid_embs, params, H)

    def run(single_buffer):
        out = prompt_generator_layer(cls_embs, vid_embs, params, num_heads=H,
                                     block_b=8, single_buffer_params=single_buffer)
        return jax.block_until_ready(out)

    # bf16 matmul operands with f32 accumulation vs. a pure-f32 reference.
    TOL = dict(atol=5e-2, rtol=5e-2)

    out = None
    try:
        cand = run(True)                 # single-buffered constant param blocks
        if jnp.allclose(cand, ref, **TOL):
            out = cand
    except Exception:
        out = None
    if out is None:
        out = run(False)                 # fallback: default double buffering

    assert out.shape == (B, N, C)
    assert jnp.allclose(out, ref, **TOL), "mismatch vs reference"
    print("KERNEL_OK")
</pallas_src>

<mosaic_0001>
module attributes {stable_mosaic.version = 11 : i64} {
  func.func @_prompt_gen_kernel(%arg0: i32, %arg1: memref<64x32xf32, #tpu.memory_space<vmem>>, %arg2: memref<128x32xf32, #tpu.memory_space<vmem>>, %arg3: memref<1x32xf32, #tpu.memory_space<vmem>>, %arg4: memref<1x32xf32, #tpu.memory_space<vmem>>, %arg5: memref<1x32xf32, #tpu.memory_space<vmem>>, %arg6: memref<1x32xf32, #tpu.memory_space<vmem>>, %arg7: memref<1x32xf32, #tpu.memory_space<vmem>>, %arg8: memref<1x32xf32, #tpu.memory_space<vmem>>, %arg9: memref<32x32xbf16, #tpu.memory_space<vmem>>, %arg10: memref<32x64xbf16, #tpu.memory_space<vmem>>, %arg11: memref<32x32xbf16, #tpu.memory_space<vmem>>, %arg12: memref<1x32xf32, #tpu.memory_space<vmem>>, %arg13: memref<32x128xbf16, #tpu.memory_space<vmem>>, %arg14: memref<1x128xf32, #tpu.memory_space<vmem>>, %arg15: memref<128x32xbf16, #tpu.memory_space<vmem>>, %arg16: memref<1x32xf32, #tpu.memory_space<vmem>>, %arg17: memref<64x32xf32, #tpu.memory_space<vmem>>) attributes {dimension_semantics = [#tpu.dimension_semantics<parallel>], iteration_bounds = array<i64: 2>, scalar_prefetch = 0 : i64, scratch_operands = 0 : i64, tpu.core_type = #tpu.core_type<tc>, window_params = [{transform_indices = @transform_0, window_bounds = array<i64: 64, 32>}, {transform_indices = @transform_1, window_bounds = array<i64: 128, 32>}, {pipeline_mode = #tpu.pipeline_mode<synchronous>, transform_indices = @transform_2, window_bounds = array<i64: 1, 32>}, {pipeline_mode = #tpu.pipeline_mode<synchronous>, transform_indices = @transform_3, window_bounds = array<i64: 1, 32>}, {pipeline_mode = #tpu.pipeline_mode<synchronous>, transform_indices = @transform_4, window_bounds = array<i64: 1, 32>}, {pipeline_mode = #tpu.pipeline_mode<synchronous>, transform_indices = @transform_5, window_bounds = array<i64: 1, 32>}, {pipeline_mode = #tpu.pipeline_mode<synchronous>, transform_indices = @transform_6, window_bounds = array<i64: 1, 32>}, {pipeline_mode = #tpu.pipeline_mode<synchronous>, transform_indices = @transform_7, window_bounds = array<i64: 1, 32>}, {pipeline_mode = #tpu.pipeline_mode<synchronous>, transform_indices = @transform_8, window_bounds = array<i64: 32, 32>}, {pipeline_mode = #tpu.pipeline_mode<synchronous>, transform_indices = @transform_9, window_bounds = array<i64: 32, 64>}, {pipeline_mode = #tpu.pipeline_mode<synchronous>, transform_indices = @transform_10, window_bounds = array<i64: 32, 32>}, {pipeline_mode = #tpu.pipeline_mode<synchronous>, transform_indices = @transform_11, window_bounds = array<i64: 1, 32>}, {pipeline_mode = #tpu.pipeline_mode<synchronous>, transform_indices = @transform_12, window_bounds = array<i64: 32, 128>}, {pipeline_mode = #tpu.pipeline_mode<synchronous>, transform_indices = @transform_13, window_bounds = array<i64: 1, 128>}, {pipeline_mode = #tpu.pipeline_mode<synchronous>, transform_indices = @transform_14, window_bounds = array<i64: 128, 32>}, {pipeline_mode = #tpu.pipeline_mode<synchronous>, transform_indices = @transform_15, window_bounds = array<i64: 1, 32>}, {transform_indices = @transform_16, window_bounds = array<i64: 64, 32>}]} {
    %c0 = arith.constant 0 : index
    %c0_0 = arith.constant 0 : index
    %0 = vector.load %arg1[%c0, %c0_0] : memref<64x32xf32, #tpu.memory_space<vmem>>, vector<64x32xf32>
    %c0_1 = arith.constant 0 : index
    %c0_2 = arith.constant 0 : index
    %1 = vector.load %arg2[%c0_1, %c0_2] : memref<128x32xf32, #tpu.memory_space<vmem>>, vector<128x32xf32>
    %c0_3 = arith.constant 0 : index
    %c0_4 = arith.constant 0 : index
    %2 = vector.load %arg3[%c0_3, %c0_4] : memref<1x32xf32, #tpu.memory_space<vmem>>, vector<1x32xf32>
    %c0_5 = arith.constant 0 : index
    %c0_6 = arith.constant 0 : index
    %3 = vector.load %arg4[%c0_5, %c0_6] : memref<1x32xf32, #tpu.memory_space<vmem>>, vector<1x32xf32>
    %cst = arith.constant dense<0.000000e+00> : vector<64xf32>
    %4 = vector.multi_reduction <add>, %0, %cst [1] : vector<64x32xf32> to vector<64xf32>
    %5 = vector.shape_cast %4 : vector<64xf32> to vector<64x1xf32>
    %cst_7 = arith.constant 3.200000e+01 : f32
    %6 = vector.broadcast %cst_7 : f32 to vector<64x1xf32>
    %7 = arith.divf %5, %6 : vector<64x1xf32>
    %8 = vector.broadcast %7 : vector<64x1xf32> to vector<64x32xf32>
    %9 = arith.subf %0, %8 : vector<64x32xf32>
    %10 = arith.mulf %9, %9 : vector<64x32xf32>
    %cst_8 = arith.constant dense<0.000000e+00> : vector<64xf32>
    %11 = vector.multi_reduction <add>, %10, %cst_8 [1] : vector<64x32xf32> to vector<64xf32>
    %12 = vector.shape_cast %11 : vector<64xf32> to vector<64x1xf32>
    %cst_9 = arith.constant 3.200000e+01 : f32
    %13 = vector.broadcast %cst_9 : f32 to vector<64x1xf32>
    %14 = arith.divf %12, %13 : vector<64x1xf32>
    %15 = vector.broadcast %7 : vector<64x1xf32> to vector<64x32xf32>
    %16 = arith.subf %0, %15 : vector<64x32xf32>
    %cst_10 = arith.constant 9.99999974E-6 : f32
    %17 = vector.broadcast %cst_10 : f32 to vector<64x1xf32>
    %18 = arith.addf %14, %17 : vector<64x1xf32>
    %19 = math.rsqrt %18 : vector<64x1xf32>
    %20 = vector.broadcast %19 : vector<64x1xf32> to vector<64x32xf32>
    %21 = arith.mulf %16, %20 : vector<64x32xf32>
    %22 = vector.broadcast %2 : vector<1x32xf32> to vector<64x32xf32>
    %23 = arith.mulf %21, %22 : vector<64x32xf32>
    %24 = vector.broadcast %3 : vector<1x32xf32> to vector<64x32xf32>
    %25 = arith.addf %23, %24 : vector<64x32xf32>
    %c0_11 = arith.constant 0 : index
    %c0_12 = arith.constant 0 : index
    %26 = vector.load %arg5[%c0_11, %c0_12] : memref<1x32xf32, #tpu.memory_space<vmem>>, vector<1x32xf32>
    %c0_13 = arith.constant 0 : index
    %c0_14 = arith.constant 0 : index
    %27 = vector.load %arg6[%c0_13, %c0_14] : memref<1x32xf32, #tpu.memory_space<vmem>>, vector<1x32xf32>
    %cst_15 = arith.constant dense<0.000000e+00> : vector<128xf32>
    %28 = vector.multi_reduction <add>, %1, %cst_15 [1] : vector<128x32xf32> to vector<128xf32>
    %29 = vector.shape_cast %28 : vector<128xf32> to vector<128x1xf32>
    %cst_16 = arith.constant 3.200000e+01 : f32
    %30 = vector.broadcast %cst_16 : f32 to vector<128x1xf32>
    %31 = arith.divf %29, %30 : vector<128x1xf32>
    %32 = vector.broadcast %31 : vector<128x1xf32> to vector<128x32xf32>
    %33 = arith.subf %1, %32 : vector<128x32xf32>
    %34 = arith.mulf %33, %33 : vector<128x32xf32>
    %cst_17 = arith.constant dense<0.000000e+00> : vector<128xf32>
    %35 = vector.multi_reduction <add>, %34, %cst_17 [1] : vector<128x32xf32> to vector<128xf32>
    %36 = vector.shape_cast %35 : vector<128xf32> to vector<128x1xf32>
    %cst_18 = arith.constant 3.200000e+01 : f32
    %37 = vector.broadcast %cst_18 : f32 to vector<128x1xf32>
    %38 = arith.divf %36, %37 : vector<128x1xf32>
    %39 = vector.broadcast %31 : vector<128x1xf32> to vector<128x32xf32>
    %40 = arith.subf %1, %39 : vector<128x32xf32>
    %cst_19 = arith.constant 9.99999974E-6 : f32
    %41 = vector.broadcast %cst_19 : f32 to vector<128x1xf32>
    %42 = arith.addf %38, %41 : vector<128x1xf32>
    %43 = math.rsqrt %42 : vector<128x1xf32>
    %44 = vector.broadcast %43 : vector<128x1xf32> to vector<128x32xf32>
    %45 = arith.mulf %40, %44 : vector<128x32xf32>
    %46 = vector.broadcast %26 : vector<1x32xf32> to vector<128x32xf32>
    %47 = arith.mulf %45, %46 : vector<128x32xf32>
    %48 = vector.broadcast %27 : vector<1x32xf32> to vector<128x32xf32>
    %49 = arith.addf %47, %48 : vector<128x32xf32>
    %50 = arith.truncf %25 : vector<64x32xf32> to vector<64x32xbf16>
    %c0_20 = arith.constant 0 : index
    %c0_21 = arith.constant 0 : index
    %51 = vector.load %arg9[%c0_20, %c0_21] : memref<32x32xbf16, #tpu.memory_space<vmem>>, vector<32x32xbf16>
    %cst_22 = arith.constant dense<0.000000e+00> : vector<64x32xf32>
    %52 = tpu.matmul %50, %51, %cst_22 {dimension_numbers = #tpu.dot_dimension_numbers<[1], [0], [0], [1], [0, 0, 1, 1], [], []>} : vector<64x32xbf16>, vector<32x32xbf16>, vector<64x32xf32> -> vector<64x32xf32>
    %53 = arith.truncf %49 : vector<128x32xf32> to vector<128x32xbf16>
    %c0_23 = arith.constant 0 : index
    %c0_24 = arith.constant 0 : index
    %54 = vector.load %arg10[%c0_23, %c0_24] : memref<32x64xbf16, #tpu.memory_space<vmem>>, vector<32x64xbf16>
    %cst_25 = arith.constant dense<0.000000e+00> : vector<128x64xf32>
    %55 = tpu.matmul %53, %54, %cst_25 {dimension_numbers = #tpu.dot_dimension_numbers<[1], [0], [0], [1], [0, 0, 1, 1], [], []>} : vector<128x32xbf16>, vector<32x64xbf16>, vector<128x64xf32> -> vector<128x64xf32>
    %56 = vector.extract_strided_slice %55 {offsets = [0, 0], sizes = [128, 32], strides = [1, 1]} : vector<128x64xf32> to vector<128x32xf32>
    %57 = vector.extract_strided_slice %55 {offsets = [0, 32], sizes = [128, 32], strides = [1, 1]} : vector<128x64xf32> to vector<128x32xf32>
    %cst_26 = arith.constant 0.353553385 : f32
    %58 = vector.broadcast %cst_26 : f32 to vector<64x32xf32>
    %59 = arith.mulf %52, %58 : vector<64x32xf32>
    %60 = vector.shape_cast %59 : vector<64x32xf32> to vector<8x8x32xf32>
    %61 = arith.truncf %60 : vector<8x8x32xf32> to vector<8x8x32xbf16>
    %62 = vector.shape_cast %56 : vector<128x32xf32> to vector<8x16x32xf32>
    %63 = arith.truncf %62 : vector<8x16x32xf32> to vector<8x16x32xbf16>
    %64 = vector.shape_cast %57 : vector<128x32xf32> to vector<8x16x32xf32>
    %65 = arith.truncf %64 : vector<8x16x32xf32> to vector<8x16x32xbf16>
    %66 = vector.extract_strided_slice %61 {offsets = [0, 0, 0], sizes = [8, 8, 8], strides = [1, 1, 1]} : vector<8x8x32xbf16> to vector<8x8x8xbf16>
    %67 = vector.extract_strided_slice %63 {offsets = [0, 0, 0], sizes = [8, 16, 8], strides = [1, 1, 1]} : vector<8x16x32xbf16> to vector<8x16x8xbf16>
    "tpu.trace_start"() <{level = 10 : i32, message = "bnd,bmd->bnm"}> : () -> ()
    %cst_27 = arith.constant dense<0.000000e+00> : vector<8x8x16xf32>
    %68 = tpu.matmul %66, %67, %cst_27 {dimension_numbers = #tpu.dot_dimension_numbers<[2], [2], [1], [1], [0, 0, 0, 1, 1, 1], [0], [0]>} : vector<8x8x8xbf16>, vector<8x16x8xbf16>, vector<8x8x16xf32> -> vector<8x8x16xf32>
    "tpu.trace_stop"() : () -> ()
    %cst_28 = arith.constant dense<0xFF800000> : vector<8x8xf32>
    %69 = vector.multi_reduction <maximumf>, %68, %cst_28 [2] : vector<8x8x16xf32> to vector<8x8xf32>
    %70 = vector.shape_cast %69 : vector<8x8xf32> to vector<8x8x1xf32>
    %71 = vector.broadcast %70 : vector<8x8x1xf32> to vector<8x8x16xf32>
    %72 = arith.subf %68, %71 : vector<8x8x16xf32>
    %73 = math.exp %72 : vector<8x8x16xf32>
    %cst_29 = arith.constant dense<0.000000e+00> : vector<8x8xf32>
    %74 = vector.multi_reduction <add>, %73, %cst_29 [2] : vector<8x8x16xf32> to vector<8x8xf32>
    %75 = vector.shape_cast %74 : vector<8x8xf32> to vector<8x8x1xf32>
    %76 = tpu.reciprocal %75 {approx = true} : vector<8x8x1xf32> -> vector<8x8x1xf32>
    %77 = vector.broadcast %76 : vector<8x8x1xf32> to vector<8x8x16xf32>
    %78 = arith.mulf %73, %77 : vector<8x8x16xf32>
    %79 = arith.truncf %78 : vector<8x8x16xf32> to vector<8x8x16xbf16>
    %80 = vector.extract_strided_slice %65 {offsets = [0, 0, 0], sizes = [8, 16, 8], strides = [1, 1, 1]} : vector<8x16x32xbf16> to vector<8x16x8xbf16>
    "tpu.trace_start"() <{level = 10 : i32, message = "bnm,bmd->bnd"}> : () -> ()
    %cst_30 = arith.constant dense<0.000000e+00> : vector<8x8x8xf32>
    %81 = tpu.matmul %79, %80, %cst_30 {dimension_numbers = #tpu.dot_dimension_numbers<[2], [1], [1], [2], [0, 0, 0, 1, 1, 2], [0], [0]>} : vector<8x8x16xbf16>, vector<8x16x8xbf16>, vector<8x8x8xf32> -> vector<8x8x8xf32>
    "tpu.trace_stop"() : () -> ()
    %82 = vector.extract_strided_slice %61 {offsets = [0, 0, 8], sizes = [8, 8, 8], strides = [1, 1, 1]} : vector<8x8x32xbf16> to vector<8x8x8xbf16>
    %83 = vector.extract_strided_slice %63 {offsets = [0, 0, 8], sizes = [8, 16, 8], strides = [1, 1, 1]} : vector<8x16x32xbf16> to vector<8x16x8xbf16>
    "tpu.trace_start"() <{level = 10 : i32, message = "bnd,bmd->bnm"}> : () -> ()
    %cst_31 = arith.constant dense<0.000000e+00> : vector<8x8x16xf32>
    %84 = tpu.matmul %82, %83, %cst_31 {dimension_numbers = #tpu.dot_dimension_numbers<[2], [2], [1], [1], [0, 0, 0, 1, 1, 1], [0], [0]>} : vector<8x8x8xbf16>, vector<8x16x8xbf16>, vector<8x8x16xf32> -> vector<8x8x16xf32>
    "tpu.trace_stop"() : () -> ()
    %cst_32 = arith.constant dense<0xFF800000> : vector<8x8xf32>
    %85 = vector.multi_reduction <maximumf>, %84, %cst_32 [2] : vector<8x8x16xf32> to vector<8x8xf32>
    %86 = vector.shape_cast %85 : vector<8x8xf32> to vector<8x8x1xf32>
    %87 = vector.broadcast %86 : vector<8x8x1xf32> to vector<8x8x16xf32>
    %88 = arith.subf %84, %87 : vector<8x8x16xf32>
    %89 = math.exp %88 : vector<8x8x16xf32>
    %cst_33 = arith.constant dense<0.000000e+00> : vector<8x8xf32>
    %90 = vector.multi_reduction <add>, %89, %cst_33 [2] : vector<8x8x16xf32> to vector<8x8xf32>
    %91 = vector.shape_cast %90 : vector<8x8xf32> to vector<8x8x1xf32>
    %92 = tpu.reciprocal %91 {approx = true} : vector<8x8x1xf32> -> vector<8x8x1xf32>
    %93 = vector.broadcast %92 : vector<8x8x1xf32> to vector<8x8x16xf32>
    %94 = arith.mulf %89, %93 : vector<8x8x16xf32>
    %95 = arith.truncf %94 : vector<8x8x16xf32> to vector<8x8x16xbf16>
    %96 = vector.extract_strided_slice %65 {offsets = [0, 0, 8], sizes = [8, 16, 8], strides = [1, 1, 1]} : vector<8x16x32xbf16> to vector<8x16x8xbf16>
    "tpu.trace_start"() <{level = 10 : i32, message = "bnm,bmd->bnd"}> : () -> ()
    %cst_34 = arith.constant dense<0.000000e+00> : vector<8x8x8xf32>
    %97 = tpu.matmul %95, %96, %cst_34 {dimension_numbers = #tpu.dot_dimension_numbers<[2], [1], [1], [2], [0, 0, 0, 1, 1, 2], [0], [0]>} : vector<8x8x16xbf16>, vector<8x16x8xbf16>, vector<8x8x8xf32> -> vector<8x8x8xf32>
    "tpu.trace_stop"() : () -> ()
    %98 = vector.extract_strided_slice %61 {offsets = [0, 0, 16], sizes = [8, 8, 8], strides = [1, 1, 1]} : vector<8x8x32xbf16> to vector<8x8x8xbf16>
    %99 = vector.extract_strided_slice %63 {offsets = [0, 0, 16], sizes = [8, 16, 8], strides = [1, 1, 1]} : vector<8x16x32xbf16> to vector<8x16x8xbf16>
    "tpu.trace_start"() <{level = 10 : i32, message = "bnd,bmd->bnm"}> : () -> ()
    %cst_35 = arith.constant dense<0.000000e+00> : vector<8x8x16xf32>
    %100 = tpu.matmul %98, %99, %cst_35 {dimension_numbers = #tpu.dot_dimension_numbers<[2], [2], [1], [1], [0, 0, 0, 1, 1, 1], [0], [0]>} : vector<8x8x8xbf16>, vector<8x16x8xbf16>, vector<8x8x16xf32> -> vector<8x8x16xf32>
    "tpu.trace_stop"() : () -> ()
    %cst_36 = arith.constant dense<0xFF800000> : vector<8x8xf32>
    %101 = vector.multi_reduction <maximumf>, %100, %cst_36 [2] : vector<8x8x16xf32> to vector<8x8xf32>
    %102 = vector.shape_cast %101 : vector<8x8xf32> to vector<8x8x1xf32>
    %103 = vector.broadcast %102 : vector<8x8x1xf32> to vector<8x8x16xf32>
    %104 = arith.subf %100, %103 : vector<8x8x16xf32>
    %105 = math.exp %104 : vector<8x8x16xf32>
    %cst_37 = arith.constant dense<0.000000e+00> : vector<8x8xf32>
    %106 = vector.multi_reduction <add>, %105, %cst_37 [2] : vector<8x8x16xf32> to vector<8x8xf32>
    %107 = vector.shape_cast %106 : vector<8x8xf32> to vector<8x8x1xf32>
    %108 = tpu.reciprocal %107 {approx = true} : vector<8x8x1xf32> -> vector<8x8x1xf32>
    %109 = vector.broadcast %108 : vector<8x8x1xf32> to vector<8x8x16xf32>
    %110 = arith.mulf %105, %109 : vector<8x8x16xf32>
    %111 = arith.truncf %110 : vector<8x8x16xf32> to vector<8x8x16xbf16>
    %112 = vector.extract_strided_slice %65 {offsets = [0, 0, 16], sizes = [8, 16, 8], strides = [1, 1, 1]} : vector<8x16x32xbf16> to vector<8x16x8xbf16>
    "tpu.trace_start"() <{level = 10 : i32, message = "bnm,bmd->bnd"}> : () -> ()
    %cst_38 = arith.constant dense<0.000000e+00> : vector<8x8x8xf32>
    %113 = tpu.matmul %111, %112, %cst_38 {dimension_numbers = #tpu.dot_dimension_numbers<[2], [1], [1], [2], [0, 0, 0, 1, 1, 2], [0], [0]>} : vector<8x8x16xbf16>, vector<8x16x8xbf16>, vector<8x8x8xf32> -> vector<8x8x8xf32>
    "tpu.trace_stop"() : () -> ()
    %114 = vector.extract_strided_slice %61 {offsets = [0, 0, 24], sizes = [8, 8, 8], strides = [1, 1, 1]} : vector<8x8x32xbf16> to vector<8x8x8xbf16>
    %115 = vector.extract_strided_slice %63 {offsets = [0, 0, 24], sizes = [8, 16, 8], strides = [1, 1, 1]} : vector<8x16x32xbf16> to vector<8x16x8xbf16>
    "tpu.trace_start"() <{level = 10 : i32, message = "bnd,bmd->bnm"}> : () -> ()
    %cst_39 = arith.constant dense<0.000000e+00> : vector<8x8x16xf32>
    %116 = tpu.matmul %114, %115, %cst_39 {dimension_numbers = #tpu.dot_dimension_numbers<[2], [2], [1], [1], [0, 0, 0, 1, 1, 1], [0], [0]>} : vector<8x8x8xbf16>, vector<8x16x8xbf16>, vector<8x8x16xf32> -> vector<8x8x16xf32>
    "tpu.trace_stop"() : () -> ()
    %cst_40 = arith.constant dense<0xFF800000> : vector<8x8xf32>
    %117 = vector.multi_reduction <maximumf>, %116, %cst_40 [2] : vector<8x8x16xf32> to vector<8x8xf32>
    %118 = vector.shape_cast %117 : vector<8x8xf32> to vector<8x8x1xf32>
    %119 = vector.broadcast %118 : vector<8x8x1xf32> to vector<8x8x16xf32>
    %120 = arith.subf %116, %119 : vector<8x8x16xf32>
    %121 = math.exp %120 : vector<8x8x16xf32>
    %cst_41 = arith.constant dense<0.000000e+00> : vector<8x8xf32>
    %122 = vector.multi_reduction <add>, %121, %cst_41 [2] : vector<8x8x16xf32> to vector<8x8xf32>
    %123 = vector.shape_cast %122 : vector<8x8xf32> to vector<8x8x1xf32>
    %124 = tpu.reciprocal %123 {approx = true} : vector<8x8x1xf32> -> vector<8x8x1xf32>
    %125 = vector.broadcast %124 : vector<8x8x1xf32> to vector<8x8x16xf32>
    %126 = arith.mulf %121, %125 : vector<8x8x16xf32>
    %127 = arith.truncf %126 : vector<8x8x16xf32> to vector<8x8x16xbf16>
    %128 = vector.extract_strided_slice %65 {offsets = [0, 0, 24], sizes = [8, 16, 8], strides = [1, 1, 1]} : vector<8x16x32xbf16> to vector<8x16x8xbf16>
    "tpu.trace_start"() <{level = 10 : i32, message = "bnm,bmd->bnd"}> : () -> ()
    %cst_42 = arith.constant dense<0.000000e+00> : vector<8x8x8xf32>
    %129 = tpu.matmul %127, %128, %cst_42 {dimension_numbers = #tpu.dot_dimension_numbers<[2], [1], [1], [2], [0, 0, 0, 1, 1, 2], [0], [0]>} : vector<8x8x16xbf16>, vector<8x16x8xbf16>, vector<8x8x8xf32> -> vector<8x8x8xf32>
    "tpu.trace_stop"() : () -> ()
    %130 = tpu.concatenate %81, %97, %113, %129 in 2 : vector<8x8x8xf32>, vector<8x8x8xf32>, vector<8x8x8xf32>, vector<8x8x8xf32> -> vector<8x8x32xf32>
    %131 = vector.shape_cast %130 : vector<8x8x32xf32> to vector<64x32xf32>
    %132 = arith.truncf %131 : vector<64x32xf32> to vector<64x32xbf16>
    %c0_43 = arith.constant 0 : index
    %c0_44 = arith.constant 0 : index
    %133 = vector.load %arg11[%c0_43, %c0_44] : memref<32x32xbf16, #tpu.memory_space<vmem>>, vector<32x32xbf16>
    %cst_45 = arith.constant dense<0.000000e+00> : vector<64x32xf32>
    %134 = tpu.matmul %132, %133, %cst_45 {dimension_numbers = #tpu.dot_dimension_numbers<[1], [0], [0], [1], [0, 0, 1, 1], [], []>} : vector<64x32xbf16>, vector<32x32xbf16>, vector<64x32xf32> -> vector<64x32xf32>
    %135 = arith.addf %0, %134 : vector<64x32xf32>
    %c0_46 = arith.constant 0 : index
    %c0_47 = arith.constant 0 : index
    %136 = vector.load %arg12[%c0_46, %c0_47] : memref<1x32xf32, #tpu.memory_space<vmem>>, vector<1x32xf32>
    %137 = vector.broadcast %136 : vector<1x32xf32> to vector<64x32xf32>
    %138 = arith.addf %135, %137 : vector<64x32xf32>
    %c0_48 = arith.constant 0 : index
    %c0_49 = arith.constant 0 : index
    %139 = vector.load %arg7[%c0_48, %c0_49] : memref<1x32xf32, #tpu.memory_space<vmem>>, vector<1x32xf32>
    %c0_50 = arith.constant 0 : index
    %c0_51 = arith.constant 0 : index
    %140 = vector.load %arg8[%c0_50, %c0_51] : memref<1x32xf32, #tpu.memory_space<vmem>>, vector<1x32xf32>
    %cst_52 = arith.constant dense<0.000000e+00> : vector<64xf32>
    %141 = vector.multi_reduction <add>, %138, %cst_52 [1] : vector<64x32xf32> to vector<64xf32>
    %142 = vector.shape_cast %141 : vector<64xf32> to vector<64x1xf32>
    %cst_53 = arith.constant 3.200000e+01 : f32
    %143 = vector.broadcast %cst_53 : f32 to vector<64x1xf32>
    %144 = arith.divf %142, %143 : vector<64x1xf32>
    %145 = vector.broadcast %144 : vector<64x1xf32> to vector<64x32xf32>
    %146 = arith.subf %138, %145 : vector<64x32xf32>
    %147 = arith.mulf %146, %146 : vector<64x32xf32>
    %cst_54 = arith.constant dense<0.000000e+00> : vector<64xf32>
    %148 = vector.multi_reduction <add>, %147, %cst_54 [1] : vector<64x32xf32> to vector<64xf32>
    %149 = vector.shape_cast %148 : vector<64xf32> to vector<64x1xf32>
    %cst_55 = arith.constant 3.200000e+01 : f32
    %150 = vector.broadcast %cst_55 : f32 to vector<64x1xf32>
    %151 = arith.divf %149, %150 : vector<64x1xf32>
    %152 = vector.broadcast %144 : vector<64x1xf32> to vector<64x32xf32>
    %153 = arith.subf %138, %152 : vector<64x32xf32>
    %cst_56 = arith.constant 9.99999974E-6 : f32
    %154 = vector.broadcast %cst_56 : f32 to vector<64x1xf32>
    %155 = arith.addf %151, %154 : vector<64x1xf32>
    %156 = math.rsqrt %155 : vector<64x1xf32>
    %157 = vector.broadcast %156 : vector<64x1xf32> to vector<64x32xf32>
    %158 = arith.mulf %153, %157 : vector<64x32xf32>
    %159 = vector.broadcast %139 : vector<1x32xf32> to vector<64x32xf32>
    %160 = arith.mulf %158, %159 : vector<64x32xf32>
    %161 = vector.broadcast %140 : vector<1x32xf32> to vector<64x32xf32>
    %162 = arith.addf %160, %161 : vector<64x32xf32>
    %163 = arith.truncf %162 : vector<64x32xf32> to vector<64x32xbf16>
    %c0_57 = arith.constant 0 : index
    %c0_58 = arith.constant 0 : index
    %164 = vector.load %arg13[%c0_57, %c0_58] : memref<32x128xbf16, #tpu.memory_space<vmem>>, vector<32x128xbf16>
    %cst_59 = arith.constant dense<0.000000e+00> : vector<64x128xf32>
    %165 = tpu.matmul %163, %164, %cst_59 {dimension_numbers = #tpu.dot_dimension_numbers<[1], [0], [0], [1], [0, 0, 1, 1], [], []>} : vector<64x32xbf16>, vector<32x128xbf16>, vector<64x128xf32> -> vector<64x128xf32>
    %c0_60 = arith.constant 0 : index
    %c0_61 = arith.constant 0 : index
    %166 = vector.load %arg14[%c0_60, %c0_61] : memref<1x128xf32, #tpu.memory_space<vmem>>, vector<1x128xf32>
    %167 = vector.broadcast %166 : vector<1x128xf32> to vector<64x128xf32>
    %168 = arith.addf %165, %167 : vector<64x128xf32>
    %cst_62 = arith.constant 1.702000e+00 : f32
    %169 = vector.broadcast %cst_62 : f32 to vector<64x128xf32>
    %170 = arith.mulf %169, %168 : vector<64x128xf32>
    %171 = arith.negf %170 : vector<64x128xf32>
    %172 = math.exp %171 : vector<64x128xf32>
    %cst_63 = arith.constant 1.000000e+00 : f32
    %173 = vector.broadcast %cst_63 : f32 to vector<64x128xf32>
    %174 = arith.addf %173, %172 : vector<64x128xf32>
    %175 = arith.divf %173, %174 : vector<64x128xf32>
    %176 = arith.mulf %168, %175 : vector<64x128xf32>
    %177 = arith.truncf %176 : vector<64x128xf32> to vector<64x128xbf16>
    %c0_64 = arith.constant 0 : index
    %c0_65 = arith.constant 0 : index
    %178 = vector.load %arg15[%c0_64, %c0_65] : memref<128x32xbf16, #tpu.memory_space<vmem>>, vector<128x32xbf16>
    %cst_66 = arith.constant dense<0.000000e+00> : vector<64x32xf32>
    %179 = tpu.matmul %177, %178, %cst_66 {dimension_numbers = #tpu.dot_dimension_numbers<[1], [0], [0], [1], [0, 0, 1, 1], [], []>} : vector<64x128xbf16>, vector<128x32xbf16>, vector<64x32xf32> -> vector<64x32xf32>
    %c0_67 = arith.constant 0 : index
    %c0_68 = arith.constant 0 : index
    %180 = vector.load %arg16[%c0_67, %c0_68] : memref<1x32xf32, #tpu.memory_space<vmem>>, vector<1x32xf32>
    %181 = vector.broadcast %180 : vector<1x32xf32> to vector<64x32xf32>
    %182 = arith.addf %179, %181 : vector<64x32xf32>
    %183 = arith.addf %138, %182 : vector<64x32xf32>
    %c0_69 = arith.constant 0 : index
    %c0_70 = arith.constant 0 : index
    %184 = vector.load %arg17[%c0_69, %c0_70] : memref<64x32xf32, #tpu.memory_space<vmem>>, vector<64x32xf32>
    tpu.vector_store %arg17[%c0_69, %c0_70], %183 {strides = array<i32>} : memref<64x32xf32, #tpu.memory_space<vmem>>, vector<64x32xf32>,
    return
  }
  func.func @transform_0(%arg0: i32) -> (i32, i32) {
    %c0_i32 = arith.constant 0 : i32
    %c0_i32_0 = arith.constant 0 : i32
    return %arg0, %c0_i32 : i32, i32
  }
  func.func @transform_1(%arg0: i32) -> (i32, i32) {
    %c0_i32 = arith.constant 0 : i32
    %c0_i32_0 = arith.constant 0 : i32
    return %arg0, %c0_i32 : i32, i32
  }
  func.func @transform_2(%arg0: i32) -> (i32, i32) {
    %c0_i32 = arith.constant 0 : i32
    %c0_i32_0 = arith.constant 0 : i32
    %c0_i32_1 = arith.constant 0 : i32
    return %c0_i32, %c0_i32_0 : i32, i32
  }
  func.func @transform_3(%arg0: i32) -> (i32, i32) {
    %c0_i32 = arith.constant 0 : i32
    %c0_i32_0 = arith.constant 0 : i32
    %c0_i32_1 = arith.constant 0 : i32
    return %c0_i32, %c0_i32_0 : i32, i32
  }
  func.func @transform_4(%arg0: i32) -> (i32, i32) {
    %c0_i32 = arith.constant 0 : i32
    %c0_i32_0 = arith.constant 0 : i32
    %c0_i32_1 = arith.constant 0 : i32
    return %c0_i32, %c0_i32_0 : i32, i32
  }
  func.func @transform_5(%arg0: i32) -> (i32, i32) {
    %c0_i32 = arith.constant 0 : i32
    %c0_i32_0 = arith.constant 0 : i32
    %c0_i32_1 = arith.constant 0 : i32
    return %c0_i32, %c0_i32_0 : i32, i32
  }
  func.func @transform_6(%arg0: i32) -> (i32, i32) {
    %c0_i32 = arith.constant 0 : i32
    %c0_i32_0 = arith.constant 0 : i32
    %c0_i32_1 = arith.constant 0 : i32
    return %c0_i32, %c0_i32_0 : i32, i32
  }
  func.func @transform_7(%arg0: i32) -> (i32, i32) {
    %c0_i32 = arith.constant 0 : i32
    %c0_i32_0 = arith.constant 0 : i32
    %c0_i32_1 = arith.constant 0 : i32
    return %c0_i32, %c0_i32_0 : i32, i32
  }
  func.func @transform_8(%arg0: i32) -> (i32, i32) {
    %c0_i32 = arith.constant 0 : i32
    %c0_i32_0 = arith.constant 0 : i32
    %c0_i32_1 = arith.constant 0 : i32
    return %c0_i32, %c0_i32_0 : i32, i32
  }
  func.func @transform_9(%arg0: i32) -> (i32, i32) {
    %c0_i32 = arith.constant 0 : i32
    %c0_i32_0 = arith.constant 0 : i32
    %c0_i32_1 = arith.constant 0 : i32
    return %c0_i32, %c0_i32_0 : i32, i32
  }
  func.func @transform_10(%arg0: i32) -> (i32, i32) {
    %c0_i32 = arith.constant 0 : i32
    %c0_i32_0 = arith.constant 0 : i32
    %c0_i32_1 = arith.constant 0 : i32
    return %c0_i32, %c0_i32_0 : i32, i32
  }
  func.func @transform_11(%arg0: i32) -> (i32, i32) {
    %c0_i32 = arith.constant 0 : i32
    %c0_i32_0 = arith.constant 0 : i32
    %c0_i32_1 = arith.constant 0 : i32
    return %c0_i32, %c0_i32_0 : i32, i32
  }
  func.func @transform_12(%arg0: i32) -> (i32, i32) {
    %c0_i32 = arith.constant 0 : i32
    %c0_i32_0 = arith.constant 0 : i32
    %c0_i32_1 = arith.constant 0 : i32
    return %c0_i32, %c0_i32_0 : i32, i32
  }
  func.func @transform_13(%arg0: i32) -> (i32, i32) {
    %c0_i32 = arith.constant 0 : i32
    %c0_i32_0 = arith.constant 0 : i32
    %c0_i32_1 = arith.constant 0 : i32
    return %c0_i32, %c0_i32_0 : i32, i32
  }
  func.func @transform_14(%arg0: i32) -> (i32, i32) {
    %c0_i32 = arith.constant 0 : i32
    %c0_i32_0 = arith.constant 0 : i32
    %c0_i32_1 = arith.constant 0 : i32
    return %c0_i32, %c0_i32_0 : i32, i32
  }
  func.func @transform_15(%arg0: i32) -> (i32, i32) {
    %c0_i32 = arith.constant 0 : i32
    %c0_i32_0 = arith.constant 0 : i32
    %c0_i32_1 = arith.constant 0 : i32
    return %c0_i32, %c0_i32_0 : i32, i32
  }
  func.func @transform_16(%arg0: i32) -> (i32, i32) {
    %c0_i32 = arith.constant 0 : i32
    %c0_i32_0 = arith.constant 0 : i32
    return %arg0, %c0_i32 : i32, i32
  }
}

module attributes {stable_mosaic.version = 11 : i64} {
  func.func @_prompt_gen_kernel(%arg0: i32, %arg1: memref<64x32xf32, #tpu.memory_space<vmem>>, %arg2: memref<128x32xf32, #tpu.memory_space<vmem>>, %arg3: memref<1x32xf32, #tpu.memory_space<vmem>>, %arg4: memref<1x32xf32, #tpu.memory_space<vmem>>, %arg5: memref<1x32xf32, #tpu.memory_space<vmem>>, %arg6: memref<1x32xf32, #tpu.memory_space<vmem>>, %arg7: memref<1x32xf32, #tpu.memory_space<vmem>>, %arg8: memref<1x32xf32, #tpu.memory_space<vmem>>, %arg9: memref<32x32xbf16, #tpu.memory_space<vmem>>, %arg10: memref<32x64xbf16, #tpu.memory_space<vmem>>, %arg11: memref<32x32xbf16, #tpu.memory_space<vmem>>, %arg12: memref<1x32xf32, #tpu.memory_space<vmem>>, %arg13: memref<32x128xbf16, #tpu.memory_space<vmem>>, %arg14: memref<1x128xf32, #tpu.memory_space<vmem>>, %arg15: memref<128x32xbf16, #tpu.memory_space<vmem>>, %arg16: memref<1x32xf32, #tpu.memory_space<vmem>>, %arg17: memref<64x32xf32, #tpu.memory_space<vmem>>) attributes {dimension_semantics = [#tpu.dimension_semantics<parallel>], iteration_bounds = array<i64: 2>, scalar_prefetch = 0 : i64, scratch_operands = 0 : i64, tpu.core_type = #tpu.core_type<tc>, window_params = [{transform_indices = @transform_0, window_bounds = array<i64: 64, 32>}, {transform_indices = @transform_1, window_bounds = array<i64: 128, 32>}, {pipeline_mode = #tpu.pipeline_mode<synchronous>, transform_indices = @transform_2, window_bounds = array<i64: 1, 32>}, {pipeline_mode = #tpu.pipeline_mode<synchronous>, transform_indices = @transform_3, window_bounds = array<i64: 1, 32>}, {pipeline_mode = #tpu.pipeline_mode<synchronous>, transform_indices = @transform_4, window_bounds = array<i64: 1, 32>}, {pipeline_mode = #tpu.pipeline_mode<synchronous>, transform_indices = @transform_5, window_bounds = array<i64: 1, 32>}, {pipeline_mode = #tpu.pipeline_mode<synchronous>, transform_indices = @transform_6, window_bounds = array<i64: 1, 32>}, {pipeline_mode = #tpu.pipeline_mode<synchronous>, transform_indices = @transform_7, window_bounds = array<i64: 1, 32>}, {pipeline_mode = #tpu.pipeline_mode<synchronous>, transform_indices = @transform_8, window_bounds = array<i64: 32, 32>}, {pipeline_mode = #tpu.pipeline_mode<synchronous>, transform_indices = @transform_9, window_bounds = array<i64: 32, 64>}, {pipeline_mode = #tpu.pipeline_mode<synchronous>, transform_indices = @transform_10, window_bounds = array<i64: 32, 32>}, {pipeline_mode = #tpu.pipeline_mode<synchronous>, transform_indices = @transform_11, window_bounds = array<i64: 1, 32>}, {pipeline_mode = #tpu.pipeline_mode<synchronous>, transform_indices = @transform_12, window_bounds = array<i64: 32, 128>}, {pipeline_mode = #tpu.pipeline_mode<synchronous>, transform_indices = @transform_13, window_bounds = array<i64: 1, 128>}, {pipeline_mode = #tpu.pipeline_mode<synchronous>, transform_indices = @transform_14, window_bounds = array<i64: 128, 32>}, {pipeline_mode = #tpu.pipeline_mode<synchronous>, transform_indices = @transform_15, window_bounds = array<i64: 1, 32>}, {transform_indices = @transform_16, window_bounds = array<i64: 64, 32>}]} {
    %c0 = arith.constant 0 : index
    %c0_0 = arith.constant 0 : index
    %0 = vector.load %arg1[%c0, %c0_0] : memref<64x32xf32, #tpu.memory_space<vmem>>, vector<64x32xf32>
    %c0_1 = arith.constant 0 : index
    %c0_2 = arith.constant 0 : index
    %1 = vector.load %arg2[%c0_1, %c0_2] : memref<128x32xf32, #tpu.memory_space<vmem>>, vector<128x32xf32>
    %c0_3 = arith.constant 0 : index
    %c0_4 = arith.constant 0 : index
    %2 = vector.load %arg3[%c0_3, %c0_4] : memref<1x32xf32, #tpu.memory_space<vmem>>, vector<1x32xf32>
    %c0_5 = arith.constant 0 : index
    %c0_6 = arith.constant 0 : index
    %3 = vector.load %arg4[%c0_5, %c0_6] : memref<1x32xf32, #tpu.memory_space<vmem>>, vector<1x32xf32>
    %cst = arith.constant dense<0.000000e+00> : vector<64xf32>
    %4 = vector.multi_reduction <add>, %0, %cst [1] : vector<64x32xf32> to vector<64xf32>
    %5 = vector.shape_cast %4 : vector<64xf32> to vector<64x1xf32>
    %cst_7 = arith.constant 3.200000e+01 : f32
    %6 = vector.broadcast %cst_7 : f32 to vector<64x1xf32>
    %7 = arith.divf %5, %6 : vector<64x1xf32>
    %8 = vector.broadcast %7 : vector<64x1xf32> to vector<64x32xf32>
    %9 = arith.subf %0, %8 : vector<64x32xf32>
    %10 = arith.mulf %9, %9 : vector<64x32xf32>
    %cst_8 = arith.constant dense<0.000000e+00> : vector<64xf32>
    %11 = vector.multi_reduction <add>, %10, %cst_8 [1] : vector<64x32xf32> to vector<64xf32>
    %12 = vector.shape_cast %11 : vector<64xf32> to vector<64x1xf32>
    %cst_9 = arith.constant 3.200000e+01 : f32
    %13 = vector.broadcast %cst_9 : f32 to vector<64x1xf32>
    %14 = arith.divf %12, %13 : vector<64x1xf32>
    %15 = vector.broadcast %7 : vector<64x1xf32> to vector<64x32xf32>
    %16 = arith.subf %0, %15 : vector<64x32xf32>
    %cst_10 = arith.constant 9.99999974E-6 : f32
    %17 = vector.broadcast %cst_10 : f32 to vector<64x1xf32>
    %18 = arith.addf %14, %17 : vector<64x1xf32>
    %19 = math.rsqrt %18 : vector<64x1xf32>
    %20 = vector.broadcast %19 : vector<64x1xf32> to vector<64x32xf32>
    %21 = arith.mulf %16, %20 : vector<64x32xf32>
    %22 = vector.broadcast %2 : vector<1x32xf32> to vector<64x32xf32>
    %23 = arith.mulf %21, %22 : vector<64x32xf32>
    %24 = vector.broadcast %3 : vector<1x32xf32> to vector<64x32xf32>
    %25 = arith.addf %23, %24 : vector<64x32xf32>
    %c0_11 = arith.constant 0 : index
    %c0_12 = arith.constant 0 : index
    %26 = vector.load %arg5[%c0_11, %c0_12] : memref<1x32xf32, #tpu.memory_space<vmem>>, vector<1x32xf32>
    %c0_13 = arith.constant 0 : index
    %c0_14 = arith.constant 0 : index
    %27 = vector.load %arg6[%c0_13, %c0_14] : memref<1x32xf32, #tpu.memory_space<vmem>>, vector<1x32xf32>
    %cst_15 = arith.constant dense<0.000000e+00> : vector<128xf32>
    %28 = vector.multi_reduction <add>, %1, %cst_15 [1] : vector<128x32xf32> to vector<128xf32>
    %29 = vector.shape_cast %28 : vector<128xf32> to vector<128x1xf32>
    %cst_16 = arith.constant 3.200000e+01 : f32
    %30 = vector.broadcast %cst_16 : f32 to vector<128x1xf32>
    %31 = arith.divf %29, %30 : vector<128x1xf32>
    %32 = vector.broadcast %31 : vector<128x1xf32> to vector<128x32xf32>
    %33 = arith.subf %1, %32 : vector<128x32xf32>
    %34 = arith.mulf %33, %33 : vector<128x32xf32>
    %cst_17 = arith.constant dense<0.000000e+00> : vector<128xf32>
    %35 = vector.multi_reduction <add>, %34, %cst_17 [1] : vector<128x32xf32> to vector<128xf32>
    %36 = vector.shape_cast %35 : vector<128xf32> to vector<128x1xf32>
    %cst_18 = arith.constant 3.200000e+01 : f32
    %37 = vector.broadcast %cst_18 : f32 to vector<128x1xf32>
    %38 = arith.divf %36, %37 : vector<128x1xf32>
    %39 = vector.broadcast %31 : vector<128x1xf32> to vector<128x32xf32>
    %40 = arith.subf %1, %39 : vector<128x32xf32>
    %cst_19 = arith.constant 9.99999974E-6 : f32
    %41 = vector.broadcast %cst_19 : f32 to vector<128x1xf32>
    %42 = arith.addf %38, %41 : vector<128x1xf32>
    %43 = math.rsqrt %42 : vector<128x1xf32>
    %44 = vector.broadcast %43 : vector<128x1xf32> to vector<128x32xf32>
    %45 = arith.mulf %40, %44 : vector<128x32xf32>
    %46 = vector.broadcast %26 : vector<1x32xf32> to vector<128x32xf32>
    %47 = arith.mulf %45, %46 : vector<128x32xf32>
    %48 = vector.broadcast %27 : vector<1x32xf32> to vector<128x32xf32>
    %49 = arith.addf %47, %48 : vector<128x32xf32>
    %50 = arith.truncf %25 : vector<64x32xf32> to vector<64x32xbf16>
    %c0_20 = arith.constant 0 : index
    %c0_21 = arith.constant 0 : index
    %51 = vector.load %arg9[%c0_20, %c0_21] : memref<32x32xbf16, #tpu.memory_space<vmem>>, vector<32x32xbf16>
    %cst_22 = arith.constant dense<0.000000e+00> : vector<64x32xf32>
    %52 = tpu.matmul %50, %51, %cst_22 {dimension_numbers = #tpu.dot_dimension_numbers<[1], [0], [0], [1], [0, 0, 1, 1], [], []>} : vector<64x32xbf16>, vector<32x32xbf16>, vector<64x32xf32> -> vector<64x32xf32>
    %53 = arith.truncf %49 : vector<128x32xf32> to vector<128x32xbf16>
    %c0_23 = arith.constant 0 : index
    %c0_24 = arith.constant 0 : index
    %54 = vector.load %arg10[%c0_23, %c0_24] : memref<32x64xbf16, #tpu.memory_space<vmem>>, vector<32x64xbf16>
    %cst_25 = arith.constant dense<0.000000e+00> : vector<128x64xf32>
    %55 = tpu.matmul %53, %54, %cst_25 {dimension_numbers = #tpu.dot_dimension_numbers<[1], [0], [0], [1], [0, 0, 1, 1], [], []>} : vector<128x32xbf16>, vector<32x64xbf16>, vector<128x64xf32> -> vector<128x64xf32>
    %56 = vector.extract_strided_slice %55 {offsets = [0, 0], sizes = [128, 32], strides = [1, 1]} : vector<128x64xf32> to vector<128x32xf32>
    %57 = vector.extract_strided_slice %55 {offsets = [0, 32], sizes = [128, 32], strides = [1, 1]} : vector<128x64xf32> to vector<128x32xf32>
    %cst_26 = arith.constant 0.353553385 : f32
    %58 = vector.broadcast %cst_26 : f32 to vector<64x32xf32>
    %59 = arith.mulf %52, %58 : vector<64x32xf32>
    %60 = vector.shape_cast %59 : vector<64x32xf32> to vector<8x8x32xf32>
    %61 = arith.truncf %60 : vector<8x8x32xf32> to vector<8x8x32xbf16>
    %62 = vector.shape_cast %56 : vector<128x32xf32> to vector<8x16x32xf32>
    %63 = arith.truncf %62 : vector<8x16x32xf32> to vector<8x16x32xbf16>
    %64 = vector.shape_cast %57 : vector<128x32xf32> to vector<8x16x32xf32>
    %65 = arith.truncf %64 : vector<8x16x32xf32> to vector<8x16x32xbf16>
    %66 = vector.extract_strided_slice %61 {offsets = [0, 0, 0], sizes = [8, 8, 8], strides = [1, 1, 1]} : vector<8x8x32xbf16> to vector<8x8x8xbf16>
    %67 = vector.extract_strided_slice %63 {offsets = [0, 0, 0], sizes = [8, 16, 8], strides = [1, 1, 1]} : vector<8x16x32xbf16> to vector<8x16x8xbf16>
    "tpu.trace_start"() <{level = 10 : i32, message = "bnd,bmd->bnm"}> : () -> ()
    %cst_27 = arith.constant dense<0.000000e+00> : vector<8x8x16xf32>
    %68 = tpu.matmul %66, %67, %cst_27 {dimension_numbers = #tpu.dot_dimension_numbers<[2], [2], [1], [1], [0, 0, 0, 1, 1, 1], [0], [0]>} : vector<8x8x8xbf16>, vector<8x16x8xbf16>, vector<8x8x16xf32> -> vector<8x8x16xf32>
    "tpu.trace_stop"() : () -> ()
    %cst_28 = arith.constant dense<0xFF800000> : vector<8x8xf32>
    %69 = vector.multi_reduction <maximumf>, %68, %cst_28 [2] : vector<8x8x16xf32> to vector<8x8xf32>
    %70 = vector.shape_cast %69 : vector<8x8xf32> to vector<8x8x1xf32>
    %71 = vector.broadcast %70 : vector<8x8x1xf32> to vector<8x8x16xf32>
    %72 = arith.subf %68, %71 : vector<8x8x16xf32>
    %73 = math.exp %72 : vector<8x8x16xf32>
    %cst_29 = arith.constant dense<0.000000e+00> : vector<8x8xf32>
    %74 = vector.multi_reduction <add>, %73, %cst_29 [2] : vector<8x8x16xf32> to vector<8x8xf32>
    %75 = vector.shape_cast %74 : vector<8x8xf32> to vector<8x8x1xf32>
    %76 = tpu.reciprocal %75 {approx = true} : vector<8x8x1xf32> -> vector<8x8x1xf32>
    %77 = vector.broadcast %76 : vector<8x8x1xf32> to vector<8x8x16xf32>
    %78 = arith.mulf %73, %77 : vector<8x8x16xf32>
    %79 = arith.truncf %78 : vector<8x8x16xf32> to vector<8x8x16xbf16>
    %80 = vector.extract_strided_slice %65 {offsets = [0, 0, 0], sizes = [8, 16, 8], strides = [1, 1, 1]} : vector<8x16x32xbf16> to vector<8x16x8xbf16>
    "tpu.trace_start"() <{level = 10 : i32, message = "bnm,bmd->bnd"}> : () -> ()
    %cst_30 = arith.constant dense<0.000000e+00> : vector<8x8x8xf32>
    %81 = tpu.matmul %79, %80, %cst_30 {dimension_numbers = #tpu.dot_dimension_numbers<[2], [1], [1], [2], [0, 0, 0, 1, 1, 2], [0], [0]>} : vector<8x8x16xbf16>, vector<8x16x8xbf16>, vector<8x8x8xf32> -> vector<8x8x8xf32>
    "tpu.trace_stop"() : () -> ()
    %82 = vector.extract_strided_slice %61 {offsets = [0, 0, 8], sizes = [8, 8, 8], strides = [1, 1, 1]} : vector<8x8x32xbf16> to vector<8x8x8xbf16>
    %83 = vector.extract_strided_slice %63 {offsets = [0, 0, 8], sizes = [8, 16, 8], strides = [1, 1, 1]} : vector<8x16x32xbf16> to vector<8x16x8xbf16>
    "tpu.trace_start"() <{level = 10 : i32, message = "bnd,bmd->bnm"}> : () -> ()
    %cst_31 = arith.constant dense<0.000000e+00> : vector<8x8x16xf32>
    %84 = tpu.matmul %82, %83, %cst_31 {dimension_numbers = #tpu.dot_dimension_numbers<[2], [2], [1], [1], [0, 0, 0, 1, 1, 1], [0], [0]>} : vector<8x8x8xbf16>, vector<8x16x8xbf16>, vector<8x8x16xf32> -> vector<8x8x16xf32>
    "tpu.trace_stop"() : () -> ()
    %cst_32 = arith.constant dense<0xFF800000> : vector<8x8xf32>
    %85 = vector.multi_reduction <maximumf>, %84, %cst_32 [2] : vector<8x8x16xf32> to vector<8x8xf32>
    %86 = vector.shape_cast %85 : vector<8x8xf32> to vector<8x8x1xf32>
    %87 = vector.broadcast %86 : vector<8x8x1xf32> to vector<8x8x16xf32>
    %88 = arith.subf %84, %87 : vector<8x8x16xf32>
    %89 = math.exp %88 : vector<8x8x16xf32>
    %cst_33 = arith.constant dense<0.000000e+00> : vector<8x8xf32>
    %90 = vector.multi_reduction <add>, %89, %cst_33 [2] : vector<8x8x16xf32> to vector<8x8xf32>
    %91 = vector.shape_cast %90 : vector<8x8xf32> to vector<8x8x1xf32>
    %92 = tpu.reciprocal %91 {approx = true} : vector<8x8x1xf32> -> vector<8x8x1xf32>
    %93 = vector.broadcast %92 : vector<8x8x1xf32> to vector<8x8x16xf32>
    %94 = arith.mulf %89, %93 : vector<8x8x16xf32>
    %95 = arith.truncf %94 : vector<8x8x16xf32> to vector<8x8x16xbf16>
    %96 = vector.extract_strided_slice %65 {offsets = [0, 0, 8], sizes = [8, 16, 8], strides = [1, 1, 1]} : vector<8x16x32xbf16> to vector<8x16x8xbf16>
    "tpu.trace_start"() <{level = 10 : i32, message = "bnm,bmd->bnd"}> : () -> ()
    %cst_34 = arith.constant dense<0.000000e+00> : vector<8x8x8xf32>
    %97 = tpu.matmul %95, %96, %cst_34 {dimension_numbers = #tpu.dot_dimension_numbers<[2], [1], [1], [2], [0, 0, 0, 1, 1, 2], [0], [0]>} : vector<8x8x16xbf16>, vector<8x16x8xbf16>, vector<8x8x8xf32> -> vector<8x8x8xf32>
    "tpu.trace_stop"() : () -> ()
    %98 = vector.extract_strided_slice %61 {offsets = [0, 0, 16], sizes = [8, 8, 8], strides = [1, 1, 1]} : vector<8x8x32xbf16> to vector<8x8x8xbf16>
    %99 = vector.extract_strided_slice %63 {offsets = [0, 0, 16], sizes = [8, 16, 8], strides = [1, 1, 1]} : vector<8x16x32xbf16> to vector<8x16x8xbf16>
    "tpu.trace_start"() <{level = 10 : i32, message = "bnd,bmd->bnm"}> : () -> ()
    %cst_35 = arith.constant dense<0.000000e+00> : vector<8x8x16xf32>
    %100 = tpu.matmul %98, %99, %cst_35 {dimension_numbers = #tpu.dot_dimension_numbers<[2], [2], [1], [1], [0, 0, 0, 1, 1, 1], [0], [0]>} : vector<8x8x8xbf16>, vector<8x16x8xbf16>, vector<8x8x16xf32> -> vector<8x8x16xf32>
    "tpu.trace_stop"() : () -> ()
    %cst_36 = arith.constant dense<0xFF800000> : vector<8x8xf32>
    %101 = vector.multi_reduction <maximumf>, %100, %cst_36 [2] : vector<8x8x16xf32> to vector<8x8xf32>
    %102 = vector.shape_cast %101 : vector<8x8xf32> to vector<8x8x1xf32>
    %103 = vector.broadcast %102 : vector<8x8x1xf32> to vector<8x8x16xf32>
    %104 = arith.subf %100, %103 : vector<8x8x16xf32>
    %105 = math.exp %104 : vector<8x8x16xf32>
    %cst_37 = arith.constant dense<0.000000e+00> : vector<8x8xf32>
    %106 = vector.multi_reduction <add>, %105, %cst_37 [2] : vector<8x8x16xf32> to vector<8x8xf32>
    %107 = vector.shape_cast %106 : vector<8x8xf32> to vector<8x8x1xf32>
    %108 = tpu.reciprocal %107 {approx = true} : vector<8x8x1xf32> -> vector<8x8x1xf32>
    %109 = vector.broadcast %108 : vector<8x8x1xf32> to vector<8x8x16xf32>
    %110 = arith.mulf %105, %109 : vector<8x8x16xf32>
    %111 = arith.truncf %110 : vector<8x8x16xf32> to vector<8x8x16xbf16>
    %112 = vector.extract_strided_slice %65 {offsets = [0, 0, 16], sizes = [8, 16, 8], strides = [1, 1, 1]} : vector<8x16x32xbf16> to vector<8x16x8xbf16>
    "tpu.trace_start"() <{level = 10 : i32, message = "bnm,bmd->bnd"}> : () -> ()
    %cst_38 = arith.constant dense<0.000000e+00> : vector<8x8x8xf32>
    %113 = tpu.matmul %111, %112, %cst_38 {dimension_numbers = #tpu.dot_dimension_numbers<[2], [1], [1], [2], [0, 0, 0, 1, 1, 2], [0], [0]>} : vector<8x8x16xbf16>, vector<8x16x8xbf16>, vector<8x8x8xf32> -> vector<8x8x8xf32>
    "tpu.trace_stop"() : () -> ()
    %114 = vector.extract_strided_slice %61 {offsets = [0, 0, 24], sizes = [8, 8, 8], strides = [1, 1, 1]} : vector<8x8x32xbf16> to vector<8x8x8xbf16>
    %115 = vector.extract_strided_slice %63 {offsets = [0, 0, 24], sizes = [8, 16, 8], strides = [1, 1, 1]} : vector<8x16x32xbf16> to vector<8x16x8xbf16>
    "tpu.trace_start"() <{level = 10 : i32, message = "bnd,bmd->bnm"}> : () -> ()
    %cst_39 = arith.constant dense<0.000000e+00> : vector<8x8x16xf32>
    %116 = tpu.matmul %114, %115, %cst_39 {dimension_numbers = #tpu.dot_dimension_numbers<[2], [2], [1], [1], [0, 0, 0, 1, 1, 1], [0], [0]>} : vector<8x8x8xbf16>, vector<8x16x8xbf16>, vector<8x8x16xf32> -> vector<8x8x16xf32>
    "tpu.trace_stop"() : () -> ()
    %cst_40 = arith.constant dense<0xFF800000> : vector<8x8xf32>
    %117 = vector.multi_reduction <maximumf>, %116, %cst_40 [2] : vector<8x8x16xf32> to vector<8x8xf32>
    %118 = vector.shape_cast %117 : vector<8x8xf32> to vector<8x8x1xf32>
    %119 = vector.broadcast %118 : vector<8x8x1xf32> to vector<8x8x16xf32>
    %120 = arith.subf %116, %119 : vector<8x8x16xf32>
    %121 = math.exp %120 : vector<8x8x16xf32>
    %cst_41 = arith.constant dense<0.000000e+00> : vector<8x8xf32>
    %122 = vector.multi_reduction <add>, %121, %cst_41 [2] : vector<8x8x16xf32> to vector<8x8xf32>
    %123 = vector.shape_cast %122 : vector<8x8xf32> to vector<8x8x1xf32>
    %124 = tpu.reciprocal %123 {approx = true} : vector<8x8x1xf32> -> vector<8x8x1xf32>
    %125 = vector.broadcast %124 : vector<8x8x1xf32> to vector<8x8x16xf32>
    %126 = arith.mulf %121, %125 : vector<8x8x16xf32>
    %127 = arith.truncf %126 : vector<8x8x16xf32> to vector<8x8x16xbf16>
    %128 = vector.extract_strided_slice %65 {offsets = [0, 0, 24], sizes = [8, 16, 8], strides = [1, 1, 1]} : vector<8x16x32xbf16> to vector<8x16x8xbf16>
    "tpu.trace_start"() <{level = 10 : i32, message = "bnm,bmd->bnd"}> : () -> ()
    %cst_42 = arith.constant dense<0.000000e+00> : vector<8x8x8xf32>
    %129 = tpu.matmul %127, %128, %cst_42 {dimension_numbers = #tpu.dot_dimension_numbers<[2], [1], [1], [2], [0, 0, 0, 1, 1, 2], [0], [0]>} : vector<8x8x16xbf16>, vector<8x16x8xbf16>, vector<8x8x8xf32> -> vector<8x8x8xf32>
    "tpu.trace_stop"() : () -> ()
    %130 = tpu.concatenate %81, %97, %113, %129 in 2 : vector<8x8x8xf32>, vector<8x8x8xf32>, vector<8x8x8xf32>, vector<8x8x8xf32> -> vector<8x8x32xf32>
    %131 = vector.shape_cast %130 : vector<8x8x32xf32> to vector<64x32xf32>
    %132 = arith.truncf %131 : vector<64x32xf32> to vector<64x32xbf16>
    %c0_43 = arith.constant 0 : index
    %c0_44 = arith.constant 0 : index
    %133 = vector.load %arg11[%c0_43, %c0_44] : memref<32x32xbf16, #tpu.memory_space<vmem>>, vector<32x32xbf16>
    %cst_45 = arith.constant dense<0.000000e+00> : vector<64x32xf32>
    %134 = tpu.matmul %132, %133, %cst_45 {dimension_numbers = #tpu.dot_dimension_numbers<[1], [0], [0], [1], [0, 0, 1, 1], [], []>} : vector<64x32xbf16>, vector<32x32xbf16>, vector<64x32xf32> -> vector<64x32xf32>
    %135 = arith.addf %0, %134 : vector<64x32xf32>
    %c0_46 = arith.constant 0 : index
    %c0_47 = arith.constant 0 : index
    %136 = vector.load %arg12[%c0_46, %c0_47] : memref<1x32xf32, #tpu.memory_space<vmem>>, vector<1x32xf32>
    %137 = vector.broadcast %136 : vector<1x32xf32> to vector<64x32xf32>
    %138 = arith.addf %135, %137 : vector<64x32xf32>
    %c0_48 = arith.constant 0 : index
    %c0_49 = arith.constant 0 : index
    %139 = vector.load %arg7[%c0_48, %c0_49] : memref<1x32xf32, #tpu.memory_space<vmem>>, vector<1x32xf32>
    %c0_50 = arith.constant 0 : index
    %c0_51 = arith.constant 0 : index
    %140 = vector.load %arg8[%c0_50, %c0_51] : memref<1x32xf32, #tpu.memory_space<vmem>>, vector<1x32xf32>
    %cst_52 = arith.constant dense<0.000000e+00> : vector<64xf32>
    %141 = vector.multi_reduction <add>, %138, %cst_52 [1] : vector<64x32xf32> to vector<64xf32>
    %142 = vector.shape_cast %141 : vector<64xf32> to vector<64x1xf32>
    %cst_53 = arith.constant 3.200000e+01 : f32
    %143 = vector.broadcast %cst_53 : f32 to vector<64x1xf32>
    %144 = arith.divf %142, %143 : vector<64x1xf32>
    %145 = vector.broadcast %144 : vector<64x1xf32> to vector<64x32xf32>
    %146 = arith.subf %138, %145 : vector<64x32xf32>
    %147 = arith.mulf %146, %146 : vector<64x32xf32>
    %cst_54 = arith.constant dense<0.000000e+00> : vector<64xf32>
    %148 = vector.multi_reduction <add>, %147, %cst_54 [1] : vector<64x32xf32> to vector<64xf32>
    %149 = vector.shape_cast %148 : vector<64xf32> to vector<64x1xf32>
    %cst_55 = arith.constant 3.200000e+01 : f32
    %150 = vector.broadcast %cst_55 : f32 to vector<64x1xf32>
    %151 = arith.divf %149, %150 : vector<64x1xf32>
    %152 = vector.broadcast %144 : vector<64x1xf32> to vector<64x32xf32>
    %153 = arith.subf %138, %152 : vector<64x32xf32>
    %cst_56 = arith.constant 9.99999974E-6 : f32
    %154 = vector.broadcast %cst_56 : f32 to vector<64x1xf32>
    %155 = arith.addf %151, %154 : vector<64x1xf32>
    %156 = math.rsqrt %155 : vector<64x1xf32>
    %157 = vector.broadcast %156 : vector<64x1xf32> to vector<64x32xf32>
    %158 = arith.mulf %153, %157 : vector<64x32xf32>
    %159 = vector.broadcast %139 : vector<1x32xf32> to vector<64x32xf32>
    %160 = arith.mulf %158, %159 : vector<64x32xf32>
    %161 = vector.broadcast %140 : vector<1x32xf32> to vector<64x32xf32>
    %162 = arith.addf %160, %161 : vector<64x32xf32>
    %163 = arith.truncf %162 : vector<64x32xf32> to vector<64x32xbf16>
    %c0_57 = arith.constant 0 : index
    %c0_58 = arith.constant 0 : index
    %164 = vector.load %arg13[%c0_57, %c0_58] : memref<32x128xbf16, #tpu.memory_space<vmem>>, vector<32x128xbf16>
    %cst_59 = arith.constant dense<0.000000e+00> : vector<64x128xf32>
    %165 = tpu.matmul %163, %164, %cst_59 {dimension_numbers = #tpu.dot_dimension_numbers<[1], [0], [0], [1], [0, 0, 1, 1], [], []>} : vector<64x32xbf16>, vector<32x128xbf16>, vector<64x128xf32> -> vector<64x128xf32>
    %c0_60 = arith.constant 0 : index
    %c0_61 = arith.constant 0 : index
    %166 = vector.load %arg14[%c0_60, %c0_61] : memref<1x128xf32, #tpu.memory_space<vmem>>, vector<1x128xf32>
    %167 = vector.broadcast %166 : vector<1x128xf32> to vector<64x128xf32>
    %168 = arith.addf %165, %167 : vector<64x128xf32>
    %cst_62 = arith.constant 1.702000e+00 : f32
    %169 = vector.broadcast %cst_62 : f32 to vector<64x128xf32>
    %170 = arith.mulf %169, %168 : vector<64x128xf32>
    %171 = arith.negf %170 : vector<64x128xf32>
    %172 = math.exp %171 : vector<64x128xf32>
    %cst_63 = arith.constant 1.000000e+00 : f32
    %173 = vector.broadcast %cst_63 : f32 to vector<64x128xf32>
    %174 = arith.addf %173, %172 : vector<64x128xf32>
    %175 = arith.divf %173, %174 : vector<64x128xf32>
    %176 = arith.mulf %168, %175 : vector<64x128xf32>
    %177 = arith.truncf %176 : vector<64x128xf32> to vector<64x128xbf16>
    %c0_64 = arith.constant 0 : index
    %c0_65 = arith.constant 0 : index
    %178 = vector.load %arg15[%c0_64, %c0_65] : memref<128x32xbf16, #tpu.memory_space<vmem>>, vector<128x32xbf16>
    %cst_66 = arith.constant dense<0.000000e+00> : vector<64x32xf32>
    %179 = tpu.matmul %177, %178, %cst_66 {dimension_numbers = #tpu.dot_dimension_numbers<[1], [0], [0], [1], [0, 0, 1, 1], [], []>} : vector<64x128xbf16>, vector<128x32xbf16>, vector<64x32xf32> -> vector<64x32xf32>
    %c0_67 = arith.constant 0 : index
    %c0_68 = arith.constant 0 : index
    %180 = vector.load %arg16[%c0_67, %c0_68] : memref<1x32xf32, #tpu.memory_space<vmem>>, vector<1x32xf32>
    %181 = vector.broadcast %180 : vector<1x32xf32> to vector<64x32xf32>
    %182 = arith.addf %179, %181 : vector<64x32xf32>
    %183 = arith.addf %138, %182 : vector<64x32xf32>
    %c0_69 = arith.constant 0 : index
    %c0_70 = arith.constant 0 : index
    %184 = vector.load %arg17[%c0_69, %c0_70] : memref<64x32xf32, #tpu.memory_space<vmem>>, vector<64x32xf32>
    tpu.vector_store %arg17[%c0_69, %c0_70], %183 {strides = array<i32>} : memref<64x32xf32, #tpu.memory_space<vmem>>, vector<64x32xf32>,
    return
  }
  func.func @transform_0(%arg0: i32) -> (i32, i32) {
    %c0_i32 = arith.constant 0 : i32
    %c0_i32_0 = arith.constant 0 : i32
    return %arg0, %c0_i32 : i32, i32
  }
  func.func @transform_1(%arg0: i32) -> (i32, i32) {
    %c0_i32 = arith.constant 0 : i32
    %c0_i32_0 = arith.constant 0 : i32
    return %arg0, %c0_i32 : i32, i32
  }
  func.func @transform_2(%arg0: i32) -> (i32, i32) {
    %c0_i32 = arith.constant 0 : i32
    %c0_i32_0 = arith.constant 0 : i32
    %c0_i32_1 = arith.constant 0 : i32
    return %c0_i32, %c0_i32_0 : i32, i32
  }
  func.func @transform_3(%arg0: i32) -> (i32, i32) {
    %c0_i32 = arith.constant 0 : i32
    %c0_i32_0 = arith.constant 0 : i32
    %c0_i32_1 = arith.constant 0 : i32
    return %c0_i32, %c0_i32_0 : i32, i32
  }
  func.func @transform_4(%arg0: i32) -> (i32, i32) {
    %c0_i32 = arith.constant 0 : i32
    %c0_i32_0 = arith.constant 0 : i32
    %c0_i32_1 = arith.constant 0 : i32
    return %c0_i32, %c0_i32_0 : i32, i32
  }
  func.func @transform_5(%arg0: i32) -> (i32, i32) {
    %c0_i32 = arith.constant 0 : i32
    %c0_i32_0 = arith.constant 0 : i32
    %c0_i32_1 = arith.constant 0 : i32
    return %c0_i32, %c0_i32_0 : i32, i32
  }
  func.func @transform_6(%arg0: i32) -> (i32, i32) {
    %c0_i32 = arith.constant 0 : i32
    %c0_i32_0 = arith.constant 0 : i32
    %c0_i32_1 = arith.constant 0 : i32
    return %c0_i32, %c0_i32_0 : i32, i32
  }
  func.func @transform_7(%arg0: i32) -> (i32, i32) {
    %c0_i32 = arith.constant 0 : i32
    %c0_i32_0 = arith.constant 0 : i32
    %c0_i32_1 = arith.constant 0 : i32
    return %c0_i32, %c0_i32_0 : i32, i32
  }
  func.func @transform_8(%arg0: i32) -> (i32, i32) {
    %c0_i32 = arith.constant 0 : i32
    %c0_i32_0 = arith.constant 0 : i32
    %c0_i32_1 = arith.constant 0 : i32
    return %c0_i32, %c0_i32_0 : i32, i32
  }
  func.func @transform_9(%arg0: i32) -> (i32, i32) {
    %c0_i32 = arith.constant 0 : i32
    %c0_i32_0 = arith.constant 0 : i32
    %c0_i32_1 = arith.constant 0 : i32
    return %c0_i32, %c0_i32_0 : i32, i32
  }
  func.func @transform_10(%arg0: i32) -> (i32, i32) {
    %c0_i32 = arith.constant 0 : i32
    %c0_i32_0 = arith.constant 0 : i32
    %c0_i32_1 = arith.constant 0 : i32
    return %c0_i32, %c0_i32_0 : i32, i32
  }
  func.func @transform_11(%arg0: i32) -> (i32, i32) {
    %c0_i32 = arith.constant 0 : i32
    %c0_i32_0 = arith.constant 0 : i32
    %c0_i32_1 = arith.constant 0 : i32
    return %c0_i32, %c0_i32_0 : i32, i32
  }
  func.func @transform_12(%arg0: i32) -> (i32, i32) {
    %c0_i32 = arith.constant 0 : i32
    %c0_i32_0 = arith.constant 0 : i32
    %c0_i32_1 = arith.constant 0 : i32
    return %c0_i32, %c0_i32_0 : i32, i32
  }
  func.func @transform_13(%arg0: i32) -> (i32, i32) {
    %c0_i32 = arith.constant 0 : i32
    %c0_i32_0 = arith.constant 0 : i32
    %c0_i32_1 = arith.constant 0 : i32
    return %c0_i32, %c0_i32_0 : i32, i32
  }
  func.func @transform_14(%arg0: i32) -> (i32, i32) {
    %c0_i32 = arith.constant 0 : i32
    %c0_i32_0 = arith.constant 0 : i32
    %c0_i32_1 = arith.constant 0 : i32
    return %c0_i32, %c0_i32_0 : i32, i32
  }
  func.func @transform_15(%arg0: i32) -> (i32, i32) {
    %c0_i32 = arith.constant 0 : i32
    %c0_i32_0 = arith.constant 0 : i32
    %c0_i32_1 = arith.constant 0 : i32
    return %c0_i32, %c0_i32_0 : i32, i32
  }
  func.func @transform_16(%arg0: i32) -> (i32, i32) {
    %c0_i32 = arith.constant 0 : i32
    %c0_i32_0 = arith.constant 0 : i32
    return %arg0, %c0_i32 : i32, i32
  }
}

</mosaic_0001>

<llo_original>
// kernel: tpu_custom_call.1
$region0: #{tpu_custom_call.1}
  #allocation0 [shape = 'u32[]', space=smem, size = 0x4, offset = 0x4, fixed_abs, tag = 'smem constant byte address 0x4 - core index']
  #allocation1 [shape = 'u32[144,128]{1,0:T(1,128)}', space=vmem, size = 0x12000, scoped, tag = 'internal scratch']
  %s0 = inlined_call_operand.vmem [shape: f32[128,32], index: 0, kind: input, shape index: {}]
  %s1 = inlined_call_operand.vmem [shape: f32[256,32], index: 1, kind: input, shape index: {}]
  %s2 = inlined_call_operand.vmem [shape: f32[1,32], index: 2, kind: input, shape index: {}]
  %s3 = inlined_call_operand.vmem [shape: f32[1,32], index: 3, kind: input, shape index: {}]
  %s4 = inlined_call_operand.vmem [shape: f32[1,32], index: 4, kind: input, shape index: {}]
  %s5 = inlined_call_operand.vmem [shape: f32[1,32], index: 5, kind: input, shape index: {}]
  %s6 = inlined_call_operand.vmem [shape: f32[1,32], index: 6, kind: input, shape index: {}]
  %s7 = inlined_call_operand.vmem [shape: f32[1,32], index: 7, kind: input, shape index: {}]
  %s8 = inlined_call_operand.vmem [shape: bf16[32,32], index: 8, kind: input, shape index: {}]
  %s9 = inlined_call_operand.vmem [shape: bf16[32,64], index: 9, kind: input, shape index: {}]
  %s10 = inlined_call_operand.vmem [shape: bf16[32,32], index: 10, kind: input, shape index: {}]
  %s11 = inlined_call_operand.vmem [shape: f32[1,32], index: 11, kind: input, shape index: {}]
  %s12 = inlined_call_operand.vmem [shape: bf16[32,128], index: 12, kind: input, shape index: {}]
  %s13 = inlined_call_operand.vmem [shape: f32[1,128], index: 13, kind: input, shape index: {}]
  %s14 = inlined_call_operand.vmem [shape: bf16[128,32], index: 14, kind: input, shape index: {}]
  %s15 = inlined_call_operand.vmem [shape: f32[1,32], index: 15, kind: input, shape index: {}]
  %s16 = inlined_call_operand.vmem [shape: f32[128,32], index: 16, kind: output, shape index: {}]
  %s17 = sld [smem:[#allocation0]]
  $region97: #{tpu_custom_call.1} parent=0
    _
  %s19 = ssub.s32 1, %s17
  %s20 = scalar_select 0, %s19, %s17
  loop: start=0, step=1, limit=4
  $region2: #{tpu_custom_call.1} parent=0 // loop_pre_header
    _
  $region3: #{tpu_custom_call.1} parent=0 // loop_header
    %s22 = sphi 0, %s26
    %p23 = scmp.ge.s32.totalorder %s22, 4
    %s32 = sphi 0, %s34
    %s35 = sphi 0, %s32
    %s36 = sphi 0, %s35
    %s52 = sphi 0, %s36
    %s58 = sphi 0, %s60
    %s61 = sphi 0, %s58
    %s62 = sphi 0, %s61
    %s78 = sphi 0, %s62
    %s82 = sphi 0, %s82
    %s84 = sphi 0, %s82
    %s85 = sphi 0, %s84
    %s99 = sphi 0, %s85
    %s103 = sphi 0, %s103
    %s105 = sphi 0, %s103
    %s106 = sphi 0, %s105
    %s120 = sphi 0, %s106
    %s124 = sphi 0, %s124
    %s126 = sphi 0, %s124
    %s127 = sphi 0, %s126
    %s141 = sphi 0, %s127
    %s145 = sphi 0, %s145
    %s147 = sphi 0, %s145
    %s148 = sphi 0, %s147
    %s162 = sphi 0, %s148
    %s166 = sphi 0, %s166
    %s168 = sphi 0, %s166
    %s169 = sphi 0, %s168
    %s183 = sphi 0, %s169
    %s187 = sphi 0, %s187
    %s189 = sphi 0, %s187
    %s190 = sphi 0, %s189
    %s204 = sphi 0, %s190
    %s208 = sphi 0, %s208
    %s210 = sphi 0, %s208
    %s211 = sphi 0, %s210
    %s225 = sphi 0, %s211
    %s229 = sphi 0, %s229
    %s231 = sphi 0, %s229
    %s232 = sphi 0, %s231
    %s246 = sphi 0, %s232
    %s250 = sphi 0, %s250
    %s252 = sphi 0, %s250
    %s253 = sphi 0, %s252
    %s267 = sphi 0, %s253
    %s271 = sphi 0, %s271
    %s273 = sphi 0, %s271
    %s274 = sphi 0, %s273
    %s288 = sphi 0, %s274
    %s292 = sphi 0, %s292
    %s294 = sphi 0, %s292
    %s295 = sphi 0, %s294
    %s309 = sphi 0, %s295
    %s313 = sphi 0, %s313
    %s315 = sphi 0, %s313
    %s316 = sphi 0, %s315
    %s330 = sphi 0, %s316
    %s334 = sphi 0, %s334
    %s336 = sphi 0, %s334
    %s337 = sphi 0, %s336
    %s351 = sphi 0, %s337
    %s355 = sphi 0, %s355
    %s357 = sphi 0, %s355
    %s358 = sphi 0, %s357
    %s372 = sphi 0, %s358
    %s378 = sphi 0, %s380
    %s381 = sphi 0, %s378
    %s382 = sphi 0, %s381
    %s398 = sphi 0, %s382
  $region4: #{tpu_custom_call.1} parent=0 // loop_header_branch
    %25 = sbr.rel (%p23) target = $region8
  $region5: #{tpu_custom_call.1} parent=0 // loop_body
    %s27 = ssub.s32 %s22, 1
    %s28 = ssub.s32 %s22, 2
    %s29 = sadd.s32 %s22, 1
    %s30 = ssub.s32 %s22, %s29
    %p31 = scmp.eq.s32.totalorder %s30, 0
    %s33 = sadd.s32 %s32, 1
    %s34 = scalar_select %p31, %s32, %s33
    %p37 = pneg %p31
    %p38 = scmp.eq.s32.totalorder %s22, 1
    %p39 = por %p37, %p38
    %p40 = scmp.ne.s32.totalorder %s32, %s35
    %p41 = scmp.eq.s32.totalorder %s22, 0
    %p42 = por %p40, %p41
    %p43 = scmp.ne.s32.totalorder %s32, %s35
    %p44 = scmp.eq.s32.totalorder %s27, 1
    %p45 = por %p43, %p44
    %p46 = scmp.ne.s32.totalorder %s35, %s36
    %p47 = scmp.eq.s32.totalorder %s27, 0
    %p48 = por %p46, %p47
    %p49 = scmp.ne.s32.totalorder %s35, %s36
    %p50 = scmp.eq.s32.totalorder %s28, 1
    %p51 = por %p49, %p50
    %p53 = scmp.ne.s32.totalorder %s36, %s52
    %p54 = scmp.eq.s32.totalorder %s28, 0
    %p55 = por %p53, %p54
    %s56 = ssub.s32 %s22, %s29
    %p57 = scmp.eq.s32.totalorder %s56, 0
    %s59 = sadd.s32 %s58, 1
    %s60 = scalar_select %p57, %s58, %s59
    %p63 = pneg %p57
    %p64 = scmp.eq.s32.totalorder %s22, 1
    %p65 = por %p63, %p64
    %p66 = scmp.ne.s32.totalorder %s58, %s61
    %p67 = scmp.eq.s32.totalorder %s22, 0
    %p68 = por %p66, %p67
    %p69 = scmp.ne.s32.totalorder %s58, %s61
    %p70 = scmp.eq.s32.totalorder %s27, 1
    %p71 = por %p69, %p70
    %p72 = scmp.ne.s32.totalorder %s61, %s62
    %p73 = scmp.eq.s32.totalorder %s27, 0
    %p74 = por %p72, %p73
    %p75 = scmp.ne.s32.totalorder %s61, %s62
    %p76 = scmp.eq.s32.totalorder %s28, 1
    %p77 = por %p75, %p76
    %p79 = scmp.ne.s32.totalorder %s62, %s78
    %p80 = scmp.eq.s32.totalorder %s28, 0
    %p81 = por %p79, %p80
    %s83 = sadd.s32 %s82, 1
    %p86 = scmp.eq.s32.totalorder %s22, 1
    %p87 = scmp.ne.s32.totalorder %s82, %s84
    %p88 = scmp.eq.s32.totalorder %s22, 0
    %p89 = por %p87, %p88
    %p90 = scmp.ne.s32.totalorder %s82, %s84
    %p91 = scmp.eq.s32.totalorder %s27, 1
    %p92 = por %p90, %p91
    %p93 = scmp.ne.s32.totalorder %s84, %s85
    %p94 = scmp.eq.s32.totalorder %s27, 0
    %p95 = por %p93, %p94
    %p96 = scmp.ne.s32.totalorder %s84, %s85
    %p97 = scmp.eq.s32.totalorder %s28, 1
    %p98 = por %p96, %p97
    %p100 = scmp.ne.s32.totalorder %s85, %s99
    %p101 = scmp.eq.s32.totalorder %s28, 0
    %p102 = por %p100, %p101
    %s104 = sadd.s32 %s103, 1
    %p107 = scmp.eq.s32.totalorder %s22, 1
    %p108 = scmp.ne.s32.totalorder %s103, %s105
    %p109 = scmp.eq.s32.totalorder %s22, 0
    %p110 = por %p108, %p109
    %p111 = scmp.ne.s32.totalorder %s103, %s105
    %p112 = scmp.eq.s32.totalorder %s27, 1
    %p113 = por %p111, %p112
    %p114 = scmp.ne.s32.totalorder %s105, %s106
    %p115 = scmp.eq.s32.totalorder %s27, 0
    %p116 = por %p114, %p115
    %p117 = scmp.ne.s32.totalorder %s105, %s106
    %p118 = scmp.eq.s32.totalorder %s28, 1
    %p119 = por %p117, %p118
    %p121 = scmp.ne.s32.totalorder %s106, %s120
    %p122 = scmp.eq.s32.totalorder %s28, 0
    %p123 = por %p121, %p122
    %s125 = sadd.s32 %s124, 1
    %p128 = scmp.eq.s32.totalorder %s22, 1
    %p129 = scmp.ne.s32.totalorder %s124, %s126
    %p130 = scmp.eq.s32.totalorder %s22, 0
    %p131 = por %p129, %p130
    %p132 = scmp.ne.s32.totalorder %s124, %s126
    %p133 = scmp.eq.s32.totalorder %s27, 1
    %p134 = por %p132, %p133
    %p135 = scmp.ne.s32.totalorder %s126, %s127
    %p136 = scmp.eq.s32.totalorder %s27, 0
    %p137 = por %p135, %p136
    %p138 = scmp.ne.s32.totalorder %s126, %s127
    %p139 = scmp.eq.s32.totalorder %s28, 1
    %p140 = por %p138, %p139
    %p142 = scmp.ne.s32.totalorder %s127, %s141
    %p143 = scmp.eq.s32.totalorder %s28, 0
    %p144 = por %p142, %p143
    %s146 = sadd.s32 %s145, 1
    %p149 = scmp.eq.s32.totalorder %s22, 1
    %p150 = scmp.ne.s32.totalorder %s145, %s147
    %p151 = scmp.eq.s32.totalorder %s22, 0
    %p152 = por %p150, %p151
    %p153 = scmp.ne.s32.totalorder %s145, %s147
    %p154 = scmp.eq.s32.totalorder %s27, 1
    %p155 = por %p153, %p154
    %p156 = scmp.ne.s32.totalorder %s147, %s148
    %p157 = scmp.eq.s32.totalorder %s27, 0
    %p158 = por %p156, %p157
    %p159 = scmp.ne.s32.totalorder %s147, %s148
    %p160 = scmp.eq.s32.totalorder %s28, 1
    %p161 = por %p159, %p160
    %p163 = scmp.ne.s32.totalorder %s148, %s162
    %p164 = scmp.eq.s32.totalorder %s28, 0
    %p165 = por %p163, %p164
    %s167 = sadd.s32 %s166, 1
    %p170 = scmp.eq.s32.totalorder %s22, 1
    %p171 = scmp.ne.s32.totalorder %s166, %s168
    %p172 = scmp.eq.s32.totalorder %s22, 0
    %p173 = por %p171, %p172
    %p174 = scmp.ne.s32.totalorder %s166, %s168
    %p175 = scmp.eq.s32.totalorder %s27, 1
    %p176 = por %p174, %p175
    %p177 = scmp.ne.s32.totalorder %s168, %s169
    %p178 = scmp.eq.s32.totalorder %s27, 0
    %p179 = por %p177, %p178
    %p180 = scmp.ne.s32.totalorder %s168, %s169
    %p181 = scmp.eq.s32.totalorder %s28, 1
    %p182 = por %p180, %p181
    %p184 = scmp.ne.s32.totalorder %s169, %s183
    %p185 = scmp.eq.s32.totalorder %s28, 0
    %p186 = por %p184, %p185
    %s188 = sadd.s32 %s187, 1
    %p191 = scmp.eq.s32.totalorder %s22, 1
    %p192 = scmp.ne.s32.totalorder %s187, %s189
    %p193 = scmp.eq.s32.totalorder %s22, 0
    %p194 = por %p192, %p193
    %p195 = scmp.ne.s32.totalorder %s187, %s189
    %p196 = scmp.eq.s32.totalorder %s27, 1
    %p197 = por %p195, %p196
    %p198 = scmp.ne.s32.totalorder %s189, %s190
    %p199 = scmp.eq.s32.totalorder %s27, 0
    %p200 = por %p198, %p199
    %p201 = scmp.ne.s32.totalorder %s189, %s190
    %p202 = scmp.eq.s32.totalorder %s28, 1
    %p203 = por %p201, %p202
    %p205 = scmp.ne.s32.totalorder %s190, %s204
    %p206 = scmp.eq.s32.totalorder %s28, 0
    %p207 = por %p205, %p206
    %s209 = sadd.s32 %s208, 1
    %p212 = scmp.eq.s32.totalorder %s22, 1
    %p213 = scmp.ne.s32.totalorder %s208, %s210
    %p214 = scmp.eq.s32.totalorder %s22, 0
    %p215 = por %p213, %p214
    %p216 = scmp.ne.s32.totalorder %s208, %s210
    %p217 = scmp.eq.s32.totalorder %s27, 1
    %p218 = por %p216, %p217
    %p219 = scmp.ne.s32.totalorder %s210, %s211
    %p220 = scmp.eq.s32.totalorder %s27, 0
    %p221 = por %p219, %p220
    %p222 = scmp.ne.s32.totalorder %s210, %s211
    %p223 = scmp.eq.s32.totalorder %s28, 1
    %p224 = por %p222, %p223
    %p226 = scmp.ne.s32.totalorder %s211, %s225
    %p227 = scmp.eq.s32.totalorder %s28, 0
    %p228 = por %p226, %p227
    %s230 = sadd.s32 %s229, 1
    %p233 = scmp.eq.s32.totalorder %s22, 1
    %p234 = scmp.ne.s32.totalorder %s229, %s231
    %p235 = scmp.eq.s32.totalorder %s22, 0
    %p236 = por %p234, %p235
    %p237 = scmp.ne.s32.totalorder %s229, %s231
    %p238 = scmp.eq.s32.totalorder %s27, 1
    %p239 = por %p237, %p238
    %p240 = scmp.ne.s32.totalorder %s231, %s232
    %p241 = scmp.eq.s32.totalorder %s27, 0
    %p242 = por %p240, %p241
    %p243 = scmp.ne.s32.totalorder %s231, %s232
    %p244 = scmp.eq.s32.totalorder %s28, 1
    %p245 = por %p243, %p244
    %p247 = scmp.ne.s32.totalorder %s232, %s246
    %p248 = scmp.eq.s32.totalorder %s28, 0
    %p249 = por %p247, %p248
    %s251 = sadd.s32 %s250, 1
    %p254 = scmp.eq.s32.totalorder %s22, 1
    %p255 = scmp.ne.s32.totalorder %s250, %s252
    %p256 = scmp.eq.s32.totalorder %s22, 0
    %p257 = por %p255, %p256
    %p258 = scmp.ne.s32.totalorder %s250, %s252
    %p259 = scmp.eq.s32.totalorder %s27, 1
    %p260 = por %p258, %p259
    %p261 = scmp.ne.s32.totalorder %s252, %s253
    %p262 = scmp.eq.s32.totalorder %s27, 0
    %p263 = por %p261, %p262
    %p264 = scmp.ne.s32.totalorder %s252, %s253
    %p265 = scmp.eq.s32.totalorder %s28, 1
    %p266 = por %p264, %p265
    %p268 = scmp.ne.s32.totalorder %s253, %s267
    %p269 = scmp.eq.s32.totalorder %s28, 0
    %p270 = por %p268, %p269
    %s272 = sadd.s32 %s271, 1
    %p275 = scmp.eq.s32.totalorder %s22, 1
    %p276 = scmp.ne.s32.totalorder %s271, %s273
    %p277 = scmp.eq.s32.totalorder %s22, 0
    %p278 = por %p276, %p277
    %p279 = scmp.ne.s32.totalorder %s271, %s273
    %p280 = scmp.eq.s32.totalorder %s27, 1
    %p281 = por %p279, %p280
    %p282 = scmp.ne.s32.totalorder %s273, %s274
    %p283 = scmp.eq.s32.totalorder %s27, 0
    %p284 = por %p282, %p283
    %p285 = scmp.ne.s32.totalorder %s273, %s274
    %p286 = scmp.eq.s32.totalorder %s28, 1
    %p287 = por %p285, %p286
    %p289 = scmp.ne.s32.totalorder %s274, %s288
    %p290 = scmp.eq.s32.totalorder %s28, 0
    %p291 = por %p289, %p290
    %s293 = sadd.s32 %s292, 1
    %p296 = scmp.eq.s32.totalorder %s22, 1
    %p297 = scmp.ne.s32.totalorder %s292, %s294
    %p298 = scmp.eq.s32.totalorder %s22, 0
    %p299 = por %p297, %p298
    %p300 = scmp.ne.s32.totalorder %s292, %s294
    %p301 = scmp.eq.s32.totalorder %s27, 1
    %p302 = por %p300, %p301
    %p303 = scmp.ne.s32.totalorder %s294, %s295
    %p304 = scmp.eq.s32.totalorder %s27, 0
    %p305 = por %p303, %p304
    %p306 = scmp.ne.s32.totalorder %s294, %s295
    %p307 = scmp.eq.s32.totalorder %s28, 1
    %p308 = por %p306, %p307
    %p310 = scmp.ne.s32.totalorder %s295, %s309
    %p311 = scmp.eq.s32.totalorder %s28, 0
    %p312 = por %p310, %p311
    %s314 = sadd.s32 %s313, 1
    %p317 = scmp.eq.s32.totalorder %s22, 1
    %p318 = scmp.ne.s32.totalorder %s313, %s315
    %p319 = scmp.eq.s32.totalorder %s22, 0
    %p320 = por %p318, %p319
    %p321 = scmp.ne.s32.totalorder %s313, %s315
    %p322 = scmp.eq.s32.totalorder %s27, 1
    %p323 = por %p321, %p322
    %p324 = scmp.ne.s32.totalorder %s315, %s316
    %p325 = scmp.eq.s32.totalorder %s27, 0
    %p326 = por %p324, %p325
    %p327 = scmp.ne.s32.totalorder %s315, %s316
    %p328 = scmp.eq.s32.totalorder %s28, 1
    %p329 = por %p327, %p328
    %p331 = scmp.ne.s32.totalorder %s316, %s330
    %p332 = scmp.eq.s32.totalorder %s28, 0
    %p333 = por %p331, %p332
    %s335 = sadd.s32 %s334, 1
    %p338 = scmp.eq.s32.totalorder %s22, 1
    %p339 = scmp.ne.s32.totalorder %s334, %s336
    %p340 = scmp.eq.s32.totalorder %s22, 0
    %p341 = por %p339, %p340
    %p342 = scmp.ne.s32.totalorder %s334, %s336
    %p343 = scmp.eq.s32.totalorder %s27, 1
    %p344 = por %p342, %p343
    %p345 = scmp.ne.s32.totalorder %s336, %s337
    %p346 = scmp.eq.s32.totalorder %s27, 0
    %p347 = por %p345, %p346
    %p348 = scmp.ne.s32.totalorder %s336, %s337
    %p349 = scmp.eq.s32.totalorder %s28, 1
    %p350 = por %p348, %p349
    %p352 = scmp.ne.s32.totalorder %s337, %s351
    %p353 = scmp.eq.s32.totalorder %s28, 0
    %p354 = por %p352, %p353
    %s356 = sadd.s32 %s355, 1
    %p359 = scmp.eq.s32.totalorder %s22, 1
    %p360 = scmp.ne.s32.totalorder %s355, %s357
    %p361 = scmp.eq.s32.totalorder %s22, 0
    %p362 = por %p360, %p361
    %p363 = scmp.ne.s32.totalorder %s355, %s357
    %p364 = scmp.eq.s32.totalorder %s27, 1
    %p365 = por %p363, %p364
    %p366 = scmp.ne.s32.totalorder %s357, %s358
    %p367 = scmp.eq.s32.totalorder %s27, 0
    %p368 = por %p366, %p367
    %p369 = scmp.ne.s32.totalorder %s357, %s358
    %p370 = scmp.eq.s32.totalorder %s28, 1
    %p371 = por %p369, %p370
    %p373 = scmp.ne.s32.totalorder %s358, %s372
    %p374 = scmp.eq.s32.totalorder %s28, 0
    %p375 = por %p373, %p374
    %s376 = ssub.s32 %s22, %s29
    %p377 = scmp.eq.s32.totalorder %s376, 0
    %s379 = sadd.s32 %s378, 1
    %s380 = scalar_select %p377, %s378, %s379
    %p383 = pneg %p377
    %p384 = scmp.eq.s32.totalorder %s22, 1
    %p385 = por %p383, %p384
    %p386 = scmp.ne.s32.totalorder %s378, %s381
    %p387 = scmp.eq.s32.totalorder %s22, 0
    %p388 = por %p386, %p387
    %p389 = scmp.ne.s32.totalorder %s378, %s381
    %p390 = scmp.eq.s32.totalorder %s27, 1
    %p391 = por %p389, %p390
    %p392 = scmp.ne.s32.totalorder %s381, %s382
    %p393 = scmp.eq.s32.totalorder %s27, 0
    %p394 = por %p392, %p393
    %p395 = scmp.ne.s32.totalorder %s381, %s382
    %p396 = scmp.eq.s32.totalorder %s28, 1
    %p397 = por %p395, %p396
    %p399 = scmp.ne.s32.totalorder %s382, %s398
    %p400 = scmp.eq.s32.totalorder %s28, 0
    %p401 = por %p399, %p400
    %p402 = scmp.le.s32.totalorder 1, %s22
    %p403 = scmp.lt.s32.totalorder %s22, 3
    %p404 = pnand %p402, %p403
    %p405 = pneg %p404
    // Predicated region
    $region9: #{tpu_custom_call.1} parent=5 // pred_check
      _
    $region10: #{tpu_custom_call.1} parent=5 // pred_check_branch
      %407 = sbr.rel (%p404) target = $region12
    $region11: #{tpu_custom_call.1} parent=5 // pred_region
      %s408 = ssub.s32 %s22, 1
      // Predicated region
      $region13: #{tpu_custom_call.1} parent=11 // pred_check
        %p409 = pneg %p95
      $region14: #{tpu_custom_call.1} parent=11 // pred_check_branch
        %411 = sbr.rel (%p409) target = $region16
      $region15: #{tpu_custom_call.1} parent=11 // pred_region
        _
      $region16: #{tpu_custom_call.1} parent=11 // pred_fallthru
        _
      // Predicated region
      $region17: #{tpu_custom_call.1} parent=11 // pred_check
        %p412 = pneg %p116
      $region18: #{tpu_custom_call.1} parent=11 // pred_check_branch
        %414 = sbr.rel (%p412) target = $region20
      $region19: #{tpu_custom_call.1} parent=11 // pred_region
        _
      $region20: #{tpu_custom_call.1} parent=11 // pred_fallthru
        _
      // Predicated region
      $region21: #{tpu_custom_call.1} parent=11 // pred_check
        %p415 = pneg %p137
      $region22: #{tpu_custom_call.1} parent=11 // pred_check_branch
        %417 = sbr.rel (%p415) target = $region24
      $region23: #{tpu_custom_call.1} parent=11 // pred_region
        _
      $region24: #{tpu_custom_call.1} parent=11 // pred_fallthru
        _
      // Predicated region
      $region25: #{tpu_custom_call.1} parent=11 // pred_check
        %p418 = pneg %p158
      $region26: #{tpu_custom_call.1} parent=11 // pred_check_branch
        %420 = sbr.rel (%p418) target = $region28
      $region27: #{tpu_custom_call.1} parent=11 // pred_region
        _
      $region28: #{tpu_custom_call.1} parent=11 // pred_fallthru
        _
      // Predicated region
      $region29: #{tpu_custom_call.1} parent=11 // pred_check
        %p421 = pneg %p179
      $region30: #{tpu_custom_call.1} parent=11 // pred_check_branch
        %423 = sbr.rel (%p421) target = $region32
      $region31: #{tpu_custom_call.1} parent=11 // pred_region
        _
      $region32: #{tpu_custom_call.1} parent=11 // pred_fallthru
        _
      // Predicated region
      $region33: #{tpu_custom_call.1} parent=11 // pred_check
        %p424 = pneg %p200
      $region34: #{tpu_custom_call.1} parent=11 // pred_check_branch
        %426 = sbr.rel (%p424) target = $region36
      $region35: #{tpu_custom_call.1} parent=11 // pred_region
        _
      $region36: #{tpu_custom_call.1} parent=11 // pred_fallthru
        _
      // Predicated region
      $region37: #{tpu_custom_call.1} parent=11 // pred_check
        %p427 = pneg %p221
      $region38: #{tpu_custom_call.1} parent=11 // pred_check_branch
        %429 = sbr.rel (%p427) target = $region40
      $region39: #{tpu_custom_call.1} parent=11 // pred_region
        _
      $region40: #{tpu_custom_call.1} parent=11 // pred_fallthru
        _
      // Predicated region
      $region41: #{tpu_custom_call.1} parent=11 // pred_check
        %p430 = pneg %p242
      $region42: #{tpu_custom_call.1} parent=11 // pred_check_branch
        %432 = sbr.rel (%p430) target = $region44
      $region43: #{tpu_custom_call.1} parent=11 // pred_region
        _
      $region44: #{tpu_custom_call.1} parent=11 // pred_fallthru
        _
      // Predicated region
      $region45: #{tpu_custom_call.1} parent=11 // pred_check
        %p433 = pneg %p263
      $region46: #{tpu_custom_call.1} parent=11 // pred_check_branch
        %435 = sbr.rel (%p433) target = $region48
      $region47: #{tpu_custom_call.1} parent=11 // pred_region
        _
      $region48: #{tpu_custom_call.1} parent=11 // pred_fallthru
        _
      // Predicated region
      $region49: #{tpu_custom_call.1} parent=11 // pred_check
        %p436 = pneg %p284
      $region50: #{tpu_custom_call.1} parent=11 // pred_check_branch
        %438 = sbr.rel (%p436) target = $region52
      $region51: #{tpu_custom_call.1} parent=11 // pred_region
        _
      $region52: #{tpu_custom_call.1} parent=11 // pred_fallthru
        _
      // Predicated region
      $region53: #{tpu_custom_call.1} parent=11 // pred_check
        %p439 = pneg %p305
      $region54: #{tpu_custom_call.1} parent=11 // pred_check_branch
        %441 = sbr.rel (%p439) target = $region56
      $region55: #{tpu_custom_call.1} parent=11 // pred_region
        _
      $region56: #{tpu_custom_call.1} parent=11 // pred_fallthru
        _
      // Predicated region
      $region57: #{tpu_custom_call.1} parent=11 // pred_check
        %p442 = pneg %p326
      $region58: #{tpu_custom_call.1} parent=11 // pred_check_branch
        %444 = sbr.rel (%p442) target = $region60
      $region59: #{tpu_custom_call.1} parent=11 // pred_region
        _
      $region60: #{tpu_custom_call.1} parent=11 // pred_fallthru
        _
      // Predicated region
      $region61: #{tpu_custom_call.1} parent=11 // pred_check
        %p445 = pneg %p347
      $region62: #{tpu_custom_call.1} parent=11 // pred_check_branch
        %447 = sbr.rel (%p445) target = $region64
      $region63: #{tpu_custom_call.1} parent=11 // pred_region
        _
      $region64: #{tpu_custom_call.1} parent=11 // pred_fallthru
        _
      // Predicated region
      $region65: #{tpu_custom_call.1} parent=11 // pred_check
        %p448 = pneg %p368
      $region66: #{tpu_custom_call.1} parent=11 // pred_check_branch
        %450 = sbr.rel (%p448) target = $region68
      $region67: #{tpu_custom_call.1} parent=11 // pred_region
        _
      $region68: #{tpu_custom_call.1} parent=11 // pred_fallthru
        _
    $region12: #{tpu_custom_call.1} parent=5 // pred_fallthru
      _
    %p451 = scmp.lt.s32.totalorder %s22, 2
    // Predicated region
    $region69: #{tpu_custom_call.1} parent=5 // pred_check
      %p452 = pneg %p451
    $region70: #{tpu_custom_call.1} parent=5 // pred_check_branch
      %454 = sbr.rel (%p452) target = $region72
    $region71: #{tpu_custom_call.1} parent=5 // pred_region
      // Predicated region
      $region73: #{tpu_custom_call.1} parent=71 // pred_check
        %p455 = pneg %p42
      $region74: #{tpu_custom_call.1} parent=71 // pred_check_branch
        %457 = sbr.rel (%p455) target = $region76
      $region75: #{tpu_custom_call.1} parent=71 // pred_region
        %s458 = smul.u32 8, %s22
        %p459 = scmp.lt.s32.totalorder %s458, 15
        %s460 = scalar_select %p459, %s458, 15
        %s461 = smul.addr %s460, 8
        %s462 = scalar_lea.vmem %s0, %s461
        %s463 = smul.u32 8, %s22
      $region76: #{tpu_custom_call.1} parent=71 // pred_fallthru
        _
      // Predicated region
      $region77: #{tpu_custom_call.1} parent=71 // pred_check
        %p464 = pneg %p68
      $region78: #{tpu_custom_call.1} parent=71 // pred_check_branch
        %466 = sbr.rel (%p464) target = $region80
      $region79: #{tpu_custom_call.1} parent=71 // pred_region
        %s467 = smul.u32 16, %s22
        %p468 = scmp.lt.s32.totalorder %s467, 31
        %s469 = scalar_select %p468, %s467, 31
        %s470 = smul.addr %s469, 8
        %s471 = scalar_lea.vmem %s1, %s470
        %s472 = smul.u32 16, %s22
      $region80: #{tpu_custom_call.1} parent=71 // pred_fallthru
        _
    $region72: #{tpu_custom_call.1} parent=5 // pred_fallthru
      _
    %p473 = scmp.le.s32.totalorder 1, %s22
    %p474 = scmp.lt.s32.totalorder %s22, 3
    %p475 = pnand %p473, %p474
    %p476 = pneg %p475
    // Predicated region
    $region81: #{tpu_custom_call.1} parent=5 // pred_check
      _
    $region82: #{tpu_custom_call.1} parent=5 // pred_check_branch
      %478 = sbr.rel (%p475) target = $region84
    $region83: #{tpu_custom_call.1} parent=5 // pred_region
      %s479 = ssub.s32 %s22, 1
      %s480 = smul.u32 8, %s27
      %p481 = scmp.lt.s32.totalorder %s480, 15
      %s482 = scalar_select %p481, %s480, 15
      %s483 = smul.addr %s482, 8
      %s484 = scalar_lea.vmem %s0, %s483
      %p485 = pneg %p48
      %p486 = pneg %p45
      %s487 = smul.u32 16, %s27
      %p488 = scmp.lt.s32.totalorder %s487, 31
      %s489 = scalar_select %p488, %s487, 31
      %s490 = smul.addr %s489, 8
      %s491 = scalar_lea.vmem %s1, %s490
      %p492 = pneg %p74
      %p493 = pneg %p71
      %p494 = pneg %p95
      %p495 = pneg %p92
      %p496 = pneg %p116
      %p497 = pneg %p113
      %p498 = pneg %p137
      %p499 = pneg %p134
      %p500 = pneg %p158
      %p501 = pneg %p155
      %p502 = pneg %p179
      %p503 = pneg %p176
      %p504 = pneg %p200
      %p505 = pneg %p197
      %p506 = pneg %p221
      %p507 = pneg %p218
      %p508 = pneg %p242
      %p509 = pneg %p239
      %p510 = pneg %p263
      %p511 = pneg %p260
      %p512 = pneg %p284
      %p513 = pneg %p281
      %p514 = pneg %p305
      %p515 = pneg %p302
      %p516 = pneg %p326
      %p517 = pneg %p323
      %p518 = pneg %p347
      %p519 = pneg %p344
      %p520 = pneg %p368
      %p521 = pneg %p365
      %p522 = pneg %p394
      %p523 = pneg %p391
      %s524 = smul.u32 8, %s27
      %p525 = scmp.lt.s32.totalorder %s524, 15
      %s526 = scalar_select %p525, %s524, 15
      %s527 = smul.addr %s526, 8
      %s528 = scalar_lea.vmem %s16, %s527
      %s529 = smul.u32 8, %s27
      %p530 = scmp.lt.s32.totalorder %s529, 15
      %s531 = scalar_select %p530, %s529, 15
      %s532 = smul.addr %s531, 8
      %s533 = scalar_lea.vmem %s0, %s532
      %s534 = smul.u32 8, %s27
      %s535 = smul.u32 16, %s27
      %p536 = scmp.lt.s32.totalorder %s535, 31
      %s537 = scalar_select %p536, %s535, 31
      %s538 = smul.addr %s537, 8
      %s539 = scalar_lea.vmem %s1, %s538
      %s540 = smul.u32 16, %s27
      %s541 = smul.u32 8, %s27
      %p542 = scmp.lt.s32.totalorder %s541, 15
      %s543 = scalar_select %p542, %s541, 15
      %s544 = smul.addr %s543, 8
      %s545 = scalar_lea.vmem %s16, %s544
      %s546 = smul.u32 8, %s27
      %v548 = vld [vmem:[%s533] sm:$0xff]
      %v549 = vld [vmem:[%s533 + $0x8] sm:$0xff]
      %v550 = vld [vmem:[%s533 + $0x10] sm:$0xff]
      %v551 = vld [vmem:[%s533 + $0x18] sm:$0xff]
      %v552 = vld [vmem:[%s533 + $0x20] sm:$0xff]
      %v553 = vld [vmem:[%s533 + $0x28] sm:$0xff]
      %v554 = vld [vmem:[%s533 + $0x30] sm:$0xff]
      %v555 = vld [vmem:[%s533 + $0x38] sm:$0xff]
      %v556 = vld [vmem:[%s539] sm:$0xff]
      %v557 = vld [vmem:[%s539 + $0x8] sm:$0xff]
      %v558 = vld [vmem:[%s539 + $0x10] sm:$0xff]
      %v559 = vld [vmem:[%s539 + $0x18] sm:$0xff]
      %v560 = vld [vmem:[%s539 + $0x20] sm:$0xff]
      %v561 = vld [vmem:[%s539 + $0x28] sm:$0xff]
      %v562 = vld [vmem:[%s539 + $0x30] sm:$0xff]
      %v563 = vld [vmem:[%s539 + $0x38] sm:$0xff]
      %v564 = vld [vmem:[%s539 + $0x40] sm:$0xff]
      %v565 = vld [vmem:[%s539 + $0x48] sm:$0xff]
      %v566 = vld [vmem:[%s539 + $0x50] sm:$0xff]
      %v567 = vld [vmem:[%s539 + $0x58] sm:$0xff]
      %v568 = vld [vmem:[%s539 + $0x60] sm:$0xff]
      %v569 = vld [vmem:[%s539 + $0x68] sm:$0xff]
      %v570 = vld [vmem:[%s539 + $0x70] sm:$0xff]
      %v571 = vld [vmem:[%s539 + $0x78] sm:$0xff]
      %v572 = vld [vmem:[%s2] sm:$0x1]
      %v573 = vld [vmem:[%s3] sm:$0x1]
      %vm574 = vcmask 261120
      %v575 = vsel %vm574, %v548, 0.0
      %576 = vadd.xlane.f32.xlu0 %v575
      %v577 = vpop.xlane.xlu0 %576
      %v578 = vsel %vm574, %v549, 0.0
      %579 = vadd.xlane.f32.xlu0 %v578
      %v580 = vpop.xlane.xlu0 %579
      %v581 = vsel %vm574, %v550, 0.0
      %582 = vadd.xlane.f32.xlu0 %v581
      %v583 = vpop.xlane.xlu0 %582
      %v584 = vsel %vm574, %v551, 0.0
      %585 = vadd.xlane.f32.xlu0 %v584
      %v586 = vpop.xlane.xlu0 %585
      %v587 = vsel %vm574, %v552, 0.0
      %588 = vadd.xlane.f32.xlu0 %v587
      %v589 = vpop.xlane.xlu0 %588
      %v590 = vsel %vm574, %v553, 0.0
      %591 = vadd.xlane.f32.xlu0 %v590
      %v592 = vpop.xlane.xlu0 %591
      %v593 = vsel %vm574, %v554, 0.0
      %594 = vadd.xlane.f32.xlu0 %v593
      %v595 = vpop.xlane.xlu0 %594
      %v596 = vsel %vm574, %v555, 0.0
      %597 = vadd.xlane.f32.xlu0 %v596
      %v598 = vpop.xlane.xlu0 %597
      %v599 = vrcp.pop 32.0
      %v600 = vmul.f32 %v577, %v599
      %v601 = vmul.f32 %v580, %v599
      %v602 = vmul.f32 %v583, %v599
      %v603 = vmul.f32 %v586, %v599
      %v604 = vmul.f32 %v589, %v599
      %v605 = vmul.f32 %v592, %v599
      %v606 = vmul.f32 %v595, %v599
      %v607 = vmul.f32 %v598, %v599
      %v608 = vsub.f32 %v548, %v600
      %v609 = vsub.f32 %v549, %v601
      %v610 = vsub.f32 %v550, %v602
      %v611 = vsub.f32 %v551, %v603
      %v612 = vsub.f32 %v552, %v604
      %v613 = vsub.f32 %v553, %v605
      %v614 = vsub.f32 %v554, %v606
      %v615 = vsub.f32 %v555, %v607
      %v616 = vmul.f32 %v608, %v608
      %v617 = vmul.f32 %v609, %v609
      %v618 = vmul.f32 %v610, %v610
      %v619 = vmul.f32 %v611, %v611
      %v620 = vmul.f32 %v612, %v612
      %v621 = vmul.f32 %v613, %v613
      %v622 = vmul.f32 %v614, %v614
      %v623 = vmul.f32 %v615, %v615
      %v624 = vsel %vm574, %v616, 0.0
      %625 = vadd.xlane.f32.xlu0 %v624
      %v626 = vpop.xlane.xlu0 %625
      %v627 = vsel %vm574, %v617, 0.0
      %628 = vadd.xlane.f32.xlu0 %v627
      %v629 = vpop.xlane.xlu0 %628
      %v630 = vsel %vm574, %v618, 0.0
      %631 = vadd.xlane.f32.xlu0 %v630
      %v632 = vpop.xlane.xlu0 %631
      %v633 = vsel %vm574, %v619, 0.0
      %634 = vadd.xlane.f32.xlu0 %v633
      %v635 = vpop.xlane.xlu0 %634
      %v636 = vsel %vm574, %v620, 0.0
      %637 = vadd.xlane.f32.xlu0 %v636
      %v638 = vpop.xlane.xlu0 %637
      %v639 = vsel %vm574, %v621, 0.0
      %640 = vadd.xlane.f32.xlu0 %v639
      %v641 = vpop.xlane.xlu0 %640
      %v642 = vsel %vm574, %v622, 0.0
      %643 = vadd.xlane.f32.xlu0 %v642
      %v644 = vpop.xlane.xlu0 %643
      %v645 = vsel %vm574, %v623, 0.0
      %646 = vadd.xlane.f32.xlu0 %v645
      %v647 = vpop.xlane.xlu0 %646
      %v648 = vmul.f32 %v626, %v599
      %v649 = vmul.f32 %v629, %v599
      %v650 = vmul.f32 %v632, %v599
      %v651 = vmul.f32 %v635, %v599
      %v652 = vmul.f32 %v638, %v599
      %v653 = vmul.f32 %v641, %v599
      %v654 = vmul.f32 %v644, %v599
      %v655 = vmul.f32 %v647, %v599
      %v656 = vadd.f32 %v648, 1e-05
      %v657 = vadd.f32 %v649, 1e-05
      %v658 = vadd.f32 %v650, 1e-05
      %v659 = vadd.f32 %v651, 1e-05
      %v660 = vadd.f32 %v652, 1e-05
      %v661 = vadd.f32 %v653, 1e-05
      %v662 = vadd.f32 %v654, 1e-05
      %v663 = vadd.f32 %v655, 1e-05
      %v664 = vrsqrt.pop %v656
      %v665 = vrsqrt.pop %v657
      %v666 = vrsqrt.pop %v658
      %v667 = vrsqrt.pop %v659
      %v668 = vrsqrt.pop %v660
      %v669 = vrsqrt.pop %v661
      %v670 = vrsqrt.pop %v662
      %v671 = vrsqrt.pop %v663
      %v672 = vmul.f32 %v608, %v664
      %v673 = vmul.f32 %v609, %v665
      %v674 = vmul.f32 %v610, %v666
      %v675 = vmul.f32 %v611, %v667
      %v676 = vmul.f32 %v612, %v668
      %v677 = vmul.f32 %v613, %v669
      %v678 = vmul.f32 %v614, %v670
      %v679 = vmul.f32 %v615, %v671
      %v681 = vlaneseq
      %v682 = vshrl.u32 %v681, 7
      %v683 = vsub.s32 0, %v682
      %v684 = vrot.slane %v572, %v683
      %v686 = vmul.f32 %v672, %v684
      %v687 = vmul.f32 %v673, %v684
      %v688 = vmul.f32 %v674, %v684
      %v689 = vmul.f32 %v675, %v684
      %v690 = vmul.f32 %v676, %v684
      %v691 = vmul.f32 %v677, %v684
      %v692 = vmul.f32 %v678, %v684
      %v693 = vmul.f32 %v679, %v684
      %v695 = vlaneseq
      %v696 = vshrl.u32 %v695, 7
      %v697 = vsub.s32 0, %v696
      %v698 = vrot.slane %v573, %v697
      %v700 = vadd.f32 %v686, %v698
      %v701 = vadd.f32 %v687, %v698
      %v702 = vadd.f32 %v688, %v698
      %v703 = vadd.f32 %v689, %v698
      %v704 = vadd.f32 %v690, %v698
      %v705 = vadd.f32 %v691, %v698
      %v706 = vadd.f32 %v692, %v698
      %v707 = vadd.f32 %v693, %v698
      %v708 = vld [vmem:[%s4] sm:$0x1]
      %v709 = vld [vmem:[%s5] sm:$0x1]
      %v710 = vsel %vm574, %v556, 0.0
      %711 = vadd.xlane.f32.xlu0 %v710
      %v712 = vpop.xlane.xlu0 %711
      %v713 = vsel %vm574, %v557, 0.0
      %714 = vadd.xlane.f32.xlu0 %v713
      %v715 = vpop.xlane.xlu0 %714
      %v716 = vsel %vm574, %v558, 0.0
      %717 = vadd.xlane.f32.xlu0 %v716
      %v718 = vpop.xlane.xlu0 %717
      %v719 = vsel %vm574, %v559, 0.0
      %720 = vadd.xlane.f32.xlu0 %v719
      %v721 = vpop.xlane.xlu0 %720
      %v722 = vsel %vm574, %v560, 0.0
      %723 = vadd.xlane.f32.xlu0 %v722
      %v724 = vpop.xlane.xlu0 %723
      %v725 = vsel %vm574, %v561, 0.0
      %726 = vadd.xlane.f32.xlu0 %v725
      %v727 = vpop.xlane.xlu0 %726
      %v728 = vsel %vm574, %v562, 0.0
      %729 = vadd.xlane.f32.xlu0 %v728
      %v730 = vpop.xlane.xlu0 %729
      %v731 = vsel %vm574, %v563, 0.0
      %732 = vadd.xlane.f32.xlu0 %v731
      %v733 = vpop.xlane.xlu0 %732
      %v734 = vsel %vm574, %v564, 0.0
      %735 = vadd.xlane.f32.xlu0 %v734
      %v736 = vpop.xlane.xlu0 %735
      %v737 = vsel %vm574, %v565, 0.0
      %738 = vadd.xlane.f32.xlu0 %v737
      %v739 = vpop.xlane.xlu0 %738
      %v740 = vsel %vm574, %v566, 0.0
      %741 = vadd.xlane.f32.xlu0 %v740
      %v742 = vpop.xlane.xlu0 %741
      %v743 = vsel %vm574, %v567, 0.0
      %744 = vadd.xlane.f32.xlu0 %v743
      %v745 = vpop.xlane.xlu0 %744
      %v746 = vsel %vm574, %v568, 0.0
      %747 = vadd.xlane.f32.xlu0 %v746
      %v748 = vpop.xlane.xlu0 %747
      %v749 = vsel %vm574, %v569, 0.0
      %750 = vadd.xlane.f32.xlu0 %v749
      %v751 = vpop.xlane.xlu0 %750
      %v752 = vsel %vm574, %v570, 0.0
      %753 = vadd.xlane.f32.xlu0 %v752
      %v754 = vpop.xlane.xlu0 %753
      %v755 = vsel %vm574, %v571, 0.0
      %756 = vadd.xlane.f32.xlu0 %v755
      %v757 = vpop.xlane.xlu0 %756
      %v758 = vmul.f32 %v712, %v599
      %v759 = vmul.f32 %v715, %v599
      %v760 = vmul.f32 %v718, %v599
      %v761 = vmul.f32 %v721, %v599
      %v762 = vmul.f32 %v724, %v599
      %v763 = vmul.f32 %v727, %v599
      %v764 = vmul.f32 %v730, %v599
      %v765 = vmul.f32 %v733, %v599
      %v766 = vmul.f32 %v736, %v599
      %v767 = vmul.f32 %v739, %v599
      %v768 = vmul.f32 %v742, %v599
      %v769 = vmul.f32 %v745, %v599
      %v770 = vmul.f32 %v748, %v599
      %v771 = vmul.f32 %v751, %v599
      %v772 = vmul.f32 %v754, %v599
      %v773 = vmul.f32 %v757, %v599
      %v774 = vsub.f32 %v556, %v758
      %v775 = vsub.f32 %v557, %v759
      %v776 = vsub.f32 %v558, %v760
      %v777 = vsub.f32 %v559, %v761
      %v778 = vsub.f32 %v560, %v762
      %v779 = vsub.f32 %v561, %v763
      %v780 = vsub.f32 %v562, %v764
      %v781 = vsub.f32 %v563, %v765
      %v782 = vsub.f32 %v564, %v766
      %v783 = vsub.f32 %v565, %v767
      %v784 = vsub.f32 %v566, %v768
      %v785 = vsub.f32 %v567, %v769
      %v786 = vsub.f32 %v568, %v770
      %v787 = vsub.f32 %v569, %v771
      %v788 = vsub.f32 %v570, %v772
      %v789 = vsub.f32 %v571, %v773
      %v790 = vmul.f32 %v774, %v774
      %v791 = vmul.f32 %v775, %v775
      %v792 = vmul.f32 %v776, %v776
      %v793 = vmul.f32 %v777, %v777
      %v794 = vmul.f32 %v778, %v778
      %v795 = vmul.f32 %v779, %v779
      %v796 = vmul.f32 %v780, %v780
      %v797 = vmul.f32 %v781, %v781
      %v798 = vmul.f32 %v782, %v782
      %v799 = vmul.f32 %v783, %v783
      %v800 = vmul.f32 %v784, %v784
      %v801 = vmul.f32 %v785, %v785
      %v802 = vmul.f32 %v786, %v786
      %v803 = vmul.f32 %v787, %v787
      %v804 = vmul.f32 %v788, %v788
      %v805 = vmul.f32 %v789, %v789
      %v806 = vsel %vm574, %v790, 0.0
      %807 = vadd.xlane.f32.xlu0 %v806
      %v808 = vpop.xlane.xlu0 %807
      %v809 = vsel %vm574, %v791, 0.0
      %810 = vadd.xlane.f32.xlu0 %v809
      %v811 = vpop.xlane.xlu0 %810
      %v812 = vsel %vm574, %v792, 0.0
      %813 = vadd.xlane.f32.xlu0 %v812
      %v814 = vpop.xlane.xlu0 %813
      %v815 = vsel %vm574, %v793, 0.0
      %816 = vadd.xlane.f32.xlu0 %v815
      %v817 = vpop.xlane.xlu0 %816
      %v818 = vsel %vm574, %v794, 0.0
      %819 = vadd.xlane.f32.xlu0 %v818
      %v820 = vpop.xlane.xlu0 %819
      %v821 = vsel %vm574, %v795, 0.0
      %822 = vadd.xlane.f32.xlu0 %v821
      %v823 = vpop.xlane.xlu0 %822
      %v824 = vsel %vm574, %v796, 0.0
      %825 = vadd.xlane.f32.xlu0 %v824
      %v826 = vpop.xlane.xlu0 %825
      %v827 = vsel %vm574, %v797, 0.0
      %828 = vadd.xlane.f32.xlu0 %v827
      %v829 = vpop.xlane.xlu0 %828
      %v830 = vsel %vm574, %v798, 0.0
      %831 = vadd.xlane.f32.xlu0 %v830
      %v832 = vpop.xlane.xlu0 %831
      %v833 = vsel %vm574, %v799, 0.0
      %834 = vadd.xlane.f32.xlu0 %v833
      %v835 = vpop.xlane.xlu0 %834
      %v836 = vsel %vm574, %v800, 0.0
      %837 = vadd.xlane.f32.xlu0 %v836
      %v838 = vpop.xlane.xlu0 %837
      %v839 = vsel %vm574, %v801, 0.0
      %840 = vadd.xlane.f32.xlu0 %v839
      %v841 = vpop.xlane.xlu0 %840
      %v842 = vsel %vm574, %v802, 0.0
      %843 = vadd.xlane.f32.xlu0 %v842
      %v844 = vpop.xlane.xlu0 %843
      %v845 = vsel %vm574, %v803, 0.0
      %846 = vadd.xlane.f32.xlu0 %v845
      %v847 = vpop.xlane.xlu0 %846
      %v848 = vsel %vm574, %v804, 0.0
      %849 = vadd.xlane.f32.xlu0 %v848
      %v850 = vpop.xlane.xlu0 %849
      %v851 = vsel %vm574, %v805, 0.0
      %852 = vadd.xlane.f32.xlu0 %v851
      %v853 = vpop.xlane.xlu0 %852
      %v854 = vmul.f32 %v808, %v599
      %v855 = vmul.f32 %v811, %v599
      %v856 = vmul.f32 %v814, %v599
      %v857 = vmul.f32 %v817, %v599
      %v858 = vmul.f32 %v820, %v599
      %v859 = vmul.f32 %v823, %v599
      %v860 = vmul.f32 %v826, %v599
      %v861 = vmul.f32 %v829, %v599
      %v862 = vmul.f32 %v832, %v599
      %v863 = vmul.f32 %v835, %v599
      %v864 = vmul.f32 %v838, %v599
      %v865 = vmul.f32 %v841, %v599
      %v866 = vmul.f32 %v844, %v599
      %v867 = vmul.f32 %v847, %v599
      %v868 = vmul.f32 %v850, %v599
      %v869 = vmul.f32 %v853, %v599
      %v870 = vadd.f32 %v854, 1e-05
      %v871 = vadd.f32 %v855, 1e-05
      %v872 = vadd.f32 %v856, 1e-05
      %v873 = vadd.f32 %v857, 1e-05
      %v874 = vadd.f32 %v858, 1e-05
      %v875 = vadd.f32 %v859, 1e-05
      %v876 = vadd.f32 %v860, 1e-05
      %v877 = vadd.f32 %v861, 1e-05
      %v878 = vadd.f32 %v862, 1e-05
      %v879 = vadd.f32 %v863, 1e-05
      %v880 = vadd.f32 %v864, 1e-05
      %v881 = vadd.f32 %v865, 1e-05
      %v882 = vadd.f32 %v866, 1e-05
      %v883 = vadd.f32 %v867, 1e-05
      %v884 = vadd.f32 %v868, 1e-05
      %v885 = vadd.f32 %v869, 1e-05
      %v886 = vrsqrt.pop %v870
      %v887 = vrsqrt.pop %v871
      %v888 = vrsqrt.pop %v872
      %v889 = vrsqrt.pop %v873
      %v890 = vrsqrt.pop %v874
      %v891 = vrsqrt.pop %v875
      %v892 = vrsqrt.pop %v876
      %v893 = vrsqrt.pop %v877
      %v894 = vrsqrt.pop %v878
      %v895 = vrsqrt.pop %v879
      %v896 = vrsqrt.pop %v880
      %v897 = vrsqrt.pop %v881
      %v898 = vrsqrt.pop %v882
      %v899 = vrsqrt.pop %v883
      %v900 = vrsqrt.pop %v884
      %v901 = vrsqrt.pop %v885
      %v902 = vmul.f32 %v774, %v886
      %v903 = vmul.f32 %v775, %v887
      %v904 = vmul.f32 %v776, %v888
      %v905 = vmul.f32 %v777, %v889
      %v906 = vmul.f32 %v778, %v890
      %v907 = vmul.f32 %v779, %v891
      %v908 = vmul.f32 %v780, %v892
      %v909 = vmul.f32 %v781, %v893
      %v910 = vmul.f32 %v782, %v894
      %v911 = vmul.f32 %v783, %v895
      %v912 = vmul.f32 %v784, %v896
      %v913 = vmul.f32 %v785, %v897
      %v914 = vmul.f32 %v786, %v898
      %v915 = vmul.f32 %v787, %v899
      %v916 = vmul.f32 %v788, %v900
      %v917 = vmul.f32 %v789, %v901
      %v919 = vlaneseq
      %v920 = vshrl.u32 %v919, 7
      %v921 = vsub.s32 0, %v920
      %v922 = vrot.slane %v708, %v921
      %v924 = vmul.f32 %v902, %v922
      %v925 = vmul.f32 %v903, %v922
      %v926 = vmul.f32 %v904, %v922
      %v927 = vmul.f32 %v905, %v922
      %v928 = vmul.f32 %v906, %v922
      %v929 = vmul.f32 %v907, %v922
      %v930 = vmul.f32 %v908, %v922
      %v931 = vmul.f32 %v909, %v922
      %v932 = vmul.f32 %v910, %v922
      %v933 = vmul.f32 %v911, %v922
      %v934 = vmul.f32 %v912, %v922
      %v935 = vmul.f32 %v913, %v922
      %v936 = vmul.f32 %v914, %v922
      %v937 = vmul.f32 %v915, %v922
      %v938 = vmul.f32 %v916, %v922
      %v939 = vmul.f32 %v917, %v922
      %v941 = vlaneseq
      %v942 = vshrl.u32 %v941, 7
      %v943 = vsub.s32 0, %v942
      %v944 = vrot.slane %v709, %v943
      %v946 = vadd.f32 %v924, %v944
      %v947 = vadd.f32 %v925, %v944
      %v948 = vadd.f32 %v926, %v944
      %v949 = vadd.f32 %v927, %v944
      %v950 = vadd.f32 %v928, %v944
      %v951 = vadd.f32 %v929, %v944
      %v952 = vadd.f32 %v930, %v944
      %v953 = vadd.f32 %v931, %v944
      %v954 = vadd.f32 %v932, %v944
      %v955 = vadd.f32 %v933, %v944
      %v956 = vadd.f32 %v934, %v944
      %v957 = vadd.f32 %v935, %v944
      %v958 = vadd.f32 %v936, %v944
      %v959 = vadd.f32 %v937, %v944
      %v960 = vadd.f32 %v938, %v944
      %v961 = vadd.f32 %v939, %v944
      %v962 = vpack.c.bf16 %v701, %v700
      %v963 = vpack.c.bf16 %v703, %v702
      %v964 = vpack.c.bf16 %v705, %v704
      %v965 = vpack.c.bf16 %v707, %v706
      %v966 = vld [vmem:[%s8] sm:$0xf]
      %v967 = vld [vmem:[%s8 + $0x4] sm:$0xf]
      %v968 = vld [vmem:[%s8 + $0x8] sm:$0xf]
      %v969 = vld [vmem:[%s8 + $0xc] sm:$0xf]
      %v974 = vunpack.c.l.b16 %v966
      %v975 = vunpack.c.l.b16 %v967
      %v976 = vunpack.c.l.b16 %v968
      %v977 = vunpack.c.l.b16 %v969
      %v978 = vpack.c.b16 %v975, %v974
      %v979 = vpack.c.b16 %v977, %v976
      %v983 = vsel %vm574, %v962, 0
      %v986 = vsel %vm574, %v963, 0
      %v989 = vsel %vm574, %v964, 0
      %v992 = vsel %vm574, %v965, 0
      %994 = vmatprep.subr.bf16.mxu0 0
      %995 = vmatpush1.bf16.msra.mxu0 0
      %996 = vmatprep.subr.bf16.mxu0 0
      %997 = vmatpush1.bf16.msra.mxu0 0
      %998 = vmatprep.subr.bf16.mxu0 0
      %999 = vmatpush1.bf16.msra.mxu0 0
      %1000 = vmatprep.subr.bf16.mxu0 0
      %1001 = vmatpush1.bf16.msra.mxu0 0
      %1002 = vmatprep.subr.bf16.mxu0 0
      %1003 = vmatpush1.bf16.msra.mxu0 0
      %1004 = vmatprep.subr.bf16.mxu0 0
      %1005 = vmatpush1.bf16.msra.mxu0 0
      %1006 = vmatprep.subr.bf16.mxu0 0
      %1007 = vmatpush1.bf16.msra.mxu0 %v979
      %1008 = vmatprep.subr.bf16.mxu0 0
      %1009 = vmatpush1.bf16.msra.mxu0 %v978
      %1010 = vmatprep.subr.bf16.mxu0 0
      %1011 = vmatpush2.bf16.msra.mxu0 0
      %1012 = vmatprep.subr.bf16.mxu0 0
      %1013 = vmatpush2.bf16.msra.mxu0 0
      %1014 = vmatprep.subr.bf16.mxu0 0
      %1015 = vmatpush2.bf16.msra.mxu0 0
      %1016 = vmatprep.subr.bf16.mxu0 0
      %1017 = vmatpush2.bf16.msra.mxu0 0
      %1018 = vmatprep.subr.bf16.mxu0 0
      %1019 = vmatpush2.bf16.msra.mxu0 0
      %1020 = vmatprep.subr.bf16.mxu0 0
      %1021 = vmatpush2.bf16.msra.mxu0 0
      %1022 = vmatprep.subr.bf16.mxu0 0
      %1023 = vmatpush2.bf16.msra.mxu0 0
      %1024 = vmatprep.subr.bf16.mxu0 0
      %1025 = vmatpush2.bf16.msra.mxu0 0
      %1026 = vmatprep.mubr.bf16.mxu0 0
      %1027 = vmatmul.mubr.bf16.gmra.mxu0 %v983
      %v1028 = vpop.f32.mrf.mxu0
      %v1029 = vadd.f32 0.0, %v1028
      %v1030 = vpop.f32.mrf.mxu0
      %v1031 = vpop.f32.mrf.mxu0
      %v1032 = vadd.f32 0.0, %v1031
      %v1033 = vpop.f32.mrf.mxu0
      %1034 = vmatprep.mubr.bf16.mxu0 0
      %1035 = vmatmul.mubr.bf16.gmra.mxu0 %v986
      %v1036 = vpop.f32.mrf.mxu0
      %v1037 = vadd.f32 0.0, %v1036
      %v1038 = vpop.f32.mrf.mxu0
      %v1039 = vpop.f32.mrf.mxu0
      %v1040 = vadd.f32 0.0, %v1039
      %v1041 = vpop.f32.mrf.mxu0
      %1042 = vmatprep.mubr.bf16.mxu0 0
      %1043 = vmatmul.mubr.bf16.gmra.mxu0 %v989
      %v1044 = vpop.f32.mrf.mxu0
      %v1045 = vadd.f32 0.0, %v1044
      %v1046 = vpop.f32.mrf.mxu0
      %v1047 = vpop.f32.mrf.mxu0
      %v1048 = vadd.f32 0.0, %v1047
      %v1049 = vpop.f32.mrf.mxu0
      %1050 = vmatprep.mubr.bf16.mxu0 0
      %1051 = vmatmul.mubr.bf16.gmra.mxu0 %v992
      %v1052 = vpop.f32.mrf.mxu0
      %v1053 = vadd.f32 0.0, %v1052
      %v1054 = vpop.f32.mrf.mxu0
      %v1055 = vpop.f32.mrf.mxu0
      %v1056 = vadd.f32 0.0, %v1055
      %v1057 = vpop.f32.mrf.mxu0
      %1058 = vdwg.mxu0
      %v1059 = vpack.c.bf16 %v947, %v946
      %v1060 = vpack.c.bf16 %v949, %v948
      %v1061 = vpack.c.bf16 %v951, %v950
      %v1062 = vpack.c.bf16 %v953, %v952
      %v1063 = vpack.c.bf16 %v955, %v954
      %v1064 = vpack.c.bf16 %v957, %v956
      %v1065 = vpack.c.bf16 %v959, %v958
      %v1066 = vpack.c.bf16 %v961, %v960
      %v1067 = vld [vmem:[%s9] sm:$0xf]
      %v1068 = vld [vmem:[%s9 + $0x4] sm:$0xf]
      %v1069 = vld [vmem:[%s9 + $0x8] sm:$0xf]
      %v1070 = vld [vmem:[%s9 + $0xc] sm:$0xf]
      %v1075 = vunpack.c.l.b16 %v1067
      %v1076 = vunpack.c.l.b16 %v1068
      %v1077 = vunpack.c.l.b16 %v1069
      %v1078 = vunpack.c.l.b16 %v1070
      %v1079 = vpack.c.b16 %v1076, %v1075
      %v1080 = vpack.c.b16 %v1078, %v1077
      %v1084 = vsel %vm574, %v1059, 0
      %v1087 = vsel %vm574, %v1060, 0
      %v1090 = vsel %vm574, %v1061, 0
      %v1093 = vsel %vm574, %v1062, 0
      %v1096 = vsel %vm574, %v1063, 0
      %v1099 = vsel %vm574, %v1064, 0
      %v1102 = vsel %vm574, %v1065, 0
      %v1105 = vsel %vm574, %v1066, 0
      %1107 = vmatprep.subr.bf16.mxu0 0
      %1108 = vmatpush1.bf16.msra.mxu0 0
      %1109 = vmatprep.subr.bf16.mxu0 0
      %1110 = vmatpush1.bf16.msra.mxu0 0
      %1111 = vmatprep.subr.bf16.mxu0 0
      %1112 = vmatpush1.bf16.msra.mxu0 0
      %1113 = vmatprep.subr.bf16.mxu0 0
      %1114 = vmatpush1.bf16.msra.mxu0 0
      %1115 = vmatprep.subr.bf16.mxu0 0
      %1116 = vmatpush1.bf16.msra.mxu0 0
      %1117 = vmatprep.subr.bf16.mxu0 0
      %1118 = vmatpush1.bf16.msra.mxu0 0
      %1119 = vmatprep.subr.bf16.mxu0 0
      %1120 = vmatpush1.bf16.msra.mxu0 %v1080
      %1121 = vmatprep.subr.bf16.mxu0 0
      %1122 = vmatpush1.bf16.msra.mxu0 %v1079
      %1123 = vmatprep.subr.bf16.mxu0 0
      %1124 = vmatpush2.bf16.msra.mxu0 0
      %1125 = vmatprep.subr.bf16.mxu0 0
      %1126 = vmatpush2.bf16.msra.mxu0 0
      %1127 = vmatprep.subr.bf16.mxu0 0
      %1128 = vmatpush2.bf16.msra.mxu0 0
      %1129 = vmatprep.subr.bf16.mxu0 0
      %1130 = vmatpush2.bf16.msra.mxu0 0
      %1131 = vmatprep.subr.bf16.mxu0 0
      %1132 = vmatpush2.bf16.msra.mxu0 0
      %1133 = vmatprep.subr.bf16.mxu0 0
      %1134 = vmatpush2.bf16.msra.mxu0 0
      %1135 = vmatprep.subr.bf16.mxu0 0
      %1136 = vmatpush2.bf16.msra.mxu0 0
      %1137 = vmatprep.subr.bf16.mxu0 0
      %1138 = vmatpush2.bf16.msra.mxu0 0
      %1139 = vmatprep.mubr.bf16.mxu0 0
      %1140 = vmatmul.mubr.bf16.gmra.mxu0 %v1084
      %v1141 = vpop.f32.mrf.mxu0
      %v1142 = vadd.f32 0.0, %v1141
      %v1143 = vpop.f32.mrf.mxu0
      %v1144 = vpop.f32.mrf.mxu0
      %v1145 = vadd.f32 0.0, %v1144
      %v1146 = vpop.f32.mrf.mxu0
      %1147 = vmatprep.mubr.bf16.mxu0 0
      %1148 = vmatmul.mubr.bf16.gmra.mxu0 %v1087
      %v1149 = vpop.f32.mrf.mxu0
      %v1150 = vadd.f32 0.0, %v1149
      %v1151 = vpop.f32.mrf.mxu0
      %v1152 = vpop.f32.mrf.mxu0
      %v1153 = vadd.f32 0.0, %v1152
      %v1154 = vpop.f32.mrf.mxu0
      %1155 = vmatprep.mubr.bf16.mxu0 0
      %1156 = vmatmul.mubr.bf16.gmra.mxu0 %v1090
      %v1157 = vpop.f32.mrf.mxu0
      %v1158 = vadd.f32 0.0, %v1157
      %v1159 = vpop.f32.mrf.mxu0
      %v1160 = vpop.f32.mrf.mxu0
      %v1161 = vadd.f32 0.0, %v1160
      %v1162 = vpop.f32.mrf.mxu0
      %1163 = vmatprep.mubr.bf16.mxu0 0
      %1164 = vmatmul.mubr.bf16.gmra.mxu0 %v1093
      %v1165 = vpop.f32.mrf.mxu0
      %v1166 = vadd.f32 0.0, %v1165
      %v1167 = vpop.f32.mrf.mxu0
      %v1168 = vpop.f32.mrf.mxu0
      %v1169 = vadd.f32 0.0, %v1168
      %v1170 = vpop.f32.mrf.mxu0
      %1171 = vmatprep.mubr.bf16.mxu0 0
      %1172 = vmatmul.mubr.bf16.gmra.mxu0 %v1096
      %v1173 = vpop.f32.mrf.mxu0
      %v1174 = vadd.f32 0.0, %v1173
      %v1175 = vpop.f32.mrf.mxu0
      %v1176 = vpop.f32.mrf.mxu0
      %v1177 = vadd.f32 0.0, %v1176
      %v1178 = vpop.f32.mrf.mxu0
      %1179 = vmatprep.mubr.bf16.mxu0 0
      %1180 = vmatmul.mubr.bf16.gmra.mxu0 %v1099
      %v1181 = vpop.f32.mrf.mxu0
      %v1182 = vadd.f32 0.0, %v1181
      %v1183 = vpop.f32.mrf.mxu0
      %v1184 = vpop.f32.mrf.mxu0
      %v1185 = vadd.f32 0.0, %v1184
      %v1186 = vpop.f32.mrf.mxu0
      %1187 = vmatprep.mubr.bf16.mxu0 0
      %1188 = vmatmul.mubr.bf16.gmra.mxu0 %v1102
      %v1189 = vpop.f32.mrf.mxu0
      %v1190 = vadd.f32 0.0, %v1189
      %v1191 = vpop.f32.mrf.mxu0
      %v1192 = vpop.f32.mrf.mxu0
      %v1193 = vadd.f32 0.0, %v1192
      %v1194 = vpop.f32.mrf.mxu0
      %1195 = vmatprep.mubr.bf16.mxu0 0
      %1196 = vmatmul.mubr.bf16.gmra.mxu0 %v1105
      %v1197 = vpop.f32.mrf.mxu0
      %v1198 = vadd.f32 0.0, %v1197
      %v1199 = vpop.f32.mrf.mxu0
      %v1200 = vpop.f32.mrf.mxu0
      %v1201 = vadd.f32 0.0, %v1200
      %v1202 = vpop.f32.mrf.mxu0
      %1203 = vdwg.mxu0
      %v1204 = vmul.f32 %v1029, 0.35355338
      %v1205 = vmul.f32 %v1032, 0.35355338
      %v1206 = vmul.f32 %v1037, 0.35355338
      %v1207 = vmul.f32 %v1040, 0.35355338
      %v1208 = vmul.f32 %v1045, 0.35355338
      %v1209 = vmul.f32 %v1048, 0.35355338
      %v1210 = vmul.f32 %v1053, 0.35355338
      %v1211 = vmul.f32 %v1056, 0.35355338
      %v1212 = vpack.c.bf16 %v1204, %v1204
      %v1213 = vpack.c.bf16 %v1205, %v1205
      %v1214 = vpack.c.bf16 %v1206, %v1206
      %v1215 = vpack.c.bf16 %v1207, %v1207
      %v1216 = vpack.c.bf16 %v1208, %v1208
      %v1217 = vpack.c.bf16 %v1209, %v1209
      %v1218 = vpack.c.bf16 %v1210, %v1210
      %v1219 = vpack.c.bf16 %v1211, %v1211
      %v1220 = vpack.c.bf16 %v1145, %v1142
      %v1221 = vpack.c.bf16 %v1153, %v1150
      %v1222 = vpack.c.bf16 %v1161, %v1158
      %v1223 = vpack.c.bf16 %v1169, %v1166
      %v1224 = vpack.c.bf16 %v1177, %v1174
      %v1225 = vpack.c.bf16 %v1185, %v1182
      %v1226 = vpack.c.bf16 %v1193, %v1190
      %v1227 = vpack.c.bf16 %v1201, %v1198
      %vm1228 = vcmask 64512
      %v1230 = vsel %vm1228, %v1212, 0
      %v1233 = vsel %vm1228, %v1220, 0
      %1235 = vmatprep.subr.bf16.mxu0 0
      %1236 = vmatpush1.bf16.xpose.msra.mxu0 0
      %1237 = vmatprep.subr.bf16.mxu0 0
      %1238 = vmatpush1.bf16.xpose.msra.mxu0 0
      %1239 = vmatprep.subr.bf16.mxu0 0
      %1240 = vmatpush1.bf16.xpose.msra.mxu0 0
      %1241 = vmatprep.subr.bf16.mxu0 0
      %1242 = vmatpush1.bf16.xpose.msra.mxu0 0
      %1243 = vmatprep.subr.bf16.mxu0 0
      %1244 = vmatpush1.bf16.xpose.msra.mxu0 0
      %1245 = vmatprep.subr.bf16.mxu0 0
      %1246 = vmatpush1.bf16.xpose.msra.mxu0 0
      %1247 = vmatprep.subr.bf16.mxu0 0
      %1248 = vmatpush1.bf16.xpose.msra.mxu0 0
      %1249 = vmatprep.subr.bf16.mxu0 0
      %1250 = vmatpush1.bf16.xpose.msra.mxu0 %v1233
      %1251 = vmatprep.subr.bf16.mxu0 0
      %1252 = vmatpush2.bf16.xpose.msra.mxu0 0
      %1253 = vmatprep.subr.bf16.mxu0 0
      %1254 = vmatpush2.bf16.xpose.msra.mxu0 0
      %1255 = vmatprep.subr.bf16.mxu0 0
      %1256 = vmatpush2.bf16.xpose.msra.mxu0 0
      %1257 = vmatprep.subr.bf16.mxu0 0
      %1258 = vmatpush2.bf16.xpose.msra.mxu0 0
      %1259 = vmatprep.subr.bf16.mxu0 0
      %1260 = vmatpush2.bf16.xpose.msra.mxu0 0
      %1261 = vmatprep.subr.bf16.mxu0 0
      %1262 = vmatpush2.bf16.xpose.msra.mxu0 0
      %1263 = vmatprep.subr.bf16.mxu0 0
      %1264 = vmatpush2.bf16.xpose.msra.mxu0 0
      %1265 = vmatprep.subr.bf16.mxu0 0
      %1266 = vmatpush2.bf16.xpose.msra.mxu0 0
      %1267 = vmatprep.mubr.bf16.mxu0 0
      %1268 = vmatmul.mubr.bf16.gmra.mxu0 %v1230
      %v1269 = vpop.f32.mrf.mxu0
      %v1270 = vadd.f32 0.0, %v1269
      %v1271 = vpop.f32.mrf.mxu0
      %v1272 = vpop.f32.mrf.mxu0
      %v1273 = vpop.f32.mrf.mxu0
      %1274 = vdwg.mxu0
      %v1276 = vsel %vm1228, %v1213, 0
      %v1279 = vsel %vm1228, %v1221, 0
      %1281 = vmatprep.subr.bf16.mxu0 0
      %1282 = vmatpush1.bf16.xpose.msra.mxu0 0
      %1283 = vmatprep.subr.bf16.mxu0 0
      %1284 = vmatpush1.bf16.xpose.msra.mxu0 0
      %1285 = vmatprep.subr.bf16.mxu0 0
      %1286 = vmatpush1.bf16.xpose.msra.mxu0 0
      %1287 = vmatprep.subr.bf16.mxu0 0
      %1288 = vmatpush1.bf16.xpose.msra.mxu0 0
      %1289 = vmatprep.subr.bf16.mxu0 0
      %1290 = vmatpush1.bf16.xpose.msra.mxu0 0
      %1291 = vmatprep.subr.bf16.mxu0 0
      %1292 = vmatpush1.bf16.xpose.msra.mxu0 0
      %1293 = vmatprep.subr.bf16.mxu0 0
      %1294 = vmatpush1.bf16.xpose.msra.mxu0 0
      %1295 = vmatprep.subr.bf16.mxu0 0
      %1296 = vmatpush1.bf16.xpose.msra.mxu0 %v1279
      %1297 = vmatprep.subr.bf16.mxu0 0
      %1298 = vmatpush2.bf16.xpose.msra.mxu0 0
      %1299 = vmatprep.subr.bf16.mxu0 0
      %1300 = vmatpush2.bf16.xpose.msra.mxu0 0
      %1301 = vmatprep.subr.bf16.mxu0 0
      %1302 = vmatpush2.bf16.xpose.msra.mxu0 0
      %1303 = vmatprep.subr.bf16.mxu0 0
      %1304 = vmatpush2.bf16.xpose.msra.mxu0 0
      %1305 = vmatprep.subr.bf16.mxu0 0
      %1306 = vmatpush2.bf16.xpose.msra.mxu0 0
      %1307 = vmatprep.subr.bf16.mxu0 0
      %1308 = vmatpush2.bf16.xpose.msra.mxu0 0
      %1309 = vmatprep.subr.bf16.mxu0 0
      %1310 = vmatpush2.bf16.xpose.msra.mxu0 0
      %1311 = vmatprep.subr.bf16.mxu0 0
      %1312 = vmatpush2.bf16.xpose.msra.mxu0 0
      %1313 = vmatprep.mubr.bf16.mxu0 0
      %1314 = vmatmul.mubr.bf16.gmra.mxu0 %v1276
      %v1315 = vpop.f32.mrf.mxu0
      %v1316 = vadd.f32 0.0, %v1315
      %v1317 = vpop.f32.mrf.mxu0
      %v1318 = vpop.f32.mrf.mxu0
      %v1319 = vpop.f32.mrf.mxu0
      %1320 = vdwg.mxu0
      %v1322 = vsel %vm1228, %v1214, 0
      %v1325 = vsel %vm1228, %v1222, 0
      %1327 = vmatprep.subr.bf16.mxu0 0
      %1328 = vmatpush1.bf16.xpose.msra.mxu0 0
      %1329 = vmatprep.subr.bf16.mxu0 0
      %1330 = vmatpush1.bf16.xpose.msra.mxu0 0
      %1331 = vmatprep.subr.bf16.mxu0 0
      %1332 = vmatpush1.bf16.xpose.msra.mxu0 0
      %1333 = vmatprep.subr.bf16.mxu0 0
      %1334 = vmatpush1.bf16.xpose.msra.mxu0 0
      %1335 = vmatprep.subr.bf16.mxu0 0
      %1336 = vmatpush1.bf16.xpose.msra.mxu0 0
      %1337 = vmatprep.subr.bf16.mxu0 0
      %1338 = vmatpush1.bf16.xpose.msra.mxu0 0
      %1339 = vmatprep.subr.bf16.mxu0 0
      %1340 = vmatpush1.bf16.xpose.msra.mxu0 0
      %1341 = vmatprep.subr.bf16.mxu0 0
      %1342 = vmatpush1.bf16.xpose.msra.mxu0 %v1325
      %1343 = vmatprep.subr.bf16.mxu0 0
      %1344 = vmatpush2.bf16.xpose.msra.mxu0 0
      %1345 = vmatprep.subr.bf16.mxu0 0
      %1346 = vmatpush2.bf16.xpose.msra.mxu0 0
      %1347 = vmatprep.subr.bf16.mxu0 0
      %1348 = vmatpush2.bf16.xpose.msra.mxu0 0
      %1349 = vmatprep.subr.bf16.mxu0 0
      %1350 = vmatpush2.bf16.xpose.msra.mxu0 0
      %1351 = vmatprep.subr.bf16.mxu0 0
      %1352 = vmatpush2.bf16.xpose.msra.mxu0 0
      %1353 = vmatprep.subr.bf16.mxu0 0
      %1354 = vmatpush2.bf16.xpose.msra.mxu0 0
      %1355 = vmatprep.subr.bf16.mxu0 0
      %1356 = vmatpush2.bf16.xpose.msra.mxu0 0
      %1357 = vmatprep.subr.bf16.mxu0 0
      %1358 = vmatpush2.bf16.xpose.msra.mxu0 0
      %1359 = vmatprep.mubr.bf16.mxu0 0
      %1360 = vmatmul.mubr.bf16.gmra.mxu0 %v1322
      %v1361 = vpop.f32.mrf.mxu0
      %v1362 = vadd.f32 0.0, %v1361
      %v1363 = vpop.f32.mrf.mxu0
      %v1364 = vpop.f32.mrf.mxu0
      %v1365 = vpop.f32.mrf.mxu0
      %1366 = vdwg.mxu0
      %v1368 = vsel %vm1228, %v1215, 0
      %v1371 = vsel %vm1228, %v1223, 0
      %1373 = vmatprep.subr.bf16.mxu0 0
      %1374 = vmatpush1.bf16.xpose.msra.mxu0 0
      %1375 = vmatprep.subr.bf16.mxu0 0
      %1376 = vmatpush1.bf16.xpose.msra.mxu0 0
      %1377 = vmatprep.subr.bf16.mxu0 0
      %1378 = vmatpush1.bf16.xpose.msra.mxu0 0
      %1379 = vmatprep.subr.bf16.mxu0 0
      %1380 = vmatpush1.bf16.xpose.msra.mxu0 0
      %1381 = vmatprep.subr.bf16.mxu0 0
      %1382 = vmatpush1.bf16.xpose.msra.mxu0 0
      %1383 = vmatprep.subr.bf16.mxu0 0
      %1384 = vmatpush1.bf16.xpose.msra.mxu0 0
      %1385 = vmatprep.subr.bf16.mxu0 0
      %1386 = vmatpush1.bf16.xpose.msra.mxu0 0
      %1387 = vmatprep.subr.bf16.mxu0 0
      %1388 = vmatpush1.bf16.xpose.msra.mxu0 %v1371
      %1389 = vmatprep.subr.bf16.mxu0 0
      %1390 = vmatpush2.bf16.xpose.msra.mxu0 0
      %1391 = vmatprep.subr.bf16.mxu0 0
      %1392 = vmatpush2.bf16.xpose.msra.mxu0 0
      %1393 = vmatprep.subr.bf16.mxu0 0
      %1394 = vmatpush2.bf16.xpose.msra.mxu0 0
      %1395 = vmatprep.subr.bf16.mxu0 0
      %1396 = vmatpush2.bf16.xpose.msra.mxu0 0
      %1397 = vmatprep.subr.bf16.mxu0 0
      %1398 = vmatpush2.bf16.xpose.msra.mxu0 0
      %1399 = vmatprep.subr.bf16.mxu0 0
      %1400 = vmatpush2.bf16.xpose.msra.mxu0 0
      %1401 = vmatprep.subr.bf16.mxu0 0
      %1402 = vmatpush2.bf16.xpose.msra.mxu0 0
      %1403 = vmatprep.subr.bf16.mxu0 0
      %1404 = vmatpush2.bf16.xpose.msra.mxu0 0
      %1405 = vmatprep.mubr.bf16.mxu0 0
      %1406 = vmatmul.mubr.bf16.gmra.mxu0 %v1368
      %v1407 = vpop.f32.mrf.mxu0
      %v1408 = vadd.f32 0.0, %v1407
      %v1409 = vpop.f32.mrf.mxu0
      %v1410 = vpop.f32.mrf.mxu0
      %v1411 = vpop.f32.mrf.mxu0
      %1412 = vdwg.mxu0
      %v1414 = vsel %vm1228, %v1216, 0
      %v1417 = vsel %vm1228, %v1224, 0
      %1419 = vmatprep.subr.bf16.mxu0 0
      %1420 = vmatpush1.bf16.xpose.msra.mxu0 0
      %1421 = vmatprep.subr.bf16.mxu0 0
      %1422 = vmatpush1.bf16.xpose.msra.mxu0 0
      %1423 = vmatprep.subr.bf16.mxu0 0
      %1424 = vmatpush1.bf16.xpose.msra.mxu0 0
      %1425 = vmatprep.subr.bf16.mxu0 0
      %1426 = vmatpush1.bf16.xpose.msra.mxu0 0
      %1427 = vmatprep.subr.bf16.mxu0 0
      %1428 = vmatpush1.bf16.xpose.msra.mxu0 0
      %1429 = vmatprep.subr.bf16.mxu0 0
      %1430 = vmatpush1.bf16.xpose.msra.mxu0 0
      %1431 = vmatprep.subr.bf16.mxu0 0
      %1432 = vmatpush1.bf16.xpose.msra.mxu0 0
      %1433 = vmatprep.subr.bf16.mxu0 0
      %1434 = vmatpush1.bf16.xpose.msra.mxu0 %v1417
      %1435 = vmatprep.subr.bf16.mxu0 0
      %1436 = vmatpush2.bf16.xpose.msra.mxu0 0
      %1437 = vmatprep.subr.bf16.mxu0 0
      %1438 = vmatpush2.bf16.xpose.msra.mxu0 0
      %1439 = vmatprep.subr.bf16.mxu0 0
      %1440 = vmatpush2.bf16.xpose.msra.mxu0 0
      %1441 = vmatprep.subr.bf16.mxu0 0
      %1442 = vmatpush2.bf16.xpose.msra.mxu0 0
      %1443 = vmatprep.subr.bf16.mxu0 0
      %1444 = vmatpush2.bf16.xpose.msra.mxu0 0
      %1445 = vmatprep.subr.bf16.mxu0 0
      %1446 = vmatpush2.bf16.xpose.msra.mxu0 0
      %1447 = vmatprep.subr.bf16.mxu0 0
      %1448 = vmatpush2.bf16.xpose.msra.mxu0 0
      %1449 = vmatprep.subr.bf16.mxu0 0
      %1450 = vmatpush2.bf16.xpose.msra.mxu0 0
      %1451 = vmatprep.mubr.bf16.mxu0 0
      %1452 = vmatmul.mubr.bf16.gmra.mxu0 %v1414
      %v1453 = vpop.f32.mrf.mxu0
      %v1454 = vadd.f32 0.0, %v1453
      %v1455 = vpop.f32.mrf.mxu0
      %v1456 = vpop.f32.mrf.mxu0
      %v1457 = vpop.f32.mrf.mxu0
      %1458 = vdwg.mxu0
      %v1460 = vsel %vm1228, %v1217, 0
      %v1463 = vsel %vm1228, %v1225, 0
      %1465 = vmatprep.subr.bf16.mxu0 0
      %1466 = vmatpush1.bf16.xpose.msra.mxu0 0
      %1467 = vmatprep.subr.bf16.mxu0 0
      %1468 = vmatpush1.bf16.xpose.msra.mxu0 0
      %1469 = vmatprep.subr.bf16.mxu0 0
      %1470 = vmatpush1.bf16.xpose.msra.mxu0 0
      %1471 = vmatprep.subr.bf16.mxu0 0
      %1472 = vmatpush1.bf16.xpose.msra.mxu0 0
      %1473 = vmatprep.subr.bf16.mxu0 0
      %1474 = vmatpush1.bf16.xpose.msra.mxu0 0
      %1475 = vmatprep.subr.bf16.mxu0 0
      %1476 = vmatpush1.bf16.xpose.msra.mxu0 0
      %1477 = vmatprep.subr.bf16.mxu0 0
      %1478 = vmatpush1.bf16.xpose.msra.mxu0 0
      %1479 = vmatprep.subr.bf16.mxu0 0
      %1480 = vmatpush1.bf16.xpose.msra.mxu0 %v1463
      %1481 = vmatprep.subr.bf16.mxu0 0
      %1482 = vmatpush2.bf16.xpose.msra.mxu0 0
      %1483 = vmatprep.subr.bf16.mxu0 0
      %1484 = vmatpush2.bf16.xpose.msra.mxu0 0
      %1485 = vmatprep.subr.bf16.mxu0 0
      %1486 = vmatpush2.bf16.xpose.msra.mxu0 0
      %1487 = vmatprep.subr.bf16.mxu0 0
      %1488 = vmatpush2.bf16.xpose.msra.mxu0 0
      %1489 = vmatprep.subr.bf16.mxu0 0
      %1490 = vmatpush2.bf16.xpose.msra.mxu0 0
      %1491 = vmatprep.subr.bf16.mxu0 0
      %1492 = vmatpush2.bf16.xpose.msra.mxu0 0
      %1493 = vmatprep.subr.bf16.mxu0 0
      %1494 = vmatpush2.bf16.xpose.msra.mxu0 0
      %1495 = vmatprep.subr.bf16.mxu0 0
      %1496 = vmatpush2.bf16.xpose.msra.mxu0 0
      %1497 = vmatprep.mubr.bf16.mxu0 0
      %1498 = vmatmul.mubr.bf16.gmra.mxu0 %v1460
      %v1499 = vpop.f32.mrf.mxu0
      %v1500 = vadd.f32 0.0, %v1499
      %v1501 = vpop.f32.mrf.mxu0
      %v1502 = vpop.f32.mrf.mxu0
      %v1503 = vpop.f32.mrf.mxu0
      %1504 = vdwg.mxu0
      %v1506 = vsel %vm1228, %v1218, 0
      %v1509 = vsel %vm1228, %v1226, 0
      %1511 = vmatprep.subr.bf16.mxu0 0
      %1512 = vmatpush1.bf16.xpose.msra.mxu0 0
      %1513 = vmatprep.subr.bf16.mxu0 0
      %1514 = vmatpush1.bf16.xpose.msra.mxu0 0
      %1515 = vmatprep.subr.bf16.mxu0 0
      %1516 = vmatpush1.bf16.xpose.msra.mxu0 0
      %1517 = vmatprep.subr.bf16.mxu0 0
      %1518 = vmatpush1.bf16.xpose.msra.mxu0 0
      %1519 = vmatprep.subr.bf16.mxu0 0
      %1520 = vmatpush1.bf16.xpose.msra.mxu0 0
      %1521 = vmatprep.subr.bf16.mxu0 0
      %1522 = vmatpush1.bf16.xpose.msra.mxu0 0
      %1523 = vmatprep.subr.bf16.mxu0 0
      %1524 = vmatpush1.bf16.xpose.msra.mxu0 0
      %1525 = vmatprep.subr.bf16.mxu0 0
      %1526 = vmatpush1.bf16.xpose.msra.mxu0 %v1509
      %1527 = vmatprep.subr.bf16.mxu0 0
      %1528 = vmatpush2.bf16.xpose.msra.mxu0 0
      %1529 = vmatprep.subr.bf16.mxu0 0
      %1530 = vmatpush2.bf16.xpose.msra.mxu0 0
      %1531 = vmatprep.subr.bf16.mxu0 0
      %1532 = vmatpush2.bf16.xpose.msra.mxu0 0
      %1533 = vmatprep.subr.bf16.mxu0 0
      %1534 = vmatpush2.bf16.xpose.msra.mxu0 0
      %1535 = vmatprep.subr.bf16.mxu0 0
      %1536 = vmatpush2.bf16.xpose.msra.mxu0 0
      %1537 = vmatprep.subr.bf16.mxu0 0
      %1538 = vmatpush2.bf16.xpose.msra.mxu0 0
      %1539 = vmatprep.subr.bf16.mxu0 0
      %1540 = vmatpush2.bf16.xpose.msra.mxu0 0
      %1541 = vmatprep.subr.bf16.mxu0 0
      %1542 = vmatpush2.bf16.xpose.msra.mxu0 0
      %1543 = vmatprep.mubr.bf16.mxu0 0
      %1544 = vmatmul.mubr.bf16.gmra.mxu0 %v1506
      %v1545 = vpop.f32.mrf.mxu0
      %v1546 = vadd.f32 0.0, %v1545
      %v1547 = vpop.f32.mrf.mxu0
      %v1548 = vpop.f32.mrf.mxu0
      %v1549 = vpop.f32.mrf.mxu0
      %1550 = vdwg.mxu0
      %v1552 = vsel %vm1228, %v1219, 0
      %v1555 = vsel %vm1228, %v1227, 0
      %1557 = vmatprep.subr.bf16.mxu0 0
      %1558 = vmatpush1.bf16.xpose.msra.mxu0 0
      %1559 = vmatprep.subr.bf16.mxu0 0
      %1560 = vmatpush1.bf16.xpose.msra.mxu0 0
      %1561 = vmatprep.subr.bf16.mxu0 0
      %1562 = vmatpush1.bf16.xpose.msra.mxu0 0
      %1563 = vmatprep.subr.bf16.mxu0 0
      %1564 = vmatpush1.bf16.xpose.msra.mxu0 0
      %1565 = vmatprep.subr.bf16.mxu0 0
      %1566 = vmatpush1.bf16.xpose.msra.mxu0 0
      %1567 = vmatprep.subr.bf16.mxu0 0
      %1568 = vmatpush1.bf16.xpose.msra.mxu0 0
      %1569 = vmatprep.subr.bf16.mxu0 0
      %1570 = vmatpush1.bf16.xpose.msra.mxu0 0
      %1571 = vmatprep.subr.bf16.mxu0 0
      %1572 = vmatpush1.bf16.xpose.msra.mxu0 %v1555
      %1573 = vmatprep.subr.bf16.mxu0 0
      %1574 = vmatpush2.bf16.xpose.msra.mxu0 0
      %1575 = vmatprep.subr.bf16.mxu0 0
      %1576 = vmatpush2.bf16.xpose.msra.mxu0 0
      %1577 = vmatprep.subr.bf16.mxu0 0
      %1578 = vmatpush2.bf16.xpose.msra.mxu0 0
      %1579 = vmatprep.subr.bf16.mxu0 0
      %1580 = vmatpush2.bf16.xpose.msra.mxu0 0
      %1581 = vmatprep.subr.bf16.mxu0 0
      %1582 = vmatpush2.bf16.xpose.msra.mxu0 0
      %1583 = vmatprep.subr.bf16.mxu0 0
      %1584 = vmatpush2.bf16.xpose.msra.mxu0 0
      %1585 = vmatprep.subr.bf16.mxu0 0
      %1586 = vmatpush2.bf16.xpose.msra.mxu0 0
      %1587 = vmatprep.subr.bf16.mxu0 0
      %1588 = vmatpush2.bf16.xpose.msra.mxu0 0
      %1589 = vmatprep.mubr.bf16.mxu0 0
      %1590 = vmatmul.mubr.bf16.gmra.mxu0 %v1552
      %v1591 = vpop.f32.mrf.mxu0
      %v1592 = vadd.f32 0.0, %v1591
      %v1593 = vpop.f32.mrf.mxu0
      %v1594 = vpop.f32.mrf.mxu0
      %v1595 = vpop.f32.mrf.mxu0
      %1596 = vdwg.mxu0
      %vm1597 = vcmask 130048
      %v1598 = vsel %vm1597, %v1270, -inf
      %1599 = vmax.xlane.f32.xlu0 %v1598
      %v1600 = vpop.xlane.xlu0 %1599
      %v1601 = vsel %vm1597, %v1316, -inf
      %1602 = vmax.xlane.f32.xlu0 %v1601
      %v1603 = vpop.xlane.xlu0 %1602
      %v1604 = vsel %vm1597, %v1362, -inf
      %1605 = vmax.xlane.f32.xlu0 %v1604
      %v1606 = vpop.xlane.xlu0 %1605
      %v1607 = vsel %vm1597, %v1408, -inf
      %1608 = vmax.xlane.f32.xlu0 %v1607
      %v1609 = vpop.xlane.xlu0 %1608
      %v1610 = vsel %vm1597, %v1454, -inf
      %1611 = vmax.xlane.f32.xlu0 %v1610
      %v1612 = vpop.xlane.xlu0 %1611
      %v1613 = vsel %vm1597, %v1500, -inf
      %1614 = vmax.xlane.f32.xlu0 %v1613
      %v1615 = vpop.xlane.xlu0 %1614
      %v1616 = vsel %vm1597, %v1546, -inf
      %1617 = vmax.xlane.f32.xlu0 %v1616
      %v1618 = vpop.xlane.xlu0 %1617
      %v1619 = vsel %vm1597, %v1592, -inf
      %1620 = vmax.xlane.f32.xlu0 %v1619
      %v1621 = vpop.xlane.xlu0 %1620
      %v1622 = vsub.f32 %v1270, %v1600
      %v1623 = vsub.f32 %v1316, %v1603
      %v1624 = vsub.f32 %v1362, %v1606
      %v1625 = vsub.f32 %v1408, %v1609
      %v1626 = vsub.f32 %v1454, %v1612
      %v1627 = vsub.f32 %v1500, %v1615
      %v1628 = vsub.f32 %v1546, %v1618
      %v1629 = vsub.f32 %v1592, %v1621
      %v1630 = vmul.f32 %v1622, 1.442695
      %v1631 = vpow.pop %v1630
      %v1632 = vmul.f32 %v1623, 1.442695
      %v1633 = vpow.pop %v1632
      %v1634 = vmul.f32 %v1624, 1.442695
      %v1635 = vpow.pop %v1634
      %v1636 = vmul.f32 %v1625, 1.442695
      %v1637 = vpow.pop %v1636
      %v1638 = vmul.f32 %v1626, 1.442695
      %v1639 = vpow.pop %v1638
      %v1640 = vmul.f32 %v1627, 1.442695
      %v1641 = vpow.pop %v1640
      %v1642 = vmul.f32 %v1628, 1.442695
      %v1643 = vpow.pop %v1642
      %v1644 = vmul.f32 %v1629, 1.442695
      %v1645 = vpow.pop %v1644
      %v1646 = vsel %vm1597, %v1631, 0.0
      %1647 = vadd.xlane.f32.xlu0 %v1646
      %v1648 = vpop.xlane.xlu0 %1647
      %v1649 = vsel %vm1597, %v1633, 0.0
      %1650 = vadd.xlane.f32.xlu0 %v1649
      %v1651 = vpop.xlane.xlu0 %1650
      %v1652 = vsel %vm1597, %v1635, 0.0
      %1653 = vadd.xlane.f32.xlu0 %v1652
      %v1654 = vpop.xlane.xlu0 %1653
      %v1655 = vsel %vm1597, %v1637, 0.0
      %1656 = vadd.xlane.f32.xlu0 %v1655
      %v1657 = vpop.xlane.xlu0 %1656
      %v1658 = vsel %vm1597, %v1639, 0.0
      %1659 = vadd.xlane.f32.xlu0 %v1658
      %v1660 = vpop.xlane.xlu0 %1659
      %v1661 = vsel %vm1597, %v1641, 0.0
      %1662 = vadd.xlane.f32.xlu0 %v1661
      %v1663 = vpop.xlane.xlu0 %1662
      %v1664 = vsel %vm1597, %v1643, 0.0
      %1665 = vadd.xlane.f32.xlu0 %v1664
      %v1666 = vpop.xlane.xlu0 %1665
      %v1667 = vsel %vm1597, %v1645, 0.0
      %1668 = vadd.xlane.f32.xlu0 %v1667
      %v1669 = vpop.xlane.xlu0 %1668
      %v1670 = vrcp.pop %v1648
      %v1671 = vrcp.pop %v1651
      %v1672 = vrcp.pop %v1654
      %v1673 = vrcp.pop %v1657
      %v1674 = vrcp.pop %v1660
      %v1675 = vrcp.pop %v1663
      %v1676 = vrcp.pop %v1666
      %v1677 = vrcp.pop %v1669
      %v1678 = vmul.f32 %v1631, %v1670
      %v1679 = vmul.f32 %v1633, %v1671
      %v1680 = vmul.f32 %v1635, %v1672
      %v1681 = vmul.f32 %v1637, %v1673
      %v1682 = vmul.f32 %v1639, %v1674
      %v1683 = vmul.f32 %v1641, %v1675
      %v1684 = vmul.f32 %v1643, %v1676
      %v1685 = vmul.f32 %v1645, %v1677
      %v1686 = vpack.c.bf16 %v1678, %v1678
      %v1687 = vpack.c.bf16 %v1679, %v1679
      %v1688 = vpack.c.bf16 %v1680, %v1680
      %v1689 = vpack.c.bf16 %v1681, %v1681
      %v1690 = vpack.c.bf16 %v1682, %v1682
      %v1691 = vpack.c.bf16 %v1683, %v1683
      %v1692 = vpack.c.bf16 %v1684, %v1684
      %v1693 = vpack.c.bf16 %v1685, %v1685
      %1695 = vrot.lane.b32.xlu0 %v1220, 96
      %v1696 = vpop.permute.xlu0 %1695
      %v1699 = vsel %vm1597, %v1686, 0
      %1701 = vmatprep.subr.bf16.mxu0 0
      %1702 = vmatpush1.bf16.msra.mxu0 0
      %1703 = vmatprep.subr.bf16.mxu0 0
      %1704 = vmatpush1.bf16.msra.mxu0 0
      %1705 = vmatprep.subr.bf16.mxu0 0
      %1706 = vmatpush1.bf16.msra.mxu0 0
      %1707 = vmatprep.subr.bf16.mxu0 0
      %1708 = vmatpush1.bf16.msra.mxu0 0
      %1709 = vmatprep.subr.bf16.mxu0 0
      %1710 = vmatpush1.bf16.msra.mxu0 0
      %1711 = vmatprep.subr.bf16.mxu0 0
      %1712 = vmatpush1.bf16.msra.mxu0 0
      %1713 = vmatprep.subr.bf16.mxu0 0
      %1714 = vmatpush1.bf16.msra.mxu0 0
      %1715 = vmatprep.subr.bf16.mxu0 0
      %1716 = vmatpush1.bf16.msra.mxu0 %v1696
      %1717 = vmatprep.subr.bf16.mxu0 0
      %1718 = vmatpush2.bf16.msra.mxu0 0
      %1719 = vmatprep.subr.bf16.mxu0 0
      %1720 = vmatpush2.bf16.msra.mxu0 0
      %1721 = vmatprep.subr.bf16.mxu0 0
      %1722 = vmatpush2.bf16.msra.mxu0 0
      %1723 = vmatprep.subr.bf16.mxu0 0
      %1724 = vmatpush2.bf16.msra.mxu0 0
      %1725 = vmatprep.subr.bf16.mxu0 0
      %1726 = vmatpush2.bf16.msra.mxu0 0
      %1727 = vmatprep.subr.bf16.mxu0 0
      %1728 = vmatpush2.bf16.msra.mxu0 0
      %1729 = vmatprep.subr.bf16.mxu0 0
      %1730 = vmatpush2.bf16.msra.mxu0 0
      %1731 = vmatprep.subr.bf16.mxu0 0
      %1732 = vmatpush2.bf16.msra.mxu0 0
      %1733 = vmatprep.mubr.bf16.mxu0 0
      %1734 = vmatmul.mubr.bf16.gmra.mxu0 %v1699
      %v1735 = vpop.f32.mrf.mxu0
      %v1736 = vadd.f32 0.0, %v1735
      %v1737 = vpop.f32.mrf.mxu0
      %v1738 = vpop.f32.mrf.mxu0
      %v1739 = vpop.f32.mrf.mxu0
      %1740 = vdwg.mxu0
      %1742 = vrot.lane.b32.xlu0 %v1221, 96
      %v1743 = vpop.permute.xlu0 %1742
      %v1746 = vsel %vm1597, %v1687, 0
      %1748 = vmatprep.subr.bf16.mxu0 0
      %1749 = vmatpush1.bf16.msra.mxu0 0
      %1750 = vmatprep.subr.bf16.mxu0 0
      %1751 = vmatpush1.bf16.msra.mxu0 0
      %1752 = vmatprep.subr.bf16.mxu0 0
      %1753 = vmatpush1.bf16.msra.mxu0 0
      %1754 = vmatprep.subr.bf16.mxu0 0
      %1755 = vmatpush1.bf16.msra.mxu0 0
      %1756 = vmatprep.subr.bf16.mxu0 0
      %1757 = vmatpush1.bf16.msra.mxu0 0
      %1758 = vmatprep.subr.bf16.mxu0 0
      %1759 = vmatpush1.bf16.msra.mxu0 0
      %1760 = vmatprep.subr.bf16.mxu0 0
      %1761 = vmatpush1.bf16.msra.mxu0 0
      %1762 = vmatprep.subr.bf16.mxu0 0
      %1763 = vmatpush1.bf16.msra.mxu0 %v1743
      %1764 = vmatprep.subr.bf16.mxu0 0
      %1765 = vmatpush2.bf16.msra.mxu0 0
      %1766 = vmatprep.subr.bf16.mxu0 0
      %1767 = vmatpush2.bf16.msra.mxu0 0
      %1768 = vmatprep.subr.bf16.mxu0 0
      %1769 = vmatpush2.bf16.msra.mxu0 0
      %1770 = vmatprep.subr.bf16.mxu0 0
      %1771 = vmatpush2.bf16.msra.mxu0 0
      %1772 = vmatprep.subr.bf16.mxu0 0
      %1773 = vmatpush2.bf16.msra.mxu0 0
      %1774 = vmatprep.subr.bf16.mxu0 0
      %1775 = vmatpush2.bf16.msra.mxu0 0
      %1776 = vmatprep.subr.bf16.mxu0 0
      %1777 = vmatpush2.bf16.msra.mxu0 0
      %1778 = vmatprep.subr.bf16.mxu0 0
      %1779 = vmatpush2.bf16.msra.mxu0 0
      %1780 = vmatprep.mubr.bf16.mxu0 0
      %1781 = vmatmul.mubr.bf16.gmra.mxu0 %v1746
      %v1782 = vpop.f32.mrf.mxu0
      %v1783 = vadd.f32 0.0, %v1782
      %v1784 = vpop.f32.mrf.mxu0
      %v1785 = vpop.f32.mrf.mxu0
      %v1786 = vpop.f32.mrf.mxu0
      %1787 = vdwg.mxu0
      %1789 = vrot.lane.b32.xlu0 %v1222, 96
      %v1790 = vpop.permute.xlu0 %1789
      %v1793 = vsel %vm1597, %v1688, 0
      %1795 = vmatprep.subr.bf16.mxu0 0
      %1796 = vmatpush1.bf16.msra.mxu0 0
      %1797 = vmatprep.subr.bf16.mxu0 0
      %1798 = vmatpush1.bf16.msra.mxu0 0
      %1799 = vmatprep.subr.bf16.mxu0 0
      %1800 = vmatpush1.bf16.msra.mxu0 0
      %1801 = vmatprep.subr.bf16.mxu0 0
      %1802 = vmatpush1.bf16.msra.mxu0 0
      %1803 = vmatprep.subr.bf16.mxu0 0
      %1804 = vmatpush1.bf16.msra.mxu0 0
      %1805 = vmatprep.subr.bf16.mxu0 0
      %1806 = vmatpush1.bf16.msra.mxu0 0
      %1807 = vmatprep.subr.bf16.mxu0 0
      %1808 = vmatpush1.bf16.msra.mxu0 0
      %1809 = vmatprep.subr.bf16.mxu0 0
      %1810 = vmatpush1.bf16.msra.mxu0 %v1790
      %1811 = vmatprep.subr.bf16.mxu0 0
      %1812 = vmatpush2.bf16.msra.mxu0 0
      %1813 = vmatprep.subr.bf16.mxu0 0
      %1814 = vmatpush2.bf16.msra.mxu0 0
      %1815 = vmatprep.subr.bf16.mxu0 0
      %1816 = vmatpush2.bf16.msra.mxu0 0
      %1817 = vmatprep.subr.bf16.mxu0 0
      %1818 = vmatpush2.bf16.msra.mxu0 0
      %1819 = vmatprep.subr.bf16.mxu0 0
      %1820 = vmatpush2.bf16.msra.mxu0 0
      %1821 = vmatprep.subr.bf16.mxu0 0
      %1822 = vmatpush2.bf16.msra.mxu0 0
      %1823 = vmatprep.subr.bf16.mxu0 0
      %1824 = vmatpush2.bf16.msra.mxu0 0
      %1825 = vmatprep.subr.bf16.mxu0 0
      %1826 = vmatpush2.bf16.msra.mxu0 0
      %1827 = vmatprep.mubr.bf16.mxu0 0
      %1828 = vmatmul.mubr.bf16.gmra.mxu0 %v1793
      %v1829 = vpop.f32.mrf.mxu0
      %v1830 = vadd.f32 0.0, %v1829
      %v1831 = vpop.f32.mrf.mxu0
      %v1832 = vpop.f32.mrf.mxu0
      %v1833 = vpop.f32.mrf.mxu0
      %1834 = vdwg.mxu0
      %1836 = vrot.lane.b32.xlu0 %v1223, 96
      %v1837 = vpop.permute.xlu0 %1836
      %v1840 = vsel %vm1597, %v1689, 0
      %1842 = vmatprep.subr.bf16.mxu0 0
      %1843 = vmatpush1.bf16.msra.mxu0 0
      %1844 = vmatprep.subr.bf16.mxu0 0
      %1845 = vmatpush1.bf16.msra.mxu0 0
      %1846 = vmatprep.subr.bf16.mxu0 0
      %1847 = vmatpush1.bf16.msra.mxu0 0
      %1848 = vmatprep.subr.bf16.mxu0 0
      %1849 = vmatpush1.bf16.msra.mxu0 0
      %1850 = vmatprep.subr.bf16.mxu0 0
      %1851 = vmatpush1.bf16.msra.mxu0 0
      %1852 = vmatprep.subr.bf16.mxu0 0
      %1853 = vmatpush1.bf16.msra.mxu0 0
      %1854 = vmatprep.subr.bf16.mxu0 0
      %1855 = vmatpush1.bf16.msra.mxu0 0
      %1856 = vmatprep.subr.bf16.mxu0 0
      %1857 = vmatpush1.bf16.msra.mxu0 %v1837
      %1858 = vmatprep.subr.bf16.mxu0 0
      %1859 = vmatpush2.bf16.msra.mxu0 0
      %1860 = vmatprep.subr.bf16.mxu0 0
      %1861 = vmatpush2.bf16.msra.mxu0 0
      %1862 = vmatprep.subr.bf16.mxu0 0
      %1863 = vmatpush2.bf16.msra.mxu0 0
      %1864 = vmatprep.subr.bf16.mxu0 0
      %1865 = vmatpush2.bf16.msra.mxu0 0
      %1866 = vmatprep.subr.bf16.mxu0 0
      %1867 = vmatpush2.bf16.msra.mxu0 0
      %1868 = vmatprep.subr.bf16.mxu0 0
      %1869 = vmatpush2.bf16.msra.mxu0 0
      %1870 = vmatprep.subr.bf16.mxu0 0
      %1871 = vmatpush2.bf16.msra.mxu0 0
      %1872 = vmatprep.subr.bf16.mxu0 0
      %1873 = vmatpush2.bf16.msra.mxu0 0
      %1874 = vmatprep.mubr.bf16.mxu0 0
      %1875 = vmatmul.mubr.bf16.gmra.mxu0 %v1840
      %v1876 = vpop.f32.mrf.mxu0
      %v1877 = vadd.f32 0.0, %v1876
      %v1878 = vpop.f32.mrf.mxu0
      %v1879 = vpop.f32.mrf.mxu0
      %v1880 = vpop.f32.mrf.mxu0
      %1881 = vdwg.mxu0
      %1883 = vrot.lane.b32.xlu0 %v1224, 96
      %v1884 = vpop.permute.xlu0 %1883
      %v1887 = vsel %vm1597, %v1690, 0
      %1889 = vmatprep.subr.bf16.mxu0 0
      %1890 = vmatpush1.bf16.msra.mxu0 0
      %1891 = vmatprep.subr.bf16.mxu0 0
      %1892 = vmatpush1.bf16.msra.mxu0 0
      %1893 = vmatprep.subr.bf16.mxu0 0
      %1894 = vmatpush1.bf16.msra.mxu0 0
      %1895 = vmatprep.subr.bf16.mxu0 0
      %1896 = vmatpush1.bf16.msra.mxu0 0
      %1897 = vmatprep.subr.bf16.mxu0 0
      %1898 = vmatpush1.bf16.msra.mxu0 0
      %1899 = vmatprep.subr.bf16.mxu0 0
      %1900 = vmatpush1.bf16.msra.mxu0 0
      %1901 = vmatprep.subr.bf16.mxu0 0
      %1902 = vmatpush1.bf16.msra.mxu0 0
      %1903 = vmatprep.subr.bf16.mxu0 0
      %1904 = vmatpush1.bf16.msra.mxu0 %v1884
      %1905 = vmatprep.subr.bf16.mxu0 0
      %1906 = vmatpush2.bf16.msra.mxu0 0
      %1907 = vmatprep.subr.bf16.mxu0 0
      %1908 = vmatpush2.bf16.msra.mxu0 0
      %1909 = vmatprep.subr.bf16.mxu0 0
      %1910 = vmatpush2.bf16.msra.mxu0 0
      %1911 = vmatprep.subr.bf16.mxu0 0
      %1912 = vmatpush2.bf16.msra.mxu0 0
      %1913 = vmatprep.subr.bf16.mxu0 0
      %1914 = vmatpush2.bf16.msra.mxu0 0
      %1915 = vmatprep.subr.bf16.mxu0 0
      %1916 = vmatpush2.bf16.msra.mxu0 0
      %1917 = vmatprep.subr.bf16.mxu0 0
      %1918 = vmatpush2.bf16.msra.mxu0 0
      %1919 = vmatprep.subr.bf16.mxu0 0
      %1920 = vmatpush2.bf16.msra.mxu0 0
      %1921 = vmatprep.mubr.bf16.mxu0 0
      %1922 = vmatmul.mubr.bf16.gmra.mxu0 %v1887
      %v1923 = vpop.f32.mrf.mxu0
      %v1924 = vadd.f32 0.0, %v1923
      %v1925 = vpop.f32.mrf.mxu0
      %v1926 = vpop.f32.mrf.mxu0
      %v1927 = vpop.f32.mrf.mxu0
      %1928 = vdwg.mxu0
      %1930 = vrot.lane.b32.xlu0 %v1225, 96
      %v1931 = vpop.permute.xlu0 %1930
      %v1934 = vsel %vm1597, %v1691, 0
      %1936 = vmatprep.subr.bf16.mxu0 0
      %1937 = vmatpush1.bf16.msra.mxu0 0
      %1938 = vmatprep.subr.bf16.mxu0 0
      %1939 = vmatpush1.bf16.msra.mxu0 0
      %1940 = vmatprep.subr.bf16.mxu0 0
      %1941 = vmatpush1.bf16.msra.mxu0 0
      %1942 = vmatprep.subr.bf16.mxu0 0
      %1943 = vmatpush1.bf16.msra.mxu0 0
      %1944 = vmatprep.subr.bf16.mxu0 0
      %1945 = vmatpush1.bf16.msra.mxu0 0
      %1946 = vmatprep.subr.bf16.mxu0 0
      %1947 = vmatpush1.bf16.msra.mxu0 0
      %1948 = vmatprep.subr.bf16.mxu0 0
      %1949 = vmatpush1.bf16.msra.mxu0 0
      %1950 = vmatprep.subr.bf16.mxu0 0
      %1951 = vmatpush1.bf16.msra.mxu0 %v1931
      %1952 = vmatprep.subr.bf16.mxu0 0
      %1953 = vmatpush2.bf16.msra.mxu0 0
      %1954 = vmatprep.subr.bf16.mxu0 0
      %1955 = vmatpush2.bf16.msra.mxu0 0
      %1956 = vmatprep.subr.bf16.mxu0 0
      %1957 = vmatpush2.bf16.msra.mxu0 0
      %1958 = vmatprep.subr.bf16.mxu0 0
      %1959 = vmatpush2.bf16.msra.mxu0 0
      %1960 = vmatprep.subr.bf16.mxu0 0
      %1961 = vmatpush2.bf16.msra.mxu0 0
      %1962 = vmatprep.subr.bf16.mxu0 0
      %1963 = vmatpush2.bf16.msra.mxu0 0
      %1964 = vmatprep.subr.bf16.mxu0 0
      %1965 = vmatpush2.bf16.msra.mxu0 0
      %1966 = vmatprep.subr.bf16.mxu0 0
      %1967 = vmatpush2.bf16.msra.mxu0 0
      %1968 = vmatprep.mubr.bf16.mxu0 0
      %1969 = vmatmul.mubr.bf16.gmra.mxu0 %v1934
      %v1970 = vpop.f32.mrf.mxu0
      %v1971 = vadd.f32 0.0, %v1970
      %v1972 = vpop.f32.mrf.mxu0
      %v1973 = vpop.f32.mrf.mxu0
      %v1974 = vpop.f32.mrf.mxu0
      %1975 = vdwg.mxu0
      %1977 = vrot.lane.b32.xlu0 %v1226, 96
      %v1978 = vpop.permute.xlu0 %1977
      %v1981 = vsel %vm1597, %v1692, 0
      %1983 = vmatprep.subr.bf16.mxu0 0
      %1984 = vmatpush1.bf16.msra.mxu0 0
      %1985 = vmatprep.subr.bf16.mxu0 0
      %1986 = vmatpush1.bf16.msra.mxu0 0
      %1987 = vmatprep.subr.bf16.mxu0 0
      %1988 = vmatpush1.bf16.msra.mxu0 0
      %1989 = vmatprep.subr.bf16.mxu0 0
      %1990 = vmatpush1.bf16.msra.mxu0 0
      %1991 = vmatprep.subr.bf16.mxu0 0
      %1992 = vmatpush1.bf16.msra.mxu0 0
      %1993 = vmatprep.subr.bf16.mxu0 0
      %1994 = vmatpush1.bf16.msra.mxu0 0
      %1995 = vmatprep.subr.bf16.mxu0 0
      %1996 = vmatpush1.bf16.msra.mxu0 0
      %1997 = vmatprep.subr.bf16.mxu0 0
      %1998 = vmatpush1.bf16.msra.mxu0 %v1978
      %1999 = vmatprep.subr.bf16.mxu0 0
      %2000 = vmatpush2.bf16.msra.mxu0 0
      %2001 = vmatprep.subr.bf16.mxu0 0
      %2002 = vmatpush2.bf16.msra.mxu0 0
      %2003 = vmatprep.subr.bf16.mxu0 0
      %2004 = vmatpush2.bf16.msra.mxu0 0
      %2005 = vmatprep.subr.bf16.mxu0 0
      %2006 = vmatpush2.bf16.msra.mxu0 0
      %2007 = vmatprep.subr.bf16.mxu0 0
      %2008 = vmatpush2.bf16.msra.mxu0 0
      %2009 = vmatprep.subr.bf16.mxu0 0
      %2010 = vmatpush2.bf16.msra.mxu0 0
      %2011 = vmatprep.subr.bf16.mxu0 0
      %2012 = vmatpush2.bf16.msra.mxu0 0
      %2013 = vmatprep.subr.bf16.mxu0 0
      %2014 = vmatpush2.bf16.msra.mxu0 0
      %2015 = vmatprep.mubr.bf16.mxu0 0
      %2016 = vmatmul.mubr.bf16.gmra.mxu0 %v1981
      %v2017 = vpop.f32.mrf.mxu0
      %v2018 = vadd.f32 0.0, %v2017
      %v2019 = vpop.f32.mrf.mxu0
      %v2020 = vpop.f32.mrf.mxu0
      %v2021 = vpop.f32.mrf.mxu0
      %2022 = vdwg.mxu0
      %2024 = vrot.lane.b32.xlu0 %v1227, 96
      %v2025 = vpop.permute.xlu0 %2024
      %v2028 = vsel %vm1597, %v1693, 0
      %2030 = vmatprep.subr.bf16.mxu0 0
      %2031 = vmatpush1.bf16.msra.mxu0 0
      %2032 = vmatprep.subr.bf16.mxu0 0
      %2033 = vmatpush1.bf16.msra.mxu0 0
      %2034 = vmatprep.subr.bf16.mxu0 0
      %2035 = vmatpush1.bf16.msra.mxu0 0
      %2036 = vmatprep.subr.bf16.mxu0 0
      %2037 = vmatpush1.bf16.msra.mxu0 0
      %2038 = vmatprep.subr.bf16.mxu0 0
      %2039 = vmatpush1.bf16.msra.mxu0 0
      %2040 = vmatprep.subr.bf16.mxu0 0
      %2041 = vmatpush1.bf16.msra.mxu0 0
      %2042 = vmatprep.subr.bf16.mxu0 0
      %2043 = vmatpush1.bf16.msra.mxu0 0
      %2044 = vmatprep.subr.bf16.mxu0 0
      %2045 = vmatpush1.bf16.msra.mxu0 %v2025
      %2046 = vmatprep.subr.bf16.mxu0 0
      %2047 = vmatpush2.bf16.msra.mxu0 0
      %2048 = vmatprep.subr.bf16.mxu0 0
      %2049 = vmatpush2.bf16.msra.mxu0 0
      %2050 = vmatprep.subr.bf16.mxu0 0
      %2051 = vmatpush2.bf16.msra.mxu0 0
      %2052 = vmatprep.subr.bf16.mxu0 0
      %2053 = vmatpush2.bf16.msra.mxu0 0
      %2054 = vmatprep.subr.bf16.mxu0 0
      %2055 = vmatpush2.bf16.msra.mxu0 0
      %2056 = vmatprep.subr.bf16.mxu0 0
      %2057 = vmatpush2.bf16.msra.mxu0 0
      %2058 = vmatprep.subr.bf16.mxu0 0
      %2059 = vmatpush2.bf16.msra.mxu0 0
      %2060 = vmatprep.subr.bf16.mxu0 0
      %2061 = vmatpush2.bf16.msra.mxu0 0
      %2062 = vmatprep.mubr.bf16.mxu0 0
      %2063 = vmatmul.mubr.bf16.gmra.mxu0 %v2028
      %v2064 = vpop.f32.mrf.mxu0
      %v2065 = vadd.f32 0.0, %v2064
      %v2066 = vpop.f32.mrf.mxu0
      %v2067 = vpop.f32.mrf.mxu0
      %v2068 = vpop.f32.mrf.mxu0
      %2069 = vdwg.mxu0
      %2071 = vrot.lane.b32.xlu0 %v1212, 120
      %v2072 = vpop.permute.xlu0 %2071
      %2073 = vrot.lane.b32.xlu0 %v1220, 120
      %v2074 = vpop.permute.xlu0 %2073
      %v2076 = vsel %vm1228, %v2072, 0
      %v2079 = vsel %vm1228, %v2074, 0
      %2081 = vmatprep.subr.bf16.mxu0 0
      %2082 = vmatpush1.bf16.xpose.msra.mxu0 0
      %2083 = vmatprep.subr.bf16.mxu0 0
      %2084 = vmatpush1.bf16.xpose.msra.mxu0 0
      %2085 = vmatprep.subr.bf16.mxu0 0
      %2086 = vmatpush1.bf16.xpose.msra.mxu0 0
      %2087 = vmatprep.subr.bf16.mxu0 0
      %2088 = vmatpush1.bf16.xpose.msra.mxu0 0
      %2089 = vmatprep.subr.bf16.mxu0 0
      %2090 = vmatpush1.bf16.xpose.msra.mxu0 0
      %2091 = vmatprep.subr.bf16.mxu0 0
      %2092 = vmatpush1.bf16.xpose.msra.mxu0 0
      %2093 = vmatprep.subr.bf16.mxu0 0
      %2094 = vmatpush1.bf16.xpose.msra.mxu0 0
      %2095 = vmatprep.subr.bf16.mxu0 0
      %2096 = vmatpush1.bf16.xpose.msra.mxu0 %v2079
      %2097 = vmatprep.subr.bf16.mxu0 0
      %2098 = vmatpush2.bf16.xpose.msra.mxu0 0
      %2099 = vmatprep.subr.bf16.mxu0 0
      %2100 = vmatpush2.bf16.xpose.msra.mxu0 0
      %2101 = vmatprep.subr.bf16.mxu0 0
      %2102 = vmatpush2.bf16.xpose.msra.mxu0 0
      %2103 = vmatprep.subr.bf16.mxu0 0
      %2104 = vmatpush2.bf16.xpose.msra.mxu0 0
      %2105 = vmatprep.subr.bf16.mxu0 0
      %2106 = vmatpush2.bf16.xpose.msra.mxu0 0
      %2107 = vmatprep.subr.bf16.mxu0 0
      %2108 = vmatpush2.bf16.xpose.msra.mxu0 0
      %2109 = vmatprep.subr.bf16.mxu0 0
      %2110 = vmatpush2.bf16.xpose.msra.mxu0 0
      %2111 = vmatprep.subr.bf16.mxu0 0
      %2112 = vmatpush2.bf16.xpose.msra.mxu0 0
      %2113 = vmatprep.mubr.bf16.mxu0 0
      %2114 = vmatmul.mubr.bf16.gmra.mxu0 %v2076
      %v2115 = vpop.f32.mrf.mxu0
      %v2116 = vadd.f32 0.0, %v2115
      %v2117 = vpop.f32.mrf.mxu0
      %v2118 = vpop.f32.mrf.mxu0
      %v2119 = vpop.f32.mrf.mxu0
      %2120 = vdwg.mxu0
      %2122 = vrot.lane.b32.xlu0 %v1213, 120
      %v2123 = vpop.permute.xlu0 %2122
      %2124 = vrot.lane.b32.xlu0 %v1221, 120
      %v2125 = vpop.permute.xlu0 %2124
      %v2127 = vsel %vm1228, %v2123, 0
      %v2130 = vsel %vm1228, %v2125, 0
      %2132 = vmatprep.subr.bf16.mxu0 0
      %2133 = vmatpush1.bf16.xpose.msra.mxu0 0
      %2134 = vmatprep.subr.bf16.mxu0 0
      %2135 = vmatpush1.bf16.xpose.msra.mxu0 0
      %2136 = vmatprep.subr.bf16.mxu0 0
      %2137 = vmatpush1.bf16.xpose.msra.mxu0 0
      %2138 = vmatprep.subr.bf16.mxu0 0
      %2139 = vmatpush1.bf16.xpose.msra.mxu0 0
      %2140 = vmatprep.subr.bf16.mxu0 0
      %2141 = vmatpush1.bf16.xpose.msra.mxu0 0
      %2142 = vmatprep.subr.bf16.mxu0 0
      %2143 = vmatpush1.bf16.xpose.msra.mxu0 0
      %2144 = vmatprep.subr.bf16.mxu0 0
      %2145 = vmatpush1.bf16.xpose.msra.mxu0 0
      %2146 = vmatprep.subr.bf16.mxu0 0
      %2147 = vmatpush1.bf16.xpose.msra.mxu0 %v2130
      %2148 = vmatprep.subr.bf16.mxu0 0
      %2149 = vmatpush2.bf16.xpose.msra.mxu0 0
      %2150 = vmatprep.subr.bf16.mxu0 0
      %2151 = vmatpush2.bf16.xpose.msra.mxu0 0
      %2152 = vmatprep.subr.bf16.mxu0 0
      %2153 = vmatpush2.bf16.xpose.msra.mxu0 0
      %2154 = vmatprep.subr.bf16.mxu0 0
      %2155 = vmatpush2.bf16.xpose.msra.mxu0 0
      %2156 = vmatprep.subr.bf16.mxu0 0
      %2157 = vmatpush2.bf16.xpose.msra.mxu0 0
      %2158 = vmatprep.subr.bf16.mxu0 0
      %2159 = vmatpush2.bf16.xpose.msra.mxu0 0
      %2160 = vmatprep.subr.bf16.mxu0 0
      %2161 = vmatpush2.bf16.xpose.msra.mxu0 0
      %2162 = vmatprep.subr.bf16.mxu0 0
      %2163 = vmatpush2.bf16.xpose.msra.mxu0 0
      %2164 = vmatprep.mubr.bf16.mxu0 0
      %2165 = vmatmul.mubr.bf16.gmra.mxu0 %v2127
      %v2166 = vpop.f32.mrf.mxu0
      %v2167 = vadd.f32 0.0, %v2166
      %v2168 = vpop.f32.mrf.mxu0
      %v2169 = vpop.f32.mrf.mxu0
      %v2170 = vpop.f32.mrf.mxu0
      %2171 = vdwg.mxu0
      %2173 = vrot.lane.b32.xlu0 %v1214, 120
      %v2174 = vpop.permute.xlu0 %2173
      %2175 = vrot.lane.b32.xlu0 %v1222, 120
      %v2176 = vpop.permute.xlu0 %2175
      %v2178 = vsel %vm1228, %v2174, 0
      %v2181 = vsel %vm1228, %v2176, 0
      %2183 = vmatprep.subr.bf16.mxu0 0
      %2184 = vmatpush1.bf16.xpose.msra.mxu0 0
      %2185 = vmatprep.subr.bf16.mxu0 0
      %2186 = vmatpush1.bf16.xpose.msra.mxu0 0
      %2187 = vmatprep.subr.bf16.mxu0 0
      %2188 = vmatpush1.bf16.xpose.msra.mxu0 0
      %2189 = vmatprep.subr.bf16.mxu0 0
      %2190 = vmatpush1.bf16.xpose.msra.mxu0 0
      %2191 = vmatprep.subr.bf16.mxu0 0
      %2192 = vmatpush1.bf16.xpose.msra.mxu0 0
      %2193 = vmatprep.subr.bf16.mxu0 0
      %2194 = vmatpush1.bf16.xpose.msra.mxu0 0
      %2195 = vmatprep.subr.bf16.mxu0 0
      %2196 = vmatpush1.bf16.xpose.msra.mxu0 0
      %2197 = vmatprep.subr.bf16.mxu0 0
      %2198 = vmatpush1.bf16.xpose.msra.mxu0 %v2181
      %2199 = vmatprep.subr.bf16.mxu0 0
      %2200 = vmatpush2.bf16.xpose.msra.mxu0 0
      %2201 = vmatprep.subr.bf16.mxu0 0
      %2202 = vmatpush2.bf16.xpose.msra.mxu0 0
      %2203 = vmatprep.subr.bf16.mxu0 0
      %2204 = vmatpush2.bf16.xpose.msra.mxu0 0
      %2205 = vmatprep.subr.bf16.mxu0 0
      %2206 = vmatpush2.bf16.xpose.msra.mxu0 0
      %2207 = vmatprep.subr.bf16.mxu0 0
      %2208 = vmatpush2.bf16.xpose.msra.mxu0 0
      %2209 = vmatprep.subr.bf16.mxu0 0
      %2210 = vmatpush2.bf16.xpose.msra.mxu0 0
      %2211 = vmatprep.subr.bf16.mxu0 0
      %2212 = vmatpush2.bf16.xpose.msra.mxu0 0
      %2213 = vmatprep.subr.bf16.mxu0 0
      %2214 = vmatpush2.bf16.xpose.msra.mxu0 0
      %2215 = vmatprep.mubr.bf16.mxu0 0
      %2216 = vmatmul.mubr.bf16.gmra.mxu0 %v2178
      %v2217 = vpop.f32.mrf.mxu0
      %v2218 = vadd.f32 0.0, %v2217
      %v2219 = vpop.f32.mrf.mxu0
      %v2220 = vpop.f32.mrf.mxu0
      %v2221 = vpop.f32.mrf.mxu0
      %2222 = vdwg.mxu0
      %2224 = vrot.lane.b32.xlu0 %v1215, 120
      %v2225 = vpop.permute.xlu0 %2224
      %2226 = vrot.lane.b32.xlu0 %v1223, 120
      %v2227 = vpop.permute.xlu0 %2226
      %v2229 = vsel %vm1228, %v2225, 0
      %v2232 = vsel %vm1228, %v2227, 0
      %2234 = vmatprep.subr.bf16.mxu0 0
      %2235 = vmatpush1.bf16.xpose.msra.mxu0 0
      %2236 = vmatprep.subr.bf16.mxu0 0
      %2237 = vmatpush1.bf16.xpose.msra.mxu0 0
      %2238 = vmatprep.subr.bf16.mxu0 0
      %2239 = vmatpush1.bf16.xpose.msra.mxu0 0
      %2240 = vmatprep.subr.bf16.mxu0 0
      %2241 = vmatpush1.bf16.xpose.msra.mxu0 0
      %2242 = vmatprep.subr.bf16.mxu0 0
      %2243 = vmatpush1.bf16.xpose.msra.mxu0 0
      %2244 = vmatprep.subr.bf16.mxu0 0
      %2245 = vmatpush1.bf16.xpose.msra.mxu0 0
      %2246 = vmatprep.subr.bf16.mxu0 0
      %2247 = vmatpush1.bf16.xpose.msra.mxu0 0
      %2248 = vmatprep.subr.bf16.mxu0 0
      %2249 = vmatpush1.bf16.xpose.msra.mxu0 %v2232
      %2250 = vmatprep.subr.bf16.mxu0 0
      %2251 = vmatpush2.bf16.xpose.msra.mxu0 0
      %2252 = vmatprep.subr.bf16.mxu0 0
      %2253 = vmatpush2.bf16.xpose.msra.mxu0 0
      %2254 = vmatprep.subr.bf16.mxu0 0
      %2255 = vmatpush2.bf16.xpose.msra.mxu0 0
      %2256 = vmatprep.subr.bf16.mxu0 0
      %2257 = vmatpush2.bf16.xpose.msra.mxu0 0
      %2258 = vmatprep.subr.bf16.mxu0 0
      %2259 = vmatpush2.bf16.xpose.msra.mxu0 0
      %2260 = vmatprep.subr.bf16.mxu0 0
      %2261 = vmatpush2.bf16.xpose.msra.mxu0 0
      %2262 = vmatprep.subr.bf16.mxu0 0
      %2263 = vmatpush2.bf16.xpose.msra.mxu0 0
      %2264 = vmatprep.subr.bf16.mxu0 0
      %2265 = vmatpush2.bf16.xpose.msra.mxu0 0
      %2266 = vmatprep.mubr.bf16.mxu0 0
      %2267 = vmatmul.mubr.bf16.gmra.mxu0 %v2229
      %v2268 = vpop.f32.mrf.mxu0
      %v2269 = vadd.f32 0.0, %v2268
      %v2270 = vpop.f32.mrf.mxu0
      %v2271 = vpop.f32.mrf.mxu0
      %v2272 = vpop.f32.mrf.mxu0
      %2273 = vdwg.mxu0
      %2275 = vrot.lane.b32.xlu0 %v1216, 120
      %v2276 = vpop.permute.xlu0 %2275
      %2277 = vrot.lane.b32.xlu0 %v1224, 120
      %v2278 = vpop.permute.xlu0 %2277
      %v2280 = vsel %vm1228, %v2276, 0
      %v2283 = vsel %vm1228, %v2278, 0
      %2285 = vmatprep.subr.bf16.mxu0 0
      %2286 = vmatpush1.bf16.xpose.msra.mxu0 0
      %2287 = vmatprep.subr.bf16.mxu0 0
      %2288 = vmatpush1.bf16.xpose.msra.mxu0 0
      %2289 = vmatprep.subr.bf16.mxu0 0
      %2290 = vmatpush1.bf16.xpose.msra.mxu0 0
      %2291 = vmatprep.subr.bf16.mxu0 0
      %2292 = vmatpush1.bf16.xpose.msra.mxu0 0
      %2293 = vmatprep.subr.bf16.mxu0 0
      %2294 = vmatpush1.bf16.xpose.msra.mxu0 0
      %2295 = vmatprep.subr.bf16.mxu0 0
      %2296 = vmatpush1.bf16.xpose.msra.mxu0 0
      %2297 = vmatprep.subr.bf16.mxu0 0
      %2298 = vmatpush1.bf16.xpose.msra.mxu0 0
      %2299 = vmatprep.subr.bf16.mxu0 0
      %2300 = vmatpush1.bf16.xpose.msra.mxu0 %v2283
      %2301 = vmatprep.subr.bf16.mxu0 0
      %2302 = vmatpush2.bf16.xpose.msra.mxu0 0
      %2303 = vmatprep.subr.bf16.mxu0 0
      %2304 = vmatpush2.bf16.xpose.msra.mxu0 0
      %2305 = vmatprep.subr.bf16.mxu0 0
      %2306 = vmatpush2.bf16.xpose.msra.mxu0 0
      %2307 = vmatprep.subr.bf16.mxu0 0
      %2308 = vmatpush2.bf16.xpose.msra.mxu0 0
      %2309 = vmatprep.subr.bf16.mxu0 0
      %2310 = vmatpush2.bf16.xpose.msra.mxu0 0
      %2311 = vmatprep.subr.bf16.mxu0 0
      %2312 = vmatpush2.bf16.xpose.msra.mxu0 0
      %2313 = vmatprep.subr.bf16.mxu0 0
      %2314 = vmatpush2.bf16.xpose.msra.mxu0 0
      %2315 = vmatprep.subr.bf16.mxu0 0
      %2316 = vmatpush2.bf16.xpose.msra.mxu0 0
      %2317 = vmatprep.mubr.bf16.mxu0 0
      %2318 = vmatmul.mubr.bf16.gmra.mxu0 %v2280
      %v2319 = vpop.f32.mrf.mxu0
      %v2320 = vadd.f32 0.0, %v2319
      %v2321 = vpop.f32.mrf.mxu0
      %v2322 = vpop.f32.mrf.mxu0
      %v2323 = vpop.f32.mrf.mxu0
      %2324 = vdwg.mxu0
      %2326 = vrot.lane.b32.xlu0 %v1217, 120
      %v2327 = vpop.permute.xlu0 %2326
      %2328 = vrot.lane.b32.xlu0 %v1225, 120
      %v2329 = vpop.permute.xlu0 %2328
      %v2331 = vsel %vm1228, %v2327, 0
      %v2334 = vsel %vm1228, %v2329, 0
      %2336 = vmatprep.subr.bf16.mxu0 0
      %2337 = vmatpush1.bf16.xpose.msra.mxu0 0
      %2338 = vmatprep.subr.bf16.mxu0 0
      %2339 = vmatpush1.bf16.xpose.msra.mxu0 0
      %2340 = vmatprep.subr.bf16.mxu0 0
      %2341 = vmatpush1.bf16.xpose.msra.mxu0 0
      %2342 = vmatprep.subr.bf16.mxu0 0
      %2343 = vmatpush1.bf16.xpose.msra.mxu0 0
      %2344 = vmatprep.subr.bf16.mxu0 0
      %2345 = vmatpush1.bf16.xpose.msra.mxu0 0
      %2346 = vmatprep.subr.bf16.mxu0 0
      %2347 = vmatpush1.bf16.xpose.msra.mxu0 0
      %2348 = vmatprep.subr.bf16.mxu0 0
      %2349 = vmatpush1.bf16.xpose.msra.mxu0 0
      %2350 = vmatprep.subr.bf16.mxu0 0
      %2351 = vmatpush1.bf16.xpose.msra.mxu0 %v2334
      %2352 = vmatprep.subr.bf16.mxu0 0
      %2353 = vmatpush2.bf16.xpose.msra.mxu0 0
      %2354 = vmatprep.subr.bf16.mxu0 0
      %2355 = vmatpush2.bf16.xpose.msra.mxu0 0
      %2356 = vmatprep.subr.bf16.mxu0 0
      %2357 = vmatpush2.bf16.xpose.msra.mxu0 0
      %2358 = vmatprep.subr.bf16.mxu0 0
      %2359 = vmatpush2.bf16.xpose.msra.mxu0 0
      %2360 = vmatprep.subr.bf16.mxu0 0
      %2361 = vmatpush2.bf16.xpose.msra.mxu0 0
      %2362 = vmatprep.subr.bf16.mxu0 0
      %2363 = vmatpush2.bf16.xpose.msra.mxu0 0
      %2364 = vmatprep.subr.bf16.mxu0 0
      %2365 = vmatpush2.bf16.xpose.msra.mxu0 0
      %2366 = vmatprep.subr.bf16.mxu0 0
      %2367 = vmatpush2.bf16.xpose.msra.mxu0 0
      %2368 = vmatprep.mubr.bf16.mxu0 0
      %2369 = vmatmul.mubr.bf16.gmra.mxu0 %v2331
      %v2370 = vpop.f32.mrf.mxu0
      %v2371 = vadd.f32 0.0, %v2370
      %v2372 = vpop.f32.mrf.mxu0
      %v2373 = vpop.f32.mrf.mxu0
      %v2374 = vpop.f32.mrf.mxu0
      %2375 = vdwg.mxu0
      %2377 = vrot.lane.b32.xlu0 %v1218, 120
      %v2378 = vpop.permute.xlu0 %2377
      %2379 = vrot.lane.b32.xlu0 %v1226, 120
      %v2380 = vpop.permute.xlu0 %2379
      %v2382 = vsel %vm1228, %v2378, 0
      %v2385 = vsel %vm1228, %v2380, 0
      %2387 = vmatprep.subr.bf16.mxu0 0
      %2388 = vmatpush1.bf16.xpose.msra.mxu0 0
      %2389 = vmatprep.subr.bf16.mxu0 0
      %2390 = vmatpush1.bf16.xpose.msra.mxu0 0
      %2391 = vmatprep.subr.bf16.mxu0 0
      %2392 = vmatpush1.bf16.xpose.msra.mxu0 0
      %2393 = vmatprep.subr.bf16.mxu0 0
      %2394 = vmatpush1.bf16.xpose.msra.mxu0 0
      %2395 = vmatprep.subr.bf16.mxu0 0
      %2396 = vmatpush1.bf16.xpose.msra.mxu0 0
      %2397 = vmatprep.subr.bf16.mxu0 0
      %2398 = vmatpush1.bf16.xpose.msra.mxu0 0
      %2399 = vmatprep.subr.bf16.mxu0 0
      %2400 = vmatpush1.bf16.xpose.msra.mxu0 0
      %2401 = vmatprep.subr.bf16.mxu0 0
      %2402 = vmatpush1.bf16.xpose.msra.mxu0 %v2385
      %2403 = vmatprep.subr.bf16.mxu0 0
      %2404 = vmatpush2.bf16.xpose.msra.mxu0 0
      %2405 = vmatprep.subr.bf16.mxu0 0
      %2406 = vmatpush2.bf16.xpose.msra.mxu0 0
      %2407 = vmatprep.subr.bf16.mxu0 0
      %2408 = vmatpush2.bf16.xpose.msra.mxu0 0
      %2409 = vmatprep.subr.bf16.mxu0 0
      %2410 = vmatpush2.bf16.xpose.msra.mxu0 0
      %2411 = vmatprep.subr.bf16.mxu0 0
      %2412 = vmatpush2.bf16.xpose.msra.mxu0 0
      %2413 = vmatprep.subr.bf16.mxu0 0
      %2414 = vmatpush2.bf16.xpose.msra.mxu0 0
      %2415 = vmatprep.subr.bf16.mxu0 0
      %2416 = vmatpush2.bf16.xpose.msra.mxu0 0
      %2417 = vmatprep.subr.bf16.mxu0 0
      %2418 = vmatpush2.bf16.xpose.msra.mxu0 0
      %2419 = vmatprep.mubr.bf16.mxu0 0
      %2420 = vmatmul.mubr.bf16.gmra.mxu0 %v2382
      %v2421 = vpop.f32.mrf.mxu0
      %v2422 = vadd.f32 0.0, %v2421
      %v2423 = vpop.f32.mrf.mxu0
      %v2424 = vpop.f32.mrf.mxu0
      %v2425 = vpop.f32.mrf.mxu0
      %2426 = vdwg.mxu0
      %2428 = vrot.lane.b32.xlu0 %v1219, 120
      %v2429 = vpop.permute.xlu0 %2428
      %2430 = vrot.lane.b32.xlu0 %v1227, 120
      %v2431 = vpop.permute.xlu0 %2430
      %v2433 = vsel %vm1228, %v2429, 0
      %v2436 = vsel %vm1228, %v2431, 0
      %2438 = vmatprep.subr.bf16.mxu0 0
      %2439 = vmatpush1.bf16.xpose.msra.mxu0 0
      %2440 = vmatprep.subr.bf16.mxu0 0
      %2441 = vmatpush1.bf16.xpose.msra.mxu0 0
      %2442 = vmatprep.subr.bf16.mxu0 0
      %2443 = vmatpush1.bf16.xpose.msra.mxu0 0
      %2444 = vmatprep.subr.bf16.mxu0 0
      %2445 = vmatpush1.bf16.xpose.msra.mxu0 0
      %2446 = vmatprep.subr.bf16.mxu0 0
      %2447 = vmatpush1.bf16.xpose.msra.mxu0 0
      %2448 = vmatprep.subr.bf16.mxu0 0
      %2449 = vmatpush1.bf16.xpose.msra.mxu0 0
      %2450 = vmatprep.subr.bf16.mxu0 0
      %2451 = vmatpush1.bf16.xpose.msra.mxu0 0
      %2452 = vmatprep.subr.bf16.mxu0 0
      %2453 = vmatpush1.bf16.xpose.msra.mxu0 %v2436
      %2454 = vmatprep.subr.bf16.mxu0 0
      %2455 = vmatpush2.bf16.xpose.msra.mxu0 0
      %2456 = vmatprep.subr.bf16.mxu0 0
      %2457 = vmatpush2.bf16.xpose.msra.mxu0 0
      %2458 = vmatprep.subr.bf16.mxu0 0
      %2459 = vmatpush2.bf16.xpose.msra.mxu0 0
      %2460 = vmatprep.subr.bf16.mxu0 0
      %2461 = vmatpush2.bf16.xpose.msra.mxu0 0
      %2462 = vmatprep.subr.bf16.mxu0 0
      %2463 = vmatpush2.bf16.xpose.msra.mxu0 0
      %2464 = vmatprep.subr.bf16.mxu0 0
      %2465 = vmatpush2.bf16.xpose.msra.mxu0 0
      %2466 = vmatprep.subr.bf16.mxu0 0
      %2467 = vmatpush2.bf16.xpose.msra.mxu0 0
      %2468 = vmatprep.subr.bf16.mxu0 0
      %2469 = vmatpush2.bf16.xpose.msra.mxu0 0
      %2470 = vmatprep.mubr.bf16.mxu0 0
      %2471 = vmatmul.mubr.bf16.gmra.mxu0 %v2433
      %v2472 = vpop.f32.mrf.mxu0
      %v2473 = vadd.f32 0.0, %v2472
      %v2474 = vpop.f32.mrf.mxu0
      %v2475 = vpop.f32.mrf.mxu0
      %v2476 = vpop.f32.mrf.mxu0
      %2477 = vdwg.mxu0
      %v2478 = vsel %vm1597, %v2116, -inf
      %2479 = vmax.xlane.f32.xlu0 %v2478
      %v2480 = vpop.xlane.xlu0 %2479
      %v2481 = vsel %vm1597, %v2167, -inf
      %2482 = vmax.xlane.f32.xlu0 %v2481
      %v2483 = vpop.xlane.xlu0 %2482
      %v2484 = vsel %vm1597, %v2218, -inf
      %2485 = vmax.xlane.f32.xlu0 %v2484
      %v2486 = vpop.xlane.xlu0 %2485
      %v2487 = vsel %vm1597, %v2269, -inf
      %2488 = vmax.xlane.f32.xlu0 %v2487
      %v2489 = vpop.xlane.xlu0 %2488
      %v2490 = vsel %vm1597, %v2320, -inf
      %2491 = vmax.xlane.f32.xlu0 %v2490
      %v2492 = vpop.xlane.xlu0 %2491
      %v2493 = vsel %vm1597, %v2371, -inf
      %2494 = vmax.xlane.f32.xlu0 %v2493
      %v2495 = vpop.xlane.xlu0 %2494
      %v2496 = vsel %vm1597, %v2422, -inf
      %2497 = vmax.xlane.f32.xlu0 %v2496
      %v2498 = vpop.xlane.xlu0 %2497
      %v2499 = vsel %vm1597, %v2473, -inf
      %2500 = vmax.xlane.f32.xlu0 %v2499
      %v2501 = vpop.xlane.xlu0 %2500
      %v2502 = vsub.f32 %v2116, %v2480
      %v2503 = vsub.f32 %v2167, %v2483
      %v2504 = vsub.f32 %v2218, %v2486
      %v2505 = vsub.f32 %v2269, %v2489
      %v2506 = vsub.f32 %v2320, %v2492
      %v2507 = vsub.f32 %v2371, %v2495
      %v2508 = vsub.f32 %v2422, %v2498
      %v2509 = vsub.f32 %v2473, %v2501
      %v2510 = vmul.f32 %v2502, 1.442695
      %v2511 = vpow.pop %v2510
      %v2512 = vmul.f32 %v2503, 1.442695
      %v2513 = vpow.pop %v2512
      %v2514 = vmul.f32 %v2504, 1.442695
      %v2515 = vpow.pop %v2514
      %v2516 = vmul.f32 %v2505, 1.442695
      %v2517 = vpow.pop %v2516
      %v2518 = vmul.f32 %v2506, 1.442695
      %v2519 = vpow.pop %v2518
      %v2520 = vmul.f32 %v2507, 1.442695
      %v2521 = vpow.pop %v2520
      %v2522 = vmul.f32 %v2508, 1.442695
      %v2523 = vpow.pop %v2522
      %v2524 = vmul.f32 %v2509, 1.442695
      %v2525 = vpow.pop %v2524
      %v2526 = vsel %vm1597, %v2511, 0.0
      %2527 = vadd.xlane.f32.xlu0 %v2526
      %v2528 = vpop.xlane.xlu0 %2527
      %v2529 = vsel %vm1597, %v2513, 0.0
      %2530 = vadd.xlane.f32.xlu0 %v2529
      %v2531 = vpop.xlane.xlu0 %2530
      %v2532 = vsel %vm1597, %v2515, 0.0
      %2533 = vadd.xlane.f32.xlu0 %v2532
      %v2534 = vpop.xlane.xlu0 %2533
      %v2535 = vsel %vm1597, %v2517, 0.0
      %2536 = vadd.xlane.f32.xlu0 %v2535
      %v2537 = vpop.xlane.xlu0 %2536
      %v2538 = vsel %vm1597, %v2519, 0.0
      %2539 = vadd.xlane.f32.xlu0 %v2538
      %v2540 = vpop.xlane.xlu0 %2539
      %v2541 = vsel %vm1597, %v2521, 0.0
      %2542 = vadd.xlane.f32.xlu0 %v2541
      %v2543 = vpop.xlane.xlu0 %2542
      %v2544 = vsel %vm1597, %v2523, 0.0
      %2545 = vadd.xlane.f32.xlu0 %v2544
      %v2546 = vpop.xlane.xlu0 %2545
      %v2547 = vsel %vm1597, %v2525, 0.0
      %2548 = vadd.xlane.f32.xlu0 %v2547
      %v2549 = vpop.xlane.xlu0 %2548
      %v2550 = vrcp.pop %v2528
      %v2551 = vrcp.pop %v2531
      %v2552 = vrcp.pop %v2534
      %v2553 = vrcp.pop %v2537
      %v2554 = vrcp.pop %v2540
      %v2555 = vrcp.pop %v2543
      %v2556 = vrcp.pop %v2546
      %v2557 = vrcp.pop %v2549
      %v2558 = vmul.f32 %v2511, %v2550
      %v2559 = vmul.f32 %v2513, %v2551
      %v2560 = vmul.f32 %v2515, %v2552
      %v2561 = vmul.f32 %v2517, %v2553
      %v2562 = vmul.f32 %v2519, %v2554
      %v2563 = vmul.f32 %v2521, %v2555
      %v2564 = vmul.f32 %v2523, %v2556
      %v2565 = vmul.f32 %v2525, %v2557
      %v2566 = vpack.c.bf16 %v2558, %v2558
      %v2567 = vpack.c.bf16 %v2559, %v2559
      %v2568 = vpack.c.bf16 %v2560, %v2560
      %v2569 = vpack.c.bf16 %v2561, %v2561
      %v2570 = vpack.c.bf16 %v2562, %v2562
      %v2571 = vpack.c.bf16 %v2563, %v2563
      %v2572 = vpack.c.bf16 %v2564, %v2564
      %v2573 = vpack.c.bf16 %v2565, %v2565
      %2574 = vrot.lane.b32.xlu0 %v1220, 88
      %v2575 = vpop.permute.xlu0 %2574
      %v2578 = vsel %vm1597, %v2566, 0
      %2580 = vmatprep.subr.bf16.mxu0 0
      %2581 = vmatpush1.bf16.msra.mxu0 0
      %2582 = vmatprep.subr.bf16.mxu0 0
      %2583 = vmatpush1.bf16.msra.mxu0 0
      %2584 = vmatprep.subr.bf16.mxu0 0
      %2585 = vmatpush1.bf16.msra.mxu0 0
      %2586 = vmatprep.subr.bf16.mxu0 0
      %2587 = vmatpush1.bf16.msra.mxu0 0
      %2588 = vmatprep.subr.bf16.mxu0 0
      %2589 = vmatpush1.bf16.msra.mxu0 0
      %2590 = vmatprep.subr.bf16.mxu0 0
      %2591 = vmatpush1.bf16.msra.mxu0 0
      %2592 = vmatprep.subr.bf16.mxu0 0
      %2593 = vmatpush1.bf16.msra.mxu0 0
      %2594 = vmatprep.subr.bf16.mxu0 0
      %2595 = vmatpush1.bf16.msra.mxu0 %v2575
      %2596 = vmatprep.subr.bf16.mxu0 0
      %2597 = vmatpush2.bf16.msra.mxu0 0
      %2598 = vmatprep.subr.bf16.mxu0 0
      %2599 = vmatpush2.bf16.msra.mxu0 0
      %2600 = vmatprep.subr.bf16.mxu0 0
      %2601 = vmatpush2.bf16.msra.mxu0 0
      %2602 = vmatprep.subr.bf16.mxu0 0
      %2603 = vmatpush2.bf16.msra.mxu0 0
      %2604 = vmatprep.subr.bf16.mxu0 0
      %2605 = vmatpush2.bf16.msra.mxu0 0
      %2606 = vmatprep.subr.bf16.mxu0 0
      %2607 = vmatpush2.bf16.msra.mxu0 0
      %2608 = vmatprep.subr.bf16.mxu0 0
      %2609 = vmatpush2.bf16.msra.mxu0 0
      %2610 = vmatprep.subr.bf16.mxu0 0
      %2611 = vmatpush2.bf16.msra.mxu0 0
      %2612 = vmatprep.mubr.bf16.mxu0 0
      %2613 = vmatmul.mubr.bf16.gmra.mxu0 %v2578
      %v2614 = vpop.f32.mrf.mxu0
      %v2615 = vadd.f32 0.0, %v2614
      %v2616 = vpop.f32.mrf.mxu0
      %v2617 = vpop.f32.mrf.mxu0
      %v2618 = vpop.f32.mrf.mxu0
      %2619 = vdwg.mxu0
      %2620 = vrot.lane.b32.xlu0 %v1221, 88
      %v2621 = vpop.permute.xlu0 %2620
      %v2624 = vsel %vm1597, %v2567, 0
      %2626 = vmatprep.subr.bf16.mxu0 0
      %2627 = vmatpush1.bf16.msra.mxu0 0
      %2628 = vmatprep.subr.bf16.mxu0 0
      %2629 = vmatpush1.bf16.msra.mxu0 0
      %2630 = vmatprep.subr.bf16.mxu0 0
      %2631 = vmatpush1.bf16.msra.mxu0 0
      %2632 = vmatprep.subr.bf16.mxu0 0
      %2633 = vmatpush1.bf16.msra.mxu0 0
      %2634 = vmatprep.subr.bf16.mxu0 0
      %2635 = vmatpush1.bf16.msra.mxu0 0
      %2636 = vmatprep.subr.bf16.mxu0 0
      %2637 = vmatpush1.bf16.msra.mxu0 0
      %2638 = vmatprep.subr.bf16.mxu0 0
      %2639 = vmatpush1.bf16.msra.mxu0 0
      %2640 = vmatprep.subr.bf16.mxu0 0
      %2641 = vmatpush1.bf16.msra.mxu0 %v2621
      %2642 = vmatprep.subr.bf16.mxu0 0
      %2643 = vmatpush2.bf16.msra.mxu0 0
      %2644 = vmatprep.subr.bf16.mxu0 0
      %2645 = vmatpush2.bf16.msra.mxu0 0
      %2646 = vmatprep.subr.bf16.mxu0 0
      %2647 = vmatpush2.bf16.msra.mxu0 0
      %2648 = vmatprep.subr.bf16.mxu0 0
      %2649 = vmatpush2.bf16.msra.mxu0 0
      %2650 = vmatprep.subr.bf16.mxu0 0
      %2651 = vmatpush2.bf16.msra.mxu0 0
      %2652 = vmatprep.subr.bf16.mxu0 0
      %2653 = vmatpush2.bf16.msra.mxu0 0
      %2654 = vmatprep.subr.bf16.mxu0 0
      %2655 = vmatpush2.bf16.msra.mxu0 0
      %2656 = vmatprep.subr.bf16.mxu0 0
      %2657 = vmatpush2.bf16.msra.mxu0 0
      %2658 = vmatprep.mubr.bf16.mxu0 0
      %2659 = vmatmul.mubr.bf16.gmra.mxu0 %v2624
      %v2660 = vpop.f32.mrf.mxu0
      %v2661 = vadd.f32 0.0, %v2660
      %v2662 = vpop.f32.mrf.mxu0
      %v2663 = vpop.f32.mrf.mxu0
      %v2664 = vpop.f32.mrf.mxu0
      %2665 = vdwg.mxu0
      %2666 = vrot.lane.b32.xlu0 %v1222, 88
      %v2667 = vpop.permute.xlu0 %2666
      %v2670 = vsel %vm1597, %v2568, 0
      %2672 = vmatprep.subr.bf16.mxu0 0
      %2673 = vmatpush1.bf16.msra.mxu0 0
      %2674 = vmatprep.subr.bf16.mxu0 0
      %2675 = vmatpush1.bf16.msra.mxu0 0
      %2676 = vmatprep.subr.bf16.mxu0 0
      %2677 = vmatpush1.bf16.msra.mxu0 0
      %2678 = vmatprep.subr.bf16.mxu0 0
      %2679 = vmatpush1.bf16.msra.mxu0 0
      %2680 = vmatprep.subr.bf16.mxu0 0
      %2681 = vmatpush1.bf16.msra.mxu0 0
      %2682 = vmatprep.subr.bf16.mxu0 0
      %2683 = vmatpush1.bf16.msra.mxu0 0
      %2684 = vmatprep.subr.bf16.mxu0 0
      %2685 = vmatpush1.bf16.msra.mxu0 0
      %2686 = vmatprep.subr.bf16.mxu0 0
      %2687 = vmatpush1.bf16.msra.mxu0 %v2667
      %2688 = vmatprep.subr.bf16.mxu0 0
      %2689 = vmatpush2.bf16.msra.mxu0 0
      %2690 = vmatprep.subr.bf16.mxu0 0
      %2691 = vmatpush2.bf16.msra.mxu0 0
      %2692 = vmatprep.subr.bf16.mxu0 0
      %2693 = vmatpush2.bf16.msra.mxu0 0
      %2694 = vmatprep.subr.bf16.mxu0 0
      %2695 = vmatpush2.bf16.msra.mxu0 0
      %2696 = vmatprep.subr.bf16.mxu0 0
      %2697 = vmatpush2.bf16.msra.mxu0 0
      %2698 = vmatprep.subr.bf16.mxu0 0
      %2699 = vmatpush2.bf16.msra.mxu0 0
      %2700 = vmatprep.subr.bf16.mxu0 0
      %2701 = vmatpush2.bf16.msra.mxu0 0
      %2702 = vmatprep.subr.bf16.mxu0 0
      %2703 = vmatpush2.bf16.msra.mxu0 0
      %2704 = vmatprep.mubr.bf16.mxu0 0
      %2705 = vmatmul.mubr.bf16.gmra.mxu0 %v2670
      %v2706 = vpop.f32.mrf.mxu0
      %v2707 = vadd.f32 0.0, %v2706
      %v2708 = vpop.f32.mrf.mxu0
      %v2709 = vpop.f32.mrf.mxu0
      %v2710 = vpop.f32.mrf.mxu0
      %2711 = vdwg.mxu0
      %2712 = vrot.lane.b32.xlu0 %v1223, 88
      %v2713 = vpop.permute.xlu0 %2712
      %v2716 = vsel %vm1597, %v2569, 0
      %2718 = vmatprep.subr.bf16.mxu0 0
      %2719 = vmatpush1.bf16.msra.mxu0 0
      %2720 = vmatprep.subr.bf16.mxu0 0
      %2721 = vmatpush1.bf16.msra.mxu0 0
      %2722 = vmatprep.subr.bf16.mxu0 0
      %2723 = vmatpush1.bf16.msra.mxu0 0
      %2724 = vmatprep.subr.bf16.mxu0 0
      %2725 = vmatpush1.bf16.msra.mxu0 0
      %2726 = vmatprep.subr.bf16.mxu0 0
      %2727 = vmatpush1.bf16.msra.mxu0 0
      %2728 = vmatprep.subr.bf16.mxu0 0
      %2729 = vmatpush1.bf16.msra.mxu0 0
      %2730 = vmatprep.subr.bf16.mxu0 0
      %2731 = vmatpush1.bf16.msra.mxu0 0
      %2732 = vmatprep.subr.bf16.mxu0 0
      %2733 = vmatpush1.bf16.msra.mxu0 %v2713
      %2734 = vmatprep.subr.bf16.mxu0 0
      %2735 = vmatpush2.bf16.msra.mxu0 0
      %2736 = vmatprep.subr.bf16.mxu0 0
      %2737 = vmatpush2.bf16.msra.mxu0 0
      %2738 = vmatprep.subr.bf16.mxu0 0
      %2739 = vmatpush2.bf16.msra.mxu0 0
      %2740 = vmatprep.subr.bf16.mxu0 0
      %2741 = vmatpush2.bf16.msra.mxu0 0
      %2742 = vmatprep.subr.bf16.mxu0 0
      %2743 = vmatpush2.bf16.msra.mxu0 0
      %2744 = vmatprep.subr.bf16.mxu0 0
      %2745 = vmatpush2.bf16.msra.mxu0 0
      %2746 = vmatprep.subr.bf16.mxu0 0
      %2747 = vmatpush2.bf16.msra.mxu0 0
      %2748 = vmatprep.subr.bf16.mxu0 0
      %2749 = vmatpush2.bf16.msra.mxu0 0
      %2750 = vmatprep.mubr.bf16.mxu0 0
      %2751 = vmatmul.mubr.bf16.gmra.mxu0 %v2716
      %v2752 = vpop.f32.mrf.mxu0
      %v2753 = vadd.f32 0.0, %v2752
      %v2754 = vpop.f32.mrf.mxu0
      %v2755 = vpop.f32.mrf.mxu0
      %v2756 = vpop.f32.mrf.mxu0
      %2757 = vdwg.mxu0
      %2758 = vrot.lane.b32.xlu0 %v1224, 88
      %v2759 = vpop.permute.xlu0 %2758
      %v2762 = vsel %vm1597, %v2570, 0
      %2764 = vmatprep.subr.bf16.mxu0 0
      %2765 = vmatpush1.bf16.msra.mxu0 0
      %2766 = vmatprep.subr.bf16.mxu0 0
      %2767 = vmatpush1.bf16.msra.mxu0 0
      %2768 = vmatprep.subr.bf16.mxu0 0
      %2769 = vmatpush1.bf16.msra.mxu0 0
      %2770 = vmatprep.subr.bf16.mxu0 0
      %2771 = vmatpush1.bf16.msra.mxu0 0
      %2772 = vmatprep.subr.bf16.mxu0 0
      %2773 = vmatpush1.bf16.msra.mxu0 0
      %2774 = vmatprep.subr.bf16.mxu0 0
      %2775 = vmatpush1.bf16.msra.mxu0 0
      %2776 = vmatprep.subr.bf16.mxu0 0
      %2777 = vmatpush1.bf16.msra.mxu0 0
      %2778 = vmatprep.subr.bf16.mxu0 0
      %2779 = vmatpush1.bf16.msra.mxu0 %v2759
      %2780 = vmatprep.subr.bf16.mxu0 0
      %2781 = vmatpush2.bf16.msra.mxu0 0
      %2782 = vmatprep.subr.bf16.mxu0 0
      %2783 = vmatpush2.bf16.msra.mxu0 0
      %2784 = vmatprep.subr.bf16.mxu0 0
      %2785 = vmatpush2.bf16.msra.mxu0 0
      %2786 = vmatprep.subr.bf16.mxu0 0
      %2787 = vmatpush2.bf16.msra.mxu0 0
      %2788 = vmatprep.subr.bf16.mxu0 0
      %2789 = vmatpush2.bf16.msra.mxu0 0
      %2790 = vmatprep.subr.bf16.mxu0 0
      %2791 = vmatpush2.bf16.msra.mxu0 0
      %2792 = vmatprep.subr.bf16.mxu0 0
      %2793 = vmatpush2.bf16.msra.mxu0 0
      %2794 = vmatprep.subr.bf16.mxu0 0
      %2795 = vmatpush2.bf16.msra.mxu0 0
      %2796 = vmatprep.mubr.bf16.mxu0 0
      %2797 = vmatmul.mubr.bf16.gmra.mxu0 %v2762
      %v2798 = vpop.f32.mrf.mxu0
      %v2799 = vadd.f32 0.0, %v2798
      %v2800 = vpop.f32.mrf.mxu0
      %v2801 = vpop.f32.mrf.mxu0
      %v2802 = vpop.f32.mrf.mxu0
      %2803 = vdwg.mxu0
      %2804 = vrot.lane.b32.xlu0 %v1225, 88
      %v2805 = vpop.permute.xlu0 %2804
      %v2808 = vsel %vm1597, %v2571, 0
      %2810 = vmatprep.subr.bf16.mxu0 0
      %2811 = vmatpush1.bf16.msra.mxu0 0
      %2812 = vmatprep.subr.bf16.mxu0 0
      %2813 = vmatpush1.bf16.msra.mxu0 0
      %2814 = vmatprep.subr.bf16.mxu0 0
      %2815 = vmatpush1.bf16.msra.mxu0 0
      %2816 = vmatprep.subr.bf16.mxu0 0
      %2817 = vmatpush1.bf16.msra.mxu0 0
      %2818 = vmatprep.subr.bf16.mxu0 0
      %2819 = vmatpush1.bf16.msra.mxu0 0
      %2820 = vmatprep.subr.bf16.mxu0 0
      %2821 = vmatpush1.bf16.msra.mxu0 0
      %2822 = vmatprep.subr.bf16.mxu0 0
      %2823 = vmatpush1.bf16.msra.mxu0 0
      %2824 = vmatprep.subr.bf16.mxu0 0
      %2825 = vmatpush1.bf16.msra.mxu0 %v2805
      %2826 = vmatprep.subr.bf16.mxu0 0
      %2827 = vmatpush2.bf16.msra.mxu0 0
      %2828 = vmatprep.subr.bf16.mxu0 0
      %2829 = vmatpush2.bf16.msra.mxu0 0
      %2830 = vmatprep.subr.bf16.mxu0 0
      %2831 = vmatpush2.bf16.msra.mxu0 0
      %2832 = vmatprep.subr.bf16.mxu0 0
      %2833 = vmatpush2.bf16.msra.mxu0 0
      %2834 = vmatprep.subr.bf16.mxu0 0
      %2835 = vmatpush2.bf16.msra.mxu0 0
      %2836 = vmatprep.subr.bf16.mxu0 0
      %2837 = vmatpush2.bf16.msra.mxu0 0
      %2838 = vmatprep.subr.bf16.mxu0 0
      %2839 = vmatpush2.bf16.msra.mxu0 0
      %2840 = vmatprep.subr.bf16.mxu0 0
      %2841 = vmatpush2.bf16.msra.mxu0 0
      %2842 = vmatprep.mubr.bf16.mxu0 0
      %2843 = vmatmul.mubr.bf16.gmra.mxu0 %v2808
      %v2844 = vpop.f32.mrf.mxu0
      %v2845 = vadd.f32 0.0, %v2844
      %v2846 = vpop.f32.mrf.mxu0
      %v2847 = vpop.f32.mrf.mxu0
      %v2848 = vpop.f32.mrf.mxu0
      %2849 = vdwg.mxu0
      %2850 = vrot.lane.b32.xlu0 %v1226, 88
      %v2851 = vpop.permute.xlu0 %2850
      %v2854 = vsel %vm1597, %v2572, 0
      %2856 = vmatprep.subr.bf16.mxu0 0
      %2857 = vmatpush1.bf16.msra.mxu0 0
      %2858 = vmatprep.subr.bf16.mxu0 0
      %2859 = vmatpush1.bf16.msra.mxu0 0
      %2860 = vmatprep.subr.bf16.mxu0 0
      %2861 = vmatpush1.bf16.msra.mxu0 0
      %2862 = vmatprep.subr.bf16.mxu0 0
      %2863 = vmatpush1.bf16.msra.mxu0 0
      %2864 = vmatprep.subr.bf16.mxu0 0
      %2865 = vmatpush1.bf16.msra.mxu0 0
      %2866 = vmatprep.subr.bf16.mxu0 0
      %2867 = vmatpush1.bf16.msra.mxu0 0
      %2868 = vmatprep.subr.bf16.mxu0 0
      %2869 = vmatpush1.bf16.msra.mxu0 0
      %2870 = vmatprep.subr.bf16.mxu0 0
      %2871 = vmatpush1.bf16.msra.mxu0 %v2851
      %2872 = vmatprep.subr.bf16.mxu0 0
      %2873 = vmatpush2.bf16.msra.mxu0 0
      %2874 = vmatprep.subr.bf16.mxu0 0
      %2875 = vmatpush2.bf16.msra.mxu0 0
      %2876 = vmatprep.subr.bf16.mxu0 0
      %2877 = vmatpush2.bf16.msra.mxu0 0
      %2878 = vmatprep.subr.bf16.mxu0 0
      %2879 = vmatpush2.bf16.msra.mxu0 0
      %2880 = vmatprep.subr.bf16.mxu0 0
      %2881 = vmatpush2.bf16.msra.mxu0 0
      %2882 = vmatprep.subr.bf16.mxu0 0
      %2883 = vmatpush2.bf16.msra.mxu0 0
      %2884 = vmatprep.subr.bf16.mxu0 0
      %2885 = vmatpush2.bf16.msra.mxu0 0
      %2886 = vmatprep.subr.bf16.mxu0 0
      %2887 = vmatpush2.bf16.msra.mxu0 0
      %2888 = vmatprep.mubr.bf16.mxu0 0
      %2889 = vmatmul.mubr.bf16.gmra.mxu0 %v2854
      %v2890 = vpop.f32.mrf.mxu0
      %v2891 = vadd.f32 0.0, %v2890
      %v2892 = vpop.f32.mrf.mxu0
      %v2893 = vpop.f32.mrf.mxu0
      %v2894 = vpop.f32.mrf.mxu0
      %2895 = vdwg.mxu0
      %2896 = vrot.lane.b32.xlu0 %v1227, 88
      %v2897 = vpop.permute.xlu0 %2896
      %v2900 = vsel %vm1597, %v2573, 0
      %2902 = vmatprep.subr.bf16.mxu0 0
      %2903 = vmatpush1.bf16.msra.mxu0 0
      %2904 = vmatprep.subr.bf16.mxu0 0
      %2905 = vmatpush1.bf16.msra.mxu0 0
      %2906 = vmatprep.subr.bf16.mxu0 0
      %2907 = vmatpush1.bf16.msra.mxu0 0
      %2908 = vmatprep.subr.bf16.mxu0 0
      %2909 = vmatpush1.bf16.msra.mxu0 0
      %2910 = vmatprep.subr.bf16.mxu0 0
      %2911 = vmatpush1.bf16.msra.mxu0 0
      %2912 = vmatprep.subr.bf16.mxu0 0
      %2913 = vmatpush1.bf16.msra.mxu0 0
      %2914 = vmatprep.subr.bf16.mxu0 0
      %2915 = vmatpush1.bf16.msra.mxu0 0
      %2916 = vmatprep.subr.bf16.mxu0 0
      %2917 = vmatpush1.bf16.msra.mxu0 %v2897
      %2918 = vmatprep.subr.bf16.mxu0 0
      %2919 = vmatpush2.bf16.msra.mxu0 0
      %2920 = vmatprep.subr.bf16.mxu0 0
      %2921 = vmatpush2.bf16.msra.mxu0 0
      %2922 = vmatprep.subr.bf16.mxu0 0
      %2923 = vmatpush2.bf16.msra.mxu0 0
      %2924 = vmatprep.subr.bf16.mxu0 0
      %2925 = vmatpush2.bf16.msra.mxu0 0
      %2926 = vmatprep.subr.bf16.mxu0 0
      %2927 = vmatpush2.bf16.msra.mxu0 0
      %2928 = vmatprep.subr.bf16.mxu0 0
      %2929 = vmatpush2.bf16.msra.mxu0 0
      %2930 = vmatprep.subr.bf16.mxu0 0
      %2931 = vmatpush2.bf16.msra.mxu0 0
      %2932 = vmatprep.subr.bf16.mxu0 0
      %2933 = vmatpush2.bf16.msra.mxu0 0
      %2934 = vmatprep.mubr.bf16.mxu0 0
      %2935 = vmatmul.mubr.bf16.gmra.mxu0 %v2900
      %v2936 = vpop.f32.mrf.mxu0
      %v2937 = vadd.f32 0.0, %v2936
      %v2938 = vpop.f32.mrf.mxu0
      %v2939 = vpop.f32.mrf.mxu0
      %v2940 = vpop.f32.mrf.mxu0
      %2941 = vdwg.mxu0
      %2942 = vrot.lane.b32.xlu0 %v1212, 112
      %v2943 = vpop.permute.xlu0 %2942
      %2944 = vrot.lane.b32.xlu0 %v1220, 112
      %v2945 = vpop.permute.xlu0 %2944
      %v2947 = vsel %vm1228, %v2943, 0
      %v2950 = vsel %vm1228, %v2945, 0
      %2952 = vmatprep.subr.bf16.mxu0 0
      %2953 = vmatpush1.bf16.xpose.msra.mxu0 0
      %2954 = vmatprep.subr.bf16.mxu0 0
      %2955 = vmatpush1.bf16.xpose.msra.mxu0 0
      %2956 = vmatprep.subr.bf16.mxu0 0
      %2957 = vmatpush1.bf16.xpose.msra.mxu0 0
      %2958 = vmatprep.subr.bf16.mxu0 0
      %2959 = vmatpush1.bf16.xpose.msra.mxu0 0
      %2960 = vmatprep.subr.bf16.mxu0 0
      %2961 = vmatpush1.bf16.xpose.msra.mxu0 0
      %2962 = vmatprep.subr.bf16.mxu0 0
      %2963 = vmatpush1.bf16.xpose.msra.mxu0 0
      %2964 = vmatprep.subr.bf16.mxu0 0
      %2965 = vmatpush1.bf16.xpose.msra.mxu0 0
      %2966 = vmatprep.subr.bf16.mxu0 0
      %2967 = vmatpush1.bf16.xpose.msra.mxu0 %v2950
      %2968 = vmatprep.subr.bf16.mxu0 0
      %2969 = vmatpush2.bf16.xpose.msra.mxu0 0
      %2970 = vmatprep.subr.bf16.mxu0 0
      %2971 = vmatpush2.bf16.xpose.msra.mxu0 0
      %2972 = vmatprep.subr.bf16.mxu0 0
      %2973 = vmatpush2.bf16.xpose.msra.mxu0 0
      %2974 = vmatprep.subr.bf16.mxu0 0
      %2975 = vmatpush2.bf16.xpose.msra.mxu0 0
      %2976 = vmatprep.subr.bf16.mxu0 0
      %2977 = vmatpush2.bf16.xpose.msra.mxu0 0
      %2978 = vmatprep.subr.bf16.mxu0 0
      %2979 = vmatpush2.bf16.xpose.msra.mxu0 0
      %2980 = vmatprep.subr.bf16.mxu0 0
      %2981 = vmatpush2.bf16.xpose.msra.mxu0 0
      %2982 = vmatprep.subr.bf16.mxu0 0
      %2983 = vmatpush2.bf16.xpose.msra.mxu0 0
      %2984 = vmatprep.mubr.bf16.mxu0 0
      %2985 = vmatmul.mubr.bf16.gmra.mxu0 %v2947
      %v2986 = vpop.f32.mrf.mxu0
      %v2987 = vadd.f32 0.0, %v2986
      %v2988 = vpop.f32.mrf.mxu0
      %v2989 = vpop.f32.mrf.mxu0
      %v2990 = vpop.f32.mrf.mxu0
      %2991 = vdwg.mxu0
      %2992 = vrot.lane.b32.xlu0 %v1213, 112
      %v2993 = vpop.permute.xlu0 %2992
      %2994 = vrot.lane.b32.xlu0 %v1221, 112
      %v2995 = vpop.permute.xlu0 %2994
      %v2997 = vsel %vm1228, %v2993, 0
      %v3000 = vsel %vm1228, %v2995, 0
      %3002 = vmatprep.subr.bf16.mxu0 0
      %3003 = vmatpush1.bf16.xpose.msra.mxu0 0
      %3004 = vmatprep.subr.bf16.mxu0 0
      %3005 = vmatpush1.bf16.xpose.msra.mxu0 0
      %3006 = vmatprep.subr.bf16.mxu0 0
      %3007 = vmatpush1.bf16.xpose.msra.mxu0 0
      %3008 = vmatprep.subr.bf16.mxu0 0
      %3009 = vmatpush1.bf16.xpose.msra.mxu0 0
      %3010 = vmatprep.subr.bf16.mxu0 0
      %3011 = vmatpush1.bf16.xpose.msra.mxu0 0
      %3012 = vmatprep.subr.bf16.mxu0 0
      %3013 = vmatpush1.bf16.xpose.msra.mxu0 0
      %3014 = vmatprep.subr.bf16.mxu0 0
      %3015 = vmatpush1.bf16.xpose.msra.mxu0 0
      %3016 = vmatprep.subr.bf16.mxu0 0
      %3017 = vmatpush1.bf16.xpose.msra.mxu0 %v3000
      %3018 = vmatprep.subr.bf16.mxu0 0
      %3019 = vmatpush2.bf16.xpose.msra.mxu0 0
      %3020 = vmatprep.subr.bf16.mxu0 0
      %3021 = vmatpush2.bf16.xpose.msra.mxu0 0
      %3022 = vmatprep.subr.bf16.mxu0 0
      %3023 = vmatpush2.bf16.xpose.msra.mxu0 0
      %3024 = vmatprep.subr.bf16.mxu0 0
      %3025 = vmatpush2.bf16.xpose.msra.mxu0 0
      %3026 = vmatprep.subr.bf16.mxu0 0
      %3027 = vmatpush2.bf16.xpose.msra.mxu0 0
      %3028 = vmatprep.subr.bf16.mxu0 0
      %3029 = vmatpush2.bf16.xpose.msra.mxu0 0
      %3030 = vmatprep.subr.bf16.mxu0 0
      %3031 = vmatpush2.bf16.xpose.msra.mxu0 0
      %3032 = vmatprep.subr.bf16.mxu0 0
      %3033 = vmatpush2.bf16.xpose.msra.mxu0 0
      %3034 = vmatprep.mubr.bf16.mxu0 0
      %3035 = vmatmul.mubr.bf16.gmra.mxu0 %v2997
      %v3036 = vpop.f32.mrf.mxu0
      %v3037 = vadd.f32 0.0, %v3036
      %v3038 = vpop.f32.mrf.mxu0
      %v3039 = vpop.f32.mrf.mxu0
      %v3040 = vpop.f32.mrf.mxu0
      %3041 = vdwg.mxu0
      %3042 = vrot.lane.b32.xlu0 %v1214, 112
      %v3043 = vpop.permute.xlu0 %3042
      %3044 = vrot.lane.b32.xlu0 %v1222, 112
      %v3045 = vpop.permute.xlu0 %3044
      %v3047 = vsel %vm1228, %v3043, 0
      %v3050 = vsel %vm1228, %v3045, 0
      %3052 = vmatprep.subr.bf16.mxu0 0
      %3053 = vmatpush1.bf16.xpose.msra.mxu0 0
      %3054 = vmatprep.subr.bf16.mxu0 0
      %3055 = vmatpush1.bf16.xpose.msra.mxu0 0
      %3056 = vmatprep.subr.bf16.mxu0 0
      %3057 = vmatpush1.bf16.xpose.msra.mxu0 0
      %3058 = vmatprep.subr.bf16.mxu0 0
      %3059 = vmatpush1.bf16.xpose.msra.mxu0 0
      %3060 = vmatprep.subr.bf16.mxu0 0
      %3061 = vmatpush1.bf16.xpose.msra.mxu0 0
      %3062 = vmatprep.subr.bf16.mxu0 0
      %3063 = vmatpush1.bf16.xpose.msra.mxu0 0
      %3064 = vmatprep.subr.bf16.mxu0 0
      %3065 = vmatpush1.bf16.xpose.msra.mxu0 0
      %3066 = vmatprep.subr.bf16.mxu0 0
      %3067 = vmatpush1.bf16.xpose.msra.mxu0 %v3050
      %3068 = vmatprep.subr.bf16.mxu0 0
      %3069 = vmatpush2.bf16.xpose.msra.mxu0 0
      %3070 = vmatprep.subr.bf16.mxu0 0
      %3071 = vmatpush2.bf16.xpose.msra.mxu0 0
      %3072 = vmatprep.subr.bf16.mxu0 0
      %3073 = vmatpush2.bf16.xpose.msra.mxu0 0
      %3074 = vmatprep.subr.bf16.mxu0 0
      %3075 = vmatpush2.bf16.xpose.msra.mxu0 0
      %3076 = vmatprep.subr.bf16.mxu0 0
      %3077 = vmatpush2.bf16.xpose.msra.mxu0 0
      %3078 = vmatprep.subr.bf16.mxu0 0
      %3079 = vmatpush2.bf16.xpose.msra.mxu0 0
      %3080 = vmatprep.subr.bf16.mxu0 0
      %3081 = vmatpush2.bf16.xpose.msra.mxu0 0
      %3082 = vmatprep.subr.bf16.mxu0 0
      %3083 = vmatpush2.bf16.xpose.msra.mxu0 0
      %3084 = vmatprep.mubr.bf16.mxu0 0
      %3085 = vmatmul.mubr.bf16.gmra.mxu0 %v3047
      %v3086 = vpop.f32.mrf.mxu0
      %v3087 = vadd.f32 0.0, %v3086
      %v3088 = vpop.f32.mrf.mxu0
      %v3089 = vpop.f32.mrf.mxu0
      %v3090 = vpop.f32.mrf.mxu0
      %3091 = vdwg.mxu0
      %3092 = vrot.lane.b32.xlu0 %v1215, 112
      %v3093 = vpop.permute.xlu0 %3092
      %3094 = vrot.lane.b32.xlu0 %v1223, 112
      %v3095 = vpop.permute.xlu0 %3094
      %v3097 = vsel %vm1228, %v3093, 0
      %v3100 = vsel %vm1228, %v3095, 0
      %3102 = vmatprep.subr.bf16.mxu0 0
      %3103 = vmatpush1.bf16.xpose.msra.mxu0 0
      %3104 = vmatprep.subr.bf16.mxu0 0
      %3105 = vmatpush1.bf16.xpose.msra.mxu0 0
      %3106 = vmatprep.subr.bf16.mxu0 0
      %3107 = vmatpush1.bf16.xpose.msra.mxu0 0
      %3108 = vmatprep.subr.bf16.mxu0 0
      %3109 = vmatpush1.bf16.xpose.msra.mxu0 0
      %3110 = vmatprep.subr.bf16.mxu0 0
      %3111 = vmatpush1.bf16.xpose.msra.mxu0 0
      %3112 = vmatprep.subr.bf16.mxu0 0
      %3113 = vmatpush1.bf16.xpose.msra.mxu0 0
      %3114 = vmatprep.subr.bf16.mxu0 0
      %3115 = vmatpush1.bf16.xpose.msra.mxu0 0
      %3116 = vmatprep.subr.bf16.mxu0 0
      %3117 = vmatpush1.bf16.xpose.msra.mxu0 %v3100
      %3118 = vmatprep.subr.bf16.mxu0 0
      %3119 = vmatpush2.bf16.xpose.msra.mxu0 0
      %3120 = vmatprep.subr.bf16.mxu0 0
      %3121 = vmatpush2.bf16.xpose.msra.mxu0 0
      %3122 = vmatprep.subr.bf16.mxu0 0
      %3123 = vmatpush2.bf16.xpose.msra.mxu0 0
      %3124 = vmatprep.subr.bf16.mxu0 0
      %3125 = vmatpush2.bf16.xpose.msra.mxu0 0
      %3126 = vmatprep.subr.bf16.mxu0 0
      %3127 = vmatpush2.bf16.xpose.msra.mxu0 0
      %3128 = vmatprep.subr.bf16.mxu0 0
      %3129 = vmatpush2.bf16.xpose.msra.mxu0 0
      %3130 = vmatprep.subr.bf16.mxu0 0
      %3131 = vmatpush2.bf16.xpose.msra.mxu0 0
      %3132 = vmatprep.subr.bf16.mxu0 0
      %3133 = vmatpush2.bf16.xpose.msra.mxu0 0
      %3134 = vmatprep.mubr.bf16.mxu0 0
      %3135 = vmatmul.mubr.bf16.gmra.mxu0 %v3097
      %v3136 = vpop.f32.mrf.mxu0
      %v3137 = vadd.f32 0.0, %v3136
      %v3138 = vpop.f32.mrf.mxu0
      %v3139 = vpop.f32.mrf.mxu0
      %v3140 = vpop.f32.mrf.mxu0
      %3141 = vdwg.mxu0
      %3142 = vrot.lane.b32.xlu0 %v1216, 112
      %v3143 = vpop.permute.xlu0 %3142
      %3144 = vrot.lane.b32.xlu0 %v1224, 112
      %v3145 = vpop.permute.xlu0 %3144
      %v3147 = vsel %vm1228, %v3143, 0
      %v3150 = vsel %vm1228, %v3145, 0
      %3152 = vmatprep.subr.bf16.mxu0 0
      %3153 = vmatpush1.bf16.xpose.msra.mxu0 0
      %3154 = vmatprep.subr.bf16.mxu0 0
      %3155 = vmatpush1.bf16.xpose.msra.mxu0 0
      %3156 = vmatprep.subr.bf16.mxu0 0
      %3157 = vmatpush1.bf16.xpose.msra.mxu0 0
      %3158 = vmatprep.subr.bf16.mxu0 0
      %3159 = vmatpush1.bf16.xpose.msra.mxu0 0
      %3160 = vmatprep.subr.bf16.mxu0 0
      %3161 = vmatpush1.bf16.xpose.msra.mxu0 0
      %3162 = vmatprep.subr.bf16.mxu0 0
      %3163 = vmatpush1.bf16.xpose.msra.mxu0 0
      %3164 = vmatprep.subr.bf16.mxu0 0
      %3165 = vmatpush1.bf16.xpose.msra.mxu0 0
      %3166 = vmatprep.subr.bf16.mxu0 0
      %3167 = vmatpush1.bf16.xpose.msra.mxu0 %v3150
      %3168 = vmatprep.subr.bf16.mxu0 0
      %3169 = vmatpush2.bf16.xpose.msra.mxu0 0
      %3170 = vmatprep.subr.bf16.mxu0 0
      %3171 = vmatpush2.bf16.xpose.msra.mxu0 0
      %3172 = vmatprep.subr.bf16.mxu0 0
      %3173 = vmatpush2.bf16.xpose.msra.mxu0 0
      %3174 = vmatprep.subr.bf16.mxu0 0
      %3175 = vmatpush2.bf16.xpose.msra.mxu0 0
      %3176 = vmatprep.subr.bf16.mxu0 0
      %3177 = vmatpush2.bf16.xpose.msra.mxu0 0
      %3178 = vmatprep.subr.bf16.mxu0 0
      %3179 = vmatpush2.bf16.xpose.msra.mxu0 0
      %3180 = vmatprep.subr.bf16.mxu0 0
      %3181 = vmatpush2.bf16.xpose.msra.mxu0 0
      %3182 = vmatprep.subr.bf16.mxu0 0
      %3183 = vmatpush2.bf16.xpose.msra.mxu0 0
      %3184 = vmatprep.mubr.bf16.mxu0 0
      %3185 = vmatmul.mubr.bf16.gmra.mxu0 %v3147
      %v3186 = vpop.f32.mrf.mxu0
      %v3187 = vadd.f32 0.0, %v3186
      %v3188 = vpop.f32.mrf.mxu0
      %v3189 = vpop.f32.mrf.mxu0
      %v3190 = vpop.f32.mrf.mxu0
      %3191 = vdwg.mxu0
      %3192 = vrot.lane.b32.xlu0 %v1217, 112
      %v3193 = vpop.permute.xlu0 %3192
      %3194 = vrot.lane.b32.xlu0 %v1225, 112
      %v3195 = vpop.permute.xlu0 %3194
      %v3197 = vsel %vm1228, %v3193, 0
      %v3200 = vsel %vm1228, %v3195, 0
      %3202 = vmatprep.subr.bf16.mxu0 0
      %3203 = vmatpush1.bf16.xpose.msra.mxu0 0
      %3204 = vmatprep.subr.bf16.mxu0 0
      %3205 = vmatpush1.bf16.xpose.msra.mxu0 0
      %3206 = vmatprep.subr.bf16.mxu0 0
      %3207 = vmatpush1.bf16.xpose.msra.mxu0 0
      %3208 = vmatprep.subr.bf16.mxu0 0
      %3209 = vmatpush1.bf16.xpose.msra.mxu0 0
      %3210 = vmatprep.subr.bf16.mxu0 0
      %3211 = vmatpush1.bf16.xpose.msra.mxu0 0
      %3212 = vmatprep.subr.bf16.mxu0 0
      %3213 = vmatpush1.bf16.xpose.msra.mxu0 0
      %3214 = vmatprep.subr.bf16.mxu0 0
      %3215 = vmatpush1.bf16.xpose.msra.mxu0 0
      %3216 = vmatprep.subr.bf16.mxu0 0
      %3217 = vmatpush1.bf16.xpose.msra.mxu0 %v3200
      %3218 = vmatprep.subr.bf16.mxu0 0
      %3219 = vmatpush2.bf16.xpose.msra.mxu0 0
      %3220 = vmatprep.subr.bf16.mxu0 0
      %3221 = vmatpush2.bf16.xpose.msra.mxu0 0
      %3222 = vmatprep.subr.bf16.mxu0 0
      %3223 = vmatpush2.bf16.xpose.msra.mxu0 0
      %3224 = vmatprep.subr.bf16.mxu0 0
      %3225 = vmatpush2.bf16.xpose.msra.mxu0 0
      %3226 = vmatprep.subr.bf16.mxu0 0
      %3227 = vmatpush2.bf16.xpose.msra.mxu0 0
      %3228 = vmatprep.subr.bf16.mxu0 0
      %3229 = vmatpush2.bf16.xpose.msra.mxu0 0
      %3230 = vmatprep.subr.bf16.mxu0 0
      %3231 = vmatpush2.bf16.xpose.msra.mxu0 0
      %3232 = vmatprep.subr.bf16.mxu0 0
      %3233 = vmatpush2.bf16.xpose.msra.mxu0 0
      %3234 = vmatprep.mubr.bf16.mxu0 0
      %3235 = vmatmul.mubr.bf16.gmra.mxu0 %v3197
      %v3236 = vpop.f32.mrf.mxu0
      %v3237 = vadd.f32 0.0, %v3236
      %v3238 = vpop.f32.mrf.mxu0
      %v3239 = vpop.f32.mrf.mxu0
      %v3240 = vpop.f32.mrf.mxu0
      %3241 = vdwg.mxu0
      %3242 = vrot.lane.b32.xlu0 %v1218, 112
      %v3243 = vpop.permute.xlu0 %3242
      %3244 = vrot.lane.b32.xlu0 %v1226, 112
      %v3245 = vpop.permute.xlu0 %3244
      %v3247 = vsel %vm1228, %v3243, 0
      %v3250 = vsel %vm1228, %v3245, 0
      %3252 = vmatprep.subr.bf16.mxu0 0
      %3253 = vmatpush1.bf16.xpose.msra.mxu0 0
      %3254 = vmatprep.subr.bf16.mxu0 0
      %3255 = vmatpush1.bf16.xpose.msra.mxu0 0
      %3256 = vmatprep.subr.bf16.mxu0 0
      %3257 = vmatpush1.bf16.xpose.msra.mxu0 0
      %3258 = vmatprep.subr.bf16.mxu0 0
      %3259 = vmatpush1.bf16.xpose.msra.mxu0 0
      %3260 = vmatprep.subr.bf16.mxu0 0
      %3261 = vmatpush1.bf16.xpose.msra.mxu0 0
      %3262 = vmatprep.subr.bf16.mxu0 0
      %3263 = vmatpush1.bf16.xpose.msra.mxu0 0
      %3264 = vmatprep.subr.bf16.mxu0 0
      %3265 = vmatpush1.bf16.xpose.msra.mxu0 0
      %3266 = vmatprep.subr.bf16.mxu0 0
      %3267 = vmatpush1.bf16.xpose.msra.mxu0 %v3250
      %3268 = vmatprep.subr.bf16.mxu0 0
      %3269 = vmatpush2.bf16.xpose.msra.mxu0 0
      %3270 = vmatprep.subr.bf16.mxu0 0
      %3271 = vmatpush2.bf16.xpose.msra.mxu0 0
      %3272 = vmatprep.subr.bf16.mxu0 0
      %3273 = vmatpush2.bf16.xpose.msra.mxu0 0
      %3274 = vmatprep.subr.bf16.mxu0 0
      %3275 = vmatpush2.bf16.xpose.msra.mxu0 0
      %3276 = vmatprep.subr.bf16.mxu0 0
      %3277 = vmatpush2.bf16.xpose.msra.mxu0 0
      %3278 = vmatprep.subr.bf16.mxu0 0
      %3279 = vmatpush2.bf16.xpose.msra.mxu0 0
      %3280 = vmatprep.subr.bf16.mxu0 0
      %3281 = vmatpush2.bf16.xpose.msra.mxu0 0
      %3282 = vmatprep.subr.bf16.mxu0 0
      %3283 = vmatpush2.bf16.xpose.msra.mxu0 0
      %3284 = vmatprep.mubr.bf16.mxu0 0
      %3285 = vmatmul.mubr.bf16.gmra.mxu0 %v3247
      %v3286 = vpop.f32.mrf.mxu0
      %v3287 = vadd.f32 0.0, %v3286
      %v3288 = vpop.f32.mrf.mxu0
      %v3289 = vpop.f32.mrf.mxu0
      %v3290 = vpop.f32.mrf.mxu0
      %3291 = vdwg.mxu0
      %3292 = vrot.lane.b32.xlu0 %v1219, 112
      %v3293 = vpop.permute.xlu0 %3292
      %3294 = vrot.lane.b32.xlu0 %v1227, 112
      %v3295 = vpop.permute.xlu0 %3294
      %v3297 = vsel %vm1228, %v3293, 0
      %v3300 = vsel %vm1228, %v3295, 0
      %3302 = vmatprep.subr.bf16.mxu0 0
      %3303 = vmatpush1.bf16.xpose.msra.mxu0 0
      %3304 = vmatprep.subr.bf16.mxu0 0
      %3305 = vmatpush1.bf16.xpose.msra.mxu0 0
      %3306 = vmatprep.subr.bf16.mxu0 0
      %3307 = vmatpush1.bf16.xpose.msra.mxu0 0
      %3308 = vmatprep.subr.bf16.mxu0 0
      %3309 = vmatpush1.bf16.xpose.msra.mxu0 0
      %3310 = vmatprep.subr.bf16.mxu0 0
      %3311 = vmatpush1.bf16.xpose.msra.mxu0 0
      %3312 = vmatprep.subr.bf16.mxu0 0
      %3313 = vmatpush1.bf16.xpose.msra.mxu0 0
      %3314 = vmatprep.subr.bf16.mxu0 0
      %3315 = vmatpush1.bf16.xpose.msra.mxu0 0
      %3316 = vmatprep.subr.bf16.mxu0 0
      %3317 = vmatpush1.bf16.xpose.msra.mxu0 %v3300
      %3318 = vmatprep.subr.bf16.mxu0 0
      %3319 = vmatpush2.bf16.xpose.msra.mxu0 0
      %3320 = vmatprep.subr.bf16.mxu0 0
      %3321 = vmatpush2.bf16.xpose.msra.mxu0 0
      %3322 = vmatprep.subr.bf16.mxu0 0
      %3323 = vmatpush2.bf16.xpose.msra.mxu0 0
      %3324 = vmatprep.subr.bf16.mxu0 0
      %3325 = vmatpush2.bf16.xpose.msra.mxu0 0
      %3326 = vmatprep.subr.bf16.mxu0 0
      %3327 = vmatpush2.bf16.xpose.msra.mxu0 0
      %3328 = vmatprep.subr.bf16.mxu0 0
      %3329 = vmatpush2.bf16.xpose.msra.mxu0 0
      %3330 = vmatprep.subr.bf16.mxu0 0
      %3331 = vmatpush2.bf16.xpose.msra.mxu0 0
      %3332 = vmatprep.subr.bf16.mxu0 0
      %3333 = vmatpush2.bf16.xpose.msra.mxu0 0
      %3334 = vmatprep.mubr.bf16.mxu0 0
      %3335 = vmatmul.mubr.bf16.gmra.mxu0 %v3297
      %v3336 = vpop.f32.mrf.mxu0
      %v3337 = vadd.f32 0.0, %v3336
      %v3338 = vpop.f32.mrf.mxu0
      %v3339 = vpop.f32.mrf.mxu0
      %v3340 = vpop.f32.mrf.mxu0
      %3341 = vdwg.mxu0
      %v3342 = vsel %vm1597, %v2987, -inf
      %3343 = vmax.xlane.f32.xlu0 %v3342
      %v3344 = vpop.xlane.xlu0 %3343
      %v3345 = vsel %vm1597, %v3037, -inf
      %3346 = vmax.xlane.f32.xlu0 %v3345
      %v3347 = vpop.xlane.xlu0 %3346
      %v3348 = vsel %vm1597, %v3087, -inf
      %3349 = vmax.xlane.f32.xlu0 %v3348
      %v3350 = vpop.xlane.xlu0 %3349
      %v3351 = vsel %vm1597, %v3137, -inf
      %3352 = vmax.xlane.f32.xlu0 %v3351
      %v3353 = vpop.xlane.xlu0 %3352
      %v3354 = vsel %vm1597, %v3187, -inf
      %3355 = vmax.xlane.f32.xlu0 %v3354
      %v3356 = vpop.xlane.xlu0 %3355
      %v3357 = vsel %vm1597, %v3237, -inf
      %3358 = vmax.xlane.f32.xlu0 %v3357
      %v3359 = vpop.xlane.xlu0 %3358
      %v3360 = vsel %vm1597, %v3287, -inf
      %3361 = vmax.xlane.f32.xlu0 %v3360
      %v3362 = vpop.xlane.xlu0 %3361
      %v3363 = vsel %vm1597, %v3337, -inf
      %3364 = vmax.xlane.f32.xlu0 %v3363
      %v3365 = vpop.xlane.xlu0 %3364
      %v3366 = vsub.f32 %v2987, %v3344
      %v3367 = vsub.f32 %v3037, %v3347
      %v3368 = vsub.f32 %v3087, %v3350
      %v3369 = vsub.f32 %v3137, %v3353
      %v3370 = vsub.f32 %v3187, %v3356
      %v3371 = vsub.f32 %v3237, %v3359
      %v3372 = vsub.f32 %v3287, %v3362
      %v3373 = vsub.f32 %v3337, %v3365
      %v3374 = vmul.f32 %v3366, 1.442695
      %v3375 = vpow.pop %v3374
      %v3376 = vmul.f32 %v3367, 1.442695
      %v3377 = vpow.pop %v3376
      %v3378 = vmul.f32 %v3368, 1.442695
      %v3379 = vpow.pop %v3378
      %v3380 = vmul.f32 %v3369, 1.442695
      %v3381 = vpow.pop %v3380
      %v3382 = vmul.f32 %v3370, 1.442695
      %v3383 = vpow.pop %v3382
      %v3384 = vmul.f32 %v3371, 1.442695
      %v3385 = vpow.pop %v3384
      %v3386 = vmul.f32 %v3372, 1.442695
      %v3387 = vpow.pop %v3386
      %v3388 = vmul.f32 %v3373, 1.442695
      %v3389 = vpow.pop %v3388
      %v3390 = vsel %vm1597, %v3375, 0.0
      %3391 = vadd.xlane.f32.xlu0 %v3390
      %v3392 = vpop.xlane.xlu0 %3391
      %v3393 = vsel %vm1597, %v3377, 0.0
      %3394 = vadd.xlane.f32.xlu0 %v3393
      %v3395 = vpop.xlane.xlu0 %3394
      %v3396 = vsel %vm1597, %v3379, 0.0
      %3397 = vadd.xlane.f32.xlu0 %v3396
      %v3398 = vpop.xlane.xlu0 %3397
      %v3399 = vsel %vm1597, %v3381, 0.0
      %3400 = vadd.xlane.f32.xlu0 %v3399
      %v3401 = vpop.xlane.xlu0 %3400
      %v3402 = vsel %vm1597, %v3383, 0.0
      %3403 = vadd.xlane.f32.xlu0 %v3402
      %v3404 = vpop.xlane.xlu0 %3403
      %v3405 = vsel %vm1597, %v3385, 0.0
      %3406 = vadd.xlane.f32.xlu0 %v3405
      %v3407 = vpop.xlane.xlu0 %3406
      %v3408 = vsel %vm1597, %v3387, 0.0
      %3409 = vadd.xlane.f32.xlu0 %v3408
      %v3410 = vpop.xlane.xlu0 %3409
      %v3411 = vsel %vm1597, %v3389, 0.0
      %3412 = vadd.xlane.f32.xlu0 %v3411
      %v3413 = vpop.xlane.xlu0 %3412
      %v3414 = vrcp.pop %v3392
      %v3415 = vrcp.pop %v3395
      %v3416 = vrcp.pop %v3398
      %v3417 = vrcp.pop %v3401
      %v3418 = vrcp.pop %v3404
      %v3419 = vrcp.pop %v3407
      %v3420 = vrcp.pop %v3410
      %v3421 = vrcp.pop %v3413
      %v3422 = vmul.f32 %v3375, %v3414
      %v3423 = vmul.f32 %v3377, %v3415
      %v3424 = vmul.f32 %v3379, %v3416
      %v3425 = vmul.f32 %v3381, %v3417
      %v3426 = vmul.f32 %v3383, %v3418
      %v3427 = vmul.f32 %v3385, %v3419
      %v3428 = vmul.f32 %v3387, %v3420
      %v3429 = vmul.f32 %v3389, %v3421
      %v3430 = vpack.c.bf16 %v3422, %v3422
      %v3431 = vpack.c.bf16 %v3423, %v3423
      %v3432 = vpack.c.bf16 %v3424, %v3424
      %v3433 = vpack.c.bf16 %v3425, %v3425
      %v3434 = vpack.c.bf16 %v3426, %v3426
      %v3435 = vpack.c.bf16 %v3427, %v3427
      %v3436 = vpack.c.bf16 %v3428, %v3428
      %v3437 = vpack.c.bf16 %v3429, %v3429
      %3438 = vrot.lane.b32.xlu0 %v1220, 80
      %v3439 = vpop.permute.xlu0 %3438
      %v3442 = vsel %vm1597, %v3430, 0
      %3444 = vmatprep.subr.bf16.mxu0 0
      %3445 = vmatpush1.bf16.msra.mxu0 0
      %3446 = vmatprep.subr.bf16.mxu0 0
      %3447 = vmatpush1.bf16.msra.mxu0 0
      %3448 = vmatprep.subr.bf16.mxu0 0
      %3449 = vmatpush1.bf16.msra.mxu0 0
      %3450 = vmatprep.subr.bf16.mxu0 0
      %3451 = vmatpush1.bf16.msra.mxu0 0
      %3452 = vmatprep.subr.bf16.mxu0 0
      %3453 = vmatpush1.bf16.msra.mxu0 0
      %3454 = vmatprep.subr.bf16.mxu0 0
      %3455 = vmatpush1.bf16.msra.mxu0 0
      %3456 = vmatprep.subr.bf16.mxu0 0
      %3457 = vmatpush1.bf16.msra.mxu0 0
      %3458 = vmatprep.subr.bf16.mxu0 0
      %3459 = vmatpush1.bf16.msra.mxu0 %v3439
      %3460 = vmatprep.subr.bf16.mxu0 0
      %3461 = vmatpush2.bf16.msra.mxu0 0
      %3462 = vmatprep.subr.bf16.mxu0 0
      %3463 = vmatpush2.bf16.msra.mxu0 0
      %3464 = vmatprep.subr.bf16.mxu0 0
      %3465 = vmatpush2.bf16.msra.mxu0 0
      %3466 = vmatprep.subr.bf16.mxu0 0
      %3467 = vmatpush2.bf16.msra.mxu0 0
      %3468 = vmatprep.subr.bf16.mxu0 0
      %3469 = vmatpush2.bf16.msra.mxu0 0
      %3470 = vmatprep.subr.bf16.mxu0 0
      %3471 = vmatpush2.bf16.msra.mxu0 0
      %3472 = vmatprep.subr.bf16.mxu0 0
      %3473 = vmatpush2.bf16.msra.mxu0 0
      %3474 = vmatprep.subr.bf16.mxu0 0
      %3475 = vmatpush2.bf16.msra.mxu0 0
      %3476 = vmatprep.mubr.bf16.mxu0 0
      %3477 = vmatmul.mubr.bf16.gmra.mxu0 %v3442
      %v3478 = vpop.f32.mrf.mxu0
      %v3479 = vadd.f32 0.0, %v3478
      %v3480 = vpop.f32.mrf.mxu0
      %v3481 = vpop.f32.mrf.mxu0
      %v3482 = vpop.f32.mrf.mxu0
      %3483 = vdwg.mxu0
      %3484 = vrot.lane.b32.xlu0 %v1221, 80
      %v3485 = vpop.permute.xlu0 %3484
      %v3488 = vsel %vm1597, %v3431, 0
      %3490 = vmatprep.subr.bf16.mxu0 0
      %3491 = vmatpush1.bf16.msra.mxu0 0
      %3492 = vmatprep.subr.bf16.mxu0 0
      %3493 = vmatpush1.bf16.msra.mxu0 0
      %3494 = vmatprep.subr.bf16.mxu0 0
      %3495 = vmatpush1.bf16.msra.mxu0 0
      %3496 = vmatprep.subr.bf16.mxu0 0
      %3497 = vmatpush1.bf16.msra.mxu0 0
      %3498 = vmatprep.subr.bf16.mxu0 0
      %3499 = vmatpush1.bf16.msra.mxu0 0
      %3500 = vmatprep.subr.bf16.mxu0 0
      %3501 = vmatpush1.bf16.msra.mxu0 0
      %3502 = vmatprep.subr.bf16.mxu0 0
      %3503 = vmatpush1.bf16.msra.mxu0 0
      %3504 = vmatprep.subr.bf16.mxu0 0
      %3505 = vmatpush1.bf16.msra.mxu0 %v3485
      %3506 = vmatprep.subr.bf16.mxu0 0
      %3507 = vmatpush2.bf16.msra.mxu0 0
      %3508 = vmatprep.subr.bf16.mxu0 0
      %3509 = vmatpush2.bf16.msra.mxu0 0
      %3510 = vmatprep.subr.bf16.mxu0 0
      %3511 = vmatpush2.bf16.msra.mxu0 0
      %3512 = vmatprep.subr.bf16.mxu0 0
      %3513 = vmatpush2.bf16.msra.mxu0 0
      %3514 = vmatprep.subr.bf16.mxu0 0
      %3515 = vmatpush2.bf16.msra.mxu0 0
      %3516 = vmatprep.subr.bf16.mxu0 0
      %3517 = vmatpush2.bf16.msra.mxu0 0
      %3518 = vmatprep.subr.bf16.mxu0 0
      %3519 = vmatpush2.bf16.msra.mxu0 0
      %3520 = vmatprep.subr.bf16.mxu0 0
      %3521 = vmatpush2.bf16.msra.mxu0 0
      %3522 = vmatprep.mubr.bf16.mxu0 0
      %3523 = vmatmul.mubr.bf16.gmra.mxu0 %v3488
      %v3524 = vpop.f32.mrf.mxu0
      %v3525 = vadd.f32 0.0, %v3524
      %v3526 = vpop.f32.mrf.mxu0
      %v3527 = vpop.f32.mrf.mxu0
      %v3528 = vpop.f32.mrf.mxu0
      %3529 = vdwg.mxu0
      %3530 = vrot.lane.b32.xlu0 %v1222, 80
      %v3531 = vpop.permute.xlu0 %3530
      %v3534 = vsel %vm1597, %v3432, 0
      %3536 = vmatprep.subr.bf16.mxu0 0
      %3537 = vmatpush1.bf16.msra.mxu0 0
      %3538 = vmatprep.subr.bf16.mxu0 0
      %3539 = vmatpush1.bf16.msra.mxu0 0
      %3540 = vmatprep.subr.bf16.mxu0 0
      %3541 = vmatpush1.bf16.msra.mxu0 0
      %3542 = vmatprep.subr.bf16.mxu0 0
      %3543 = vmatpush1.bf16.msra.mxu0 0
      %3544 = vmatprep.subr.bf16.mxu0 0
      %3545 = vmatpush1.bf16.msra.mxu0 0
      %3546 = vmatprep.subr.bf16.mxu0 0
      %3547 = vmatpush1.bf16.msra.mxu0 0
      %3548 = vmatprep.subr.bf16.mxu0 0
      %3549 = vmatpush1.bf16.msra.mxu0 0
      %3550 = vmatprep.subr.bf16.mxu0 0
      %3551 = vmatpush1.bf16.msra.mxu0 %v3531
      %3552 = vmatprep.subr.bf16.mxu0 0
      %3553 = vmatpush2.bf16.msra.mxu0 0
      %3554 = vmatprep.subr.bf16.mxu0 0
      %3555 = vmatpush2.bf16.msra.mxu0 0
      %3556 = vmatprep.subr.bf16.mxu0 0
      %3557 = vmatpush2.bf16.msra.mxu0 0
      %3558 = vmatprep.subr.bf16.mxu0 0
      %3559 = vmatpush2.bf16.msra.mxu0 0
      %3560 = vmatprep.subr.bf16.mxu0 0
      %3561 = vmatpush2.bf16.msra.mxu0 0
      %3562 = vmatprep.subr.bf16.mxu0 0
      %3563 = vmatpush2.bf16.msra.mxu0 0
      %3564 = vmatprep.subr.bf16.mxu0 0
      %3565 = vmatpush2.bf16.msra.mxu0 0
      %3566 = vmatprep.subr.bf16.mxu0 0
      %3567 = vmatpush2.bf16.msra.mxu0 0
      %3568 = vmatprep.mubr.bf16.mxu0 0
      %3569 = vmatmul.mubr.bf16.gmra.mxu0 %v3534
      %v3570 = vpop.f32.mrf.mxu0
      %v3571 = vadd.f32 0.0, %v3570
      %v3572 = vpop.f32.mrf.mxu0
      %v3573 = vpop.f32.mrf.mxu0
      %v3574 = vpop.f32.mrf.mxu0
      %3575 = vdwg.mxu0
      %3576 = vrot.lane.b32.xlu0 %v1223, 80
      %v3577 = vpop.permute.xlu0 %3576
      %v3580 = vsel %vm1597, %v3433, 0
      %3582 = vmatprep.subr.bf16.mxu0 0
      %3583 = vmatpush1.bf16.msra.mxu0 0
      %3584 = vmatprep.subr.bf16.mxu0 0
      %3585 = vmatpush1.bf16.msra.mxu0 0
      %3586 = vmatprep.subr.bf16.mxu0 0
      %3587 = vmatpush1.bf16.msra.mxu0 0
      %3588 = vmatprep.subr.bf16.mxu0 0
      %3589 = vmatpush1.bf16.msra.mxu0 0
      %3590 = vmatprep.subr.bf16.mxu0 0
      %3591 = vmatpush1.bf16.msra.mxu0 0
      %3592 = vmatprep.subr.bf16.mxu0 0
      %3593 = vmatpush1.bf16.msra.mxu0 0
      %3594 = vmatprep.subr.bf16.mxu0 0
      %3595 = vmatpush1.bf16.msra.mxu0 0
      %3596 = vmatprep.subr.bf16.mxu0 0
      %3597 = vmatpush1.bf16.msra.mxu0 %v3577
      %3598 = vmatprep.subr.bf16.mxu0 0
      %3599 = vmatpush2.bf16.msra.mxu0 0
      %3600 = vmatprep.subr.bf16.mxu0 0
      %3601 = vmatpush2.bf16.msra.mxu0 0
      %3602 = vmatprep.subr.bf16.mxu0 0
      %3603 = vmatpush2.bf16.msra.mxu0 0
      %3604 = vmatprep.subr.bf16.mxu0 0
      %3605 = vmatpush2.bf16.msra.mxu0 0
      %3606 = vmatprep.subr.bf16.mxu0 0
      %3607 = vmatpush2.bf16.msra.mxu0 0
      %3608 = vmatprep.subr.bf16.mxu0 0
      %3609 = vmatpush2.bf16.msra.mxu0 0
      %3610 = vmatprep.subr.bf16.mxu0 0
      %3611 = vmatpush2.bf16.msra.mxu0 0
      %3612 = vmatprep.subr.bf16.mxu0 0
      %3613 = vmatpush2.bf16.msra.mxu0 0
      %3614 = vmatprep.mubr.bf16.mxu0 0
      %3615 = vmatmul.mubr.bf16.gmra.mxu0 %v3580
      %v3616 = vpop.f32.mrf.mxu0
      %v3617 = vadd.f32 0.0, %v3616
      %v3618 = vpop.f32.mrf.mxu0
      %v3619 = vpop.f32.mrf.mxu0
      %v3620 = vpop.f32.mrf.mxu0
      %3621 = vdwg.mxu0
      %3622 = vrot.lane.b32.xlu0 %v1224, 80
      %v3623 = vpop.permute.xlu0 %3622
      %v3626 = vsel %vm1597, %v3434, 0
      %3628 = vmatprep.subr.bf16.mxu0 0
      %3629 = vmatpush1.bf16.msra.mxu0 0
      %3630 = vmatprep.subr.bf16.mxu0 0
      %3631 = vmatpush1.bf16.msra.mxu0 0
      %3632 = vmatprep.subr.bf16.mxu0 0
      %3633 = vmatpush1.bf16.msra.mxu0 0
      %3634 = vmatprep.subr.bf16.mxu0 0
      %3635 = vmatpush1.bf16.msra.mxu0 0
      %3636 = vmatprep.subr.bf16.mxu0 0
      %3637 = vmatpush1.bf16.msra.mxu0 0
      %3638 = vmatprep.subr.bf16.mxu0 0
      %3639 = vmatpush1.bf16.msra.mxu0 0
      %3640 = vmatprep.subr.bf16.mxu0 0
      %3641 = vmatpush1.bf16.msra.mxu0 0
      %3642 = vmatprep.subr.bf16.mxu0 0
      %3643 = vmatpush1.bf16.msra.mxu0 %v3623
      %3644 = vmatprep.subr.bf16.mxu0 0
      %3645 = vmatpush2.bf16.msra.mxu0 0
      %3646 = vmatprep.subr.bf16.mxu0 0
      %3647 = vmatpush2.bf16.msra.mxu0 0
      %3648 = vmatprep.subr.bf16.mxu0 0
      %3649 = vmatpush2.bf16.msra.mxu0 0
      %3650 = vmatprep.subr.bf16.mxu0 0
      %3651 = vmatpush2.bf16.msra.mxu0 0
      %3652 = vmatprep.subr.bf16.mxu0 0
      %3653 = vmatpush2.bf16.msra.mxu0 0
      %3654 = vmatprep.subr.bf16.mxu0 0
      %3655 = vmatpush2.bf16.msra.mxu0 0
      %3656 = vmatprep.subr.bf16.mxu0 0
      %3657 = vmatpush2.bf16.msra.mxu0 0
      %3658 = vmatprep.subr.bf16.mxu0 0
      %3659 = vmatpush2.bf16.msra.mxu0 0
      %3660 = vmatprep.mubr.bf16.mxu0 0
      %3661 = vmatmul.mubr.bf16.gmra.mxu0 %v3626
      %v3662 = vpop.f32.mrf.mxu0
      %v3663 = vadd.f32 0.0, %v3662
      %v3664 = vpop.f32.mrf.mxu0
      %v3665 = vpop.f32.mrf.mxu0
      %v3666 = vpop.f32.mrf.mxu0
      %3667 = vdwg.mxu0
      %3668 = vrot.lane.b32.xlu0 %v1225, 80
      %v3669 = vpop.permute.xlu0 %3668
      %v3672 = vsel %vm1597, %v3435, 0
      %3674 = vmatprep.subr.bf16.mxu0 0
      %3675 = vmatpush1.bf16.msra.mxu0 0
      %3676 = vmatprep.subr.bf16.mxu0 0
      %3677 = vmatpush1.bf16.msra.mxu0 0
      %3678 = vmatprep.subr.bf16.mxu0 0
      %3679 = vmatpush1.bf16.msra.mxu0 0
      %3680 = vmatprep.subr.bf16.mxu0 0
      %3681 = vmatpush1.bf16.msra.mxu0 0
      %3682 = vmatprep.subr.bf16.mxu0 0
      %3683 = vmatpush1.bf16.msra.mxu0 0
      %3684 = vmatprep.subr.bf16.mxu0 0
      %3685 = vmatpush1.bf16.msra.mxu0 0
      %3686 = vmatprep.subr.bf16.mxu0 0
      %3687 = vmatpush1.bf16.msra.mxu0 0
      %3688 = vmatprep.subr.bf16.mxu0 0
      %3689 = vmatpush1.bf16.msra.mxu0 %v3669
      %3690 = vmatprep.subr.bf16.mxu0 0
      %3691 = vmatpush2.bf16.msra.mxu0 0
      %3692 = vmatprep.subr.bf16.mxu0 0
      %3693 = vmatpush2.bf16.msra.mxu0 0
      %3694 = vmatprep.subr.bf16.mxu0 0
      %3695 = vmatpush2.bf16.msra.mxu0 0
      %3696 = vmatprep.subr.bf16.mxu0 0
      %3697 = vmatpush2.bf16.msra.mxu0 0
      %3698 = vmatprep.subr.bf16.mxu0 0
      %3699 = vmatpush2.bf16.msra.mxu0 0
      %3700 = vmatprep.subr.bf16.mxu0 0
      %3701 = vmatpush2.bf16.msra.mxu0 0
      %3702 = vmatprep.subr.bf16.mxu0 0
      %3703 = vmatpush2.bf16.msra.mxu0 0
      %3704 = vmatprep.subr.bf16.mxu0 0
      %3705 = vmatpush2.bf16.msra.mxu0 0
      %3706 = vmatprep.mubr.bf16.mxu0 0
      %3707 = vmatmul.mubr.bf16.gmra.mxu0 %v3672
      %v3708 = vpop.f32.mrf.mxu0
      %v3709 = vadd.f32 0.0, %v3708
      %v3710 = vpop.f32.mrf.mxu0
      %v3711 = vpop.f32.mrf.mxu0
      %v3712 = vpop.f32.mrf.mxu0
      %3713 = vdwg.mxu0
      %3714 = vrot.lane.b32.xlu0 %v1226, 80
      %v3715 = vpop.permute.xlu0 %3714
      %v3718 = vsel %vm1597, %v3436, 0
      %3720 = vmatprep.subr.bf16.mxu0 0
      %3721 = vmatpush1.bf16.msra.mxu0 0
      %3722 = vmatprep.subr.bf16.mxu0 0
      %3723 = vmatpush1.bf16.msra.mxu0 0
      %3724 = vmatprep.subr.bf16.mxu0 0
      %3725 = vmatpush1.bf16.msra.mxu0 0
      %3726 = vmatprep.subr.bf16.mxu0 0
      %3727 = vmatpush1.bf16.msra.mxu0 0
      %3728 = vmatprep.subr.bf16.mxu0 0
      %3729 = vmatpush1.bf16.msra.mxu0 0
      %3730 = vmatprep.subr.bf16.mxu0 0
      %3731 = vmatpush1.bf16.msra.mxu0 0
      %3732 = vmatprep.subr.bf16.mxu0 0
      %3733 = vmatpush1.bf16.msra.mxu0 0
      %3734 = vmatprep.subr.bf16.mxu0 0
      %3735 = vmatpush1.bf16.msra.mxu0 %v3715
      %3736 = vmatprep.subr.bf16.mxu0 0
      %3737 = vmatpush2.bf16.msra.mxu0 0
      %3738 = vmatprep.subr.bf16.mxu0 0
      %3739 = vmatpush2.bf16.msra.mxu0 0
      %3740 = vmatprep.subr.bf16.mxu0 0
      %3741 = vmatpush2.bf16.msra.mxu0 0
      %3742 = vmatprep.subr.bf16.mxu0 0
      %3743 = vmatpush2.bf16.msra.mxu0 0
      %3744 = vmatprep.subr.bf16.mxu0 0
      %3745 = vmatpush2.bf16.msra.mxu0 0
      %3746 = vmatprep.subr.bf16.mxu0 0
      %3747 = vmatpush2.bf16.msra.mxu0 0
      %3748 = vmatprep.subr.bf16.mxu0 0
      %3749 = vmatpush2.bf16.msra.mxu0 0
      %3750 = vmatprep.subr.bf16.mxu0 0
      %3751 = vmatpush2.bf16.msra.mxu0 0
      %3752 = vmatprep.mubr.bf16.mxu0 0
      %3753 = vmatmul.mubr.bf16.gmra.mxu0 %v3718
      %v3754 = vpop.f32.mrf.mxu0
      %v3755 = vadd.f32 0.0, %v3754
      %v3756 = vpop.f32.mrf.mxu0
      %v3757 = vpop.f32.mrf.mxu0
      %v3758 = vpop.f32.mrf.mxu0
      %3759 = vdwg.mxu0
      %3760 = vrot.lane.b32.xlu0 %v1227, 80
      %v3761 = vpop.permute.xlu0 %3760
      %v3764 = vsel %vm1597, %v3437, 0
      %3766 = vmatprep.subr.bf16.mxu0 0
      %3767 = vmatpush1.bf16.msra.mxu0 0
      %3768 = vmatprep.subr.bf16.mxu0 0
      %3769 = vmatpush1.bf16.msra.mxu0 0
      %3770 = vmatprep.subr.bf16.mxu0 0
      %3771 = vmatpush1.bf16.msra.mxu0 0
      %3772 = vmatprep.subr.bf16.mxu0 0
      %3773 = vmatpush1.bf16.msra.mxu0 0
      %3774 = vmatprep.subr.bf16.mxu0 0
      %3775 = vmatpush1.bf16.msra.mxu0 0
      %3776 = vmatprep.subr.bf16.mxu0 0
      %3777 = vmatpush1.bf16.msra.mxu0 0
      %3778 = vmatprep.subr.bf16.mxu0 0
      %3779 = vmatpush1.bf16.msra.mxu0 0
      %3780 = vmatprep.subr.bf16.mxu0 0
      %3781 = vmatpush1.bf16.msra.mxu0 %v3761
      %3782 = vmatprep.subr.bf16.mxu0 0
      %3783 = vmatpush2.bf16.msra.mxu0 0
      %3784 = vmatprep.subr.bf16.mxu0 0
      %3785 = vmatpush2.bf16.msra.mxu0 0
      %3786 = vmatprep.subr.bf16.mxu0 0
      %3787 = vmatpush2.bf16.msra.mxu0 0
      %3788 = vmatprep.subr.bf16.mxu0 0
      %3789 = vmatpush2.bf16.msra.mxu0 0
      %3790 = vmatprep.subr.bf16.mxu0 0
      %3791 = vmatpush2.bf16.msra.mxu0 0
      %3792 = vmatprep.subr.bf16.mxu0 0
      %3793 = vmatpush2.bf16.msra.mxu0 0
      %3794 = vmatprep.subr.bf16.mxu0 0
      %3795 = vmatpush2.bf16.msra.mxu0 0
      %3796 = vmatprep.subr.bf16.mxu0 0
      %3797 = vmatpush2.bf16.msra.mxu0 0
      %3798 = vmatprep.mubr.bf16.mxu0 0
      %3799 = vmatmul.mubr.bf16.gmra.mxu0 %v3764
      %v3800 = vpop.f32.mrf.mxu0
      %v3801 = vadd.f32 0.0, %v3800
      %v3802 = vpop.f32.mrf.mxu0
      %v3803 = vpop.f32.mrf.mxu0
      %v3804 = vpop.f32.mrf.mxu0
      %3805 = vdwg.mxu0
      %3806 = vrot.lane.b32.xlu0 %v1212, 104
      %v3807 = vpop.permute.xlu0 %3806
      %3808 = vrot.lane.b32.xlu0 %v1220, 104
      %v3809 = vpop.permute.xlu0 %3808
      %v3811 = vsel %vm1228, %v3807, 0
      %v3814 = vsel %vm1228, %v3809, 0
      %3816 = vmatprep.subr.bf16.mxu0 0
      %3817 = vmatpush1.bf16.xpose.msra.mxu0 0
      %3818 = vmatprep.subr.bf16.mxu0 0
      %3819 = vmatpush1.bf16.xpose.msra.mxu0 0
      %3820 = vmatprep.subr.bf16.mxu0 0
      %3821 = vmatpush1.bf16.xpose.msra.mxu0 0
      %3822 = vmatprep.subr.bf16.mxu0 0
      %3823 = vmatpush1.bf16.xpose.msra.mxu0 0
      %3824 = vmatprep.subr.bf16.mxu0 0
      %3825 = vmatpush1.bf16.xpose.msra.mxu0 0
      %3826 = vmatprep.subr.bf16.mxu0 0
      %3827 = vmatpush1.bf16.xpose.msra.mxu0 0
      %3828 = vmatprep.subr.bf16.mxu0 0
      %3829 = vmatpush1.bf16.xpose.msra.mxu0 0
      %3830 = vmatprep.subr.bf16.mxu0 0
      %3831 = vmatpush1.bf16.xpose.msra.mxu0 %v3814
      %3832 = vmatprep.subr.bf16.mxu0 0
      %3833 = vmatpush2.bf16.xpose.msra.mxu0 0
      %3834 = vmatprep.subr.bf16.mxu0 0
      %3835 = vmatpush2.bf16.xpose.msra.mxu0 0
      %3836 = vmatprep.subr.bf16.mxu0 0
      %3837 = vmatpush2.bf16.xpose.msra.mxu0 0
      %3838 = vmatprep.subr.bf16.mxu0 0
      %3839 = vmatpush2.bf16.xpose.msra.mxu0 0
      %3840 = vmatprep.subr.bf16.mxu0 0
      %3841 = vmatpush2.bf16.xpose.msra.mxu0 0
      %3842 = vmatprep.subr.bf16.mxu0 0
      %3843 = vmatpush2.bf16.xpose.msra.mxu0 0
      %3844 = vmatprep.subr.bf16.mxu0 0
      %3845 = vmatpush2.bf16.xpose.msra.mxu0 0
      %3846 = vmatprep.subr.bf16.mxu0 0
      %3847 = vmatpush2.bf16.xpose.msra.mxu0 0
      %3848 = vmatprep.mubr.bf16.mxu0 0
      %3849 = vmatmul.mubr.bf16.gmra.mxu0 %v3811
      %v3850 = vpop.f32.mrf.mxu0
      %v3851 = vadd.f32 0.0, %v3850
      %v3852 = vpop.f32.mrf.mxu0
      %v3853 = vpop.f32.mrf.mxu0
      %v3854 = vpop.f32.mrf.mxu0
      %3855 = vdwg.mxu0
      %3856 = vrot.lane.b32.xlu0 %v1213, 104
      %v3857 = vpop.permute.xlu0 %3856
      %3858 = vrot.lane.b32.xlu0 %v1221, 104
      %v3859 = vpop.permute.xlu0 %3858
      %v3861 = vsel %vm1228, %v3857, 0
      %v3864 = vsel %vm1228, %v3859, 0
      %3866 = vmatprep.subr.bf16.mxu0 0
      %3867 = vmatpush1.bf16.xpose.msra.mxu0 0
      %3868 = vmatprep.subr.bf16.mxu0 0
      %3869 = vmatpush1.bf16.xpose.msra.mxu0 0
      %3870 = vmatprep.subr.bf16.mxu0 0
      %3871 = vmatpush1.bf16.xpose.msra.mxu0 0
      %3872 = vmatprep.subr.bf16.mxu0 0
      %3873 = vmatpush1.bf16.xpose.msra.mxu0 0
      %3874 = vmatprep.subr.bf16.mxu0 0
      %3875 = vmatpush1.bf16.xpose.msra.mxu0 0
      %3876 = vmatprep.subr.bf16.mxu0 0
      %3877 = vmatpush1.bf16.xpose.msra.mxu0 0
      %3878 = vmatprep.subr.bf16.mxu0 0
      %3879 = vmatpush1.bf16.xpose.msra.mxu0 0
      %3880 = vmatprep.subr.bf16.mxu0 0
      %3881 = vmatpush1.bf16.xpose.msra.mxu0 %v3864
      %3882 = vmatprep.subr.bf16.mxu0 0
      %3883 = vmatpush2.bf16.xpose.msra.mxu0 0
      %3884 = vmatprep.subr.bf16.mxu0 0
      %3885 = vmatpush2.bf16.xpose.msra.mxu0 0
      %3886 = vmatprep.subr.bf16.mxu0 0
      %3887 = vmatpush2.bf16.xpose.msra.mxu0 0
      %3888 = vmatprep.subr.bf16.mxu0 0
      %3889 = vmatpush2.bf16.xpose.msra.mxu0 0
      %3890 = vmatprep.subr.bf16.mxu0 0
      %3891 = vmatpush2.bf16.xpose.msra.mxu0 0
      %3892 = vmatprep.subr.bf16.mxu0 0
      %3893 = vmatpush2.bf16.xpose.msra.mxu0 0
      %3894 = vmatprep.subr.bf16.mxu0 0
      %3895 = vmatpush2.bf16.xpose.msra.mxu0 0
      %3896 = vmatprep.subr.bf16.mxu0 0
      %3897 = vmatpush2.bf16.xpose.msra.mxu0 0
      %3898 = vmatprep.mubr.bf16.mxu0 0
      %3899 = vmatmul.mubr.bf16.gmra.mxu0 %v3861
      %v3900 = vpop.f32.mrf.mxu0
      %v3901 = vadd.f32 0.0, %v3900
      %v3902 = vpop.f32.mrf.mxu0
      %v3903 = vpop.f32.mrf.mxu0
      %v3904 = vpop.f32.mrf.mxu0
      %3905 = vdwg.mxu0
      %3906 = vrot.lane.b32.xlu0 %v1214, 104
      %v3907 = vpop.permute.xlu0 %3906
      %3908 = vrot.lane.b32.xlu0 %v1222, 104
      %v3909 = vpop.permute.xlu0 %3908
      %v3911 = vsel %vm1228, %v3907, 0
      %v3914 = vsel %vm1228, %v3909, 0
      %3916 = vmatprep.subr.bf16.mxu0 0
      %3917 = vmatpush1.bf16.xpose.msra.mxu0 0
      %3918 = vmatprep.subr.bf16.mxu0 0
      %3919 = vmatpush1.bf16.xpose.msra.mxu0 0
      %3920 = vmatprep.subr.bf16.mxu0 0
      %3921 = vmatpush1.bf16.xpose.msra.mxu0 0
      %3922 = vmatprep.subr.bf16.mxu0 0
      %3923 = vmatpush1.bf16.xpose.msra.mxu0 0
      %3924 = vmatprep.subr.bf16.mxu0 0
      %3925 = vmatpush1.bf16.xpose.msra.mxu0 0
      %3926 = vmatprep.subr.bf16.mxu0 0
      %3927 = vmatpush1.bf16.xpose.msra.mxu0 0
      %3928 = vmatprep.subr.bf16.mxu0 0
      %3929 = vmatpush1.bf16.xpose.msra.mxu0 0
      %3930 = vmatprep.subr.bf16.mxu0 0
      %3931 = vmatpush1.bf16.xpose.msra.mxu0 %v3914
      %3932 = vmatprep.subr.bf16.mxu0 0
      %3933 = vmatpush2.bf16.xpose.msra.mxu0 0
      %3934 = vmatprep.subr.bf16.mxu0 0
      %3935 = vmatpush2.bf16.xpose.msra.mxu0 0
      %3936 = vmatprep.subr.bf16.mxu0 0
      %3937 = vmatpush2.bf16.xpose.msra.mxu0 0
      %3938 = vmatprep.subr.bf16.mxu0 0
      %3939 = vmatpush2.bf16.xpose.msra.mxu0 0
      %3940 = vmatprep.subr.bf16.mxu0 0
      %3941 = vmatpush2.bf16.xpose.msra.mxu0 0
      %3942 = vmatprep.subr.bf16.mxu0 0
      %3943 = vmatpush2.bf16.xpose.msra.mxu0 0
      %3944 = vmatprep.subr.bf16.mxu0 0
      %3945 = vmatpush2.bf16.xpose.msra.mxu0 0
      %3946 = vmatprep.subr.bf16.mxu0 0
      %3947 = vmatpush2.bf16.xpose.msra.mxu0 0
      %3948 = vmatprep.mubr.bf16.mxu0 0
      %3949 = vmatmul.mubr.bf16.gmra.mxu0 %v3911
      %v3950 = vpop.f32.mrf.mxu0
      %v3951 = vadd.f32 0.0, %v3950
      %v3952 = vpop.f32.mrf.mxu0
      %v3953 = vpop.f32.mrf.mxu0
      %v3954 = vpop.f32.mrf.mxu0
      %3955 = vdwg.mxu0
      %3956 = vrot.lane.b32.xlu0 %v1215, 104
      %v3957 = vpop.permute.xlu0 %3956
      %3958 = vrot.lane.b32.xlu0 %v1223, 104
      %v3959 = vpop.permute.xlu0 %3958
      %v3961 = vsel %vm1228, %v3957, 0
      %v3964 = vsel %vm1228, %v3959, 0
      %3966 = vmatprep.subr.bf16.mxu0 0
      %3967 = vmatpush1.bf16.xpose.msra.mxu0 0
      %3968 = vmatprep.subr.bf16.mxu0 0
      %3969 = vmatpush1.bf16.xpose.msra.mxu0 0
      %3970 = vmatprep.subr.bf16.mxu0 0
      %3971 = vmatpush1.bf16.xpose.msra.mxu0 0
      %3972 = vmatprep.subr.bf16.mxu0 0
      %3973 = vmatpush1.bf16.xpose.msra.mxu0 0
      %3974 = vmatprep.subr.bf16.mxu0 0
      %3975 = vmatpush1.bf16.xpose.msra.mxu0 0
      %3976 = vmatprep.subr.bf16.mxu0 0
      %3977 = vmatpush1.bf16.xpose.msra.mxu0 0
      %3978 = vmatprep.subr.bf16.mxu0 0
      %3979 = vmatpush1.bf16.xpose.msra.mxu0 0
      %3980 = vmatprep.subr.bf16.mxu0 0
      %3981 = vmatpush1.bf16.xpose.msra.mxu0 %v3964
      %3982 = vmatprep.subr.bf16.mxu0 0
      %3983 = vmatpush2.bf16.xpose.msra.mxu0 0
      %3984 = vmatprep.subr.bf16.mxu0 0
      %3985 = vmatpush2.bf16.xpose.msra.mxu0 0
      %3986 = vmatprep.subr.bf16.mxu0 0
      %3987 = vmatpush2.bf16.xpose.msra.mxu0 0
      %3988 = vmatprep.subr.bf16.mxu0 0
      %3989 = vmatpush2.bf16.xpose.msra.mxu0 0
      %3990 = vmatprep.subr.bf16.mxu0 0
      %3991 = vmatpush2.bf16.xpose.msra.mxu0 0
      %3992 = vmatprep.subr.bf16.mxu0 0
      %3993 = vmatpush2.bf16.xpose.msra.mxu0 0
      %3994 = vmatprep.subr.bf16.mxu0 0
      %3995 = vmatpush2.bf16.xpose.msra.mxu0 0
      %3996 = vmatprep.subr.bf16.mxu0 0
      %3997 = vmatpush2.bf16.xpose.msra.mxu0 0
      %3998 = vmatprep.mubr.bf16.mxu0 0
      %3999 = vmatmul.mubr.bf16.gmra.mxu0 %v3961
      %v4000 = vpop.f32.mrf.mxu0
      %v4001 = vadd.f32 0.0, %v4000
      %v4002 = vpop.f32.mrf.mxu0
      %v4003 = vpop.f32.mrf.mxu0
      %v4004 = vpop.f32.mrf.mxu0
      %4005 = vdwg.mxu0
      %4006 = vrot.lane.b32.xlu0 %v1216, 104
      %v4007 = vpop.permute.xlu0 %4006
      %4008 = vrot.lane.b32.xlu0 %v1224, 104
      %v4009 = vpop.permute.xlu0 %4008
      %v4011 = vsel %vm1228, %v4007, 0
      %v4014 = vsel %vm1228, %v4009, 0
      %4016 = vmatprep.subr.bf16.mxu0 0
      %4017 = vmatpush1.bf16.xpose.msra.mxu0 0
      %4018 = vmatprep.subr.bf16.mxu0 0
      %4019 = vmatpush1.bf16.xpose.msra.mxu0 0
      %4020 = vmatprep.subr.bf16.mxu0 0
      %4021 = vmatpush1.bf16.xpose.msra.mxu0 0
      %4022 = vmatprep.subr.bf16.mxu0 0
      %4023 = vmatpush1.bf16.xpose.msra.mxu0 0
      %4024 = vmatprep.subr.bf16.mxu0 0
      %4025 = vmatpush1.bf16.xpose.msra.mxu0 0
      %4026 = vmatprep.subr.bf16.mxu0 0
      %4027 = vmatpush1.bf16.xpose.msra.mxu0 0
      %4028 = vmatprep.subr.bf16.mxu0 0
      %4029 = vmatpush1.bf16.xpose.msra.mxu0 0
      %4030 = vmatprep.subr.bf16.mxu0 0
      %4031 = vmatpush1.bf16.xpose.msra.mxu0 %v4014
      %4032 = vmatprep.subr.bf16.mxu0 0
      %4033 = vmatpush2.bf16.xpose.msra.mxu0 0
      %4034 = vmatprep.subr.bf16.mxu0 0
      %4035 = vmatpush2.bf16.xpose.msra.mxu0 0
      %4036 = vmatprep.subr.bf16.mxu0 0
      %4037 = vmatpush2.bf16.xpose.msra.mxu0 0
      %4038 = vmatprep.subr.bf16.mxu0 0
      %4039 = vmatpush2.bf16.xpose.msra.mxu0 0
      %4040 = vmatprep.subr.bf16.mxu0 0
      %4041 = vmatpush2.bf16.xpose.msra.mxu0 0
      %4042 = vmatprep.subr.bf16.mxu0 0
      %4043 = vmatpush2.bf16.xpose.msra.mxu0 0
      %4044 = vmatprep.subr.bf16.mxu0 0
      %4045 = vmatpush2.bf16.xpose.msra.mxu0 0
      %4046 = vmatprep.subr.bf16.mxu0 0
      %4047 = vmatpush2.bf16.xpose.msra.mxu0 0
      %4048 = vmatprep.mubr.bf16.mxu0 0
      %4049 = vmatmul.mubr.bf16.gmra.mxu0 %v4011
      %v4050 = vpop.f32.mrf.mxu0
      %v4051 = vadd.f32 0.0, %v4050
      %v4052 = vpop.f32.mrf.mxu0
      %v4053 = vpop.f32.mrf.mxu0
      %v4054 = vpop.f32.mrf.mxu0
      %4055 = vdwg.mxu0
      %4056 = vrot.lane.b32.xlu0 %v1217, 104
      %v4057 = vpop.permute.xlu0 %4056
      %4058 = vrot.lane.b32.xlu0 %v1225, 104
      %v4059 = vpop.permute.xlu0 %4058
      %v4061 = vsel %vm1228, %v4057, 0
      %v4064 = vsel %vm1228, %v4059, 0
      %4066 = vmatprep.subr.bf16.mxu0 0
      %4067 = vmatpush1.bf16.xpose.msra.mxu0 0
      %4068 = vmatprep.subr.bf16.mxu0 0
      %4069 = vmatpush1.bf16.xpose.msra.mxu0 0
      %4070 = vmatprep.subr.bf16.mxu0 0
      %4071 = vmatpush1.bf16.xpose.msra.mxu0 0
      %4072 = vmatprep.subr.bf16.mxu0 0
      %4073 = vmatpush1.bf16.xpose.msra.mxu0 0
      %4074 = vmatprep.subr.bf16.mxu0 0
      %4075 = vmatpush1.bf16.xpose.msra.mxu0 0
      %4076 = vmatprep.subr.bf16.mxu0 0
      %4077 = vmatpush1.bf16.xpose.msra.mxu0 0
      %4078 = vmatprep.subr.bf16.mxu0 0
      %4079 = vmatpush1.bf16.xpose.msra.mxu0 0
      %4080 = vmatprep.subr.bf16.mxu0 0
      %4081 = vmatpush1.bf16.xpose.msra.mxu0 %v4064
      %4082 = vmatprep.subr.bf16.mxu0 0
      %4083 = vmatpush2.bf16.xpose.msra.mxu0 0
      %4084 = vmatprep.subr.bf16.mxu0 0
      %4085 = vmatpush2.bf16.xpose.msra.mxu0 0
      %4086 = vmatprep.subr.bf16.mxu0 0
      %4087 = vmatpush2.bf16.xpose.msra.mxu0 0
      %4088 = vmatprep.subr.bf16.mxu0 0
      %4089 = vmatpush2.bf16.xpose.msra.mxu0 0
      %4090 = vmatprep.subr.bf16.mxu0 0
      %4091 = vmatpush2.bf16.xpose.msra.mxu0 0
      %4092 = vmatprep.subr.bf16.mxu0 0
      %4093 = vmatpush2.bf16.xpose.msra.mxu0 0
      %4094 = vmatprep.subr.bf16.mxu0 0
      %4095 = vmatpush2.bf16.xpose.msra.mxu0 0
      %4096 = vmatprep.subr.bf16.mxu0 0
      %4097 = vmatpush2.bf16.xpose.msra.mxu0 0
      %4098 = vmatprep.mubr.bf16.mxu0 0
      %4099 = vmatmul.mubr.bf16.gmra.mxu0 %v4061
      %v4100 = vpop.f32.mrf.mxu0
      %v4101 = vadd.f32 0.0, %v4100
      %v4102 = vpop.f32.mrf.mxu0
      %v4103 = vpop.f32.mrf.mxu0
      %v4104 = vpop.f32.mrf.mxu0
      %4105 = vdwg.mxu0
      %4106 = vrot.lane.b32.xlu0 %v1218, 104
      %v4107 = vpop.permute.xlu0 %4106
      %4108 = vrot.lane.b32.xlu0 %v1226, 104
      %v4109 = vpop.permute.xlu0 %4108
      %v4111 = vsel %vm1228, %v4107, 0
      %v4114 = vsel %vm1228, %v4109, 0
      %4116 = vmatprep.subr.bf16.mxu0 0
      %4117 = vmatpush1.bf16.xpose.msra.mxu0 0
      %4118 = vmatprep.subr.bf16.mxu0 0
      %4119 = vmatpush1.bf16.xpose.msra.mxu0 0
      %4120 = vmatprep.subr.bf16.mxu0 0
      %4121 = vmatpush1.bf16.xpose.msra.mxu0 0
      %4122 = vmatprep.subr.bf16.mxu0 0
      %4123 = vmatpush1.bf16.xpose.msra.mxu0 0
      %4124 = vmatprep.subr.bf16.mxu0 0
      %4125 = vmatpush1.bf16.xpose.msra.mxu0 0
      %4126 = vmatprep.subr.bf16.mxu0 0
      %4127 = vmatpush1.bf16.xpose.msra.mxu0 0
      %4128 = vmatprep.subr.bf16.mxu0 0
      %4129 = vmatpush1.bf16.xpose.msra.mxu0 0
      %4130 = vmatprep.subr.bf16.mxu0 0
      %4131 = vmatpush1.bf16.xpose.msra.mxu0 %v4114
      %4132 = vmatprep.subr.bf16.mxu0 0
      %4133 = vmatpush2.bf16.xpose.msra.mxu0 0
      %4134 = vmatprep.subr.bf16.mxu0 0
      %4135 = vmatpush2.bf16.xpose.msra.mxu0 0
      %4136 = vmatprep.subr.bf16.mxu0 0
      %4137 = vmatpush2.bf16.xpose.msra.mxu0 0
      %4138 = vmatprep.subr.bf16.mxu0 0
      %4139 = vmatpush2.bf16.xpose.msra.mxu0 0
      %4140 = vmatprep.subr.bf16.mxu0 0
      %4141 = vmatpush2.bf16.xpose.msra.mxu0 0
      %4142 = vmatprep.subr.bf16.mxu0 0
      %4143 = vmatpush2.bf16.xpose.msra.mxu0 0
      %4144 = vmatprep.subr.bf16.mxu0 0
      %4145 = vmatpush2.bf16.xpose.msra.mxu0 0
      %4146 = vmatprep.subr.bf16.mxu0 0
      %4147 = vmatpush2.bf16.xpose.msra.mxu0 0
      %4148 = vmatprep.mubr.bf16.mxu0 0
      %4149 = vmatmul.mubr.bf16.gmra.mxu0 %v4111
      %v4150 = vpop.f32.mrf.mxu0
      %v4151 = vadd.f32 0.0, %v4150
      %v4152 = vpop.f32.mrf.mxu0
      %v4153 = vpop.f32.mrf.mxu0
      %v4154 = vpop.f32.mrf.mxu0
      %4155 = vdwg.mxu0
      %4156 = vrot.lane.b32.xlu0 %v1219, 104
      %v4157 = vpop.permute.xlu0 %4156
      %4158 = vrot.lane.b32.xlu0 %v1227, 104
      %v4159 = vpop.permute.xlu0 %4158
      %v4161 = vsel %vm1228, %v4157, 0
      %v4164 = vsel %vm1228, %v4159, 0
      %4166 = vmatprep.subr.bf16.mxu0 0
      %4167 = vmatpush1.bf16.xpose.msra.mxu0 0
      %4168 = vmatprep.subr.bf16.mxu0 0
      %4169 = vmatpush1.bf16.xpose.msra.mxu0 0
      %4170 = vmatprep.subr.bf16.mxu0 0
      %4171 = vmatpush1.bf16.xpose.msra.mxu0 0
      %4172 = vmatprep.subr.bf16.mxu0 0
      %4173 = vmatpush1.bf16.xpose.msra.mxu0 0
      %4174 = vmatprep.subr.bf16.mxu0 0
      %4175 = vmatpush1.bf16.xpose.msra.mxu0 0
      %4176 = vmatprep.subr.bf16.mxu0 0
      %4177 = vmatpush1.bf16.xpose.msra.mxu0 0
      %4178 = vmatprep.subr.bf16.mxu0 0
      %4179 = vmatpush1.bf16.xpose.msra.mxu0 0
      %4180 = vmatprep.subr.bf16.mxu0 0
      %4181 = vmatpush1.bf16.xpose.msra.mxu0 %v4164
      %4182 = vmatprep.subr.bf16.mxu0 0
      %4183 = vmatpush2.bf16.xpose.msra.mxu0 0
      %4184 = vmatprep.subr.bf16.mxu0 0
      %4185 = vmatpush2.bf16.xpose.msra.mxu0 0
      %4186 = vmatprep.subr.bf16.mxu0 0
      %4187 = vmatpush2.bf16.xpose.msra.mxu0 0
      %4188 = vmatprep.subr.bf16.mxu0 0
      %4189 = vmatpush2.bf16.xpose.msra.mxu0 0
      %4190 = vmatprep.subr.bf16.mxu0 0
      %4191 = vmatpush2.bf16.xpose.msra.mxu0 0
      %4192 = vmatprep.subr.bf16.mxu0 0
      %4193 = vmatpush2.bf16.xpose.msra.mxu0 0
      %4194 = vmatprep.subr.bf16.mxu0 0
      %4195 = vmatpush2.bf16.xpose.msra.mxu0 0
      %4196 = vmatprep.subr.bf16.mxu0 0
      %4197 = vmatpush2.bf16.xpose.msra.mxu0 0
      %4198 = vmatprep.mubr.bf16.mxu0 0
      %4199 = vmatmul.mubr.bf16.gmra.mxu0 %v4161
      %v4200 = vpop.f32.mrf.mxu0
      %v4201 = vadd.f32 0.0, %v4200
      %v4202 = vpop.f32.mrf.mxu0
      %v4203 = vpop.f32.mrf.mxu0
      %v4204 = vpop.f32.mrf.mxu0
      %4205 = vdwg.mxu0
      %v4206 = vsel %vm1597, %v3851, -inf
      %4207 = vmax.xlane.f32.xlu0 %v4206
      %v4208 = vpop.xlane.xlu0 %4207
      %v4209 = vsel %vm1597, %v3901, -inf
      %4210 = vmax.xlane.f32.xlu0 %v4209
      %v4211 = vpop.xlane.xlu0 %4210
      %v4212 = vsel %vm1597, %v3951, -inf
      %4213 = vmax.xlane.f32.xlu0 %v4212
      %v4214 = vpop.xlane.xlu0 %4213
      %v4215 = vsel %vm1597, %v4001, -inf
      %4216 = vmax.xlane.f32.xlu0 %v4215
      %v4217 = vpop.xlane.xlu0 %4216
      %v4218 = vsel %vm1597, %v4051, -inf
      %4219 = vmax.xlane.f32.xlu0 %v4218
      %v4220 = vpop.xlane.xlu0 %4219
      %v4221 = vsel %vm1597, %v4101, -inf
      %4222 = vmax.xlane.f32.xlu0 %v4221
      %v4223 = vpop.xlane.xlu0 %4222
      %v4224 = vsel %vm1597, %v4151, -inf
      %4225 = vmax.xlane.f32.xlu0 %v4224
      %v4226 = vpop.xlane.xlu0 %4225
      %v4227 = vsel %vm1597, %v4201, -inf
      %4228 = vmax.xlane.f32.xlu0 %v4227
      %v4229 = vpop.xlane.xlu0 %4228
      %v4230 = vsub.f32 %v3851, %v4208
      %v4231 = vsub.f32 %v3901, %v4211
      %v4232 = vsub.f32 %v3951, %v4214
      %v4233 = vsub.f32 %v4001, %v4217
      %v4234 = vsub.f32 %v4051, %v4220
      %v4235 = vsub.f32 %v4101, %v4223
      %v4236 = vsub.f32 %v4151, %v4226
      %v4237 = vsub.f32 %v4201, %v4229
      %v4238 = vmul.f32 %v4230, 1.442695
      %v4239 = vpow.pop %v4238
      %v4240 = vmul.f32 %v4231, 1.442695
      %v4241 = vpow.pop %v4240
      %v4242 = vmul.f32 %v4232, 1.442695
      %v4243 = vpow.pop %v4242
      %v4244 = vmul.f32 %v4233, 1.442695
      %v4245 = vpow.pop %v4244
      %v4246 = vmul.f32 %v4234, 1.442695
      %v4247 = vpow.pop %v4246
      %v4248 = vmul.f32 %v4235, 1.442695
      %v4249 = vpow.pop %v4248
      %v4250 = vmul.f32 %v4236, 1.442695
      %v4251 = vpow.pop %v4250
      %v4252 = vmul.f32 %v4237, 1.442695
      %v4253 = vpow.pop %v4252
      %v4254 = vsel %vm1597, %v4239, 0.0
      %4255 = vadd.xlane.f32.xlu0 %v4254
      %v4256 = vpop.xlane.xlu0 %4255
      %v4257 = vsel %vm1597, %v4241, 0.0
      %4258 = vadd.xlane.f32.xlu0 %v4257
      %v4259 = vpop.xlane.xlu0 %4258
      %v4260 = vsel %vm1597, %v4243, 0.0
      %4261 = vadd.xlane.f32.xlu0 %v4260
      %v4262 = vpop.xlane.xlu0 %4261
      %v4263 = vsel %vm1597, %v4245, 0.0
      %4264 = vadd.xlane.f32.xlu0 %v4263
      %v4265 = vpop.xlane.xlu0 %4264
      %v4266 = vsel %vm1597, %v4247, 0.0
      %4267 = vadd.xlane.f32.xlu0 %v4266
      %v4268 = vpop.xlane.xlu0 %4267
      %v4269 = vsel %vm1597, %v4249, 0.0
      %4270 = vadd.xlane.f32.xlu0 %v4269
      %v4271 = vpop.xlane.xlu0 %4270
      %v4272 = vsel %vm1597, %v4251, 0.0
      %4273 = vadd.xlane.f32.xlu0 %v4272
      %v4274 = vpop.xlane.xlu0 %4273
      %v4275 = vsel %vm1597, %v4253, 0.0
      %4276 = vadd.xlane.f32.xlu0 %v4275
      %v4277 = vpop.xlane.xlu0 %4276
      %v4278 = vrcp.pop %v4256
      %v4279 = vrcp.pop %v4259
      %v4280 = vrcp.pop %v4262
      %v4281 = vrcp.pop %v4265
      %v4282 = vrcp.pop %v4268
      %v4283 = vrcp.pop %v4271
      %v4284 = vrcp.pop %v4274
      %v4285 = vrcp.pop %v4277
      %v4286 = vmul.f32 %v4239, %v4278
      %v4287 = vmul.f32 %v4241, %v4279
      %v4288 = vmul.f32 %v4243, %v4280
      %v4289 = vmul.f32 %v4245, %v4281
      %v4290 = vmul.f32 %v4247, %v4282
      %v4291 = vmul.f32 %v4249, %v4283
      %v4292 = vmul.f32 %v4251, %v4284
      %v4293 = vmul.f32 %v4253, %v4285
      %v4294 = vpack.c.bf16 %v4286, %v4286
      %v4295 = vpack.c.bf16 %v4287, %v4287
      %v4296 = vpack.c.bf16 %v4288, %v4288
      %v4297 = vpack.c.bf16 %v4289, %v4289
      %v4298 = vpack.c.bf16 %v4290, %v4290
      %v4299 = vpack.c.bf16 %v4291, %v4291
      %v4300 = vpack.c.bf16 %v4292, %v4292
      %v4301 = vpack.c.bf16 %v4293, %v4293
      %4302 = vrot.lane.b32.xlu0 %v1220, 72
      %v4303 = vpop.permute.xlu0 %4302
      %v4306 = vsel %vm1597, %v4294, 0
      %4308 = vmatprep.subr.bf16.mxu0 0
      %4309 = vmatpush1.bf16.msra.mxu0 0
      %4310 = vmatprep.subr.bf16.mxu0 0
      %4311 = vmatpush1.bf16.msra.mxu0 0
      %4312 = vmatprep.subr.bf16.mxu0 0
      %4313 = vmatpush1.bf16.msra.mxu0 0
      %4314 = vmatprep.subr.bf16.mxu0 0
      %4315 = vmatpush1.bf16.msra.mxu0 0
      %4316 = vmatprep.subr.bf16.mxu0 0
      %4317 = vmatpush1.bf16.msra.mxu0 0
      %4318 = vmatprep.subr.bf16.mxu0 0
      %4319 = vmatpush1.bf16.msra.mxu0 0
      %4320 = vmatprep.subr.bf16.mxu0 0
      %4321 = vmatpush1.bf16.msra.mxu0 0
      %4322 = vmatprep.subr.bf16.mxu0 0
      %4323 = vmatpush1.bf16.msra.mxu0 %v4303
      %4324 = vmatprep.subr.bf16.mxu0 0
      %4325 = vmatpush2.bf16.msra.mxu0 0
      %4326 = vmatprep.subr.bf16.mxu0 0
      %4327 = vmatpush2.bf16.msra.mxu0 0
      %4328 = vmatprep.subr.bf16.mxu0 0
      %4329 = vmatpush2.bf16.msra.mxu0 0
      %4330 = vmatprep.subr.bf16.mxu0 0
      %4331 = vmatpush2.bf16.msra.mxu0 0
      %4332 = vmatprep.subr.bf16.mxu0 0
      %4333 = vmatpush2.bf16.msra.mxu0 0
      %4334 = vmatprep.subr.bf16.mxu0 0
      %4335 = vmatpush2.bf16.msra.mxu0 0
      %4336 = vmatprep.subr.bf16.mxu0 0
      %4337 = vmatpush2.bf16.msra.mxu0 0
      %4338 = vmatprep.subr.bf16.mxu0 0
      %4339 = vmatpush2.bf16.msra.mxu0 0
      %4340 = vmatprep.mubr.bf16.mxu0 0
      %4341 = vmatmul.mubr.bf16.gmra.mxu0 %v4306
      %v4342 = vpop.f32.mrf.mxu0
      %v4343 = vadd.f32 0.0, %v4342
      %v4344 = vpop.f32.mrf.mxu0
      %v4345 = vpop.f32.mrf.mxu0
      %v4346 = vpop.f32.mrf.mxu0
      %4347 = vdwg.mxu0
      %4348 = vrot.lane.b32.xlu0 %v1221, 72
      %v4349 = vpop.permute.xlu0 %4348
      %v4352 = vsel %vm1597, %v4295, 0
      %4354 = vmatprep.subr.bf16.mxu0 0
      %4355 = vmatpush1.bf16.msra.mxu0 0
      %4356 = vmatprep.subr.bf16.mxu0 0
      %4357 = vmatpush1.bf16.msra.mxu0 0
      %4358 = vmatprep.subr.bf16.mxu0 0
      %4359 = vmatpush1.bf16.msra.mxu0 0
      %4360 = vmatprep.subr.bf16.mxu0 0
      %4361 = vmatpush1.bf16.msra.mxu0 0
      %4362 = vmatprep.subr.bf16.mxu0 0
      %4363 = vmatpush1.bf16.msra.mxu0 0
      %4364 = vmatprep.subr.bf16.mxu0 0
      %4365 = vmatpush1.bf16.msra.mxu0 0
      %4366 = vmatprep.subr.bf16.mxu0 0
      %4367 = vmatpush1.bf16.msra.mxu0 0
      %4368 = vmatprep.subr.bf16.mxu0 0
      %4369 = vmatpush1.bf16.msra.mxu0 %v4349
      %4370 = vmatprep.subr.bf16.mxu0 0
      %4371 = vmatpush2.bf16.msra.mxu0 0
      %4372 = vmatprep.subr.bf16.mxu0 0
      %4373 = vmatpush2.bf16.msra.mxu0 0
      %4374 = vmatprep.subr.bf16.mxu0 0
      %4375 = vmatpush2.bf16.msra.mxu0 0
      %4376 = vmatprep.subr.bf16.mxu0 0
      %4377 = vmatpush2.bf16.msra.mxu0 0
      %4378 = vmatprep.subr.bf16.mxu0 0
      %4379 = vmatpush2.bf16.msra.mxu0 0
      %4380 = vmatprep.subr.bf16.mxu0 0
      %4381 = vmatpush2.bf16.msra.mxu0 0
      %4382 = vmatprep.subr.bf16.mxu0 0
      %4383 = vmatpush2.bf16.msra.mxu0 0
      %4384 = vmatprep.subr.bf16.mxu0 0
      %4385 = vmatpush2.bf16.msra.mxu0 0
      %4386 = vmatprep.mubr.bf16.mxu0 0
      %4387 = vmatmul.mubr.bf16.gmra.mxu0 %v4352
      %v4388 = vpop.f32.mrf.mxu0
      %v4389 = vadd.f32 0.0, %v4388
      %v4390 = vpop.f32.mrf.mxu0
      %v4391 = vpop.f32.mrf.mxu0
      %v4392 = vpop.f32.mrf.mxu0
      %4393 = vdwg.mxu0
      %4394 = vrot.lane.b32.xlu0 %v1222, 72
      %v4395 = vpop.permute.xlu0 %4394
      %v4398 = vsel %vm1597, %v4296, 0
      %4400 = vmatprep.subr.bf16.mxu0 0
      %4401 = vmatpush1.bf16.msra.mxu0 0
      %4402 = vmatprep.subr.bf16.mxu0 0
      %4403 = vmatpush1.bf16.msra.mxu0 0
      %4404 = vmatprep.subr.bf16.mxu0 0
      %4405 = vmatpush1.bf16.msra.mxu0 0
      %4406 = vmatprep.subr.bf16.mxu0 0
      %4407 = vmatpush1.bf16.msra.mxu0 0
      %4408 = vmatprep.subr.bf16.mxu0 0
      %4409 = vmatpush1.bf16.msra.mxu0 0
      %4410 = vmatprep.subr.bf16.mxu0 0
      %4411 = vmatpush1.bf16.msra.mxu0 0
      %4412 = vmatprep.subr.bf16.mxu0 0
      %4413 = vmatpush1.bf16.msra.mxu0 0
      %4414 = vmatprep.subr.bf16.mxu0 0
      %4415 = vmatpush1.bf16.msra.mxu0 %v4395
      %4416 = vmatprep.subr.bf16.mxu0 0
      %4417 = vmatpush2.bf16.msra.mxu0 0
      %4418 = vmatprep.subr.bf16.mxu0 0
      %4419 = vmatpush2.bf16.msra.mxu0 0
      %4420 = vmatprep.subr.bf16.mxu0 0
      %4421 = vmatpush2.bf16.msra.mxu0 0
      %4422 = vmatprep.subr.bf16.mxu0 0
      %4423 = vmatpush2.bf16.msra.mxu0 0
      %4424 = vmatprep.subr.bf16.mxu0 0
      %4425 = vmatpush2.bf16.msra.mxu0 0
      %4426 = vmatprep.subr.bf16.mxu0 0
      %4427 = vmatpush2.bf16.msra.mxu0 0
      %4428 = vmatprep.subr.bf16.mxu0 0
      %4429 = vmatpush2.bf16.msra.mxu0 0
      %4430 = vmatprep.subr.bf16.mxu0 0
      %4431 = vmatpush2.bf16.msra.mxu0 0
      %4432 = vmatprep.mubr.bf16.mxu0 0
      %4433 = vmatmul.mubr.bf16.gmra.mxu0 %v4398
      %v4434 = vpop.f32.mrf.mxu0
      %v4435 = vadd.f32 0.0, %v4434
      %v4436 = vpop.f32.mrf.mxu0
      %v4437 = vpop.f32.mrf.mxu0
      %v4438 = vpop.f32.mrf.mxu0
      %4439 = vdwg.mxu0
      %4440 = vrot.lane.b32.xlu0 %v1223, 72
      %v4441 = vpop.permute.xlu0 %4440
      %v4444 = vsel %vm1597, %v4297, 0
      %4446 = vmatprep.subr.bf16.mxu0 0
      %4447 = vmatpush1.bf16.msra.mxu0 0
      %4448 = vmatprep.subr.bf16.mxu0 0
      %4449 = vmatpush1.bf16.msra.mxu0 0
      %4450 = vmatprep.subr.bf16.mxu0 0
      %4451 = vmatpush1.bf16.msra.mxu0 0
      %4452 = vmatprep.subr.bf16.mxu0 0
      %4453 = vmatpush1.bf16.msra.mxu0 0
      %4454 = vmatprep.subr.bf16.mxu0 0
      %4455 = vmatpush1.bf16.msra.mxu0 0
      %4456 = vmatprep.subr.bf16.mxu0 0
      %4457 = vmatpush1.bf16.msra.mxu0 0
      %4458 = vmatprep.subr.bf16.mxu0 0
      %4459 = vmatpush1.bf16.msra.mxu0 0
      %4460 = vmatprep.subr.bf16.mxu0 0
      %4461 = vmatpush1.bf16.msra.mxu0 %v4441
      %4462 = vmatprep.subr.bf16.mxu0 0
      %4463 = vmatpush2.bf16.msra.mxu0 0
      %4464 = vmatprep.subr.bf16.mxu0 0
      %4465 = vmatpush2.bf16.msra.mxu0 0
      %4466 = vmatprep.subr.bf16.mxu0 0
      %4467 = vmatpush2.bf16.msra.mxu0 0
      %4468 = vmatprep.subr.bf16.mxu0 0
      %4469 = vmatpush2.bf16.msra.mxu0 0
      %4470 = vmatprep.subr.bf16.mxu0 0
      %4471 = vmatpush2.bf16.msra.mxu0 0
      %4472 = vmatprep.subr.bf16.mxu0 0
      %4473 = vmatpush2.bf16.msra.mxu0 0
      %4474 = vmatprep.subr.bf16.mxu0 0
      %4475 = vmatpush2.bf16.msra.mxu0 0
      %4476 = vmatprep.subr.bf16.mxu0 0
      %4477 = vmatpush2.bf16.msra.mxu0 0
      %4478 = vmatprep.mubr.bf16.mxu0 0
      %4479 = vmatmul.mubr.bf16.gmra.mxu0 %v4444
      %v4480 = vpop.f32.mrf.mxu0
      %v4481 = vadd.f32 0.0, %v4480
      %v4482 = vpop.f32.mrf.mxu0
      %v4483 = vpop.f32.mrf.mxu0
      %v4484 = vpop.f32.mrf.mxu0
      %4485 = vdwg.mxu0
      %4486 = vrot.lane.b32.xlu0 %v1224, 72
      %v4487 = vpop.permute.xlu0 %4486
      %v4490 = vsel %vm1597, %v4298, 0
      %4492 = vmatprep.subr.bf16.mxu0 0
      %4493 = vmatpush1.bf16.msra.mxu0 0
      %4494 = vmatprep.subr.bf16.mxu0 0
      %4495 = vmatpush1.bf16.msra.mxu0 0
      %4496 = vmatprep.subr.bf16.mxu0 0
      %4497 = vmatpush1.bf16.msra.mxu0 0
      %4498 = vmatprep.subr.bf16.mxu0 0
      %4499 = vmatpush1.bf16.msra.mxu0 0
      %4500 = vmatprep.subr.bf16.mxu0 0
      %4501 = vmatpush1.bf16.msra.mxu0 0
      %4502 = vmatprep.subr.bf16.mxu0 0
      %4503 = vmatpush1.bf16.msra.mxu0 0
      %4504 = vmatprep.subr.bf16.mxu0 0
      %4505 = vmatpush1.bf16.msra.mxu0 0
      %4506 = vmatprep.subr.bf16.mxu0 0
      %4507 = vmatpush1.bf16.msra.mxu0 %v4487
      %4508 = vmatprep.subr.bf16.mxu0 0
      %4509 = vmatpush2.bf16.msra.mxu0 0
      %4510 = vmatprep.subr.bf16.mxu0 0
      %4511 = vmatpush2.bf16.msra.mxu0 0
      %4512 = vmatprep.subr.bf16.mxu0 0
      %4513 = vmatpush2.bf16.msra.mxu0 0
      %4514 = vmatprep.subr.bf16.mxu0 0
      %4515 = vmatpush2.bf16.msra.mxu0 0
      %4516 = vmatprep.subr.bf16.mxu0 0
      %4517 = vmatpush2.bf16.msra.mxu0 0
      %4518 = vmatprep.subr.bf16.mxu0 0
      %4519 = vmatpush2.bf16.msra.mxu0 0
      %4520 = vmatprep.subr.bf16.mxu0 0
      %4521 = vmatpush2.bf16.msra.mxu0 0
      %4522 = vmatprep.subr.bf16.mxu0 0
      %4523 = vmatpush2.bf16.msra.mxu0 0
      %4524 = vmatprep.mubr.bf16.mxu0 0
      %4525 = vmatmul.mubr.bf16.gmra.mxu0 %v4490
      %v4526 = vpop.f32.mrf.mxu0
      %v4527 = vadd.f32 0.0, %v4526
      %v4528 = vpop.f32.mrf.mxu0
      %v4529 = vpop.f32.mrf.mxu0
      %v4530 = vpop.f32.mrf.mxu0
      %4531 = vdwg.mxu0
      %4532 = vrot.lane.b32.xlu0 %v1225, 72
      %v4533 = vpop.permute.xlu0 %4532
      %v4536 = vsel %vm1597, %v4299, 0
      %4538 = vmatprep.subr.bf16.mxu0 0
      %4539 = vmatpush1.bf16.msra.mxu0 0
      %4540 = vmatprep.subr.bf16.mxu0 0
      %4541 = vmatpush1.bf16.msra.mxu0 0
      %4542 = vmatprep.subr.bf16.mxu0 0
      %4543 = vmatpush1.bf16.msra.mxu0 0
      %4544 = vmatprep.subr.bf16.mxu0 0
      %4545 = vmatpush1.bf16.msra.mxu0 0
      %4546 = vmatprep.subr.bf16.mxu0 0
      %4547 = vmatpush1.bf16.msra.mxu0 0
      %4548 = vmatprep.subr.bf16.mxu0 0
      %4549 = vmatpush1.bf16.msra.mxu0 0
      %4550 = vmatprep.subr.bf16.mxu0 0
      %4551 = vmatpush1.bf16.msra.mxu0 0
      %4552 = vmatprep.subr.bf16.mxu0 0
      %4553 = vmatpush1.bf16.msra.mxu0 %v4533
      %4554 = vmatprep.subr.bf16.mxu0 0
      %4555 = vmatpush2.bf16.msra.mxu0 0
      %4556 = vmatprep.subr.bf16.mxu0 0
      %4557 = vmatpush2.bf16.msra.mxu0 0
      %4558 = vmatprep.subr.bf16.mxu0 0
      %4559 = vmatpush2.bf16.msra.mxu0 0
      %4560 = vmatprep.subr.bf16.mxu0 0
      %4561 = vmatpush2.bf16.msra.mxu0 0
      %4562 = vmatprep.subr.bf16.mxu0 0
      %4563 = vmatpush2.bf16.msra.mxu0 0
      %4564 = vmatprep.subr.bf16.mxu0 0
      %4565 = vmatpush2.bf16.msra.mxu0 0
      %4566 = vmatprep.subr.bf16.mxu0 0
      %4567 = vmatpush2.bf16.msra.mxu0 0
      %4568 = vmatprep.subr.bf16.mxu0 0
      %4569 = vmatpush2.bf16.msra.mxu0 0
      %4570 = vmatprep.mubr.bf16.mxu0 0
      %4571 = vmatmul.mubr.bf16.gmra.mxu0 %v4536
      %v4572 = vpop.f32.mrf.mxu0
      %v4573 = vadd.f32 0.0, %v4572
      %v4574 = vpop.f32.mrf.mxu0
      %v4575 = vpop.f32.mrf.mxu0
      %v4576 = vpop.f32.mrf.mxu0
      %4577 = vdwg.mxu0
      %4578 = vrot.lane.b32.xlu0 %v1226, 72
      %v4579 = vpop.permute.xlu0 %4578
      %v4582 = vsel %vm1597, %v4300, 0
      %4584 = vmatprep.subr.bf16.mxu0 0
      %4585 = vmatpush1.bf16.msra.mxu0 0
      %4586 = vmatprep.subr.bf16.mxu0 0
      %4587 = vmatpush1.bf16.msra.mxu0 0
      %4588 = vmatprep.subr.bf16.mxu0 0
      %4589 = vmatpush1.bf16.msra.mxu0 0
      %4590 = vmatprep.subr.bf16.mxu0 0
      %4591 = vmatpush1.bf16.msra.mxu0 0
      %4592 = vmatprep.subr.bf16.mxu0 0
      %4593 = vmatpush1.bf16.msra.mxu0 0
      %4594 = vmatprep.subr.bf16.mxu0 0
      %4595 = vmatpush1.bf16.msra.mxu0 0
      %4596 = vmatprep.subr.bf16.mxu0 0
      %4597 = vmatpush1.bf16.msra.mxu0 0
      %4598 = vmatprep.subr.bf16.mxu0 0
      %4599 = vmatpush1.bf16.msra.mxu0 %v4579
      %4600 = vmatprep.subr.bf16.mxu0 0
      %4601 = vmatpush2.bf16.msra.mxu0 0
      %4602 = vmatprep.subr.bf16.mxu0 0
      %4603 = vmatpush2.bf16.msra.mxu0 0
      %4604 = vmatprep.subr.bf16.mxu0 0
      %4605 = vmatpush2.bf16.msra.mxu0 0
      %4606 = vmatprep.subr.bf16.mxu0 0
      %4607 = vmatpush2.bf16.msra.mxu0 0
      %4608 = vmatprep.subr.bf16.mxu0 0
      %4609 = vmatpush2.bf16.msra.mxu0 0
      %4610 = vmatprep.subr.bf16.mxu0 0
      %4611 = vmatpush2.bf16.msra.mxu0 0
      %4612 = vmatprep.subr.bf16.mxu0 0
      %4613 = vmatpush2.bf16.msra.mxu0 0
      %4614 = vmatprep.subr.bf16.mxu0 0
      %4615 = vmatpush2.bf16.msra.mxu0 0
      %4616 = vmatprep.mubr.bf16.mxu0 0
      %4617 = vmatmul.mubr.bf16.gmra.mxu0 %v4582
      %v4618 = vpop.f32.mrf.mxu0
      %v4619 = vadd.f32 0.0, %v4618
      %v4620 = vpop.f32.mrf.mxu0
      %v4621 = vpop.f32.mrf.mxu0
      %v4622 = vpop.f32.mrf.mxu0
      %4623 = vdwg.mxu0
      %4624 = vrot.lane.b32.xlu0 %v1227, 72
      %v4625 = vpop.permute.xlu0 %4624
      %v4628 = vsel %vm1597, %v4301, 0
      %4630 = vmatprep.subr.bf16.mxu0 0
      %4631 = vmatpush1.bf16.msra.mxu0 0
      %4632 = vmatprep.subr.bf16.mxu0 0
      %4633 = vmatpush1.bf16.msra.mxu0 0
      %4634 = vmatprep.subr.bf16.mxu0 0
      %4635 = vmatpush1.bf16.msra.mxu0 0
      %4636 = vmatprep.subr.bf16.mxu0 0
      %4637 = vmatpush1.bf16.msra.mxu0 0
      %4638 = vmatprep.subr.bf16.mxu0 0
      %4639 = vmatpush1.bf16.msra.mxu0 0
      %4640 = vmatprep.subr.bf16.mxu0 0
      %4641 = vmatpush1.bf16.msra.mxu0 0
      %4642 = vmatprep.subr.bf16.mxu0 0
      %4643 = vmatpush1.bf16.msra.mxu0 0
      %4644 = vmatprep.subr.bf16.mxu0 0
      %4645 = vmatpush1.bf16.msra.mxu0 %v4625
      %4646 = vmatprep.subr.bf16.mxu0 0
      %4647 = vmatpush2.bf16.msra.mxu0 0
      %4648 = vmatprep.subr.bf16.mxu0 0
      %4649 = vmatpush2.bf16.msra.mxu0 0
      %4650 = vmatprep.subr.bf16.mxu0 0
      %4651 = vmatpush2.bf16.msra.mxu0 0
      %4652 = vmatprep.subr.bf16.mxu0 0
      %4653 = vmatpush2.bf16.msra.mxu0 0
      %4654 = vmatprep.subr.bf16.mxu0 0
      %4655 = vmatpush2.bf16.msra.mxu0 0
      %4656 = vmatprep.subr.bf16.mxu0 0
      %4657 = vmatpush2.bf16.msra.mxu0 0
      %4658 = vmatprep.subr.bf16.mxu0 0
      %4659 = vmatpush2.bf16.msra.mxu0 0
      %4660 = vmatprep.subr.bf16.mxu0 0
      %4661 = vmatpush2.bf16.msra.mxu0 0
      %4662 = vmatprep.mubr.bf16.mxu0 0
      %4663 = vmatmul.mubr.bf16.gmra.mxu0 %v4628
      %v4664 = vpop.f32.mrf.mxu0
      %v4665 = vadd.f32 0.0, %v4664
      %v4666 = vpop.f32.mrf.mxu0
      %v4667 = vpop.f32.mrf.mxu0
      %v4668 = vpop.f32.mrf.mxu0
      %4669 = vdwg.mxu0
      %4678 = vrot.lane.b32.xlu0 %v2615, 8
      %v4679 = vpop.permute.xlu0 %4678
      %4680 = vrot.lane.b32.xlu0 %v2661, 8
      %v4681 = vpop.permute.xlu0 %4680
      %4682 = vrot.lane.b32.xlu0 %v2707, 8
      %v4683 = vpop.permute.xlu0 %4682
      %4684 = vrot.lane.b32.xlu0 %v2753, 8
      %v4685 = vpop.permute.xlu0 %4684
      %4686 = vrot.lane.b32.xlu0 %v2799, 8
      %v4687 = vpop.permute.xlu0 %4686
      %4688 = vrot.lane.b32.xlu0 %v2845, 8
      %v4689 = vpop.permute.xlu0 %4688
      %4690 = vrot.lane.b32.xlu0 %v2891, 8
      %v4691 = vpop.permute.xlu0 %4690
      %4692 = vrot.lane.b32.xlu0 %v2937, 8
      %v4693 = vpop.permute.xlu0 %4692
      %4710 = vrot.lane.b32.xlu0 %v3479, 16
      %v4711 = vpop.permute.xlu0 %4710
      %4712 = vrot.lane.b32.xlu0 %v3525, 16
      %v4713 = vpop.permute.xlu0 %4712
      %4714 = vrot.lane.b32.xlu0 %v3571, 16
      %v4715 = vpop.permute.xlu0 %4714
      %4716 = vrot.lane.b32.xlu0 %v3617, 16
      %v4717 = vpop.permute.xlu0 %4716
      %4718 = vrot.lane.b32.xlu0 %v3663, 16
      %v4719 = vpop.permute.xlu0 %4718
      %4720 = vrot.lane.b32.xlu0 %v3709, 16
      %v4721 = vpop.permute.xlu0 %4720
      %4722 = vrot.lane.b32.xlu0 %v3755, 16
      %v4723 = vpop.permute.xlu0 %4722
      %4724 = vrot.lane.b32.xlu0 %v3801, 16
      %v4725 = vpop.permute.xlu0 %4724
      %4742 = vrot.lane.b32.xlu0 %v4343, 24
      %v4743 = vpop.permute.xlu0 %4742
      %4744 = vrot.lane.b32.xlu0 %v4389, 24
      %v4745 = vpop.permute.xlu0 %4744
      %4746 = vrot.lane.b32.xlu0 %v4435, 24
      %v4747 = vpop.permute.xlu0 %4746
      %4748 = vrot.lane.b32.xlu0 %v4481, 24
      %v4749 = vpop.permute.xlu0 %4748
      %4750 = vrot.lane.b32.xlu0 %v4527, 24
      %v4751 = vpop.permute.xlu0 %4750
      %4752 = vrot.lane.b32.xlu0 %v4573, 24
      %v4753 = vpop.permute.xlu0 %4752
      %4754 = vrot.lane.b32.xlu0 %v4619, 24
      %v4755 = vpop.permute.xlu0 %4754
      %4756 = vrot.lane.b32.xlu0 %v4665, 24
      %v4757 = vpop.permute.xlu0 %4756
      %v4766 = vsel %vm1228, %v1736, %v4679
      %v4767 = vsel %vm1228, %v1783, %v4681
      %v4768 = vsel %vm1228, %v1830, %v4683
      %v4769 = vsel %vm1228, %v1877, %v4685
      %v4770 = vsel %vm1228, %v1924, %v4687
      %v4771 = vsel %vm1228, %v1971, %v4689
      %v4772 = vsel %vm1228, %v2018, %v4691
      %v4773 = vsel %vm1228, %v2065, %v4693
      %v4774 = vsel %vm1597, %v4766, %v4711
      %v4775 = vsel %vm1597, %v4767, %v4713
      %v4776 = vsel %vm1597, %v4768, %v4715
      %v4777 = vsel %vm1597, %v4769, %v4717
      %v4778 = vsel %vm1597, %v4770, %v4719
      %v4779 = vsel %vm1597, %v4771, %v4721
      %v4780 = vsel %vm1597, %v4772, %v4723
      %v4781 = vsel %vm1597, %v4773, %v4725
      %vm4782 = vcmask 195584
      %v4783 = vsel %vm4782, %v4774, %v4743
      %v4784 = vsel %vm4782, %v4775, %v4745
      %v4785 = vsel %vm4782, %v4776, %v4747
      %v4786 = vsel %vm4782, %v4777, %v4749
      %v4787 = vsel %vm4782, %v4778, %v4751
      %v4788 = vsel %vm4782, %v4779, %v4753
      %v4789 = vsel %vm4782, %v4780, %v4755
      %v4790 = vsel %vm4782, %v4781, %v4757
      %v4791 = vpack.c.bf16 %v4784, %v4783
      %v4792 = vpack.c.bf16 %v4786, %v4785
      %v4793 = vpack.c.bf16 %v4788, %v4787
      %v4794 = vpack.c.bf16 %v4790, %v4789
      %v4795 = vld [vmem:[%s10] sm:$0xf]
      %v4796 = vld [vmem:[%s10 + $0x4] sm:$0xf]
      %v4797 = vld [vmem:[%s10 + $0x8] sm:$0xf]
      %v4798 = vld [vmem:[%s10 + $0xc] sm:$0xf]
      %v4803 = vunpack.c.l.b16 %v4795
      %v4804 = vunpack.c.l.b16 %v4796
      %v4805 = vunpack.c.l.b16 %v4797
      %v4806 = vunpack.c.l.b16 %v4798
      %v4807 = vpack.c.b16 %v4804, %v4803
      %v4808 = vpack.c.b16 %v4806, %v4805
      %v4812 = vsel %vm574, %v4791, 0
      %v4815 = vsel %vm574, %v4792, 0
      %v4818 = vsel %vm574, %v4793, 0
      %v4821 = vsel %vm574, %v4794, 0
      %4823 = vmatprep.subr.bf16.mxu0 0
      %4824 = vmatpush1.bf16.msra.mxu0 0
      %4825 = vmatprep.subr.bf16.mxu0 0
      %4826 = vmatpush1.bf16.msra.mxu0 0
      %4827 = vmatprep.subr.bf16.mxu0 0
      %4828 = vmatpush1.bf16.msra.mxu0 0
      %4829 = vmatprep.subr.bf16.mxu0 0
      %4830 = vmatpush1.bf16.msra.mxu0 0
      %4831 = vmatprep.subr.bf16.mxu0 0
      %4832 = vmatpush1.bf16.msra.mxu0 0
      %4833 = vmatprep.subr.bf16.mxu0 0
      %4834 = vmatpush1.bf16.msra.mxu0 0
      %4835 = vmatprep.subr.bf16.mxu0 0
      %4836 = vmatpush1.bf16.msra.mxu0 %v4808
      %4837 = vmatprep.subr.bf16.mxu0 0
      %4838 = vmatpush1.bf16.msra.mxu0 %v4807
      %4839 = vmatprep.subr.bf16.mxu0 0
      %4840 = vmatpush2.bf16.msra.mxu0 0
      %4841 = vmatprep.subr.bf16.mxu0 0
      %4842 = vmatpush2.bf16.msra.mxu0 0
      %4843 = vmatprep.subr.bf16.mxu0 0
      %4844 = vmatpush2.bf16.msra.mxu0 0
      %4845 = vmatprep.subr.bf16.mxu0 0
      %4846 = vmatpush2.bf16.msra.mxu0 0
      %4847 = vmatprep.subr.bf16.mxu0 0
      %4848 = vmatpush2.bf16.msra.mxu0 0
      %4849 = vmatprep.subr.bf16.mxu0 0
      %4850 = vmatpush2.bf16.msra.mxu0 0
      %4851 = vmatprep.subr.bf16.mxu0 0
      %4852 = vmatpush2.bf16.msra.mxu0 0
      %4853 = vmatprep.subr.bf16.mxu0 0
      %4854 = vmatpush2.bf16.msra.mxu0 0
      %4855 = vmatprep.mubr.bf16.mxu0 0
      %4856 = vmatmul.mubr.bf16.gmra.mxu0 %v4812
      %v4857 = vpop.f32.mrf.mxu0
      %v4858 = vadd.f32 0.0, %v4857
      %v4859 = vpop.f32.mrf.mxu0
      %v4860 = vpop.f32.mrf.mxu0
      %v4861 = vadd.f32 0.0, %v4860
      %v4862 = vpop.f32.mrf.mxu0
      %4863 = vmatprep.mubr.bf16.mxu0 0
      %4864 = vmatmul.mubr.bf16.gmra.mxu0 %v4815
      %v4865 = vpop.f32.mrf.mxu0
      %v4866 = vadd.f32 0.0, %v4865
      %v4867 = vpop.f32.mrf.mxu0
      %v4868 = vpop.f32.mrf.mxu0
      %v4869 = vadd.f32 0.0, %v4868
      %v4870 = vpop.f32.mrf.mxu0
      %4871 = vmatprep.mubr.bf16.mxu0 0
      %4872 = vmatmul.mubr.bf16.gmra.mxu0 %v4818
      %v4873 = vpop.f32.mrf.mxu0
      %v4874 = vadd.f32 0.0, %v4873
      %v4875 = vpop.f32.mrf.mxu0
      %v4876 = vpop.f32.mrf.mxu0
      %v4877 = vadd.f32 0.0, %v4876
      %v4878 = vpop.f32.mrf.mxu0
      %4879 = vmatprep.mubr.bf16.mxu0 0
      %4880 = vmatmul.mubr.bf16.gmra.mxu0 %v4821
      %v4881 = vpop.f32.mrf.mxu0
      %v4882 = vadd.f32 0.0, %v4881
      %v4883 = vpop.f32.mrf.mxu0
      %v4884 = vpop.f32.mrf.mxu0
      %v4885 = vadd.f32 0.0, %v4884
      %v4886 = vpop.f32.mrf.mxu0
      %4887 = vdwg.mxu0
      %v4888 = vadd.f32 %v548, %v4858
      %v4889 = vadd.f32 %v549, %v4861
      %v4890 = vadd.f32 %v550, %v4866
      %v4891 = vadd.f32 %v551, %v4869
      %v4892 = vadd.f32 %v552, %v4874
      %v4893 = vadd.f32 %v553, %v4877
      %v4894 = vadd.f32 %v554, %v4882
      %v4895 = vadd.f32 %v555, %v4885
      %v4896 = vld [vmem:[%s11] sm:$0x1]
      %v4898 = vlaneseq
      %v4899 = vshrl.u32 %v4898, 7
      %v4900 = vsub.s32 0, %v4899
      %v4901 = vrot.slane %v4896, %v4900
      %v4903 = vadd.f32 %v4888, %v4901
      %v4904 = vadd.f32 %v4889, %v4901
      %v4905 = vadd.f32 %v4890, %v4901
      %v4906 = vadd.f32 %v4891, %v4901
      %v4907 = vadd.f32 %v4892, %v4901
      %v4908 = vadd.f32 %v4893, %v4901
      %v4909 = vadd.f32 %v4894, %v4901
      %v4910 = vadd.f32 %v4895, %v4901
      %v4911 = vld [vmem:[%s6] sm:$0x1]
      %v4912 = vld [vmem:[%s7] sm:$0x1]
      %v4913 = vsel %vm574, %v4903, 0.0
      %4914 = vadd.xlane.f32.xlu0 %v4913
      %v4915 = vpop.xlane.xlu0 %4914
      %v4916 = vsel %vm574, %v4904, 0.0
      %4917 = vadd.xlane.f32.xlu0 %v4916
      %v4918 = vpop.xlane.xlu0 %4917
      %v4919 = vsel %vm574, %v4905, 0.0
      %4920 = vadd.xlane.f32.xlu0 %v4919
      %v4921 = vpop.xlane.xlu0 %4920
      %v4922 = vsel %vm574, %v4906, 0.0
      %4923 = vadd.xlane.f32.xlu0 %v4922
      %v4924 = vpop.xlane.xlu0 %4923
      %v4925 = vsel %vm574, %v4907, 0.0
      %4926 = vadd.xlane.f32.xlu0 %v4925
      %v4927 = vpop.xlane.xlu0 %4926
      %v4928 = vsel %vm574, %v4908, 0.0
      %4929 = vadd.xlane.f32.xlu0 %v4928
      %v4930 = vpop.xlane.xlu0 %4929
      %v4931 = vsel %vm574, %v4909, 0.0
      %4932 = vadd.xlane.f32.xlu0 %v4931
      %v4933 = vpop.xlane.xlu0 %4932
      %v4934 = vsel %vm574, %v4910, 0.0
      %4935 = vadd.xlane.f32.xlu0 %v4934
      %v4936 = vpop.xlane.xlu0 %4935
      %v4937 = vmul.f32 %v4915, %v599
      %v4938 = vmul.f32 %v4918, %v599
      %v4939 = vmul.f32 %v4921, %v599
      %v4940 = vmul.f32 %v4924, %v599
      %v4941 = vmul.f32 %v4927, %v599
      %v4942 = vmul.f32 %v4930, %v599
      %v4943 = vmul.f32 %v4933, %v599
      %v4944 = vmul.f32 %v4936, %v599
      %v4945 = vsub.f32 %v4903, %v4937
      %v4946 = vsub.f32 %v4904, %v4938
      %v4947 = vsub.f32 %v4905, %v4939
      %v4948 = vsub.f32 %v4906, %v4940
      %v4949 = vsub.f32 %v4907, %v4941
      %v4950 = vsub.f32 %v4908, %v4942
      %v4951 = vsub.f32 %v4909, %v4943
      %v4952 = vsub.f32 %v4910, %v4944
      %v4953 = vmul.f32 %v4945, %v4945
      %v4954 = vmul.f32 %v4946, %v4946
      %v4955 = vmul.f32 %v4947, %v4947
      %v4956 = vmul.f32 %v4948, %v4948
      %v4957 = vmul.f32 %v4949, %v4949
      %v4958 = vmul.f32 %v4950, %v4950
      %v4959 = vmul.f32 %v4951, %v4951
      %v4960 = vmul.f32 %v4952, %v4952
      %v4961 = vsel %vm574, %v4953, 0.0
      %4962 = vadd.xlane.f32.xlu0 %v4961
      %v4963 = vpop.xlane.xlu0 %4962
      %v4964 = vsel %vm574, %v4954, 0.0
      %4965 = vadd.xlane.f32.xlu0 %v4964
      %v4966 = vpop.xlane.xlu0 %4965
      %v4967 = vsel %vm574, %v4955, 0.0
      %4968 = vadd.xlane.f32.xlu0 %v4967
      %v4969 = vpop.xlane.xlu0 %4968
      %v4970 = vsel %vm574, %v4956, 0.0
      %4971 = vadd.xlane.f32.xlu0 %v4970
      %v4972 = vpop.xlane.xlu0 %4971
      %v4973 = vsel %vm574, %v4957, 0.0
      %4974 = vadd.xlane.f32.xlu0 %v4973
      %v4975 = vpop.xlane.xlu0 %4974
      %v4976 = vsel %vm574, %v4958, 0.0
      %4977 = vadd.xlane.f32.xlu0 %v4976
      %v4978 = vpop.xlane.xlu0 %4977
      %v4979 = vsel %vm574, %v4959, 0.0
      %4980 = vadd.xlane.f32.xlu0 %v4979
      %v4981 = vpop.xlane.xlu0 %4980
      %v4982 = vsel %vm574, %v4960, 0.0
      %4983 = vadd.xlane.f32.xlu0 %v4982
      %v4984 = vpop.xlane.xlu0 %4983
      %v4985 = vmul.f32 %v4963, %v599
      %v4986 = vmul.f32 %v4966, %v599
      %v4987 = vmul.f32 %v4969, %v599
      %v4988 = vmul.f32 %v4972, %v599
      %v4989 = vmul.f32 %v4975, %v599
      %v4990 = vmul.f32 %v4978, %v599
      %v4991 = vmul.f32 %v4981, %v599
      %v4992 = vmul.f32 %v4984, %v599
      %v4993 = vadd.f32 %v4985, 1e-05
      %v4994 = vadd.f32 %v4986, 1e-05
      %v4995 = vadd.f32 %v4987, 1e-05
      %v4996 = vadd.f32 %v4988, 1e-05
      %v4997 = vadd.f32 %v4989, 1e-05
      %v4998 = vadd.f32 %v4990, 1e-05
      %v4999 = vadd.f32 %v4991, 1e-05
      %v5000 = vadd.f32 %v4992, 1e-05
      %v5001 = vrsqrt.pop %v4993
      %v5002 = vrsqrt.pop %v4994
      %v5003 = vrsqrt.pop %v4995
      %v5004 = vrsqrt.pop %v4996
      %v5005 = vrsqrt.pop %v4997
      %v5006 = vrsqrt.pop %v4998
      %v5007 = vrsqrt.pop %v4999
      %v5008 = vrsqrt.pop %v5000
      %v5009 = vmul.f32 %v4945, %v5001
      %v5010 = vmul.f32 %v4946, %v5002
      %v5011 = vmul.f32 %v4947, %v5003
      %v5012 = vmul.f32 %v4948, %v5004
      %v5013 = vmul.f32 %v4949, %v5005
      %v5014 = vmul.f32 %v4950, %v5006
      %v5015 = vmul.f32 %v4951, %v5007
      %v5016 = vmul.f32 %v4952, %v5008
      %v5018 = vlaneseq
      %v5019 = vshrl.u32 %v5018, 7
      %v5020 = vsub.s32 0, %v5019
      %v5021 = vrot.slane %v4911, %v5020
      %v5023 = vmul.f32 %v5009, %v5021
      %v5024 = vmul.f32 %v5010, %v5021
      %v5025 = vmul.f32 %v5011, %v5021
      %v5026 = vmul.f32 %v5012, %v5021
      %v5027 = vmul.f32 %v5013, %v5021
      %v5028 = vmul.f32 %v5014, %v5021
      %v5029 = vmul.f32 %v5015, %v5021
      %v5030 = vmul.f32 %v5016, %v5021
      %v5032 = vlaneseq
      %v5033 = vshrl.u32 %v5032, 7
      %v5034 = vsub.s32 0, %v5033
      %v5035 = vrot.slane %v4912, %v5034
      %v5037 = vadd.f32 %v5023, %v5035
      %v5038 = vadd.f32 %v5024, %v5035
      %v5039 = vadd.f32 %v5025, %v5035
      %v5040 = vadd.f32 %v5026, %v5035
      %v5041 = vadd.f32 %v5027, %v5035
      %v5042 = vadd.f32 %v5028, %v5035
      %v5043 = vadd.f32 %v5029, %v5035
      %v5044 = vadd.f32 %v5030, %v5035
      %v5045 = vpack.c.bf16 %v5038, %v5037
      %v5046 = vpack.c.bf16 %v5040, %v5039
      %v5047 = vpack.c.bf16 %v5042, %v5041
      %v5048 = vpack.c.bf16 %v5044, %v5043
      %v5049 = vld [vmem:[%s12] sm:$0xf]
      %v5050 = vld [vmem:[%s12 + $0x4] sm:$0xf]
      %v5051 = vld [vmem:[%s12 + $0x8] sm:$0xf]
      %v5052 = vld [vmem:[%s12 + $0xc] sm:$0xf]
      %v5053 = vld [vmem:[%s13] sm:$0x1]
      %v5055 = vlaneseq
      %v5056 = vshrl.u32 %v5055, 7
      %v5057 = vsub.s32 0, %v5056
      %v5058 = vrot.slane %v5053, %v5057
      %v5064 = vunpack.c.l.b16 %v5049
      %v5065 = vunpack.c.l.b16 %v5050
      %v5066 = vunpack.c.l.b16 %v5051
      %v5067 = vunpack.c.l.b16 %v5052
      %v5068 = vpack.c.b16 %v5065, %v5064
      %v5069 = vpack.c.b16 %v5067, %v5066
      %v5073 = vsel %vm574, %v5045, 0
      %v5076 = vsel %vm574, %v5046, 0
      %v5079 = vsel %vm574, %v5047, 0
      %v5082 = vsel %vm574, %v5048, 0
      %5084 = vmatprep.subr.bf16.mxu0 0
      %5085 = vmatpush1.bf16.msra.mxu0 0
      %5086 = vmatprep.subr.bf16.mxu0 0
      %5087 = vmatpush1.bf16.msra.mxu0 0
      %5088 = vmatprep.subr.bf16.mxu0 0
      %5089 = vmatpush1.bf16.msra.mxu0 0
      %5090 = vmatprep.subr.bf16.mxu0 0
      %5091 = vmatpush1.bf16.msra.mxu0 0
      %5092 = vmatprep.subr.bf16.mxu0 0
      %5093 = vmatpush1.bf16.msra.mxu0 0
      %5094 = vmatprep.subr.bf16.mxu0 0
      %5095 = vmatpush1.bf16.msra.mxu0 0
      %5096 = vmatprep.subr.bf16.mxu0 0
      %5097 = vmatpush1.bf16.msra.mxu0 %v5069
      %5098 = vmatprep.subr.bf16.mxu0 0
      %5099 = vmatpush1.bf16.msra.mxu0 %v5068
      %5100 = vmatprep.subr.bf16.mxu0 0
      %5101 = vmatpush2.bf16.msra.mxu0 0
      %5102 = vmatprep.subr.bf16.mxu0 0
      %5103 = vmatpush2.bf16.msra.mxu0 0
      %5104 = vmatprep.subr.bf16.mxu0 0
      %5105 = vmatpush2.bf16.msra.mxu0 0
      %5106 = vmatprep.subr.bf16.mxu0 0
      %5107 = vmatpush2.bf16.msra.mxu0 0
      %5108 = vmatprep.subr.bf16.mxu0 0
      %5109 = vmatpush2.bf16.msra.mxu0 0
      %5110 = vmatprep.subr.bf16.mxu0 0
      %5111 = vmatpush2.bf16.msra.mxu0 0
      %5112 = vmatprep.subr.bf16.mxu0 0
      %5113 = vmatpush2.bf16.msra.mxu0 0
      %5114 = vmatprep.subr.bf16.mxu0 0
      %5115 = vmatpush2.bf16.msra.mxu0 0
      %5116 = vmatprep.mubr.bf16.mxu0 0
      %5117 = vmatmul.mubr.bf16.gmra.mxu0 %v5073
      %v5118 = vpop.f32.mrf.mxu0
      %v5119 = vadd.f32 %v5058, %v5118
      %v5120 = vpop.f32.mrf.mxu0
      %v5121 = vpop.f32.mrf.mxu0
      %v5122 = vadd.f32 %v5058, %v5121
      %v5123 = vpop.f32.mrf.mxu0
      %5124 = vmatprep.mubr.bf16.mxu0 0
      %5125 = vmatmul.mubr.bf16.gmra.mxu0 %v5076
      %v5126 = vpop.f32.mrf.mxu0
      %v5127 = vadd.f32 %v5058, %v5126
      %v5128 = vpop.f32.mrf.mxu0
      %v5129 = vpop.f32.mrf.mxu0
      %v5130 = vadd.f32 %v5058, %v5129
      %v5131 = vpop.f32.mrf.mxu0
      %5132 = vmatprep.mubr.bf16.mxu0 0
      %5133 = vmatmul.mubr.bf16.gmra.mxu0 %v5079
      %v5134 = vpop.f32.mrf.mxu0
      %v5135 = vadd.f32 %v5058, %v5134
      %v5136 = vpop.f32.mrf.mxu0
      %v5137 = vpop.f32.mrf.mxu0
      %v5138 = vadd.f32 %v5058, %v5137
      %v5139 = vpop.f32.mrf.mxu0
      %5140 = vmatprep.mubr.bf16.mxu0 0
      %5141 = vmatmul.mubr.bf16.gmra.mxu0 %v5082
      %v5142 = vpop.f32.mrf.mxu0
      %v5143 = vadd.f32 %v5058, %v5142
      %v5144 = vpop.f32.mrf.mxu0
      %v5145 = vpop.f32.mrf.mxu0
      %v5146 = vadd.f32 %v5058, %v5145
      %v5147 = vpop.f32.mrf.mxu0
      %5148 = vdwg.mxu0
      %v5149 = vmul.f32 %v5119, 1.702
      %v5150 = vmul.f32 %v5122, 1.702
      %v5151 = vmul.f32 %v5127, 1.702
      %v5152 = vmul.f32 %v5130, 1.702
      %v5153 = vmul.f32 %v5135, 1.702
      %v5154 = vmul.f32 %v5138, 1.702
      %v5155 = vmul.f32 %v5143, 1.702
      %v5156 = vmul.f32 %v5146, 1.702
      %v5157 = vxor.u32 %v5149, 2147483648
      %v5158 = vxor.u32 %v5150, 2147483648
      %v5159 = vxor.u32 %v5151, 2147483648
      %v5160 = vxor.u32 %v5152, 2147483648
      %v5161 = vxor.u32 %v5153, 2147483648
      %v5162 = vxor.u32 %v5154, 2147483648
      %v5163 = vxor.u32 %v5155, 2147483648
      %v5164 = vxor.u32 %v5156, 2147483648
      %v5165 = vmul.f32 %v5157, 1.442695
      %v5166 = vpow.pop %v5165
      %v5167 = vmul.f32 %v5158, 1.442695
      %v5168 = vpow.pop %v5167
      %v5169 = vmul.f32 %v5159, 1.442695
      %v5170 = vpow.pop %v5169
      %v5171 = vmul.f32 %v5160, 1.442695
      %v5172 = vpow.pop %v5171
      %v5173 = vmul.f32 %v5161, 1.442695
      %v5174 = vpow.pop %v5173
      %v5175 = vmul.f32 %v5162, 1.442695
      %v5176 = vpow.pop %v5175
      %v5177 = vmul.f32 %v5163, 1.442695
      %v5178 = vpow.pop %v5177
      %v5179 = vmul.f32 %v5164, 1.442695
      %v5180 = vpow.pop %v5179
      %v5181 = vadd.f32 %v5166, 1.0
      %v5182 = vadd.f32 %v5168, 1.0
      %v5183 = vadd.f32 %v5170, 1.0
      %v5184 = vadd.f32 %v5172, 1.0
      %v5185 = vadd.f32 %v5174, 1.0
      %v5186 = vadd.f32 %v5176, 1.0
      %v5187 = vadd.f32 %v5178, 1.0
      %v5188 = vadd.f32 %v5180, 1.0
      %v5189 = vrcp.pop %v5181
      %v5190 = vmul.f32 1.0, %v5189
      %v5191 = vrcp.pop %v5182
      %v5192 = vmul.f32 1.0, %v5191
      %v5193 = vrcp.pop %v5183
      %v5194 = vmul.f32 1.0, %v5193
      %v5195 = vrcp.pop %v5184
      %v5196 = vmul.f32 1.0, %v5195
      %v5197 = vrcp.pop %v5185
      %v5198 = vmul.f32 1.0, %v5197
      %v5199 = vrcp.pop %v5186
      %v5200 = vmul.f32 1.0, %v5199
      %v5201 = vrcp.pop %v5187
      %v5202 = vmul.f32 1.0, %v5201
      %v5203 = vrcp.pop %v5188
      %v5204 = vmul.f32 1.0, %v5203
      %v5205 = vmul.f32 %v5119, %v5190
      %v5206 = vmul.f32 %v5122, %v5192
      %v5207 = vmul.f32 %v5127, %v5194
      %v5208 = vmul.f32 %v5130, %v5196
      %v5209 = vmul.f32 %v5135, %v5198
      %v5210 = vmul.f32 %v5138, %v5200
      %v5211 = vmul.f32 %v5143, %v5202
      %v5212 = vmul.f32 %v5146, %v5204
      %v5213 = vpack.c.bf16 %v5206, %v5205
      %v5214 = vpack.c.bf16 %v5208, %v5207
      %v5215 = vpack.c.bf16 %v5210, %v5209
      %v5216 = vpack.c.bf16 %v5212, %v5211
      %v5217 = vld [vmem:[%s14] sm:$0xf]
      %v5218 = vld [vmem:[%s14 + $0x4] sm:$0xf]
      %v5219 = vld [vmem:[%s14 + $0x8] sm:$0xf]
      %v5220 = vld [vmem:[%s14 + $0xc] sm:$0xf]
      %v5221 = vld [vmem:[%s14 + $0x10] sm:$0xf]
      %v5222 = vld [vmem:[%s14 + $0x14] sm:$0xf]
      %v5223 = vld [vmem:[%s14 + $0x18] sm:$0xf]
      %v5224 = vld [vmem:[%s14 + $0x1c] sm:$0xf]
      %v5225 = vld [vmem:[%s14 + $0x20] sm:$0xf]
      %v5226 = vld [vmem:[%s14 + $0x24] sm:$0xf]
      %v5227 = vld [vmem:[%s14 + $0x28] sm:$0xf]
      %v5228 = vld [vmem:[%s14 + $0x2c] sm:$0xf]
      %v5229 = vld [vmem:[%s14 + $0x30] sm:$0xf]
      %v5230 = vld [vmem:[%s14 + $0x34] sm:$0xf]
      %v5231 = vld [vmem:[%s14 + $0x38] sm:$0xf]
      %v5232 = vld [vmem:[%s14 + $0x3c] sm:$0xf]
      %v5233 = vld [vmem:[%s15] sm:$0x1]
      %v5235 = vlaneseq
      %v5236 = vshrl.u32 %v5235, 7
      %v5237 = vsub.s32 0, %v5236
      %v5238 = vrot.slane %v5233, %v5237
      %v5256 = vunpack.c.l.b16 %v5217
      %v5257 = vunpack.c.l.b16 %v5218
      %v5258 = vunpack.c.l.b16 %v5219
      %v5259 = vunpack.c.l.b16 %v5220
      %v5260 = vunpack.c.l.b16 %v5221
      %v5261 = vunpack.c.l.b16 %v5222
      %v5262 = vunpack.c.l.b16 %v5223
      %v5263 = vunpack.c.l.b16 %v5224
      %v5264 = vunpack.c.l.b16 %v5225
      %v5265 = vunpack.c.l.b16 %v5226
      %v5266 = vunpack.c.l.b16 %v5227
      %v5267 = vunpack.c.l.b16 %v5228
      %v5268 = vunpack.c.l.b16 %v5229
      %v5269 = vunpack.c.l.b16 %v5230
      %v5270 = vunpack.c.l.b16 %v5231
      %v5271 = vunpack.c.l.b16 %v5232
      %v5272 = vpack.c.b16 %v5257, %v5256
      %v5273 = vpack.c.b16 %v5259, %v5258
      %v5274 = vpack.c.b16 %v5261, %v5260
      %v5275 = vpack.c.b16 %v5263, %v5262
      %v5276 = vpack.c.b16 %v5265, %v5264
      %v5277 = vpack.c.b16 %v5267, %v5266
      %v5278 = vpack.c.b16 %v5269, %v5268
      %v5279 = vpack.c.b16 %v5271, %v5270
      %5288 = vmatprep.subr.bf16.mxu0 0
      %5289 = vmatpush1.bf16.msra.mxu0 %v5279
      %5290 = vmatprep.subr.bf16.mxu0 0
      %5291 = vmatpush1.bf16.msra.mxu0 %v5278
      %5292 = vmatprep.subr.bf16.mxu0 0
      %5293 = vmatpush1.bf16.msra.mxu0 %v5277
      %5294 = vmatprep.subr.bf16.mxu0 0
      %5295 = vmatpush1.bf16.msra.mxu0 %v5276
      %5296 = vmatprep.subr.bf16.mxu0 0
      %5297 = vmatpush1.bf16.msra.mxu0 %v5275
      %5298 = vmatprep.subr.bf16.mxu0 0
      %5299 = vmatpush1.bf16.msra.mxu0 %v5274
      %5300 = vmatprep.subr.bf16.mxu0 0
      %5301 = vmatpush1.bf16.msra.mxu0 %v5273
      %5302 = vmatprep.subr.bf16.mxu0 0
      %5303 = vmatpush1.bf16.msra.mxu0 %v5272
      %5304 = vmatprep.subr.bf16.mxu0 0
      %5305 = vmatpush2.bf16.msra.mxu0 0
      %5306 = vmatprep.subr.bf16.mxu0 0
      %5307 = vmatpush2.bf16.msra.mxu0 0
      %5308 = vmatprep.subr.bf16.mxu0 0
      %5309 = vmatpush2.bf16.msra.mxu0 0
      %5310 = vmatprep.subr.bf16.mxu0 0
      %5311 = vmatpush2.bf16.msra.mxu0 0
      %5312 = vmatprep.subr.bf16.mxu0 0
      %5313 = vmatpush2.bf16.msra.mxu0 0
      %5314 = vmatprep.subr.bf16.mxu0 0
      %5315 = vmatpush2.bf16.msra.mxu0 0
      %5316 = vmatprep.subr.bf16.mxu0 0
      %5317 = vmatpush2.bf16.msra.mxu0 0
      %5318 = vmatprep.subr.bf16.mxu0 0
      %5319 = vmatpush2.bf16.msra.mxu0 0
      %5320 = vmatprep.mubr.bf16.mxu0 0
      %5321 = vmatmul.mubr.bf16.gmra.mxu0 %v5213
      %v5322 = vpop.f32.mrf.mxu0
      %v5323 = vadd.f32 %v5238, %v5322
      %v5324 = vpop.f32.mrf.mxu0
      %v5325 = vpop.f32.mrf.mxu0
      %v5326 = vadd.f32 %v5238, %v5325
      %v5327 = vpop.f32.mrf.mxu0
      %5328 = vmatprep.mubr.bf16.mxu0 0
      %5329 = vmatmul.mubr.bf16.gmra.mxu0 %v5214
      %v5330 = vpop.f32.mrf.mxu0
      %v5331 = vadd.f32 %v5238, %v5330
      %v5332 = vpop.f32.mrf.mxu0
      %v5333 = vpop.f32.mrf.mxu0
      %v5334 = vadd.f32 %v5238, %v5333
      %v5335 = vpop.f32.mrf.mxu0
      %5336 = vmatprep.mubr.bf16.mxu0 0
      %5337 = vmatmul.mubr.bf16.gmra.mxu0 %v5215
      %v5338 = vpop.f32.mrf.mxu0
      %v5339 = vadd.f32 %v5238, %v5338
      %v5340 = vpop.f32.mrf.mxu0
      %v5341 = vpop.f32.mrf.mxu0
      %v5342 = vadd.f32 %v5238, %v5341
      %v5343 = vpop.f32.mrf.mxu0
      %5344 = vmatprep.mubr.bf16.mxu0 0
      %5345 = vmatmul.mubr.bf16.gmra.mxu0 %v5216
      %v5346 = vpop.f32.mrf.mxu0
      %v5347 = vadd.f32 %v5238, %v5346
      %v5348 = vpop.f32.mrf.mxu0
      %v5349 = vpop.f32.mrf.mxu0
      %v5350 = vadd.f32 %v5238, %v5349
      %v5351 = vpop.f32.mrf.mxu0
      %5352 = vdwg.mxu0
      %v5353 = vadd.f32 %v4903, %v5323
      %v5354 = vadd.f32 %v4904, %v5326
      %v5355 = vadd.f32 %v4905, %v5331
      %v5356 = vadd.f32 %v4906, %v5334
      %v5357 = vadd.f32 %v4907, %v5339
      %v5358 = vadd.f32 %v4908, %v5342
      %v5359 = vadd.f32 %v4909, %v5347
      %v5360 = vadd.f32 %v4910, %v5350
      %5361 = vst.msk [vmem:[%s545] sm:$0xff] %vm574, %v5353
      %5362 = vst.msk [vmem:[%s545 + $0x8] sm:$0xff] %vm574, %v5354
      %5363 = vst.msk [vmem:[%s545 + $0x10] sm:$0xff] %vm574, %v5355
      %5364 = vst.msk [vmem:[%s545 + $0x18] sm:$0xff] %vm574, %v5356
      %5365 = vst.msk [vmem:[%s545 + $0x20] sm:$0xff] %vm574, %v5357
      %5366 = vst.msk [vmem:[%s545 + $0x28] sm:$0xff] %vm574, %v5358
      %5367 = vst.msk [vmem:[%s545 + $0x30] sm:$0xff] %vm574, %v5359
      %5368 = vst.msk [vmem:[%s545 + $0x38] sm:$0xff] %vm574, %v5360
      %s5369 = smul.u32 8, %s27
      %p5370 = scmp.lt.s32.totalorder %s5369, 15
      %s5371 = scalar_select %p5370, %s5369, 15
      %s5372 = smul.addr %s5371, 8
      %s5373 = scalar_lea.vmem %s16, %s5372
      // Predicated region
      $region85: #{tpu_custom_call.1} parent=83 // pred_check
        %p5374 = pneg %p391
      $region86: #{tpu_custom_call.1} parent=83 // pred_check_branch
        %5376 = sbr.rel (%p5374) target = $region88
      $region87: #{tpu_custom_call.1} parent=83 // pred_region
        %s5377 = smul.u32 8, %s27
      $region88: #{tpu_custom_call.1} parent=83 // pred_fallthru
        _
    $region84: #{tpu_custom_call.1} parent=5 // pred_fallthru
      _
    %p5378 = scmp.le.s32.totalorder 2, %s22
    // Predicated region
    $region89: #{tpu_custom_call.1} parent=5 // pred_check
      %p5379 = pneg %p5378
    $region90: #{tpu_custom_call.1} parent=5 // pred_check_branch
      %5381 = sbr.rel (%p5379) target = $region92
    $region91: #{tpu_custom_call.1} parent=5 // pred_region
      %s5382 = ssub.s32 %s22, 2
      // Predicated region
      $region93: #{tpu_custom_call.1} parent=91 // pred_check
        %p5383 = pneg %p397
      $region94: #{tpu_custom_call.1} parent=91 // pred_check_branch
        %5385 = sbr.rel (%p5383) target = $region96
      $region95: #{tpu_custom_call.1} parent=91 // pred_region
        %s5386 = smul.u32 8, %s28
        %p5387 = scmp.lt.s32.totalorder %s5386, 15
        %s5388 = scalar_select %p5387, %s5386, 15
        %s5389 = smul.addr %s5388, 8
        %s5390 = scalar_lea.vmem %s16, %s5389
      $region96: #{tpu_custom_call.1} parent=91 // pred_fallthru
        _
    $region92: #{tpu_custom_call.1} parent=5 // pred_fallthru
      _
  $region6: #{tpu_custom_call.1} parent=0 // loop_footer
    %s26 = sadd.s32 1, %s22
  $region7: #{tpu_custom_call.1} parent=0 // loop_footer_branch
    %21 = sbr.rel target = $region3
  $region8: #{tpu_custom_call.1} parent=0 // loop_exit
    _

// kernel: tpu_custom_call.1
$region0: #{tpu_custom_call.1}
  #allocation0 [shape = 'u32[]', space=smem, size = 0x4, offset = 0x4, fixed_abs, tag = 'smem constant byte address 0x4 - core index']
  #allocation1 [shape = 'u32[144,128]{1,0:T(1,128)}', space=vmem, size = 0x12000, scoped, tag = 'internal scratch']
  %s0 = inlined_call_operand.vmem [shape: f32[128,32], index: 0, kind: input, shape index: {}]
  %s1 = inlined_call_operand.vmem [shape: f32[256,32], index: 1, kind: input, shape index: {}]
  %s2 = inlined_call_operand.vmem [shape: f32[1,32], index: 2, kind: input, shape index: {}]
  %s3 = inlined_call_operand.vmem [shape: f32[1,32], index: 3, kind: input, shape index: {}]
  %s4 = inlined_call_operand.vmem [shape: f32[1,32], index: 4, kind: input, shape index: {}]
  %s5 = inlined_call_operand.vmem [shape: f32[1,32], index: 5, kind: input, shape index: {}]
  %s6 = inlined_call_operand.vmem [shape: f32[1,32], index: 6, kind: input, shape index: {}]
  %s7 = inlined_call_operand.vmem [shape: f32[1,32], index: 7, kind: input, shape index: {}]
  %s8 = inlined_call_operand.vmem [shape: bf16[32,32], index: 8, kind: input, shape index: {}]
  %s9 = inlined_call_operand.vmem [shape: bf16[32,64], index: 9, kind: input, shape index: {}]
  %s10 = inlined_call_operand.vmem [shape: bf16[32,32], index: 10, kind: input, shape index: {}]
  %s11 = inlined_call_operand.vmem [shape: f32[1,32], index: 11, kind: input, shape index: {}]
  %s12 = inlined_call_operand.vmem [shape: bf16[32,128], index: 12, kind: input, shape index: {}]
  %s13 = inlined_call_operand.vmem [shape: f32[1,128], index: 13, kind: input, shape index: {}]
  %s14 = inlined_call_operand.vmem [shape: bf16[128,32], index: 14, kind: input, shape index: {}]
  %s15 = inlined_call_operand.vmem [shape: f32[1,32], index: 15, kind: input, shape index: {}]
  %s16 = inlined_call_operand.vmem [shape: f32[128,32], index: 16, kind: output, shape index: {}]
  %s17 = sld [smem:[#allocation0]]
  $region97: #{tpu_custom_call.1} parent=0
    _
  %s19 = ssub.s32 1, %s17
  %s20 = scalar_select 0, %s19, %s17
  loop: start=0, step=1, limit=4
  $region2: #{tpu_custom_call.1} parent=0 // loop_pre_header
    _
  $region3: #{tpu_custom_call.1} parent=0 // loop_header
    %s22 = sphi 0, %s26
    %p23 = scmp.ge.s32.totalorder %s22, 4
    %s32 = sphi 0, %s34
    %s35 = sphi 0, %s32
    %s36 = sphi 0, %s35
    %s52 = sphi 0, %s36
    %s58 = sphi 0, %s60
    %s61 = sphi 0, %s58
    %s62 = sphi 0, %s61
    %s78 = sphi 0, %s62
    %s82 = sphi 0, %s82
    %s84 = sphi 0, %s82
    %s85 = sphi 0, %s84
    %s99 = sphi 0, %s85
    %s103 = sphi 0, %s103
    %s105 = sphi 0, %s103
    %s106 = sphi 0, %s105
    %s120 = sphi 0, %s106
    %s124 = sphi 0, %s124
    %s126 = sphi 0, %s124
    %s127 = sphi 0, %s126
    %s141 = sphi 0, %s127
    %s145 = sphi 0, %s145
    %s147 = sphi 0, %s145
    %s148 = sphi 0, %s147
    %s162 = sphi 0, %s148
    %s166 = sphi 0, %s166
    %s168 = sphi 0, %s166
    %s169 = sphi 0, %s168
    %s183 = sphi 0, %s169
    %s187 = sphi 0, %s187
    %s189 = sphi 0, %s187
    %s190 = sphi 0, %s189
    %s204 = sphi 0, %s190
    %s208 = sphi 0, %s208
    %s210 = sphi 0, %s208
    %s211 = sphi 0, %s210
    %s225 = sphi 0, %s211
    %s229 = sphi 0, %s229
    %s231 = sphi 0, %s229
    %s232 = sphi 0, %s231
    %s246 = sphi 0, %s232
    %s250 = sphi 0, %s250
    %s252 = sphi 0, %s250
    %s253 = sphi 0, %s252
    %s267 = sphi 0, %s253
    %s271 = sphi 0, %s271
    %s273 = sphi 0, %s271
    %s274 = sphi 0, %s273
    %s288 = sphi 0, %s274
    %s292 = sphi 0, %s292
    %s294 = sphi 0, %s292
    %s295 = sphi 0, %s294
    %s309 = sphi 0, %s295
    %s313 = sphi 0, %s313
    %s315 = sphi 0, %s313
    %s316 = sphi 0, %s315
    %s330 = sphi 0, %s316
    %s334 = sphi 0, %s334
    %s336 = sphi 0, %s334
    %s337 = sphi 0, %s336
    %s351 = sphi 0, %s337
    %s355 = sphi 0, %s355
    %s357 = sphi 0, %s355
    %s358 = sphi 0, %s357
    %s372 = sphi 0, %s358
    %s378 = sphi 0, %s380
    %s381 = sphi 0, %s378
    %s382 = sphi 0, %s381
    %s398 = sphi 0, %s382
  $region4: #{tpu_custom_call.1} parent=0 // loop_header_branch
    %25 = sbr.rel (%p23) target = $region8
  $region5: #{tpu_custom_call.1} parent=0 // loop_body
    %s27 = ssub.s32 %s22, 1
    %s28 = ssub.s32 %s22, 2
    %s29 = sadd.s32 %s22, 1
    %s30 = ssub.s32 %s22, %s29
    %p31 = scmp.eq.s32.totalorder %s30, 0
    %s33 = sadd.s32 %s32, 1
    %s34 = scalar_select %p31, %s32, %s33
    %p37 = pneg %p31
    %p38 = scmp.eq.s32.totalorder %s22, 1
    %p39 = por %p37, %p38
    %p40 = scmp.ne.s32.totalorder %s32, %s35
    %p41 = scmp.eq.s32.totalorder %s22, 0
    %p42 = por %p40, %p41
    %p43 = scmp.ne.s32.totalorder %s32, %s35
    %p44 = scmp.eq.s32.totalorder %s27, 1
    %p45 = por %p43, %p44
    %p46 = scmp.ne.s32.totalorder %s35, %s36
    %p47 = scmp.eq.s32.totalorder %s27, 0
    %p48 = por %p46, %p47
    %p49 = scmp.ne.s32.totalorder %s35, %s36
    %p50 = scmp.eq.s32.totalorder %s28, 1
    %p51 = por %p49, %p50
    %p53 = scmp.ne.s32.totalorder %s36, %s52
    %p54 = scmp.eq.s32.totalorder %s28, 0
    %p55 = por %p53, %p54
    %s56 = ssub.s32 %s22, %s29
    %p57 = scmp.eq.s32.totalorder %s56, 0
    %s59 = sadd.s32 %s58, 1
    %s60 = scalar_select %p57, %s58, %s59
    %p63 = pneg %p57
    %p64 = scmp.eq.s32.totalorder %s22, 1
    %p65 = por %p63, %p64
    %p66 = scmp.ne.s32.totalorder %s58, %s61
    %p67 = scmp.eq.s32.totalorder %s22, 0
    %p68 = por %p66, %p67
    %p69 = scmp.ne.s32.totalorder %s58, %s61
    %p70 = scmp.eq.s32.totalorder %s27, 1
    %p71 = por %p69, %p70
    %p72 = scmp.ne.s32.totalorder %s61, %s62
    %p73 = scmp.eq.s32.totalorder %s27, 0
    %p74 = por %p72, %p73
    %p75 = scmp.ne.s32.totalorder %s61, %s62
    %p76 = scmp.eq.s32.totalorder %s28, 1
    %p77 = por %p75, %p76
    %p79 = scmp.ne.s32.totalorder %s62, %s78
    %p80 = scmp.eq.s32.totalorder %s28, 0
    %p81 = por %p79, %p80
    %s83 = sadd.s32 %s82, 1
    %p86 = scmp.eq.s32.totalorder %s22, 1
    %p87 = scmp.ne.s32.totalorder %s82, %s84
    %p88 = scmp.eq.s32.totalorder %s22, 0
    %p89 = por %p87, %p88
    %p90 = scmp.ne.s32.totalorder %s82, %s84
    %p91 = scmp.eq.s32.totalorder %s27, 1
    %p92 = por %p90, %p91
    %p93 = scmp.ne.s32.totalorder %s84, %s85
    %p94 = scmp.eq.s32.totalorder %s27, 0
    %p95 = por %p93, %p94
    %p96 = scmp.ne.s32.totalorder %s84, %s85
    %p97 = scmp.eq.s32.totalorder %s28, 1
    %p98 = por %p96, %p97
    %p100 = scmp.ne.s32.totalorder %s85, %s99
    %p101 = scmp.eq.s32.totalorder %s28, 0
    %p102 = por %p100, %p101
    %s104 = sadd.s32 %s103, 1
    %p107 = scmp.eq.s32.totalorder %s22, 1
    %p108 = scmp.ne.s32.totalorder %s103, %s105
    %p109 = scmp.eq.s32.totalorder %s22, 0
    %p110 = por %p108, %p109
    %p111 = scmp.ne.s32.totalorder %s103, %s105
    %p112 = scmp.eq.s32.totalorder %s27, 1
    %p113 = por %p111, %p112
    %p114 = scmp.ne.s32.totalorder %s105, %s106
    %p115 = scmp.eq.s32.totalorder %s27, 0
    %p116 = por %p114, %p115
    %p117 = scmp.ne.s32.totalorder %s105, %s106
    %p118 = scmp.eq.s32.totalorder %s28, 1
    %p119 = por %p117, %p118
    %p121 = scmp.ne.s32.totalorder %s106, %s120
    %p122 = scmp.eq.s32.totalorder %s28, 0
    %p123 = por %p121, %p122
    %s125 = sadd.s32 %s124, 1
    %p128 = scmp.eq.s32.totalorder %s22, 1
    %p129 = scmp.ne.s32.totalorder %s124, %s126
    %p130 = scmp.eq.s32.totalorder %s22, 0
    %p131 = por %p129, %p130
    %p132 = scmp.ne.s32.totalorder %s124, %s126
    %p133 = scmp.eq.s32.totalorder %s27, 1
    %p134 = por %p132, %p133
    %p135 = scmp.ne.s32.totalorder %s126, %s127
    %p136 = scmp.eq.s32.totalorder %s27, 0
    %p137 = por %p135, %p136
    %p138 = scmp.ne.s32.totalorder %s126, %s127
    %p139 = scmp.eq.s32.totalorder %s28, 1
    %p140 = por %p138, %p139
    %p142 = scmp.ne.s32.totalorder %s127, %s141
    %p143 = scmp.eq.s32.totalorder %s28, 0
    %p144 = por %p142, %p143
    %s146 = sadd.s32 %s145, 1
    %p149 = scmp.eq.s32.totalorder %s22, 1
    %p150 = scmp.ne.s32.totalorder %s145, %s147
    %p151 = scmp.eq.s32.totalorder %s22, 0
    %p152 = por %p150, %p151
    %p153 = scmp.ne.s32.totalorder %s145, %s147
    %p154 = scmp.eq.s32.totalorder %s27, 1
    %p155 = por %p153, %p154
    %p156 = scmp.ne.s32.totalorder %s147, %s148
    %p157 = scmp.eq.s32.totalorder %s27, 0
    %p158 = por %p156, %p157
    %p159 = scmp.ne.s32.totalorder %s147, %s148
    %p160 = scmp.eq.s32.totalorder %s28, 1
    %p161 = por %p159, %p160
    %p163 = scmp.ne.s32.totalorder %s148, %s162
    %p164 = scmp.eq.s32.totalorder %s28, 0
    %p165 = por %p163, %p164
    %s167 = sadd.s32 %s166, 1
    %p170 = scmp.eq.s32.totalorder %s22, 1
    %p171 = scmp.ne.s32.totalorder %s166, %s168
    %p172 = scmp.eq.s32.totalorder %s22, 0
    %p173 = por %p171, %p172
    %p174 = scmp.ne.s32.totalorder %s166, %s168
    %p175 = scmp.eq.s32.totalorder %s27, 1
    %p176 = por %p174, %p175
    %p177 = scmp.ne.s32.totalorder %s168, %s169
    %p178 = scmp.eq.s32.totalorder %s27, 0
    %p179 = por %p177, %p178
    %p180 = scmp.ne.s32.totalorder %s168, %s169
    %p181 = scmp.eq.s32.totalorder %s28, 1
    %p182 = por %p180, %p181
    %p184 = scmp.ne.s32.totalorder %s169, %s183
    %p185 = scmp.eq.s32.totalorder %s28, 0
    %p186 = por %p184, %p185
    %s188 = sadd.s32 %s187, 1
    %p191 = scmp.eq.s32.totalorder %s22, 1
    %p192 = scmp.ne.s32.totalorder %s187, %s189
    %p193 = scmp.eq.s32.totalorder %s22, 0
    %p194 = por %p192, %p193
    %p195 = scmp.ne.s32.totalorder %s187, %s189
    %p196 = scmp.eq.s32.totalorder %s27, 1
    %p197 = por %p195, %p196
    %p198 = scmp.ne.s32.totalorder %s189, %s190
    %p199 = scmp.eq.s32.totalorder %s27, 0
    %p200 = por %p198, %p199
    %p201 = scmp.ne.s32.totalorder %s189, %s190
    %p202 = scmp.eq.s32.totalorder %s28, 1
    %p203 = por %p201, %p202
    %p205 = scmp.ne.s32.totalorder %s190, %s204
    %p206 = scmp.eq.s32.totalorder %s28, 0
    %p207 = por %p205, %p206
    %s209 = sadd.s32 %s208, 1
    %p212 = scmp.eq.s32.totalorder %s22, 1
    %p213 = scmp.ne.s32.totalorder %s208, %s210
    %p214 = scmp.eq.s32.totalorder %s22, 0
    %p215 = por %p213, %p214
    %p216 = scmp.ne.s32.totalorder %s208, %s210
    %p217 = scmp.eq.s32.totalorder %s27, 1
    %p218 = por %p216, %p217
    %p219 = scmp.ne.s32.totalorder %s210, %s211
    %p220 = scmp.eq.s32.totalorder %s27, 0
    %p221 = por %p219, %p220
    %p222 = scmp.ne.s32.totalorder %s210, %s211
    %p223 = scmp.eq.s32.totalorder %s28, 1
    %p224 = por %p222, %p223
    %p226 = scmp.ne.s32.totalorder %s211, %s225
    %p227 = scmp.eq.s32.totalorder %s28, 0
    %p228 = por %p226, %p227
    %s230 = sadd.s32 %s229, 1
    %p233 = scmp.eq.s32.totalorder %s22, 1
    %p234 = scmp.ne.s32.totalorder %s229, %s231
    %p235 = scmp.eq.s32.totalorder %s22, 0
    %p236 = por %p234, %p235
    %p237 = scmp.ne.s32.totalorder %s229, %s231
    %p238 = scmp.eq.s32.totalorder %s27, 1
    %p239 = por %p237, %p238
    %p240 = scmp.ne.s32.totalorder %s231, %s232
    %p241 = scmp.eq.s32.totalorder %s27, 0
    %p242 = por %p240, %p241
    %p243 = scmp.ne.s32.totalorder %s231, %s232
    %p244 = scmp.eq.s32.totalorder %s28, 1
    %p245 = por %p243, %p244
    %p247 = scmp.ne.s32.totalorder %s232, %s246
    %p248 = scmp.eq.s32.totalorder %s28, 0
    %p249 = por %p247, %p248
    %s251 = sadd.s32 %s250, 1
    %p254 = scmp.eq.s32.totalorder %s22, 1
    %p255 = scmp.ne.s32.totalorder %s250, %s252
    %p256 = scmp.eq.s32.totalorder %s22, 0
    %p257 = por %p255, %p256
    %p258 = scmp.ne.s32.totalorder %s250, %s252
    %p259 = scmp.eq.s32.totalorder %s27, 1
    %p260 = por %p258, %p259
    %p261 = scmp.ne.s32.totalorder %s252, %s253
    %p262 = scmp.eq.s32.totalorder %s27, 0
    %p263 = por %p261, %p262
    %p264 = scmp.ne.s32.totalorder %s252, %s253
    %p265 = scmp.eq.s32.totalorder %s28, 1
    %p266 = por %p264, %p265
    %p268 = scmp.ne.s32.totalorder %s253, %s267
    %p269 = scmp.eq.s32.totalorder %s28, 0
    %p270 = por %p268, %p269
    %s272 = sadd.s32 %s271, 1
    %p275 = scmp.eq.s32.totalorder %s22, 1
    %p276 = scmp.ne.s32.totalorder %s271, %s273
    %p277 = scmp.eq.s32.totalorder %s22, 0
    %p278 = por %p276, %p277
    %p279 = scmp.ne.s32.totalorder %s271, %s273
    %p280 = scmp.eq.s32.totalorder %s27, 1
    %p281 = por %p279, %p280
    %p282 = scmp.ne.s32.totalorder %s273, %s274
    %p283 = scmp.eq.s32.totalorder %s27, 0
    %p284 = por %p282, %p283
    %p285 = scmp.ne.s32.totalorder %s273, %s274
    %p286 = scmp.eq.s32.totalorder %s28, 1
    %p287 = por %p285, %p286
    %p289 = scmp.ne.s32.totalorder %s274, %s288
    %p290 = scmp.eq.s32.totalorder %s28, 0
    %p291 = por %p289, %p290
    %s293 = sadd.s32 %s292, 1
    %p296 = scmp.eq.s32.totalorder %s22, 1
    %p297 = scmp.ne.s32.totalorder %s292, %s294
    %p298 = scmp.eq.s32.totalorder %s22, 0
    %p299 = por %p297, %p298
    %p300 = scmp.ne.s32.totalorder %s292, %s294
    %p301 = scmp.eq.s32.totalorder %s27, 1
    %p302 = por %p300, %p301
    %p303 = scmp.ne.s32.totalorder %s294, %s295
    %p304 = scmp.eq.s32.totalorder %s27, 0
    %p305 = por %p303, %p304
    %p306 = scmp.ne.s32.totalorder %s294, %s295
    %p307 = scmp.eq.s32.totalorder %s28, 1
    %p308 = por %p306, %p307
    %p310 = scmp.ne.s32.totalorder %s295, %s309
    %p311 = scmp.eq.s32.totalorder %s28, 0
    %p312 = por %p310, %p311
    %s314 = sadd.s32 %s313, 1
    %p317 = scmp.eq.s32.totalorder %s22, 1
    %p318 = scmp.ne.s32.totalorder %s313, %s315
    %p319 = scmp.eq.s32.totalorder %s22, 0
    %p320 = por %p318, %p319
    %p321 = scmp.ne.s32.totalorder %s313, %s315
    %p322 = scmp.eq.s32.totalorder %s27, 1
    %p323 = por %p321, %p322
    %p324 = scmp.ne.s32.totalorder %s315, %s316
    %p325 = scmp.eq.s32.totalorder %s27, 0
    %p326 = por %p324, %p325
    %p327 = scmp.ne.s32.totalorder %s315, %s316
    %p328 = scmp.eq.s32.totalorder %s28, 1
    %p329 = por %p327, %p328
    %p331 = scmp.ne.s32.totalorder %s316, %s330
    %p332 = scmp.eq.s32.totalorder %s28, 0
    %p333 = por %p331, %p332
    %s335 = sadd.s32 %s334, 1
    %p338 = scmp.eq.s32.totalorder %s22, 1
    %p339 = scmp.ne.s32.totalorder %s334, %s336
    %p340 = scmp.eq.s32.totalorder %s22, 0
    %p341 = por %p339, %p340
    %p342 = scmp.ne.s32.totalorder %s334, %s336
    %p343 = scmp.eq.s32.totalorder %s27, 1
    %p344 = por %p342, %p343
    %p345 = scmp.ne.s32.totalorder %s336, %s337
    %p346 = scmp.eq.s32.totalorder %s27, 0
    %p347 = por %p345, %p346
    %p348 = scmp.ne.s32.totalorder %s336, %s337
    %p349 = scmp.eq.s32.totalorder %s28, 1
    %p350 = por %p348, %p349
    %p352 = scmp.ne.s32.totalorder %s337, %s351
    %p353 = scmp.eq.s32.totalorder %s28, 0
    %p354 = por %p352, %p353
    %s356 = sadd.s32 %s355, 1
    %p359 = scmp.eq.s32.totalorder %s22, 1
    %p360 = scmp.ne.s32.totalorder %s355, %s357
    %p361 = scmp.eq.s32.totalorder %s22, 0
    %p362 = por %p360, %p361
    %p363 = scmp.ne.s32.totalorder %s355, %s357
    %p364 = scmp.eq.s32.totalorder %s27, 1
    %p365 = por %p363, %p364
    %p366 = scmp.ne.s32.totalorder %s357, %s358
    %p367 = scmp.eq.s32.totalorder %s27, 0
    %p368 = por %p366, %p367
    %p369 = scmp.ne.s32.totalorder %s357, %s358
    %p370 = scmp.eq.s32.totalorder %s28, 1
    %p371 = por %p369, %p370
    %p373 = scmp.ne.s32.totalorder %s358, %s372
    %p374 = scmp.eq.s32.totalorder %s28, 0
    %p375 = por %p373, %p374
    %s376 = ssub.s32 %s22, %s29
    %p377 = scmp.eq.s32.totalorder %s376, 0
    %s379 = sadd.s32 %s378, 1
    %s380 = scalar_select %p377, %s378, %s379
    %p383 = pneg %p377
    %p384 = scmp.eq.s32.totalorder %s22, 1
    %p385 = por %p383, %p384
    %p386 = scmp.ne.s32.totalorder %s378, %s381
    %p387 = scmp.eq.s32.totalorder %s22, 0
    %p388 = por %p386, %p387
    %p389 = scmp.ne.s32.totalorder %s378, %s381
    %p390 = scmp.eq.s32.totalorder %s27, 1
    %p391 = por %p389, %p390
    %p392 = scmp.ne.s32.totalorder %s381, %s382
    %p393 = scmp.eq.s32.totalorder %s27, 0
    %p394 = por %p392, %p393
    %p395 = scmp.ne.s32.totalorder %s381, %s382
    %p396 = scmp.eq.s32.totalorder %s28, 1
    %p397 = por %p395, %p396
    %p399 = scmp.ne.s32.totalorder %s382, %s398
    %p400 = scmp.eq.s32.totalorder %s28, 0
    %p401 = por %p399, %p400
    %p402 = scmp.le.s32.totalorder 1, %s22
    %p403 = scmp.lt.s32.totalorder %s22, 3
    %p404 = pnand %p402, %p403
    %p405 = pneg %p404
    // Predicated region
    $region9: #{tpu_custom_call.1} parent=5 // pred_check
      _
    $region10: #{tpu_custom_call.1} parent=5 // pred_check_branch
      %407 = sbr.rel (%p404) target = $region12
    $region11: #{tpu_custom_call.1} parent=5 // pred_region
      %s408 = ssub.s32 %s22, 1
      // Predicated region
      $region13: #{tpu_custom_call.1} parent=11 // pred_check
        %p409 = pneg %p95
      $region14: #{tpu_custom_call.1} parent=11 // pred_check_branch
        %411 = sbr.rel (%p409) target = $region16
      $region15: #{tpu_custom_call.1} parent=11 // pred_region
        _
      $region16: #{tpu_custom_call.1} parent=11 // pred_fallthru
        _
      // Predicated region
      $region17: #{tpu_custom_call.1} parent=11 // pred_check
        %p412 = pneg %p116
      $region18: #{tpu_custom_call.1} parent=11 // pred_check_branch
        %414 = sbr.rel (%p412) target = $region20
      $region19: #{tpu_custom_call.1} parent=11 // pred_region
        _
      $region20: #{tpu_custom_call.1} parent=11 // pred_fallthru
        _
      // Predicated region
      $region21: #{tpu_custom_call.1} parent=11 // pred_check
        %p415 = pneg %p137
      $region22: #{tpu_custom_call.1} parent=11 // pred_check_branch
        %417 = sbr.rel (%p415) target = $region24
      $region23: #{tpu_custom_call.1} parent=11 // pred_region
        _
      $region24: #{tpu_custom_call.1} parent=11 // pred_fallthru
        _
      // Predicated region
      $region25: #{tpu_custom_call.1} parent=11 // pred_check
        %p418 = pneg %p158
      $region26: #{tpu_custom_call.1} parent=11 // pred_check_branch
        %420 = sbr.rel (%p418) target = $region28
      $region27: #{tpu_custom_call.1} parent=11 // pred_region
        _
      $region28: #{tpu_custom_call.1} parent=11 // pred_fallthru
        _
      // Predicated region
      $region29: #{tpu_custom_call.1} parent=11 // pred_check
        %p421 = pneg %p179
      $region30: #{tpu_custom_call.1} parent=11 // pred_check_branch
        %423 = sbr.rel (%p421) target = $region32
      $region31: #{tpu_custom_call.1} parent=11 // pred_region
        _
      $region32: #{tpu_custom_call.1} parent=11 // pred_fallthru
        _
      // Predicated region
      $region33: #{tpu_custom_call.1} parent=11 // pred_check
        %p424 = pneg %p200
      $region34: #{tpu_custom_call.1} parent=11 // pred_check_branch
        %426 = sbr.rel (%p424) target = $region36
      $region35: #{tpu_custom_call.1} parent=11 // pred_region
        _
      $region36: #{tpu_custom_call.1} parent=11 // pred_fallthru
        _
      // Predicated region
      $region37: #{tpu_custom_call.1} parent=11 // pred_check
        %p427 = pneg %p221
      $region38: #{tpu_custom_call.1} parent=11 // pred_check_branch
        %429 = sbr.rel (%p427) target = $region40
      $region39: #{tpu_custom_call.1} parent=11 // pred_region
        _
      $region40: #{tpu_custom_call.1} parent=11 // pred_fallthru
        _
      // Predicated region
      $region41: #{tpu_custom_call.1} parent=11 // pred_check
        %p430 = pneg %p242
      $region42: #{tpu_custom_call.1} parent=11 // pred_check_branch
        %432 = sbr.rel (%p430) target = $region44
      $region43: #{tpu_custom_call.1} parent=11 // pred_region
        _
      $region44: #{tpu_custom_call.1} parent=11 // pred_fallthru
        _
      // Predicated region
      $region45: #{tpu_custom_call.1} parent=11 // pred_check
        %p433 = pneg %p263
      $region46: #{tpu_custom_call.1} parent=11 // pred_check_branch
        %435 = sbr.rel (%p433) target = $region48
      $region47: #{tpu_custom_call.1} parent=11 // pred_region
        _
      $region48: #{tpu_custom_call.1} parent=11 // pred_fallthru
        _
      // Predicated region
      $region49: #{tpu_custom_call.1} parent=11 // pred_check
        %p436 = pneg %p284
      $region50: #{tpu_custom_call.1} parent=11 // pred_check_branch
        %438 = sbr.rel (%p436) target = $region52
      $region51: #{tpu_custom_call.1} parent=11 // pred_region
        _
      $region52: #{tpu_custom_call.1} parent=11 // pred_fallthru
        _
      // Predicated region
      $region53: #{tpu_custom_call.1} parent=11 // pred_check
        %p439 = pneg %p305
      $region54: #{tpu_custom_call.1} parent=11 // pred_check_branch
        %441 = sbr.rel (%p439) target = $region56
      $region55: #{tpu_custom_call.1} parent=11 // pred_region
        _
      $region56: #{tpu_custom_call.1} parent=11 // pred_fallthru
        _
      // Predicated region
      $region57: #{tpu_custom_call.1} parent=11 // pred_check
        %p442 = pneg %p326
      $region58: #{tpu_custom_call.1} parent=11 // pred_check_branch
        %444 = sbr.rel (%p442) target = $region60
      $region59: #{tpu_custom_call.1} parent=11 // pred_region
        _
      $region60: #{tpu_custom_call.1} parent=11 // pred_fallthru
        _
      // Predicated region
      $region61: #{tpu_custom_call.1} parent=11 // pred_check
        %p445 = pneg %p347
      $region62: #{tpu_custom_call.1} parent=11 // pred_check_branch
        %447 = sbr.rel (%p445) target = $region64
      $region63: #{tpu_custom_call.1} parent=11 // pred_region
        _
      $region64: #{tpu_custom_call.1} parent=11 // pred_fallthru
        _
      // Predicated region
      $region65: #{tpu_custom_call.1} parent=11 // pred_check
        %p448 = pneg %p368
      $region66: #{tpu_custom_call.1} parent=11 // pred_check_branch
        %450 = sbr.rel (%p448) target = $region68
      $region67: #{tpu_custom_call.1} parent=11 // pred_region
        _
      $region68: #{tpu_custom_call.1} parent=11 // pred_fallthru
        _
    $region12: #{tpu_custom_call.1} parent=5 // pred_fallthru
      _
    %p451 = scmp.lt.s32.totalorder %s22, 2
    // Predicated region
    $region69: #{tpu_custom_call.1} parent=5 // pred_check
      %p452 = pneg %p451
    $region70: #{tpu_custom_call.1} parent=5 // pred_check_branch
      %454 = sbr.rel (%p452) target = $region72
    $region71: #{tpu_custom_call.1} parent=5 // pred_region
      // Predicated region
      $region73: #{tpu_custom_call.1} parent=71 // pred_check
        %p455 = pneg %p42
      $region74: #{tpu_custom_call.1} parent=71 // pred_check_branch
        %457 = sbr.rel (%p455) target = $region76
      $region75: #{tpu_custom_call.1} parent=71 // pred_region
        %s458 = smul.u32 8, %s22
        %p459 = scmp.lt.s32.totalorder %s458, 15
        %s460 = scalar_select %p459, %s458, 15
        %s461 = smul.addr %s460, 8
        %s462 = scalar_lea.vmem %s0, %s461
        %s463 = smul.u32 8, %s22
      $region76: #{tpu_custom_call.1} parent=71 // pred_fallthru
        _
      // Predicated region
      $region77: #{tpu_custom_call.1} parent=71 // pred_check
        %p464 = pneg %p68
      $region78: #{tpu_custom_call.1} parent=71 // pred_check_branch
        %466 = sbr.rel (%p464) target = $region80
      $region79: #{tpu_custom_call.1} parent=71 // pred_region
        %s467 = smul.u32 16, %s22
        %p468 = scmp.lt.s32.totalorder %s467, 31
        %s469 = scalar_select %p468, %s467, 31
        %s470 = smul.addr %s469, 8
        %s471 = scalar_lea.vmem %s1, %s470
        %s472 = smul.u32 16, %s22
      $region80: #{tpu_custom_call.1} parent=71 // pred_fallthru
        _
    $region72: #{tpu_custom_call.1} parent=5 // pred_fallthru
      _
    %p473 = scmp.le.s32.totalorder 1, %s22
    %p474 = scmp.lt.s32.totalorder %s22, 3
    %p475 = pnand %p473, %p474
    %p476 = pneg %p475
    // Predicated region
    $region81: #{tpu_custom_call.1} parent=5 // pred_check
      _
    $region82: #{tpu_custom_call.1} parent=5 // pred_check_branch
      %478 = sbr.rel (%p475) target = $region84
    $region83: #{tpu_custom_call.1} parent=5 // pred_region
      %s479 = ssub.s32 %s22, 1
      %s480 = smul.u32 8, %s27
      %p481 = scmp.lt.s32.totalorder %s480, 15
      %s482 = scalar_select %p481, %s480, 15
      %s483 = smul.addr %s482, 8
      %s484 = scalar_lea.vmem %s0, %s483
      %p485 = pneg %p48
      %p486 = pneg %p45
      %s487 = smul.u32 16, %s27
      %p488 = scmp.lt.s32.totalorder %s487, 31
      %s489 = scalar_select %p488, %s487, 31
      %s490 = smul.addr %s489, 8
      %s491 = scalar_lea.vmem %s1, %s490
      %p492 = pneg %p74
      %p493 = pneg %p71
      %p494 = pneg %p95
      %p495 = pneg %p92
      %p496 = pneg %p116
      %p497 = pneg %p113
      %p498 = pneg %p137
      %p499 = pneg %p134
      %p500 = pneg %p158
      %p501 = pneg %p155
      %p502 = pneg %p179
      %p503 = pneg %p176
      %p504 = pneg %p200
      %p505 = pneg %p197
      %p506 = pneg %p221
      %p507 = pneg %p218
      %p508 = pneg %p242
      %p509 = pneg %p239
      %p510 = pneg %p263
      %p511 = pneg %p260
      %p512 = pneg %p284
      %p513 = pneg %p281
      %p514 = pneg %p305
      %p515 = pneg %p302
      %p516 = pneg %p326
      %p517 = pneg %p323
      %p518 = pneg %p347
      %p519 = pneg %p344
      %p520 = pneg %p368
      %p521 = pneg %p365
      %p522 = pneg %p394
      %p523 = pneg %p391
      %s524 = smul.u32 8, %s27
      %p525 = scmp.lt.s32.totalorder %s524, 15
      %s526 = scalar_select %p525, %s524, 15
      %s527 = smul.addr %s526, 8
      %s528 = scalar_lea.vmem %s16, %s527
      %s529 = smul.u32 8, %s27
      %p530 = scmp.lt.s32.totalorder %s529, 15
      %s531 = scalar_select %p530, %s529, 15
      %s532 = smul.addr %s531, 8
      %s533 = scalar_lea.vmem %s0, %s532
      %s534 = smul.u32 8, %s27
      %s535 = smul.u32 16, %s27
      %p536 = scmp.lt.s32.totalorder %s535, 31
      %s537 = scalar_select %p536, %s535, 31
      %s538 = smul.addr %s537, 8
      %s539 = scalar_lea.vmem %s1, %s538
      %s540 = smul.u32 16, %s27
      %s541 = smul.u32 8, %s27
      %p542 = scmp.lt.s32.totalorder %s541, 15
      %s543 = scalar_select %p542, %s541, 15
      %s544 = smul.addr %s543, 8
      %s545 = scalar_lea.vmem %s16, %s544
      %s546 = smul.u32 8, %s27
      %v548 = vld [vmem:[%s533] sm:$0xff]
      %v549 = vld [vmem:[%s533 + $0x8] sm:$0xff]
      %v550 = vld [vmem:[%s533 + $0x10] sm:$0xff]
      %v551 = vld [vmem:[%s533 + $0x18] sm:$0xff]
      %v552 = vld [vmem:[%s533 + $0x20] sm:$0xff]
      %v553 = vld [vmem:[%s533 + $0x28] sm:$0xff]
      %v554 = vld [vmem:[%s533 + $0x30] sm:$0xff]
      %v555 = vld [vmem:[%s533 + $0x38] sm:$0xff]
      %v556 = vld [vmem:[%s539] sm:$0xff]
      %v557 = vld [vmem:[%s539 + $0x8] sm:$0xff]
      %v558 = vld [vmem:[%s539 + $0x10] sm:$0xff]
      %v559 = vld [vmem:[%s539 + $0x18] sm:$0xff]
      %v560 = vld [vmem:[%s539 + $0x20] sm:$0xff]
      %v561 = vld [vmem:[%s539 + $0x28] sm:$0xff]
      %v562 = vld [vmem:[%s539 + $0x30] sm:$0xff]
      %v563 = vld [vmem:[%s539 + $0x38] sm:$0xff]
      %v564 = vld [vmem:[%s539 + $0x40] sm:$0xff]
      %v565 = vld [vmem:[%s539 + $0x48] sm:$0xff]
      %v566 = vld [vmem:[%s539 + $0x50] sm:$0xff]
      %v567 = vld [vmem:[%s539 + $0x58] sm:$0xff]
      %v568 = vld [vmem:[%s539 + $0x60] sm:$0xff]
      %v569 = vld [vmem:[%s539 + $0x68] sm:$0xff]
      %v570 = vld [vmem:[%s539 + $0x70] sm:$0xff]
      %v571 = vld [vmem:[%s539 + $0x78] sm:$0xff]
      %v572 = vld [vmem:[%s2] sm:$0x1]
      %v573 = vld [vmem:[%s3] sm:$0x1]
      %vm574 = vcmask 261120
      %v575 = vsel %vm574, %v548, 0.0
      %576 = vadd.xlane.f32.xlu0 %v575
      %v577 = vpop.xlane.xlu0 %576
      %v578 = vsel %vm574, %v549, 0.0
      %579 = vadd.xlane.f32.xlu0 %v578
      %v580 = vpop.xlane.xlu0 %579
      %v581 = vsel %vm574, %v550, 0.0
      %582 = vadd.xlane.f32.xlu0 %v581
      %v583 = vpop.xlane.xlu0 %582
      %v584 = vsel %vm574, %v551, 0.0
      %585 = vadd.xlane.f32.xlu0 %v584
      %v586 = vpop.xlane.xlu0 %585
      %v587 = vsel %vm574, %v552, 0.0
      %588 = vadd.xlane.f32.xlu0 %v587
      %v589 = vpop.xlane.xlu0 %588
      %v590 = vsel %vm574, %v553, 0.0
      %591 = vadd.xlane.f32.xlu0 %v590
      %v592 = vpop.xlane.xlu0 %591
      %v593 = vsel %vm574, %v554, 0.0
      %594 = vadd.xlane.f32.xlu0 %v593
      %v595 = vpop.xlane.xlu0 %594
      %v596 = vsel %vm574, %v555, 0.0
      %597 = vadd.xlane.f32.xlu0 %v596
      %v598 = vpop.xlane.xlu0 %597
      %v599 = vrcp.pop 32.0
      %v600 = vmul.f32 %v577, %v599
      %v601 = vmul.f32 %v580, %v599
      %v602 = vmul.f32 %v583, %v599
      %v603 = vmul.f32 %v586, %v599
      %v604 = vmul.f32 %v589, %v599
      %v605 = vmul.f32 %v592, %v599
      %v606 = vmul.f32 %v595, %v599
      %v607 = vmul.f32 %v598, %v599
      %v608 = vsub.f32 %v548, %v600
      %v609 = vsub.f32 %v549, %v601
      %v610 = vsub.f32 %v550, %v602
      %v611 = vsub.f32 %v551, %v603
      %v612 = vsub.f32 %v552, %v604
      %v613 = vsub.f32 %v553, %v605
      %v614 = vsub.f32 %v554, %v606
      %v615 = vsub.f32 %v555, %v607
      %v616 = vmul.f32 %v608, %v608
      %v617 = vmul.f32 %v609, %v609
      %v618 = vmul.f32 %v610, %v610
      %v619 = vmul.f32 %v611, %v611
      %v620 = vmul.f32 %v612, %v612
      %v621 = vmul.f32 %v613, %v613
      %v622 = vmul.f32 %v614, %v614
      %v623 = vmul.f32 %v615, %v615
      %v624 = vsel %vm574, %v616, 0.0
      %625 = vadd.xlane.f32.xlu0 %v624
      %v626 = vpop.xlane.xlu0 %625
      %v627 = vsel %vm574, %v617, 0.0
      %628 = vadd.xlane.f32.xlu0 %v627
      %v629 = vpop.xlane.xlu0 %628
      %v630 = vsel %vm574, %v618, 0.0
      %631 = vadd.xlane.f32.xlu0 %v630
      %v632 = vpop.xlane.xlu0 %631
      %v633 = vsel %vm574, %v619, 0.0
      %634 = vadd.xlane.f32.xlu0 %v633
      %v635 = vpop.xlane.xlu0 %634
      %v636 = vsel %vm574, %v620, 0.0
      %637 = vadd.xlane.f32.xlu0 %v636
      %v638 = vpop.xlane.xlu0 %637
      %v639 = vsel %vm574, %v621, 0.0
      %640 = vadd.xlane.f32.xlu0 %v639
      %v641 = vpop.xlane.xlu0 %640
      %v642 = vsel %vm574, %v622, 0.0
      %643 = vadd.xlane.f32.xlu0 %v642
      %v644 = vpop.xlane.xlu0 %643
      %v645 = vsel %vm574, %v623, 0.0
      %646 = vadd.xlane.f32.xlu0 %v645
      %v647 = vpop.xlane.xlu0 %646
      %v648 = vmul.f32 %v626, %v599
      %v649 = vmul.f32 %v629, %v599
      %v650 = vmul.f32 %v632, %v599
      %v651 = vmul.f32 %v635, %v599
      %v652 = vmul.f32 %v638, %v599
      %v653 = vmul.f32 %v641, %v599
      %v654 = vmul.f32 %v644, %v599
      %v655 = vmul.f32 %v647, %v599
      %v656 = vadd.f32 %v648, 1e-05
      %v657 = vadd.f32 %v649, 1e-05
      %v658 = vadd.f32 %v650, 1e-05
      %v659 = vadd.f32 %v651, 1e-05
      %v660 = vadd.f32 %v652, 1e-05
      %v661 = vadd.f32 %v653, 1e-05
      %v662 = vadd.f32 %v654, 1e-05
      %v663 = vadd.f32 %v655, 1e-05
      %v664 = vrsqrt.pop %v656
      %v665 = vrsqrt.pop %v657
      %v666 = vrsqrt.pop %v658
      %v667 = vrsqrt.pop %v659
      %v668 = vrsqrt.pop %v660
      %v669 = vrsqrt.pop %v661
      %v670 = vrsqrt.pop %v662
      %v671 = vrsqrt.pop %v663
      %v672 = vmul.f32 %v608, %v664
      %v673 = vmul.f32 %v609, %v665
      %v674 = vmul.f32 %v610, %v666
      %v675 = vmul.f32 %v611, %v667
      %v676 = vmul.f32 %v612, %v668
      %v677 = vmul.f32 %v613, %v669
      %v678 = vmul.f32 %v614, %v670
      %v679 = vmul.f32 %v615, %v671
      %v681 = vlaneseq
      %v682 = vshrl.u32 %v681, 7
      %v683 = vsub.s32 0, %v682
      %v684 = vrot.slane %v572, %v683
      %v686 = vmul.f32 %v672, %v684
      %v687 = vmul.f32 %v673, %v684
      %v688 = vmul.f32 %v674, %v684
      %v689 = vmul.f32 %v675, %v684
      %v690 = vmul.f32 %v676, %v684
      %v691 = vmul.f32 %v677, %v684
      %v692 = vmul.f32 %v678, %v684
      %v693 = vmul.f32 %v679, %v684
      %v695 = vlaneseq
      %v696 = vshrl.u32 %v695, 7
      %v697 = vsub.s32 0, %v696
      %v698 = vrot.slane %v573, %v697
      %v700 = vadd.f32 %v686, %v698
      %v701 = vadd.f32 %v687, %v698
      %v702 = vadd.f32 %v688, %v698
      %v703 = vadd.f32 %v689, %v698
      %v704 = vadd.f32 %v690, %v698
      %v705 = vadd.f32 %v691, %v698
      %v706 = vadd.f32 %v692, %v698
      %v707 = vadd.f32 %v693, %v698
      %v708 = vld [vmem:[%s4] sm:$0x1]
      %v709 = vld [vmem:[%s5] sm:$0x1]
      %v710 = vsel %vm574, %v556, 0.0
      %711 = vadd.xlane.f32.xlu0 %v710
      %v712 = vpop.xlane.xlu0 %711
      %v713 = vsel %vm574, %v557, 0.0
      %714 = vadd.xlane.f32.xlu0 %v713
      %v715 = vpop.xlane.xlu0 %714
      %v716 = vsel %vm574, %v558, 0.0
      %717 = vadd.xlane.f32.xlu0 %v716
      %v718 = vpop.xlane.xlu0 %717
      %v719 = vsel %vm574, %v559, 0.0
      %720 = vadd.xlane.f32.xlu0 %v719
      %v721 = vpop.xlane.xlu0 %720
      %v722 = vsel %vm574, %v560, 0.0
      %723 = vadd.xlane.f32.xlu0 %v722
      %v724 = vpop.xlane.xlu0 %723
      %v725 = vsel %vm574, %v561, 0.0
      %726 = vadd.xlane.f32.xlu0 %v725
      %v727 = vpop.xlane.xlu0 %726
      %v728 = vsel %vm574, %v562, 0.0
      %729 = vadd.xlane.f32.xlu0 %v728
      %v730 = vpop.xlane.xlu0 %729
      %v731 = vsel %vm574, %v563, 0.0
      %732 = vadd.xlane.f32.xlu0 %v731
      %v733 = vpop.xlane.xlu0 %732
      %v734 = vsel %vm574, %v564, 0.0
      %735 = vadd.xlane.f32.xlu0 %v734
      %v736 = vpop.xlane.xlu0 %735
      %v737 = vsel %vm574, %v565, 0.0
      %738 = vadd.xlane.f32.xlu0 %v737
      %v739 = vpop.xlane.xlu0 %738
      %v740 = vsel %vm574, %v566, 0.0
      %741 = vadd.xlane.f32.xlu0 %v740
      %v742 = vpop.xlane.xlu0 %741
      %v743 = vsel %vm574, %v567, 0.0
      %744 = vadd.xlane.f32.xlu0 %v743
      %v745 = vpop.xlane.xlu0 %744
      %v746 = vsel %vm574, %v568, 0.0
      %747 = vadd.xlane.f32.xlu0 %v746
      %v748 = vpop.xlane.xlu0 %747
      %v749 = vsel %vm574, %v569, 0.0
      %750 = vadd.xlane.f32.xlu0 %v749
      %v751 = vpop.xlane.xlu0 %750
      %v752 = vsel %vm574, %v570, 0.0
      %753 = vadd.xlane.f32.xlu0 %v752
      %v754 = vpop.xlane.xlu0 %753
      %v755 = vsel %vm574, %v571, 0.0
      %756 = vadd.xlane.f32.xlu0 %v755
      %v757 = vpop.xlane.xlu0 %756
      %v758 = vmul.f32 %v712, %v599
      %v759 = vmul.f32 %v715, %v599
      %v760 = vmul.f32 %v718, %v599
      %v761 = vmul.f32 %v721, %v599
      %v762 = vmul.f32 %v724, %v599
      %v763 = vmul.f32 %v727, %v599
      %v764 = vmul.f32 %v730, %v599
      %v765 = vmul.f32 %v733, %v599
      %v766 = vmul.f32 %v736, %v599
      %v767 = vmul.f32 %v739, %v599
      %v768 = vmul.f32 %v742, %v599
      %v769 = vmul.f32 %v745, %v599
      %v770 = vmul.f32 %v748, %v599
      %v771 = vmul.f32 %v751, %v599
      %v772 = vmul.f32 %v754, %v599
      %v773 = vmul.f32 %v757, %v599
      %v774 = vsub.f32 %v556, %v758
      %v775 = vsub.f32 %v557, %v759
      %v776 = vsub.f32 %v558, %v760
      %v777 = vsub.f32 %v559, %v761
      %v778 = vsub.f32 %v560, %v762
      %v779 = vsub.f32 %v561, %v763
      %v780 = vsub.f32 %v562, %v764
      %v781 = vsub.f32 %v563, %v765
      %v782 = vsub.f32 %v564, %v766
      %v783 = vsub.f32 %v565, %v767
      %v784 = vsub.f32 %v566, %v768
      %v785 = vsub.f32 %v567, %v769
      %v786 = vsub.f32 %v568, %v770
      %v787 = vsub.f32 %v569, %v771
      %v788 = vsub.f32 %v570, %v772
      %v789 = vsub.f32 %v571, %v773
      %v790 = vmul.f32 %v774, %v774
      %v791 = vmul.f32 %v775, %v775
      %v792 = vmul.f32 %v776, %v776
      %v793 = vmul.f32 %v777, %v777
      %v794 = vmul.f32 %v778, %v778
      %v795 = vmul.f32 %v779, %v779
      %v796 = vmul.f32 %v780, %v780
      %v797 = vmul.f32 %v781, %v781
      %v798 = vmul.f32 %v782, %v782
      %v799 = vmul.f32 %v783, %v783
      %v800 = vmul.f32 %v784, %v784
      %v801 = vmul.f32 %v785, %v785
      %v802 = vmul.f32 %v786, %v786
      %v803 = vmul.f32 %v787, %v787
      %v804 = vmul.f32 %v788, %v788
      %v805 = vmul.f32 %v789, %v789
      %v806 = vsel %vm574, %v790, 0.0
      %807 = vadd.xlane.f32.xlu0 %v806
      %v808 = vpop.xlane.xlu0 %807
      %v809 = vsel %vm574, %v791, 0.0
      %810 = vadd.xlane.f32.xlu0 %v809
      %v811 = vpop.xlane.xlu0 %810
      %v812 = vsel %vm574, %v792, 0.0
      %813 = vadd.xlane.f32.xlu0 %v812
      %v814 = vpop.xlane.xlu0 %813
      %v815 = vsel %vm574, %v793, 0.0
      %816 = vadd.xlane.f32.xlu0 %v815
      %v817 = vpop.xlane.xlu0 %816
      %v818 = vsel %vm574, %v794, 0.0
      %819 = vadd.xlane.f32.xlu0 %v818
      %v820 = vpop.xlane.xlu0 %819
      %v821 = vsel %vm574, %v795, 0.0
      %822 = vadd.xlane.f32.xlu0 %v821
      %v823 = vpop.xlane.xlu0 %822
      %v824 = vsel %vm574, %v796, 0.0
      %825 = vadd.xlane.f32.xlu0 %v824
      %v826 = vpop.xlane.xlu0 %825
      %v827 = vsel %vm574, %v797, 0.0
      %828 = vadd.xlane.f32.xlu0 %v827
      %v829 = vpop.xlane.xlu0 %828
      %v830 = vsel %vm574, %v798, 0.0
      %831 = vadd.xlane.f32.xlu0 %v830
      %v832 = vpop.xlane.xlu0 %831
      %v833 = vsel %vm574, %v799, 0.0
      %834 = vadd.xlane.f32.xlu0 %v833
      %v835 = vpop.xlane.xlu0 %834
      %v836 = vsel %vm574, %v800, 0.0
      %837 = vadd.xlane.f32.xlu0 %v836
      %v838 = vpop.xlane.xlu0 %837
      %v839 = vsel %vm574, %v801, 0.0
      %840 = vadd.xlane.f32.xlu0 %v839
      %v841 = vpop.xlane.xlu0 %840
      %v842 = vsel %vm574, %v802, 0.0
      %843 = vadd.xlane.f32.xlu0 %v842
      %v844 = vpop.xlane.xlu0 %843
      %v845 = vsel %vm574, %v803, 0.0
      %846 = vadd.xlane.f32.xlu0 %v845
      %v847 = vpop.xlane.xlu0 %846
      %v848 = vsel %vm574, %v804, 0.0
      %849 = vadd.xlane.f32.xlu0 %v848
      %v850 = vpop.xlane.xlu0 %849
      %v851 = vsel %vm574, %v805, 0.0
      %852 = vadd.xlane.f32.xlu0 %v851
      %v853 = vpop.xlane.xlu0 %852
      %v854 = vmul.f32 %v808, %v599
      %v855 = vmul.f32 %v811, %v599
      %v856 = vmul.f32 %v814, %v599
      %v857 = vmul.f32 %v817, %v599
      %v858 = vmul.f32 %v820, %v599
      %v859 = vmul.f32 %v823, %v599
      %v860 = vmul.f32 %v826, %v599
      %v861 = vmul.f32 %v829, %v599
      %v862 = vmul.f32 %v832, %v599
      %v863 = vmul.f32 %v835, %v599
      %v864 = vmul.f32 %v838, %v599
      %v865 = vmul.f32 %v841, %v599
      %v866 = vmul.f32 %v844, %v599
      %v867 = vmul.f32 %v847, %v599
      %v868 = vmul.f32 %v850, %v599
      %v869 = vmul.f32 %v853, %v599
      %v870 = vadd.f32 %v854, 1e-05
      %v871 = vadd.f32 %v855, 1e-05
      %v872 = vadd.f32 %v856, 1e-05
      %v873 = vadd.f32 %v857, 1e-05
      %v874 = vadd.f32 %v858, 1e-05
      %v875 = vadd.f32 %v859, 1e-05
      %v876 = vadd.f32 %v860, 1e-05
      %v877 = vadd.f32 %v861, 1e-05
      %v878 = vadd.f32 %v862, 1e-05
      %v879 = vadd.f32 %v863, 1e-05
      %v880 = vadd.f32 %v864, 1e-05
      %v881 = vadd.f32 %v865, 1e-05
      %v882 = vadd.f32 %v866, 1e-05
      %v883 = vadd.f32 %v867, 1e-05
      %v884 = vadd.f32 %v868, 1e-05
      %v885 = vadd.f32 %v869, 1e-05
      %v886 = vrsqrt.pop %v870
      %v887 = vrsqrt.pop %v871
      %v888 = vrsqrt.pop %v872
      %v889 = vrsqrt.pop %v873
      %v890 = vrsqrt.pop %v874
      %v891 = vrsqrt.pop %v875
      %v892 = vrsqrt.pop %v876
      %v893 = vrsqrt.pop %v877
      %v894 = vrsqrt.pop %v878
      %v895 = vrsqrt.pop %v879
      %v896 = vrsqrt.pop %v880
      %v897 = vrsqrt.pop %v881
      %v898 = vrsqrt.pop %v882
      %v899 = vrsqrt.pop %v883
      %v900 = vrsqrt.pop %v884
      %v901 = vrsqrt.pop %v885
      %v902 = vmul.f32 %v774, %v886
      %v903 = vmul.f32 %v775, %v887
      %v904 = vmul.f32 %v776, %v888
      %v905 = vmul.f32 %v777, %v889
      %v906 = vmul.f32 %v778, %v890
      %v907 = vmul.f32 %v779, %v891
      %v908 = vmul.f32 %v780, %v892
      %v909 = vmul.f32 %v781, %v893
      %v910 = vmul.f32 %v782, %v894
      %v911 = vmul.f32 %v783, %v895
      %v912 = vmul.f32 %v784, %v896
      %v913 = vmul.f32 %v785, %v897
      %v914 = vmul.f32 %v786, %v898
      %v915 = vmul.f32 %v787, %v899
      %v916 = vmul.f32 %v788, %v900
      %v917 = vmul.f32 %v789, %v901
      %v919 = vlaneseq
      %v920 = vshrl.u32 %v919, 7
      %v921 = vsub.s32 0, %v920
      %v922 = vrot.slane %v708, %v921
      %v924 = vmul.f32 %v902, %v922
      %v925 = vmul.f32 %v903, %v922
      %v926 = vmul.f32 %v904, %v922
      %v927 = vmul.f32 %v905, %v922
      %v928 = vmul.f32 %v906, %v922
      %v929 = vmul.f32 %v907, %v922
      %v930 = vmul.f32 %v908, %v922
      %v931 = vmul.f32 %v909, %v922
      %v932 = vmul.f32 %v910, %v922
      %v933 = vmul.f32 %v911, %v922
      %v934 = vmul.f32 %v912, %v922
      %v935 = vmul.f32 %v913, %v922
      %v936 = vmul.f32 %v914, %v922
      %v937 = vmul.f32 %v915, %v922
      %v938 = vmul.f32 %v916, %v922
      %v939 = vmul.f32 %v917, %v922
      %v941 = vlaneseq
      %v942 = vshrl.u32 %v941, 7
      %v943 = vsub.s32 0, %v942
      %v944 = vrot.slane %v709, %v943
      %v946 = vadd.f32 %v924, %v944
      %v947 = vadd.f32 %v925, %v944
      %v948 = vadd.f32 %v926, %v944
      %v949 = vadd.f32 %v927, %v944
      %v950 = vadd.f32 %v928, %v944
      %v951 = vadd.f32 %v929, %v944
      %v952 = vadd.f32 %v930, %v944
      %v953 = vadd.f32 %v931, %v944
      %v954 = vadd.f32 %v932, %v944
      %v955 = vadd.f32 %v933, %v944
      %v956 = vadd.f32 %v934, %v944
      %v957 = vadd.f32 %v935, %v944
      %v958 = vadd.f32 %v936, %v944
      %v959 = vadd.f32 %v937, %v944
      %v960 = vadd.f32 %v938, %v944
      %v961 = vadd.f32 %v939, %v944
      %v962 = vpack.c.bf16 %v701, %v700
      %v963 = vpack.c.bf16 %v703, %v702
      %v964 = vpack.c.bf16 %v705, %v704
      %v965 = vpack.c.bf16 %v707, %v706
      %v966 = vld [vmem:[%s8] sm:$0xf]
      %v967 = vld [vmem:[%s8 + $0x4] sm:$0xf]
      %v968 = vld [vmem:[%s8 + $0x8] sm:$0xf]
      %v969 = vld [vmem:[%s8 + $0xc] sm:$0xf]
      %v974 = vunpack.c.l.b16 %v966
      %v975 = vunpack.c.l.b16 %v967
      %v976 = vunpack.c.l.b16 %v968
      %v977 = vunpack.c.l.b16 %v969
      %v978 = vpack.c.b16 %v975, %v974
      %v979 = vpack.c.b16 %v977, %v976
      %v983 = vsel %vm574, %v962, 0
      %v986 = vsel %vm574, %v963, 0
      %v989 = vsel %vm574, %v964, 0
      %v992 = vsel %vm574, %v965, 0
      %994 = vmatprep.subr.bf16.mxu0 0
      %995 = vmatpush1.bf16.msra.mxu0 0
      %996 = vmatprep.subr.bf16.mxu0 0
      %997 = vmatpush1.bf16.msra.mxu0 0
      %998 = vmatprep.subr.bf16.mxu0 0
      %999 = vmatpush1.bf16.msra.mxu0 0
      %1000 = vmatprep.subr.bf16.mxu0 0
      %1001 = vmatpush1.bf16.msra.mxu0 0
      %1002 = vmatprep.subr.bf16.mxu0 0
      %1003 = vmatpush1.bf16.msra.mxu0 0
      %1004 = vmatprep.subr.bf16.mxu0 0
      %1005 = vmatpush1.bf16.msra.mxu0 0
      %1006 = vmatprep.subr.bf16.mxu0 0
      %1007 = vmatpush1.bf16.msra.mxu0 %v979
      %1008 = vmatprep.subr.bf16.mxu0 0
      %1009 = vmatpush1.bf16.msra.mxu0 %v978
      %1010 = vmatprep.subr.bf16.mxu0 0
      %1011 = vmatpush2.bf16.msra.mxu0 0
      %1012 = vmatprep.subr.bf16.mxu0 0
      %1013 = vmatpush2.bf16.msra.mxu0 0
      %1014 = vmatprep.subr.bf16.mxu0 0
      %1015 = vmatpush2.bf16.msra.mxu0 0
      %1016 = vmatprep.subr.bf16.mxu0 0
      %1017 = vmatpush2.bf16.msra.mxu0 0
      %1018 = vmatprep.subr.bf16.mxu0 0
      %1019 = vmatpush2.bf16.msra.mxu0 0
      %1020 = vmatprep.subr.bf16.mxu0 0
      %1021 = vmatpush2.bf16.msra.mxu0 0
      %1022 = vmatprep.subr.bf16.mxu0 0
      %1023 = vmatpush2.bf16.msra.mxu0 0
      %1024 = vmatprep.subr.bf16.mxu0 0
      %1025 = vmatpush2.bf16.msra.mxu0 0
      %1026 = vmatprep.mubr.bf16.mxu0 0
      %1027 = vmatmul.mubr.bf16.gmra.mxu0 %v983
      %v1028 = vpop.f32.mrf.mxu0
      %v1029 = vadd.f32 0.0, %v1028
      %v1030 = vpop.f32.mrf.mxu0
      %v1031 = vpop.f32.mrf.mxu0
      %v1032 = vadd.f32 0.0, %v1031
      %v1033 = vpop.f32.mrf.mxu0
      %1034 = vmatprep.mubr.bf16.mxu0 0
      %1035 = vmatmul.mubr.bf16.gmra.mxu0 %v986
      %v1036 = vpop.f32.mrf.mxu0
      %v1037 = vadd.f32 0.0, %v1036
      %v1038 = vpop.f32.mrf.mxu0
      %v1039 = vpop.f32.mrf.mxu0
      %v1040 = vadd.f32 0.0, %v1039
      %v1041 = vpop.f32.mrf.mxu0
      %1042 = vmatprep.mubr.bf16.mxu0 0
      %1043 = vmatmul.mubr.bf16.gmra.mxu0 %v989
      %v1044 = vpop.f32.mrf.mxu0
      %v1045 = vadd.f32 0.0, %v1044
      %v1046 = vpop.f32.mrf.mxu0
      %v1047 = vpop.f32.mrf.mxu0
      %v1048 = vadd.f32 0.0, %v1047
      %v1049 = vpop.f32.mrf.mxu0
      %1050 = vmatprep.mubr.bf16.mxu0 0
      %1051 = vmatmul.mubr.bf16.gmra.mxu0 %v992
      %v1052 = vpop.f32.mrf.mxu0
      %v1053 = vadd.f32 0.0, %v1052
      %v1054 = vpop.f32.mrf.mxu0
      %v1055 = vpop.f32.mrf.mxu0
      %v1056 = vadd.f32 0.0, %v1055
      %v1057 = vpop.f32.mrf.mxu0
      %1058 = vdwg.mxu0
      %v1059 = vpack.c.bf16 %v947, %v946
      %v1060 = vpack.c.bf16 %v949, %v948
      %v1061 = vpack.c.bf16 %v951, %v950
      %v1062 = vpack.c.bf16 %v953, %v952
      %v1063 = vpack.c.bf16 %v955, %v954
      %v1064 = vpack.c.bf16 %v957, %v956
      %v1065 = vpack.c.bf16 %v959, %v958
      %v1066 = vpack.c.bf16 %v961, %v960
      %v1067 = vld [vmem:[%s9] sm:$0xf]
      %v1068 = vld [vmem:[%s9 + $0x4] sm:$0xf]
      %v1069 = vld [vmem:[%s9 + $0x8] sm:$0xf]
      %v1070 = vld [vmem:[%s9 + $0xc] sm:$0xf]
      %v1075 = vunpack.c.l.b16 %v1067
      %v1076 = vunpack.c.l.b16 %v1068
      %v1077 = vunpack.c.l.b16 %v1069
      %v1078 = vunpack.c.l.b16 %v1070
      %v1079 = vpack.c.b16 %v1076, %v1075
      %v1080 = vpack.c.b16 %v1078, %v1077
      %v1084 = vsel %vm574, %v1059, 0
      %v1087 = vsel %vm574, %v1060, 0
      %v1090 = vsel %vm574, %v1061, 0
      %v1093 = vsel %vm574, %v1062, 0
      %v1096 = vsel %vm574, %v1063, 0
      %v1099 = vsel %vm574, %v1064, 0
      %v1102 = vsel %vm574, %v1065, 0
      %v1105 = vsel %vm574, %v1066, 0
      %1107 = vmatprep.subr.bf16.mxu0 0
      %1108 = vmatpush1.bf16.msra.mxu0 0
      %1109 = vmatprep.subr.bf16.mxu0 0
      %1110 = vmatpush1.bf16.msra.mxu0 0
      %1111 = vmatprep.subr.bf16.mxu0 0
      %1112 = vmatpush1.bf16.msra.mxu0 0
      %1113 = vmatprep.subr.bf16.mxu0 0
      %1114 = vmatpush1.bf16.msra.mxu0 0
      %1115 = vmatprep.subr.bf16.mxu0 0
      %1116 = vmatpush1.bf16.msra.mxu0 0
      %1117 = vmatprep.subr.bf16.mxu0 0
      %1118 = vmatpush1.bf16.msra.mxu0 0
      %1119 = vmatprep.subr.bf16.mxu0 0
      %1120 = vmatpush1.bf16.msra.mxu0 %v1080
      %1121 = vmatprep.subr.bf16.mxu0 0
      %1122 = vmatpush1.bf16.msra.mxu0 %v1079
      %1123 = vmatprep.subr.bf16.mxu0 0
      %1124 = vmatpush2.bf16.msra.mxu0 0
      %1125 = vmatprep.subr.bf16.mxu0 0
      %1126 = vmatpush2.bf16.msra.mxu0 0
      %1127 = vmatprep.subr.bf16.mxu0 0
      %1128 = vmatpush2.bf16.msra.mxu0 0
      %1129 = vmatprep.subr.bf16.mxu0 0
      %1130 = vmatpush2.bf16.msra.mxu0 0
      %1131 = vmatprep.subr.bf16.mxu0 0
      %1132 = vmatpush2.bf16.msra.mxu0 0
      %1133 = vmatprep.subr.bf16.mxu0 0
      %1134 = vmatpush2.bf16.msra.mxu0 0
      %1135 = vmatprep.subr.bf16.mxu0 0
      %1136 = vmatpush2.bf16.msra.mxu0 0
      %1137 = vmatprep.subr.bf16.mxu0 0
      %1138 = vmatpush2.bf16.msra.mxu0 0
      %1139 = vmatprep.mubr.bf16.mxu0 0
      %1140 = vmatmul.mubr.bf16.gmra.mxu0 %v1084
      %v1141 = vpop.f32.mrf.mxu0
      %v1142 = vadd.f32 0.0, %v1141
      %v1143 = vpop.f32.mrf.mxu0
      %v1144 = vpop.f32.mrf.mxu0
      %v1145 = vadd.f32 0.0, %v1144
      %v1146 = vpop.f32.mrf.mxu0
      %1147 = vmatprep.mubr.bf16.mxu0 0
      %1148 = vmatmul.mubr.bf16.gmra.mxu0 %v1087
      %v1149 = vpop.f32.mrf.mxu0
      %v1150 = vadd.f32 0.0, %v1149
      %v1151 = vpop.f32.mrf.mxu0
      %v1152 = vpop.f32.mrf.mxu0
      %v1153 = vadd.f32 0.0, %v1152
      %v1154 = vpop.f32.mrf.mxu0
      %1155 = vmatprep.mubr.bf16.mxu0 0
      %1156 = vmatmul.mubr.bf16.gmra.mxu0 %v1090
      %v1157 = vpop.f32.mrf.mxu0
      %v1158 = vadd.f32 0.0, %v1157
      %v1159 = vpop.f32.mrf.mxu0
      %v1160 = vpop.f32.mrf.mxu0
      %v1161 = vadd.f32 0.0, %v1160
      %v1162 = vpop.f32.mrf.mxu0
      %1163 = vmatprep.mubr.bf16.mxu0 0
      %1164 = vmatmul.mubr.bf16.gmra.mxu0 %v1093
      %v1165 = vpop.f32.mrf.mxu0
      %v1166 = vadd.f32 0.0, %v1165
      %v1167 = vpop.f32.mrf.mxu0
      %v1168 = vpop.f32.mrf.mxu0
      %v1169 = vadd.f32 0.0, %v1168
      %v1170 = vpop.f32.mrf.mxu0
      %1171 = vmatprep.mubr.bf16.mxu0 0
      %1172 = vmatmul.mubr.bf16.gmra.mxu0 %v1096
      %v1173 = vpop.f32.mrf.mxu0
      %v1174 = vadd.f32 0.0, %v1173
      %v1175 = vpop.f32.mrf.mxu0
      %v1176 = vpop.f32.mrf.mxu0
      %v1177 = vadd.f32 0.0, %v1176
      %v1178 = vpop.f32.mrf.mxu0
      %1179 = vmatprep.mubr.bf16.mxu0 0
      %1180 = vmatmul.mubr.bf16.gmra.mxu0 %v1099
      %v1181 = vpop.f32.mrf.mxu0
      %v1182 = vadd.f32 0.0, %v1181
      %v1183 = vpop.f32.mrf.mxu0
      %v1184 = vpop.f32.mrf.mxu0
      %v1185 = vadd.f32 0.0, %v1184
      %v1186 = vpop.f32.mrf.mxu0
      %1187 = vmatprep.mubr.bf16.mxu0 0
      %1188 = vmatmul.mubr.bf16.gmra.mxu0 %v1102
      %v1189 = vpop.f32.mrf.mxu0
      %v1190 = vadd.f32 0.0, %v1189
      %v1191 = vpop.f32.mrf.mxu0
      %v1192 = vpop.f32.mrf.mxu0
      %v1193 = vadd.f32 0.0, %v1192
      %v1194 = vpop.f32.mrf.mxu0
      %1195 = vmatprep.mubr.bf16.mxu0 0
      %1196 = vmatmul.mubr.bf16.gmra.mxu0 %v1105
      %v1197 = vpop.f32.mrf.mxu0
      %v1198 = vadd.f32 0.0, %v1197
      %v1199 = vpop.f32.mrf.mxu0
      %v1200 = vpop.f32.mrf.mxu0
      %v1201 = vadd.f32 0.0, %v1200
      %v1202 = vpop.f32.mrf.mxu0
      %1203 = vdwg.mxu0
      %v1204 = vmul.f32 %v1029, 0.35355338
      %v1205 = vmul.f32 %v1032, 0.35355338
      %v1206 = vmul.f32 %v1037, 0.35355338
      %v1207 = vmul.f32 %v1040, 0.35355338
      %v1208 = vmul.f32 %v1045, 0.35355338
      %v1209 = vmul.f32 %v1048, 0.35355338
      %v1210 = vmul.f32 %v1053, 0.35355338
      %v1211 = vmul.f32 %v1056, 0.35355338
      %v1212 = vpack.c.bf16 %v1204, %v1204
      %v1213 = vpack.c.bf16 %v1205, %v1205
      %v1214 = vpack.c.bf16 %v1206, %v1206
      %v1215 = vpack.c.bf16 %v1207, %v1207
      %v1216 = vpack.c.bf16 %v1208, %v1208
      %v1217 = vpack.c.bf16 %v1209, %v1209
      %v1218 = vpack.c.bf16 %v1210, %v1210
      %v1219 = vpack.c.bf16 %v1211, %v1211
      %v1220 = vpack.c.bf16 %v1145, %v1142
      %v1221 = vpack.c.bf16 %v1153, %v1150
      %v1222 = vpack.c.bf16 %v1161, %v1158
      %v1223 = vpack.c.bf16 %v1169, %v1166
      %v1224 = vpack.c.bf16 %v1177, %v1174
      %v1225 = vpack.c.bf16 %v1185, %v1182
      %v1226 = vpack.c.bf16 %v1193, %v1190
      %v1227 = vpack.c.bf16 %v1201, %v1198
      %vm1228 = vcmask 64512
      %v1230 = vsel %vm1228, %v1212, 0
      %v1233 = vsel %vm1228, %v1220, 0
      %1235 = vmatprep.subr.bf16.mxu0 0
      %1236 = vmatpush1.bf16.xpose.msra.mxu0 0
      %1237 = vmatprep.subr.bf16.mxu0 0
      %1238 = vmatpush1.bf16.xpose.msra.mxu0 0
      %1239 = vmatprep.subr.bf16.mxu0 0
      %1240 = vmatpush1.bf16.xpose.msra.mxu0 0
      %1241 = vmatprep.subr.bf16.mxu0 0
      %1242 = vmatpush1.bf16.xpose.msra.mxu0 0
      %1243 = vmatprep.subr.bf16.mxu0 0
      %1244 = vmatpush1.bf16.xpose.msra.mxu0 0
      %1245 = vmatprep.subr.bf16.mxu0 0
      %1246 = vmatpush1.bf16.xpose.msra.mxu0 0
      %1247 = vmatprep.subr.bf16.mxu0 0
      %1248 = vmatpush1.bf16.xpose.msra.mxu0 0
      %1249 = vmatprep.subr.bf16.mxu0 0
      %1250 = vmatpush1.bf16.xpose.msra.mxu0 %v1233
      %1251 = vmatprep.subr.bf16.mxu0 0
      %1252 = vmatpush2.bf16.xpose.msra.mxu0 0
      %1253 = vmatprep.subr.bf16.mxu0 0
      %1254 = vmatpush2.bf16.xpose.msra.mxu0 0
      %1255 = vmatprep.subr.bf16.mxu0 0
      %1256 = vmatpush2.bf16.xpose.msra.mxu0 0
      %1257 = vmatprep.subr.bf16.mxu0 0
      %1258 = vmatpush2.bf16.xpose.msra.mxu0 0
      %1259 = vmatprep.subr.bf16.mxu0 0
      %1260 = vmatpush2.bf16.xpose.msra.mxu0 0
      %1261 = vmatprep.subr.bf16.mxu0 0
      %1262 = vmatpush2.bf16.xpose.msra.mxu0 0
      %1263 = vmatprep.subr.bf16.mxu0 0
      %1264 = vmatpush2.bf16.xpose.msra.mxu0 0
      %1265 = vmatprep.subr.bf16.mxu0 0
      %1266 = vmatpush2.bf16.xpose.msra.mxu0 0
      %1267 = vmatprep.mubr.bf16.mxu0 0
      %1268 = vmatmul.mubr.bf16.gmra.mxu0 %v1230
      %v1269 = vpop.f32.mrf.mxu0
      %v1270 = vadd.f32 0.0, %v1269
      %v1271 = vpop.f32.mrf.mxu0
      %v1272 = vpop.f32.mrf.mxu0
      %v1273 = vpop.f32.mrf.mxu0
      %1274 = vdwg.mxu0
      %v1276 = vsel %vm1228, %v1213, 0
      %v1279 = vsel %vm1228, %v1221, 0
      %1281 = vmatprep.subr.bf16.mxu0 0
      %1282 = vmatpush1.bf16.xpose.msra.mxu0 0
      %1283 = vmatprep.subr.bf16.mxu0 0
      %1284 = vmatpush1.bf16.xpose.msra.mxu0 0
      %1285 = vmatprep.subr.bf16.mxu0 0
      %1286 = vmatpush1.bf16.xpose.msra.mxu0 0
      %1287 = vmatprep.subr.bf16.mxu0 0
      %1288 = vmatpush1.bf16.xpose.msra.mxu0 0
      %1289 = vmatprep.subr.bf16.mxu0 0
      %1290 = vmatpush1.bf16.xpose.msra.mxu0 0
      %1291 = vmatprep.subr.bf16.mxu0 0
      %1292 = vmatpush1.bf16.xpose.msra.mxu0 0
      %1293 = vmatprep.subr.bf16.mxu0 0
      %1294 = vmatpush1.bf16.xpose.msra.mxu0 0
      %1295 = vmatprep.subr.bf16.mxu0 0
      %1296 = vmatpush1.bf16.xpose.msra.mxu0 %v1279
      %1297 = vmatprep.subr.bf16.mxu0 0
      %1298 = vmatpush2.bf16.xpose.msra.mxu0 0
      %1299 = vmatprep.subr.bf16.mxu0 0
      %1300 = vmatpush2.bf16.xpose.msra.mxu0 0
      %1301 = vmatprep.subr.bf16.mxu0 0
      %1302 = vmatpush2.bf16.xpose.msra.mxu0 0
      %1303 = vmatprep.subr.bf16.mxu0 0
      %1304 = vmatpush2.bf16.xpose.msra.mxu0 0
      %1305 = vmatprep.subr.bf16.mxu0 0
      %1306 = vmatpush2.bf16.xpose.msra.mxu0 0
      %1307 = vmatprep.subr.bf16.mxu0 0
      %1308 = vmatpush2.bf16.xpose.msra.mxu0 0
      %1309 = vmatprep.subr.bf16.mxu0 0
      %1310 = vmatpush2.bf16.xpose.msra.mxu0 0
      %1311 = vmatprep.subr.bf16.mxu0 0
      %1312 = vmatpush2.bf16.xpose.msra.mxu0 0
      %1313 = vmatprep.mubr.bf16.mxu0 0
      %1314 = vmatmul.mubr.bf16.gmra.mxu0 %v1276
      %v1315 = vpop.f32.mrf.mxu0
      %v1316 = vadd.f32 0.0, %v1315
      %v1317 = vpop.f32.mrf.mxu0
      %v1318 = vpop.f32.mrf.mxu0
      %v1319 = vpop.f32.mrf.mxu0
      %1320 = vdwg.mxu0
      %v1322 = vsel %vm1228, %v1214, 0
      %v1325 = vsel %vm1228, %v1222, 0
      %1327 = vmatprep.subr.bf16.mxu0 0
      %1328 = vmatpush1.bf16.xpose.msra.mxu0 0
      %1329 = vmatprep.subr.bf16.mxu0 0
      %1330 = vmatpush1.bf16.xpose.msra.mxu0 0
      %1331 = vmatprep.subr.bf16.mxu0 0
      %1332 = vmatpush1.bf16.xpose.msra.mxu0 0
      %1333 = vmatprep.subr.bf16.mxu0 0
      %1334 = vmatpush1.bf16.xpose.msra.mxu0 0
      %1335 = vmatprep.subr.bf16.mxu0 0
      %1336 = vmatpush1.bf16.xpose.msra.mxu0 0
      %1337 = vmatprep.subr.bf16.mxu0 0
      %1338 = vmatpush1.bf16.xpose.msra.mxu0 0
      %1339 = vmatprep.subr.bf16.mxu0 0
      %1340 = vmatpush1.bf16.xpose.msra.mxu0 0
      %1341 = vmatprep.subr.bf16.mxu0 0
      %1342 = vmatpush1.bf16.xpose.msra.mxu0 %v1325
      %1343 = vmatprep.subr.bf16.mxu0 0
      %1344 = vmatpush2.bf16.xpose.msra.mxu0 0
      %1345 = vmatprep.subr.bf16.mxu0 0
      %1346 = vmatpush2.bf16.xpose.msra.mxu0 0
      %1347 = vmatprep.subr.bf16.mxu0 0
      %1348 = vmatpush2.bf16.xpose.msra.mxu0 0
      %1349 = vmatprep.subr.bf16.mxu0 0
      %1350 = vmatpush2.bf16.xpose.msra.mxu0 0
      %1351 = vmatprep.subr.bf16.mxu0 0
      %1352 = vmatpush2.bf16.xpose.msra.mxu0 0
      %1353 = vmatprep.subr.bf16.mxu0 0
      %1354 = vmatpush2.bf16.xpose.msra.mxu0 0
      %1355 = vmatprep.subr.bf16.mxu0 0
      %1356 = vmatpush2.bf16.xpose.msra.mxu0 0
      %1357 = vmatprep.subr.bf16.mxu0 0
      %1358 = vmatpush2.bf16.xpose.msra.mxu0 0
      %1359 = vmatprep.mubr.bf16.mxu0 0
      %1360 = vmatmul.mubr.bf16.gmra.mxu0 %v1322
      %v1361 = vpop.f32.mrf.mxu0
      %v1362 = vadd.f32 0.0, %v1361
      %v1363 = vpop.f32.mrf.mxu0
      %v1364 = vpop.f32.mrf.mxu0
      %v1365 = vpop.f32.mrf.mxu0
      %1366 = vdwg.mxu0
      %v1368 = vsel %vm1228, %v1215, 0
      %v1371 = vsel %vm1228, %v1223, 0
      %1373 = vmatprep.subr.bf16.mxu0 0
      %1374 = vmatpush1.bf16.xpose.msra.mxu0 0
      %1375 = vmatprep.subr.bf16.mxu0 0
      %1376 = vmatpush1.bf16.xpose.msra.mxu0 0
      %1377 = vmatprep.subr.bf16.mxu0 0
      %1378 = vmatpush1.bf16.xpose.msra.mxu0 0
      %1379 = vmatprep.subr.bf16.mxu0 0
      %1380 = vmatpush1.bf16.xpose.msra.mxu0 0
      %1381 = vmatprep.subr.bf16.mxu0 0
      %1382 = vmatpush1.bf16.xpose.msra.mxu0 0
      %1383 = vmatprep.subr.bf16.mxu0 0
      %1384 = vmatpush1.bf16.xpose.msra.mxu0 0
      %1385 = vmatprep.subr.bf16.mxu0 0
      %1386 = vmatpush1.bf16.xpose.msra.mxu0 0
      %1387 = vmatprep.subr.bf16.mxu0 0
      %1388 = vmatpush1.bf16.xpose.msra.mxu0 %v1371
      %1389 = vmatprep.subr.bf16.mxu0 0
      %1390 = vmatpush2.bf16.xpose.msra.mxu0 0
      %1391 = vmatprep.subr.bf16.mxu0 0
      %1392 = vmatpush2.bf16.xpose.msra.mxu0 0
      %1393 = vmatprep.subr.bf16.mxu0 0
      %1394 = vmatpush2.bf16.xpose.msra.mxu0 0
      %1395 = vmatprep.subr.bf16.mxu0 0
      %1396 = vmatpush2.bf16.xpose.msra.mxu0 0
      %1397 = vmatprep.subr.bf16.mxu0 0
      %1398 = vmatpush2.bf16.xpose.msra.mxu0 0
      %1399 = vmatprep.subr.bf16.mxu0 0
      %1400 = vmatpush2.bf16.xpose.msra.mxu0 0
      %1401 = vmatprep.subr.bf16.mxu0 0
      %1402 = vmatpush2.bf16.xpose.msra.mxu0 0
      %1403 = vmatprep.subr.bf16.mxu0 0
      %1404 = vmatpush2.bf16.xpose.msra.mxu0 0
      %1405 = vmatprep.mubr.bf16.mxu0 0
      %1406 = vmatmul.mubr.bf16.gmra.mxu0 %v1368
      %v1407 = vpop.f32.mrf.mxu0
      %v1408 = vadd.f32 0.0, %v1407
      %v1409 = vpop.f32.mrf.mxu0
      %v1410 = vpop.f32.mrf.mxu0
      %v1411 = vpop.f32.mrf.mxu0
      %1412 = vdwg.mxu0
      %v1414 = vsel %vm1228, %v1216, 0
      %v1417 = vsel %vm1228, %v1224, 0
      %1419 = vmatprep.subr.bf16.mxu0 0
      %1420 = vmatpush1.bf16.xpose.msra.mxu0 0
      %1421 = vmatprep.subr.bf16.mxu0 0
      %1422 = vmatpush1.bf16.xpose.msra.mxu0 0
      %1423 = vmatprep.subr.bf16.mxu0 0
      %1424 = vmatpush1.bf16.xpose.msra.mxu0 0
      %1425 = vmatprep.subr.bf16.mxu0 0
      %1426 = vmatpush1.bf16.xpose.msra.mxu0 0
      %1427 = vmatprep.subr.bf16.mxu0 0
      %1428 = vmatpush1.bf16.xpose.msra.mxu0 0
      %1429 = vmatprep.subr.bf16.mxu0 0
      %1430 = vmatpush1.bf16.xpose.msra.mxu0 0
      %1431 = vmatprep.subr.bf16.mxu0 0
      %1432 = vmatpush1.bf16.xpose.msra.mxu0 0
      %1433 = vmatprep.subr.bf16.mxu0 0
      %1434 = vmatpush1.bf16.xpose.msra.mxu0 %v1417
      %1435 = vmatprep.subr.bf16.mxu0 0
      %1436 = vmatpush2.bf16.xpose.msra.mxu0 0
      %1437 = vmatprep.subr.bf16.mxu0 0
      %1438 = vmatpush2.bf16.xpose.msra.mxu0 0
      %1439 = vmatprep.subr.bf16.mxu0 0
      %1440 = vmatpush2.bf16.xpose.msra.mxu0 0
      %1441 = vmatprep.subr.bf16.mxu0 0
      %1442 = vmatpush2.bf16.xpose.msra.mxu0 0
      %1443 = vmatprep.subr.bf16.mxu0 0
      %1444 = vmatpush2.bf16.xpose.msra.mxu0 0
      %1445 = vmatprep.subr.bf16.mxu0 0
      %1446 = vmatpush2.bf16.xpose.msra.mxu0 0
      %1447 = vmatprep.subr.bf16.mxu0 0
      %1448 = vmatpush2.bf16.xpose.msra.mxu0 0
      %1449 = vmatprep.subr.bf16.mxu0 0
      %1450 = vmatpush2.bf16.xpose.msra.mxu0 0
      %1451 = vmatprep.mubr.bf16.mxu0 0
      %1452 = vmatmul.mubr.bf16.gmra.mxu0 %v1414
      %v1453 = vpop.f32.mrf.mxu0
      %v1454 = vadd.f32 0.0, %v1453
      %v1455 = vpop.f32.mrf.mxu0
      %v1456 = vpop.f32.mrf.mxu0
      %v1457 = vpop.f32.mrf.mxu0
      %1458 = vdwg.mxu0
      %v1460 = vsel %vm1228, %v1217, 0
      %v1463 = vsel %vm1228, %v1225, 0
      %1465 = vmatprep.subr.bf16.mxu0 0
      %1466 = vmatpush1.bf16.xpose.msra.mxu0 0
      %1467 = vmatprep.subr.bf16.mxu0 0
      %1468 = vmatpush1.bf16.xpose.msra.mxu0 0
      %1469 = vmatprep.subr.bf16.mxu0 0
      %1470 = vmatpush1.bf16.xpose.msra.mxu0 0
      %1471 = vmatprep.subr.bf16.mxu0 0
      %1472 = vmatpush1.bf16.xpose.msra.mxu0 0
      %1473 = vmatprep.subr.bf16.mxu0 0
      %1474 = vmatpush1.bf16.xpose.msra.mxu0 0
      %1475 = vmatprep.subr.bf16.mxu0 0
      %1476 = vmatpush1.bf16.xpose.msra.mxu0 0
      %1477 = vmatprep.subr.bf16.mxu0 0
      %1478 = vmatpush1.bf16.xpose.msra.mxu0 0
      %1479 = vmatprep.subr.bf16.mxu0 0
      %1480 = vmatpush1.bf16.xpose.msra.mxu0 %v1463
      %1481 = vmatprep.subr.bf16.mxu0 0
      %1482 = vmatpush2.bf16.xpose.msra.mxu0 0
      %1483 = vmatprep.subr.bf16.mxu0 0
      %1484 = vmatpush2.bf16.xpose.msra.mxu0 0
      %1485 = vmatprep.subr.bf16.mxu0 0
      %1486 = vmatpush2.bf16.xpose.msra.mxu0 0
      %1487 = vmatprep.subr.bf16.mxu0 0
      %1488 = vmatpush2.bf16.xpose.msra.mxu0 0
      %1489 = vmatprep.subr.bf16.mxu0 0
      %1490 = vmatpush2.bf16.xpose.msra.mxu0 0
      %1491 = vmatprep.subr.bf16.mxu0 0
      %1492 = vmatpush2.bf16.xpose.msra.mxu0 0
      %1493 = vmatprep.subr.bf16.mxu0 0
      %1494 = vmatpush2.bf16.xpose.msra.mxu0 0
      %1495 = vmatprep.subr.bf16.mxu0 0
      %1496 = vmatpush2.bf16.xpose.msra.mxu0 0
      %1497 = vmatprep.mubr.bf16.mxu0 0
      %1498 = vmatmul.mubr.bf16.gmra.mxu0 %v1460
      %v1499 = vpop.f32.mrf.mxu0
      %v1500 = vadd.f32 0.0, %v1499
      %v1501 = vpop.f32.mrf.mxu0
      %v1502 = vpop.f32.mrf.mxu0
      %v1503 = vpop.f32.mrf.mxu0
      %1504 = vdwg.mxu0
      %v1506 = vsel %vm1228, %v1218, 0
      %v1509 = vsel %vm1228, %v1226, 0
      %1511 = vmatprep.subr.bf16.mxu0 0
      %1512 = vmatpush1.bf16.xpose.msra.mxu0 0
      %1513 = vmatprep.subr.bf16.mxu0 0
      %1514 = vmatpush1.bf16.xpose.msra.mxu0 0
      %1515 = vmatprep.subr.bf16.mxu0 0
      %1516 = vmatpush1.bf16.xpose.msra.mxu0 0
      %1517 = vmatprep.subr.bf16.mxu0 0
      %1518 = vmatpush1.bf16.xpose.msra.mxu0 0
      %1519 = vmatprep.subr.bf16.mxu0 0
      %1520 = vmatpush1.bf16.xpose.msra.mxu0 0
      %1521 = vmatprep.subr.bf16.mxu0 0
      %1522 = vmatpush1.bf16.xpose.msra.mxu0 0
      %1523 = vmatprep.subr.bf16.mxu0 0
      %1524 = vmatpush1.bf16.xpose.msra.mxu0 0
      %1525 = vmatprep.subr.bf16.mxu0 0
      %1526 = vmatpush1.bf16.xpose.msra.mxu0 %v1509
      %1527 = vmatprep.subr.bf16.mxu0 0
      %1528 = vmatpush2.bf16.xpose.msra.mxu0 0
      %1529 = vmatprep.subr.bf16.mxu0 0
      %1530 = vmatpush2.bf16.xpose.msra.mxu0 0
      %1531 = vmatprep.subr.bf16.mxu0 0
      %1532 = vmatpush2.bf16.xpose.msra.mxu0 0
      %1533 = vmatprep.subr.bf16.mxu0 0
      %1534 = vmatpush2.bf16.xpose.msra.mxu0 0
      %1535 = vmatprep.subr.bf16.mxu0 0
      %1536 = vmatpush2.bf16.xpose.msra.mxu0 0
      %1537 = vmatprep.subr.bf16.mxu0 0
      %1538 = vmatpush2.bf16.xpose.msra.mxu0 0
      %1539 = vmatprep.subr.bf16.mxu0 0
      %1540 = vmatpush2.bf16.xpose.msra.mxu0 0
      %1541 = vmatprep.subr.bf16.mxu0 0
      %1542 = vmatpush2.bf16.xpose.msra.mxu0 0
      %1543 = vmatprep.mubr.bf16.mxu0 0
      %1544 = vmatmul.mubr.bf16.gmra.mxu0 %v1506
      %v1545 = vpop.f32.mrf.mxu0
      %v1546 = vadd.f32 0.0, %v1545
      %v1547 = vpop.f32.mrf.mxu0
      %v1548 = vpop.f32.mrf.mxu0
      %v1549 = vpop.f32.mrf.mxu0
      %1550 = vdwg.mxu0
      %v1552 = vsel %vm1228, %v1219, 0
      %v1555 = vsel %vm1228, %v1227, 0
      %1557 = vmatprep.subr.bf16.mxu0 0
      %1558 = vmatpush1.bf16.xpose.msra.mxu0 0
      %1559 = vmatprep.subr.bf16.mxu0 0
      %1560 = vmatpush1.bf16.xpose.msra.mxu0 0
      %1561 = vmatprep.subr.bf16.mxu0 0
      %1562 = vmatpush1.bf16.xpose.msra.mxu0 0
      %1563 = vmatprep.subr.bf16.mxu0 0
      %1564 = vmatpush1.bf16.xpose.msra.mxu0 0
      %1565 = vmatprep.subr.bf16.mxu0 0
      %1566 = vmatpush1.bf16.xpose.msra.mxu0 0
      %1567 = vmatprep.subr.bf16.mxu0 0
      %1568 = vmatpush1.bf16.xpose.msra.mxu0 0
      %1569 = vmatprep.subr.bf16.mxu0 0
      %1570 = vmatpush1.bf16.xpose.msra.mxu0 0
      %1571 = vmatprep.subr.bf16.mxu0 0
      %1572 = vmatpush1.bf16.xpose.msra.mxu0 %v1555
      %1573 = vmatprep.subr.bf16.mxu0 0
      %1574 = vmatpush2.bf16.xpose.msra.mxu0 0
      %1575 = vmatprep.subr.bf16.mxu0 0
      %1576 = vmatpush2.bf16.xpose.msra.mxu0 0
      %1577 = vmatprep.subr.bf16.mxu0 0
      %1578 = vmatpush2.bf16.xpose.msra.mxu0 0
      %1579 = vmatprep.subr.bf16.mxu0 0
      %1580 = vmatpush2.bf16.xpose.msra.mxu0 0
      %1581 = vmatprep.subr.bf16.mxu0 0
      %1582 = vmatpush2.bf16.xpose.msra.mxu0 0
      %1583 = vmatprep.subr.bf16.mxu0 0
      %1584 = vmatpush2.bf16.xpose.msra.mxu0 0
      %1585 = vmatprep.subr.bf16.mxu0 0
      %1586 = vmatpush2.bf16.xpose.msra.mxu0 0
      %1587 = vmatprep.subr.bf16.mxu0 0
      %1588 = vmatpush2.bf16.xpose.msra.mxu0 0
      %1589 = vmatprep.mubr.bf16.mxu0 0
      %1590 = vmatmul.mubr.bf16.gmra.mxu0 %v1552
      %v1591 = vpop.f32.mrf.mxu0
      %v1592 = vadd.f32 0.0, %v1591
      %v1593 = vpop.f32.mrf.mxu0
      %v1594 = vpop.f32.mrf.mxu0
      %v1595 = vpop.f32.mrf.mxu0
      %1596 = vdwg.mxu0
      %vm1597 = vcmask 130048
      %v1598 = vsel %vm1597, %v1270, -inf
      %1599 = vmax.xlane.f32.xlu0 %v1598
      %v1600 = vpop.xlane.xlu0 %1599
      %v1601 = vsel %vm1597, %v1316, -inf
      %1602 = vmax.xlane.f32.xlu0 %v1601
      %v1603 = vpop.xlane.xlu0 %1602
      %v1604 = vsel %vm1597, %v1362, -inf
      %1605 = vmax.xlane.f32.xlu0 %v1604
      %v1606 = vpop.xlane.xlu0 %1605
      %v1607 = vsel %vm1597, %v1408, -inf
      %1608 = vmax.xlane.f32.xlu0 %v1607
      %v1609 = vpop.xlane.xlu0 %1608
      %v1610 = vsel %vm1597, %v1454, -inf
      %1611 = vmax.xlane.f32.xlu0 %v1610
      %v1612 = vpop.xlane.xlu0 %1611
      %v1613 = vsel %vm1597, %v1500, -inf
      %1614 = vmax.xlane.f32.xlu0 %v1613
      %v1615 = vpop.xlane.xlu0 %1614
      %v1616 = vsel %vm1597, %v1546, -inf
      %1617 = vmax.xlane.f32.xlu0 %v1616
      %v1618 = vpop.xlane.xlu0 %1617
      %v1619 = vsel %vm1597, %v1592, -inf
      %1620 = vmax.xlane.f32.xlu0 %v1619
      %v1621 = vpop.xlane.xlu0 %1620
      %v1622 = vsub.f32 %v1270, %v1600
      %v1623 = vsub.f32 %v1316, %v1603
      %v1624 = vsub.f32 %v1362, %v1606
      %v1625 = vsub.f32 %v1408, %v1609
      %v1626 = vsub.f32 %v1454, %v1612
      %v1627 = vsub.f32 %v1500, %v1615
      %v1628 = vsub.f32 %v1546, %v1618
      %v1629 = vsub.f32 %v1592, %v1621
      %v1630 = vmul.f32 %v1622, 1.442695
      %v1631 = vpow.pop %v1630
      %v1632 = vmul.f32 %v1623, 1.442695
      %v1633 = vpow.pop %v1632
      %v1634 = vmul.f32 %v1624, 1.442695
      %v1635 = vpow.pop %v1634
      %v1636 = vmul.f32 %v1625, 1.442695
      %v1637 = vpow.pop %v1636
      %v1638 = vmul.f32 %v1626, 1.442695
      %v1639 = vpow.pop %v1638
      %v1640 = vmul.f32 %v1627, 1.442695
      %v1641 = vpow.pop %v1640
      %v1642 = vmul.f32 %v1628, 1.442695
      %v1643 = vpow.pop %v1642
      %v1644 = vmul.f32 %v1629, 1.442695
      %v1645 = vpow.pop %v1644
      %v1646 = vsel %vm1597, %v1631, 0.0
      %1647 = vadd.xlane.f32.xlu0 %v1646
      %v1648 = vpop.xlane.xlu0 %1647
      %v1649 = vsel %vm1597, %v1633, 0.0
      %1650 = vadd.xlane.f32.xlu0 %v1649
      %v1651 = vpop.xlane.xlu0 %1650
      %v1652 = vsel %vm1597, %v1635, 0.0
      %1653 = vadd.xlane.f32.xlu0 %v1652
      %v1654 = vpop.xlane.xlu0 %1653
      %v1655 = vsel %vm1597, %v1637, 0.0
      %1656 = vadd.xlane.f32.xlu0 %v1655
      %v1657 = vpop.xlane.xlu0 %1656
      %v1658 = vsel %vm1597, %v1639, 0.0
      %1659 = vadd.xlane.f32.xlu0 %v1658
      %v1660 = vpop.xlane.xlu0 %1659
      %v1661 = vsel %vm1597, %v1641, 0.0
      %1662 = vadd.xlane.f32.xlu0 %v1661
      %v1663 = vpop.xlane.xlu0 %1662
      %v1664 = vsel %vm1597, %v1643, 0.0
      %1665 = vadd.xlane.f32.xlu0 %v1664
      %v1666 = vpop.xlane.xlu0 %1665
      %v1667 = vsel %vm1597, %v1645, 0.0
      %1668 = vadd.xlane.f32.xlu0 %v1667
      %v1669 = vpop.xlane.xlu0 %1668
      %v1670 = vrcp.pop %v1648
      %v1671 = vrcp.pop %v1651
      %v1672 = vrcp.pop %v1654
      %v1673 = vrcp.pop %v1657
      %v1674 = vrcp.pop %v1660
      %v1675 = vrcp.pop %v1663
      %v1676 = vrcp.pop %v1666
      %v1677 = vrcp.pop %v1669
      %v1678 = vmul.f32 %v1631, %v1670
      %v1679 = vmul.f32 %v1633, %v1671
      %v1680 = vmul.f32 %v1635, %v1672
      %v1681 = vmul.f32 %v1637, %v1673
      %v1682 = vmul.f32 %v1639, %v1674
      %v1683 = vmul.f32 %v1641, %v1675
      %v1684 = vmul.f32 %v1643, %v1676
      %v1685 = vmul.f32 %v1645, %v1677
      %v1686 = vpack.c.bf16 %v1678, %v1678
      %v1687 = vpack.c.bf16 %v1679, %v1679
      %v1688 = vpack.c.bf16 %v1680, %v1680
      %v1689 = vpack.c.bf16 %v1681, %v1681
      %v1690 = vpack.c.bf16 %v1682, %v1682
      %v1691 = vpack.c.bf16 %v1683, %v1683
      %v1692 = vpack.c.bf16 %v1684, %v1684
      %v1693 = vpack.c.bf16 %v1685, %v1685
      %1695 = vrot.lane.b32.xlu0 %v1220, 96
      %v1696 = vpop.permute.xlu0 %1695
      %v1699 = vsel %vm1597, %v1686, 0
      %1701 = vmatprep.subr.bf16.mxu0 0
      %1702 = vmatpush1.bf16.msra.mxu0 0
      %1703 = vmatprep.subr.bf16.mxu0 0
      %1704 = vmatpush1.bf16.msra.mxu0 0
      %1705 = vmatprep.subr.bf16.mxu0 0
      %1706 = vmatpush1.bf16.msra.mxu0 0
      %1707 = vmatprep.subr.bf16.mxu0 0
      %1708 = vmatpush1.bf16.msra.mxu0 0
      %1709 = vmatprep.subr.bf16.mxu0 0
      %1710 = vmatpush1.bf16.msra.mxu0 0
      %1711 = vmatprep.subr.bf16.mxu0 0
      %1712 = vmatpush1.bf16.msra.mxu0 0
      %1713 = vmatprep.subr.bf16.mxu0 0
      %1714 = vmatpush1.bf16.msra.mxu0 0
      %1715 = vmatprep.subr.bf16.mxu0 0
      %1716 = vmatpush1.bf16.msra.mxu0 %v1696
      %1717 = vmatprep.subr.bf16.mxu0 0
      %1718 = vmatpush2.bf16.msra.mxu0 0
      %1719 = vmatprep.subr.bf16.mxu0 0
      %1720 = vmatpush2.bf16.msra.mxu0 0
      %1721 = vmatprep.subr.bf16.mxu0 0
      %1722 = vmatpush2.bf16.msra.mxu0 0
      %1723 = vmatprep.subr.bf16.mxu0 0
      %1724 = vmatpush2.bf16.msra.mxu0 0
      %1725 = vmatprep.subr.bf16.mxu0 0
      %1726 = vmatpush2.bf16.msra.mxu0 0
      %1727 = vmatprep.subr.bf16.mxu0 0
      %1728 = vmatpush2.bf16.msra.mxu0 0
      %1729 = vmatprep.subr.bf16.mxu0 0
      %1730 = vmatpush2.bf16.msra.mxu0 0
      %1731 = vmatprep.subr.bf16.mxu0 0
      %1732 = vmatpush2.bf16.msra.mxu0 0
      %1733 = vmatprep.mubr.bf16.mxu0 0
      %1734 = vmatmul.mubr.bf16.gmra.mxu0 %v1699
      %v1735 = vpop.f32.mrf.mxu0
      %v1736 = vadd.f32 0.0, %v1735
      %v1737 = vpop.f32.mrf.mxu0
      %v1738 = vpop.f32.mrf.mxu0
      %v1739 = vpop.f32.mrf.mxu0
      %1740 = vdwg.mxu0
      %1742 = vrot.lane.b32.xlu0 %v1221, 96
      %v1743 = vpop.permute.xlu0 %1742
      %v1746 = vsel %vm1597, %v1687, 0
      %1748 = vmatprep.subr.bf16.mxu0 0
      %1749 = vmatpush1.bf16.msra.mxu0 0
      %1750 = vmatprep.subr.bf16.mxu0 0
      %1751 = vmatpush1.bf16.msra.mxu0 0
      %1752 = vmatprep.subr.bf16.mxu0 0
      %1753 = vmatpush1.bf16.msra.mxu0 0
      %1754 = vmatprep.subr.bf16.mxu0 0
      %1755 = vmatpush1.bf16.msra.mxu0 0
      %1756 = vmatprep.subr.bf16.mxu0 0
      %1757 = vmatpush1.bf16.msra.mxu0 0
      %1758 = vmatprep.subr.bf16.mxu0 0
      %1759 = vmatpush1.bf16.msra.mxu0 0
      %1760 = vmatprep.subr.bf16.mxu0 0
      %1761 = vmatpush1.bf16.msra.mxu0 0
      %1762 = vmatprep.subr.bf16.mxu0 0
      %1763 = vmatpush1.bf16.msra.mxu0 %v1743
      %1764 = vmatprep.subr.bf16.mxu0 0
      %1765 = vmatpush2.bf16.msra.mxu0 0
      %1766 = vmatprep.subr.bf16.mxu0 0
      %1767 = vmatpush2.bf16.msra.mxu0 0
      %1768 = vmatprep.subr.bf16.mxu0 0
      %1769 = vmatpush2.bf16.msra.mxu0 0
      %1770 = vmatprep.subr.bf16.mxu0 0
      %1771 = vmatpush2.bf16.msra.mxu0 0
      %1772 = vmatprep.subr.bf16.mxu0 0
      %1773 = vmatpush2.bf16.msra.mxu0 0
      %1774 = vmatprep.subr.bf16.mxu0 0
      %1775 = vmatpush2.bf16.msra.mxu0 0
      %1776 = vmatprep.subr.bf16.mxu0 0
      %1777 = vmatpush2.bf16.msra.mxu0 0
      %1778 = vmatprep.subr.bf16.mxu0 0
      %1779 = vmatpush2.bf16.msra.mxu0 0
      %1780 = vmatprep.mubr.bf16.mxu0 0
      %1781 = vmatmul.mubr.bf16.gmra.mxu0 %v1746
      %v1782 = vpop.f32.mrf.mxu0
      %v1783 = vadd.f32 0.0, %v1782
      %v1784 = vpop.f32.mrf.mxu0
      %v1785 = vpop.f32.mrf.mxu0
      %v1786 = vpop.f32.mrf.mxu0
      %1787 = vdwg.mxu0
      %1789 = vrot.lane.b32.xlu0 %v1222, 96
      %v1790 = vpop.permute.xlu0 %1789
      %v1793 = vsel %vm1597, %v1688, 0
      %1795 = vmatprep.subr.bf16.mxu0 0
      %1796 = vmatpush1.bf16.msra.mxu0 0
      %1797 = vmatprep.subr.bf16.mxu0 0
      %1798 = vmatpush1.bf16.msra.mxu0 0
      %1799 = vmatprep.subr.bf16.mxu0 0
      %1800 = vmatpush1.bf16.msra.mxu0 0
      %1801 = vmatprep.subr.bf16.mxu0 0
      %1802 = vmatpush1.bf16.msra.mxu0 0
      %1803 = vmatprep.subr.bf16.mxu0 0
      %1804 = vmatpush1.bf16.msra.mxu0 0
      %1805 = vmatprep.subr.bf16.mxu0 0
      %1806 = vmatpush1.bf16.msra.mxu0 0
      %1807 = vmatprep.subr.bf16.mxu0 0
      %1808 = vmatpush1.bf16.msra.mxu0 0
      %1809 = vmatprep.subr.bf16.mxu0 0
      %1810 = vmatpush1.bf16.msra.mxu0 %v1790
      %1811 = vmatprep.subr.bf16.mxu0 0
      %1812 = vmatpush2.bf16.msra.mxu0 0
      %1813 = vmatprep.subr.bf16.mxu0 0
      %1814 = vmatpush2.bf16.msra.mxu0 0
      %1815 = vmatprep.subr.bf16.mxu0 0
      %1816 = vmatpush2.bf16.msra.mxu0 0
      %1817 = vmatprep.subr.bf16.mxu0 0
      %1818 = vmatpush2.bf16.msra.mxu0 0
      %1819 = vmatprep.subr.bf16.mxu0 0
      %1820 = vmatpush2.bf16.msra.mxu0 0
      %1821 = vmatprep.subr.bf16.mxu0 0
      %1822 = vmatpush2.bf16.msra.mxu0 0
      %1823 = vmatprep.subr.bf16.mxu0 0
      %1824 = vmatpush2.bf16.msra.mxu0 0
      %1825 = vmatprep.subr.bf16.mxu0 0
      %1826 = vmatpush2.bf16.msra.mxu0 0
      %1827 = vmatprep.mubr.bf16.mxu0 0
      %1828 = vmatmul.mubr.bf16.gmra.mxu0 %v1793
      %v1829 = vpop.f32.mrf.mxu0
      %v1830 = vadd.f32 0.0, %v1829
      %v1831 = vpop.f32.mrf.mxu0
      %v1832 = vpop.f32.mrf.mxu0
      %v1833 = vpop.f32.mrf.mxu0
      %1834 = vdwg.mxu0
      %1836 = vrot.lane.b32.xlu0 %v1223, 96
      %v1837 = vpop.permute.xlu0 %1836
      %v1840 = vsel %vm1597, %v1689, 0
      %1842 = vmatprep.subr.bf16.mxu0 0
      %1843 = vmatpush1.bf16.msra.mxu0 0
      %1844 = vmatprep.subr.bf16.mxu0 0
      %1845 = vmatpush1.bf16.msra.mxu0 0
      %1846 = vmatprep.subr.bf16.mxu0 0
      %1847 = vmatpush1.bf16.msra.mxu0 0
      %1848 = vmatprep.subr.bf16.mxu0 0
      %1849 = vmatpush1.bf16.msra.mxu0 0
      %1850 = vmatprep.subr.bf16.mxu0 0
      %1851 = vmatpush1.bf16.msra.mxu0 0
      %1852 = vmatprep.subr.bf16.mxu0 0
      %1853 = vmatpush1.bf16.msra.mxu0 0
      %1854 = vmatprep.subr.bf16.mxu0 0
      %1855 = vmatpush1.bf16.msra.mxu0 0
      %1856 = vmatprep.subr.bf16.mxu0 0
      %1857 = vmatpush1.bf16.msra.mxu0 %v1837
      %1858 = vmatprep.subr.bf16.mxu0 0
      %1859 = vmatpush2.bf16.msra.mxu0 0
      %1860 = vmatprep.subr.bf16.mxu0 0
      %1861 = vmatpush2.bf16.msra.mxu0 0
      %1862 = vmatprep.subr.bf16.mxu0 0
      %1863 = vmatpush2.bf16.msra.mxu0 0
      %1864 = vmatprep.subr.bf16.mxu0 0
      %1865 = vmatpush2.bf16.msra.mxu0 0
      %1866 = vmatprep.subr.bf16.mxu0 0
      %1867 = vmatpush2.bf16.msra.mxu0 0
      %1868 = vmatprep.subr.bf16.mxu0 0
      %1869 = vmatpush2.bf16.msra.mxu0 0
      %1870 = vmatprep.subr.bf16.mxu0 0
      %1871 = vmatpush2.bf16.msra.mxu0 0
      %1872 = vmatprep.subr.bf16.mxu0 0
      %1873 = vmatpush2.bf16.msra.mxu0 0
      %1874 = vmatprep.mubr.bf16.mxu0 0
      %1875 = vmatmul.mubr.bf16.gmra.mxu0 %v1840
      %v1876 = vpop.f32.mrf.mxu0
      %v1877 = vadd.f32 0.0, %v1876
      %v1878 = vpop.f32.mrf.mxu0
      %v1879 = vpop.f32.mrf.mxu0
      %v1880 = vpop.f32.mrf.mxu0
      %1881 = vdwg.mxu0
      %1883 = vrot.lane.b32.xlu0 %v1224, 96
      %v1884 = vpop.permute.xlu0 %1883
      %v1887 = vsel %vm1597, %v1690, 0
      %1889 = vmatprep.subr.bf16.mxu0 0
      %1890 = vmatpush1.bf16.msra.mxu0 0
      %1891 = vmatprep.subr.bf16.mxu0 0
      %1892 = vmatpush1.bf16.msra.mxu0 0
      %1893 = vmatprep.subr.bf16.mxu0 0
      %1894 = vmatpush1.bf16.msra.mxu0 0
      %1895 = vmatprep.subr.bf16.mxu0 0
      %1896 = vmatpush1.bf16.msra.mxu0 0
      %1897 = vmatprep.subr.bf16.mxu0 0
      %1898 = vmatpush1.bf16.msra.mxu0 0
      %1899 = vmatprep.subr.bf16.mxu0 0
      %1900 = vmatpush1.bf16.msra.mxu0 0
      %1901 = vmatprep.subr.bf16.mxu0 0
      %1902 = vmatpush1.bf16.msra.mxu0 0
      %1903 = vmatprep.subr.bf16.mxu0 0
      %1904 = vmatpush1.bf16.msra.mxu0 %v1884
      %1905 = vmatprep.subr.bf16.mxu0 0
      %1906 = vmatpush2.bf16.msra.mxu0 0
      %1907 = vmatprep.subr.bf16.mxu0 0
      %1908 = vmatpush2.bf16.msra.mxu0 0
      %1909 = vmatprep.subr.bf16.mxu0 0
      %1910 = vmatpush2.bf16.msra.mxu0 0
      %1911 = vmatprep.subr.bf16.mxu0 0
      %1912 = vmatpush2.bf16.msra.mxu0 0
      %1913 = vmatprep.subr.bf16.mxu0 0
      %1914 = vmatpush2.bf16.msra.mxu0 0
      %1915 = vmatprep.subr.bf16.mxu0 0
      %1916 = vmatpush2.bf16.msra.mxu0 0
      %1917 = vmatprep.subr.bf16.mxu0 0
      %1918 = vmatpush2.bf16.msra.mxu0 0
      %1919 = vmatprep.subr.bf16.mxu0 0
      %1920 = vmatpush2.bf16.msra.mxu0 0
      %1921 = vmatprep.mubr.bf16.mxu0 0
      %1922 = vmatmul.mubr.bf16.gmra.mxu0 %v1887
      %v1923 = vpop.f32.mrf.mxu0
      %v1924 = vadd.f32 0.0, %v1923
      %v1925 = vpop.f32.mrf.mxu0
      %v1926 = vpop.f32.mrf.mxu0
      %v1927 = vpop.f32.mrf.mxu0
      %1928 = vdwg.mxu0
      %1930 = vrot.lane.b32.xlu0 %v1225, 96
      %v1931 = vpop.permute.xlu0 %1930
      %v1934 = vsel %vm1597, %v1691, 0
      %1936 = vmatprep.subr.bf16.mxu0 0
      %1937 = vmatpush1.bf16.msra.mxu0 0
      %1938 = vmatprep.subr.bf16.mxu0 0
      %1939 = vmatpush1.bf16.msra.mxu0 0
      %1940 = vmatprep.subr.bf16.mxu0 0
      %1941 = vmatpush1.bf16.msra.mxu0 0
      %1942 = vmatprep.subr.bf16.mxu0 0
      %1943 = vmatpush1.bf16.msra.mxu0 0
      %1944 = vmatprep.subr.bf16.mxu0 0
      %1945 = vmatpush1.bf16.msra.mxu0 0
      %1946 = vmatprep.subr.bf16.mxu0 0
      %1947 = vmatpush1.bf16.msra.mxu0 0
      %1948 = vmatprep.subr.bf16.mxu0 0
      %1949 = vmatpush1.bf16.msra.mxu0 0
      %1950 = vmatprep.subr.bf16.mxu0 0
      %1951 = vmatpush1.bf16.msra.mxu0 %v1931
      %1952 = vmatprep.subr.bf16.mxu0 0
      %1953 = vmatpush2.bf16.msra.mxu0 0
      %1954 = vmatprep.subr.bf16.mxu0 0
      %1955 = vmatpush2.bf16.msra.mxu0 0
      %1956 = vmatprep.subr.bf16.mxu0 0
      %1957 = vmatpush2.bf16.msra.mxu0 0
      %1958 = vmatprep.subr.bf16.mxu0 0
      %1959 = vmatpush2.bf16.msra.mxu0 0
      %1960 = vmatprep.subr.bf16.mxu0 0
      %1961 = vmatpush2.bf16.msra.mxu0 0
      %1962 = vmatprep.subr.bf16.mxu0 0
      %1963 = vmatpush2.bf16.msra.mxu0 0
      %1964 = vmatprep.subr.bf16.mxu0 0
      %1965 = vmatpush2.bf16.msra.mxu0 0
      %1966 = vmatprep.subr.bf16.mxu0 0
      %1967 = vmatpush2.bf16.msra.mxu0 0
      %1968 = vmatprep.mubr.bf16.mxu0 0
      %1969 = vmatmul.mubr.bf16.gmra.mxu0 %v1934
      %v1970 = vpop.f32.mrf.mxu0
      %v1971 = vadd.f32 0.0, %v1970
      %v1972 = vpop.f32.mrf.mxu0
      %v1973 = vpop.f32.mrf.mxu0
      %v1974 = vpop.f32.mrf.mxu0
      %1975 = vdwg.mxu0
      %1977 = vrot.lane.b32.xlu0 %v1226, 96
      %v1978 = vpop.permute.xlu0 %1977
      %v1981 = vsel %vm1597, %v1692, 0
      %1983 = vmatprep.subr.bf16.mxu0 0
      %1984 = vmatpush1.bf16.msra.mxu0 0
      %1985 = vmatprep.subr.bf16.mxu0 0
      %1986 = vmatpush1.bf16.msra.mxu0 0
      %1987 = vmatprep.subr.bf16.mxu0 0
      %1988 = vmatpush1.bf16.msra.mxu0 0
      %1989 = vmatprep.subr.bf16.mxu0 0
      %1990 = vmatpush1.bf16.msra.mxu0 0
      %1991 = vmatprep.subr.bf16.mxu0 0
      %1992 = vmatpush1.bf16.msra.mxu0 0
      %1993 = vmatprep.subr.bf16.mxu0 0
      %1994 = vmatpush1.bf16.msra.mxu0 0
      %1995 = vmatprep.subr.bf16.mxu0 0
      %1996 = vmatpush1.bf16.msra.mxu0 0
      %1997 = vmatprep.subr.bf16.mxu0 0
      %1998 = vmatpush1.bf16.msra.mxu0 %v1978
      %1999 = vmatprep.subr.bf16.mxu0 0
      %2000 = vmatpush2.bf16.msra.mxu0 0
      %2001 = vmatprep.subr.bf16.mxu0 0
      %2002 = vmatpush2.bf16.msra.mxu0 0
      %2003 = vmatprep.subr.bf16.mxu0 0
      %2004 = vmatpush2.bf16.msra.mxu0 0
      %2005 = vmatprep.subr.bf16.mxu0 0
      %2006 = vmatpush2.bf16.msra.mxu0 0
      %2007 = vmatprep.subr.bf16.mxu0 0
      %2008 = vmatpush2.bf16.msra.mxu0 0
      %2009 = vmatprep.subr.bf16.mxu0 0
      %2010 = vmatpush2.bf16.msra.mxu0 0
      %2011 = vmatprep.subr.bf16.mxu0 0
      %2012 = vmatpush2.bf16.msra.mxu0 0
      %2013 = vmatprep.subr.bf16.mxu0 0
      %2014 = vmatpush2.bf16.msra.mxu0 0
      %2015 = vmatprep.mubr.bf16.mxu0 0
      %2016 = vmatmul.mubr.bf16.gmra.mxu0 %v1981
      %v2017 = vpop.f32.mrf.mxu0
      %v2018 = vadd.f32 0.0, %v2017
      %v2019 = vpop.f32.mrf.mxu0
      %v2020 = vpop.f32.mrf.mxu0
      %v2021 = vpop.f32.mrf.mxu0
      %2022 = vdwg.mxu0
      %2024 = vrot.lane.b32.xlu0 %v1227, 96
      %v2025 = vpop.permute.xlu0 %2024
      %v2028 = vsel %vm1597, %v1693, 0
      %2030 = vmatprep.subr.bf16.mxu0 0
      %2031 = vmatpush1.bf16.msra.mxu0 0
      %2032 = vmatprep.subr.bf16.mxu0 0
      %2033 = vmatpush1.bf16.msra.mxu0 0
      %2034 = vmatprep.subr.bf16.mxu0 0
      %2035 = vmatpush1.bf16.msra.mxu0 0
      %2036 = vmatprep.subr.bf16.mxu0 0
      %2037 = vmatpush1.bf16.msra.mxu0 0
      %2038 = vmatprep.subr.bf16.mxu0 0
      %2039 = vmatpush1.bf16.msra.mxu0 0
      %2040 = vmatprep.subr.bf16.mxu0 0
      %2041 = vmatpush1.bf16.msra.mxu0 0
      %2042 = vmatprep.subr.bf16.mxu0 0
      %2043 = vmatpush1.bf16.msra.mxu0 0
      %2044 = vmatprep.subr.bf16.mxu0 0
      %2045 = vmatpush1.bf16.msra.mxu0 %v2025
      %2046 = vmatprep.subr.bf16.mxu0 0
      %2047 = vmatpush2.bf16.msra.mxu0 0
      %2048 = vmatprep.subr.bf16.mxu0 0
      %2049 = vmatpush2.bf16.msra.mxu0 0
      %2050 = vmatprep.subr.bf16.mxu0 0
      %2051 = vmatpush2.bf16.msra.mxu0 0
      %2052 = vmatprep.subr.bf16.mxu0 0
      %2053 = vmatpush2.bf16.msra.mxu0 0
      %2054 = vmatprep.subr.bf16.mxu0 0
      %2055 = vmatpush2.bf16.msra.mxu0 0
      %2056 = vmatprep.subr.bf16.mxu0 0
      %2057 = vmatpush2.bf16.msra.mxu0 0
      %2058 = vmatprep.subr.bf16.mxu0 0
      %2059 = vmatpush2.bf16.msra.mxu0 0
      %2060 = vmatprep.subr.bf16.mxu0 0
      %2061 = vmatpush2.bf16.msra.mxu0 0
      %2062 = vmatprep.mubr.bf16.mxu0 0
      %2063 = vmatmul.mubr.bf16.gmra.mxu0 %v2028
      %v2064 = vpop.f32.mrf.mxu0
      %v2065 = vadd.f32 0.0, %v2064
      %v2066 = vpop.f32.mrf.mxu0
      %v2067 = vpop.f32.mrf.mxu0
      %v2068 = vpop.f32.mrf.mxu0
      %2069 = vdwg.mxu0
      %2071 = vrot.lane.b32.xlu0 %v1212, 120
      %v2072 = vpop.permute.xlu0 %2071
      %2073 = vrot.lane.b32.xlu0 %v1220, 120
      %v2074 = vpop.permute.xlu0 %2073
      %v2076 = vsel %vm1228, %v2072, 0
      %v2079 = vsel %vm1228, %v2074, 0
      %2081 = vmatprep.subr.bf16.mxu0 0
      %2082 = vmatpush1.bf16.xpose.msra.mxu0 0
      %2083 = vmatprep.subr.bf16.mxu0 0
      %2084 = vmatpush1.bf16.xpose.msra.mxu0 0
      %2085 = vmatprep.subr.bf16.mxu0 0
      %2086 = vmatpush1.bf16.xpose.msra.mxu0 0
      %2087 = vmatprep.subr.bf16.mxu0 0
      %2088 = vmatpush1.bf16.xpose.msra.mxu0 0
      %2089 = vmatprep.subr.bf16.mxu0 0
      %2090 = vmatpush1.bf16.xpose.msra.mxu0 0
      %2091 = vmatprep.subr.bf16.mxu0 0
      %2092 = vmatpush1.bf16.xpose.msra.mxu0 0
      %2093 = vmatprep.subr.bf16.mxu0 0
      %2094 = vmatpush1.bf16.xpose.msra.mxu0 0
      %2095 = vmatprep.subr.bf16.mxu0 0
      %2096 = vmatpush1.bf16.xpose.msra.mxu0 %v2079
      %2097 = vmatprep.subr.bf16.mxu0 0
      %2098 = vmatpush2.bf16.xpose.msra.mxu0 0
      %2099 = vmatprep.subr.bf16.mxu0 0
      %2100 = vmatpush2.bf16.xpose.msra.mxu0 0
      %2101 = vmatprep.subr.bf16.mxu0 0
      %2102 = vmatpush2.bf16.xpose.msra.mxu0 0
      %2103 = vmatprep.subr.bf16.mxu0 0
      %2104 = vmatpush2.bf16.xpose.msra.mxu0 0
      %2105 = vmatprep.subr.bf16.mxu0 0
      %2106 = vmatpush2.bf16.xpose.msra.mxu0 0
      %2107 = vmatprep.subr.bf16.mxu0 0
      %2108 = vmatpush2.bf16.xpose.msra.mxu0 0
      %2109 = vmatprep.subr.bf16.mxu0 0
      %2110 = vmatpush2.bf16.xpose.msra.mxu0 0
      %2111 = vmatprep.subr.bf16.mxu0 0
      %2112 = vmatpush2.bf16.xpose.msra.mxu0 0
      %2113 = vmatprep.mubr.bf16.mxu0 0
      %2114 = vmatmul.mubr.bf16.gmra.mxu0 %v2076
      %v2115 = vpop.f32.mrf.mxu0
      %v2116 = vadd.f32 0.0, %v2115
      %v2117 = vpop.f32.mrf.mxu0
      %v2118 = vpop.f32.mrf.mxu0
      %v2119 = vpop.f32.mrf.mxu0
      %2120 = vdwg.mxu0
      %2122 = vrot.lane.b32.xlu0 %v1213, 120
      %v2123 = vpop.permute.xlu0 %2122
      %2124 = vrot.lane.b32.xlu0 %v1221, 120
      %v2125 = vpop.permute.xlu0 %2124
      %v2127 = vsel %vm1228, %v2123, 0
      %v2130 = vsel %vm1228, %v2125, 0
      %2132 = vmatprep.subr.bf16.mxu0 0
      %2133 = vmatpush1.bf16.xpose.msra.mxu0 0
      %2134 = vmatprep.subr.bf16.mxu0 0
      %2135 = vmatpush1.bf16.xpose.msra.mxu0 0
      %2136 = vmatprep.subr.bf16.mxu0 0
      %2137 = vmatpush1.bf16.xpose.msra.mxu0 0
      %2138 = vmatprep.subr.bf16.mxu0 0
      %2139 = vmatpush1.bf16.xpose.msra.mxu0 0
      %2140 = vmatprep.subr.bf16.mxu0 0
      %2141 = vmatpush1.bf16.xpose.msra.mxu0 0
      %2142 = vmatprep.subr.bf16.mxu0 0
      %2143 = vmatpush1.bf16.xpose.msra.mxu0 0
      %2144 = vmatprep.subr.bf16.mxu0 0
      %2145 = vmatpush1.bf16.xpose.msra.mxu0 0
      %2146 = vmatprep.subr.bf16.mxu0 0
      %2147 = vmatpush1.bf16.xpose.msra.mxu0 %v2130
      %2148 = vmatprep.subr.bf16.mxu0 0
      %2149 = vmatpush2.bf16.xpose.msra.mxu0 0
      %2150 = vmatprep.subr.bf16.mxu0 0
      %2151 = vmatpush2.bf16.xpose.msra.mxu0 0
      %2152 = vmatprep.subr.bf16.mxu0 0
      %2153 = vmatpush2.bf16.xpose.msra.mxu0 0
      %2154 = vmatprep.subr.bf16.mxu0 0
      %2155 = vmatpush2.bf16.xpose.msra.mxu0 0
      %2156 = vmatprep.subr.bf16.mxu0 0
      %2157 = vmatpush2.bf16.xpose.msra.mxu0 0
      %2158 = vmatprep.subr.bf16.mxu0 0
      %2159 = vmatpush2.bf16.xpose.msra.mxu0 0
      %2160 = vmatprep.subr.bf16.mxu0 0
      %2161 = vmatpush2.bf16.xpose.msra.mxu0 0
      %2162 = vmatprep.subr.bf16.mxu0 0
      %2163 = vmatpush2.bf16.xpose.msra.mxu0 0
      %2164 = vmatprep.mubr.bf16.mxu0 0
      %2165 = vmatmul.mubr.bf16.gmra.mxu0 %v2127
      %v2166 = vpop.f32.mrf.mxu0
      %v2167 = vadd.f32 0.0, %v2166
      %v2168 = vpop.f32.mrf.mxu0
      %v2169 = vpop.f32.mrf.mxu0
      %v2170 = vpop.f32.mrf.mxu0
      %2171 = vdwg.mxu0
      %2173 = vrot.lane.b32.xlu0 %v1214, 120
      %v2174 = vpop.permute.xlu0 %2173
      %2175 = vrot.lane.b32.xlu0 %v1222, 120
      %v2176 = vpop.permute.xlu0 %2175
      %v2178 = vsel %vm1228, %v2174, 0
      %v2181 = vsel %vm1228, %v2176, 0
      %2183 = vmatprep.subr.bf16.mxu0 0
      %2184 = vmatpush1.bf16.xpose.msra.mxu0 0
      %2185 = vmatprep.subr.bf16.mxu0 0
      %2186 = vmatpush1.bf16.xpose.msra.mxu0 0
      %2187 = vmatprep.subr.bf16.mxu0 0
      %2188 = vmatpush1.bf16.xpose.msra.mxu0 0
      %2189 = vmatprep.subr.bf16.mxu0 0
      %2190 = vmatpush1.bf16.xpose.msra.mxu0 0
      %2191 = vmatprep.subr.bf16.mxu0 0
      %2192 = vmatpush1.bf16.xpose.msra.mxu0 0
      %2193 = vmatprep.subr.bf16.mxu0 0
      %2194 = vmatpush1.bf16.xpose.msra.mxu0 0
      %2195 = vmatprep.subr.bf16.mxu0 0
      %2196 = vmatpush1.bf16.xpose.msra.mxu0 0
      %2197 = vmatprep.subr.bf16.mxu0 0
      %2198 = vmatpush1.bf16.xpose.msra.mxu0 %v2181
      %2199 = vmatprep.subr.bf16.mxu0 0
      %2200 = vmatpush2.bf16.xpose.msra.mxu0 0
      %2201 = vmatprep.subr.bf16.mxu0 0
      %2202 = vmatpush2.bf16.xpose.msra.mxu0 0
      %2203 = vmatprep.subr.bf16.mxu0 0
      %2204 = vmatpush2.bf16.xpose.msra.mxu0 0
      %2205 = vmatprep.subr.bf16.mxu0 0
      %2206 = vmatpush2.bf16.xpose.msra.mxu0 0
      %2207 = vmatprep.subr.bf16.mxu0 0
      %2208 = vmatpush2.bf16.xpose.msra.mxu0 0
      %2209 = vmatprep.subr.bf16.mxu0 0
      %2210 = vmatpush2.bf16.xpose.msra.mxu0 0
      %2211 = vmatprep.subr.bf16.mxu0 0
      %2212 = vmatpush2.bf16.xpose.msra.mxu0 0
      %2213 = vmatprep.subr.bf16.mxu0 0
      %2214 = vmatpush2.bf16.xpose.msra.mxu0 0
      %2215 = vmatprep.mubr.bf16.mxu0 0
      %2216 = vmatmul.mubr.bf16.gmra.mxu0 %v2178
      %v2217 = vpop.f32.mrf.mxu0
      %v2218 = vadd.f32 0.0, %v2217
      %v2219 = vpop.f32.mrf.mxu0
      %v2220 = vpop.f32.mrf.mxu0
      %v2221 = vpop.f32.mrf.mxu0
      %2222 = vdwg.mxu0
      %2224 = vrot.lane.b32.xlu0 %v1215, 120
      %v2225 = vpop.permute.xlu0 %2224
      %2226 = vrot.lane.b32.xlu0 %v1223, 120
      %v2227 = vpop.permute.xlu0 %2226
      %v2229 = vsel %vm1228, %v2225, 0
      %v2232 = vsel %vm1228, %v2227, 0
      %2234 = vmatprep.subr.bf16.mxu0 0
      %2235 = vmatpush1.bf16.xpose.msra.mxu0 0
      %2236 = vmatprep.subr.bf16.mxu0 0
      %2237 = vmatpush1.bf16.xpose.msra.mxu0 0
      %2238 = vmatprep.subr.bf16.mxu0 0
      %2239 = vmatpush1.bf16.xpose.msra.mxu0 0
      %2240 = vmatprep.subr.bf16.mxu0 0
      %2241 = vmatpush1.bf16.xpose.msra.mxu0 0
      %2242 = vmatprep.subr.bf16.mxu0 0
      %2243 = vmatpush1.bf16.xpose.msra.mxu0 0
      %2244 = vmatprep.subr.bf16.mxu0 0
      %2245 = vmatpush1.bf16.xpose.msra.mxu0 0
      %2246 = vmatprep.subr.bf16.mxu0 0
      %2247 = vmatpush1.bf16.xpose.msra.mxu0 0
      %2248 = vmatprep.subr.bf16.mxu0 0
      %2249 = vmatpush1.bf16.xpose.msra.mxu0 %v2232
      %2250 = vmatprep.subr.bf16.mxu0 0
      %2251 = vmatpush2.bf16.xpose.msra.mxu0 0
      %2252 = vmatprep.subr.bf16.mxu0 0
      %2253 = vmatpush2.bf16.xpose.msra.mxu0 0
      %2254 = vmatprep.subr.bf16.mxu0 0
      %2255 = vmatpush2.bf16.xpose.msra.mxu0 0
      %2256 = vmatprep.subr.bf16.mxu0 0
      %2257 = vmatpush2.bf16.xpose.msra.mxu0 0
      %2258 = vmatprep.subr.bf16.mxu0 0
      %2259 = vmatpush2.bf16.xpose.msra.mxu0 0
      %2260 = vmatprep.subr.bf16.mxu0 0
      %2261 = vmatpush2.bf16.xpose.msra.mxu0 0
      %2262 = vmatprep.subr.bf16.mxu0 0
      %2263 = vmatpush2.bf16.xpose.msra.mxu0 0
      %2264 = vmatprep.subr.bf16.mxu0 0
      %2265 = vmatpush2.bf16.xpose.msra.mxu0 0
      %2266 = vmatprep.mubr.bf16.mxu0 0
      %2267 = vmatmul.mubr.bf16.gmra.mxu0 %v2229
      %v2268 = vpop.f32.mrf.mxu0
      %v2269 = vadd.f32 0.0, %v2268
      %v2270 = vpop.f32.mrf.mxu0
      %v2271 = vpop.f32.mrf.mxu0
      %v2272 = vpop.f32.mrf.mxu0
      %2273 = vdwg.mxu0
      %2275 = vrot.lane.b32.xlu0 %v1216, 120
      %v2276 = vpop.permute.xlu0 %2275
      %2277 = vrot.lane.b32.xlu0 %v1224, 120
      %v2278 = vpop.permute.xlu0 %2277
      %v2280 = vsel %vm1228, %v2276, 0
      %v2283 = vsel %vm1228, %v2278, 0
      %2285 = vmatprep.subr.bf16.mxu0 0
      %2286 = vmatpush1.bf16.xpose.msra.mxu0 0
      %2287 = vmatprep.subr.bf16.mxu0 0
      %2288 = vmatpush1.bf16.xpose.msra.mxu0 0
      %2289 = vmatprep.subr.bf16.mxu0 0
      %2290 = vmatpush1.bf16.xpose.msra.mxu0 0
      %2291 = vmatprep.subr.bf16.mxu0 0
      %2292 = vmatpush1.bf16.xpose.msra.mxu0 0
      %2293 = vmatprep.subr.bf16.mxu0 0
      %2294 = vmatpush1.bf16.xpose.msra.mxu0 0
      %2295 = vmatprep.subr.bf16.mxu0 0
      %2296 = vmatpush1.bf16.xpose.msra.mxu0 0
      %2297 = vmatprep.subr.bf16.mxu0 0
      %2298 = vmatpush1.bf16.xpose.msra.mxu0 0
      %2299 = vmatprep.subr.bf16.mxu0 0
      %2300 = vmatpush1.bf16.xpose.msra.mxu0 %v2283
      %2301 = vmatprep.subr.bf16.mxu0 0
      %2302 = vmatpush2.bf16.xpose.msra.mxu0 0
      %2303 = vmatprep.subr.bf16.mxu0 0
      %2304 = vmatpush2.bf16.xpose.msra.mxu0 0
      %2305 = vmatprep.subr.bf16.mxu0 0
      %2306 = vmatpush2.bf16.xpose.msra.mxu0 0
      %2307 = vmatprep.subr.bf16.mxu0 0
      %2308 = vmatpush2.bf16.xpose.msra.mxu0 0
      %2309 = vmatprep.subr.bf16.mxu0 0
      %2310 = vmatpush2.bf16.xpose.msra.mxu0 0
      %2311 = vmatprep.subr.bf16.mxu0 0
      %2312 = vmatpush2.bf16.xpose.msra.mxu0 0
      %2313 = vmatprep.subr.bf16.mxu0 0
      %2314 = vmatpush2.bf16.xpose.msra.mxu0 0
      %2315 = vmatprep.subr.bf16.mxu0 0
      %2316 = vmatpush2.bf16.xpose.msra.mxu0 0
      %2317 = vmatprep.mubr.bf16.mxu0 0
      %2318 = vmatmul.mubr.bf16.gmra.mxu0 %v2280
      %v2319 = vpop.f32.mrf.mxu0
      %v2320 = vadd.f32 0.0, %v2319
      %v2321 = vpop.f32.mrf.mxu0
      %v2322 = vpop.f32.mrf.mxu0
      %v2323 = vpop.f32.mrf.mxu0
      %2324 = vdwg.mxu0
      %2326 = vrot.lane.b32.xlu0 %v1217, 120
      %v2327 = vpop.permute.xlu0 %2326
      %2328 = vrot.lane.b32.xlu0 %v1225, 120
      %v2329 = vpop.permute.xlu0 %2328
      %v2331 = vsel %vm1228, %v2327, 0
      %v2334 = vsel %vm1228, %v2329, 0
      %2336 = vmatprep.subr.bf16.mxu0 0
      %2337 = vmatpush1.bf16.xpose.msra.mxu0 0
      %2338 = vmatprep.subr.bf16.mxu0 0
      %2339 = vmatpush1.bf16.xpose.msra.mxu0 0
      %2340 = vmatprep.subr.bf16.mxu0 0
      %2341 = vmatpush1.bf16.xpose.msra.mxu0 0
      %2342 = vmatprep.subr.bf16.mxu0 0
      %2343 = vmatpush1.bf16.xpose.msra.mxu0 0
      %2344 = vmatprep.subr.bf16.mxu0 0
      %2345 = vmatpush1.bf16.xpose.msra.mxu0 0
      %2346 = vmatprep.subr.bf16.mxu0 0
      %2347 = vmatpush1.bf16.xpose.msra.mxu0 0
      %2348 = vmatprep.subr.bf16.mxu0 0
      %2349 = vmatpush1.bf16.xpose.msra.mxu0 0
      %2350 = vmatprep.subr.bf16.mxu0 0
      %2351 = vmatpush1.bf16.xpose.msra.mxu0 %v2334
      %2352 = vmatprep.subr.bf16.mxu0 0
      %2353 = vmatpush2.bf16.xpose.msra.mxu0 0
      %2354 = vmatprep.subr.bf16.mxu0 0
      %2355 = vmatpush2.bf16.xpose.msra.mxu0 0
      %2356 = vmatprep.subr.bf16.mxu0 0
      %2357 = vmatpush2.bf16.xpose.msra.mxu0 0
      %2358 = vmatprep.subr.bf16.mxu0 0
      %2359 = vmatpush2.bf16.xpose.msra.mxu0 0
      %2360 = vmatprep.subr.bf16.mxu0 0
      %2361 = vmatpush2.bf16.xpose.msra.mxu0 0
      %2362 = vmatprep.subr.bf16.mxu0 0
      %2363 = vmatpush2.bf16.xpose.msra.mxu0 0
      %2364 = vmatprep.subr.bf16.mxu0 0
      %2365 = vmatpush2.bf16.xpose.msra.mxu0 0
      %2366 = vmatprep.subr.bf16.mxu0 0
      %2367 = vmatpush2.bf16.xpose.msra.mxu0 0
      %2368 = vmatprep.mubr.bf16.mxu0 0
      %2369 = vmatmul.mubr.bf16.gmra.mxu0 %v2331
      %v2370 = vpop.f32.mrf.mxu0
      %v2371 = vadd.f32 0.0, %v2370
      %v2372 = vpop.f32.mrf.mxu0
      %v2373 = vpop.f32.mrf.mxu0
      %v2374 = vpop.f32.mrf.mxu0
      %2375 = vdwg.mxu0
      %2377 = vrot.lane.b32.xlu0 %v1218, 120
      %v2378 = vpop.permute.xlu0 %2377
      %2379 = vrot.lane.b32.xlu0 %v1226, 120
      %v2380 = vpop.permute.xlu0 %2379
      %v2382 = vsel %vm1228, %v2378, 0
      %v2385 = vsel %vm1228, %v2380, 0
      %2387 = vmatprep.subr.bf16.mxu0 0
      %2388 = vmatpush1.bf16.xpose.msra.mxu0 0
      %2389 = vmatprep.subr.bf16.mxu0 0
      %2390 = vmatpush1.bf16.xpose.msra.mxu0 0
      %2391 = vmatprep.subr.bf16.mxu0 0
      %2392 = vmatpush1.bf16.xpose.msra.mxu0 0
      %2393 = vmatprep.subr.bf16.mxu0 0
      %2394 = vmatpush1.bf16.xpose.msra.mxu0 0
      %2395 = vmatprep.subr.bf16.mxu0 0
      %2396 = vmatpush1.bf16.xpose.msra.mxu0 0
      %2397 = vmatprep.subr.bf16.mxu0 0
      %2398 = vmatpush1.bf16.xpose.msra.mxu0 0
      %2399 = vmatprep.subr.bf16.mxu0 0
      %2400 = vmatpush1.bf16.xpose.msra.mxu0 0
      %2401 = vmatprep.subr.bf16.mxu0 0
      %2402 = vmatpush1.bf16.xpose.msra.mxu0 %v2385
      %2403 = vmatprep.subr.bf16.mxu0 0
      %2404 = vmatpush2.bf16.xpose.msra.mxu0 0
      %2405 = vmatprep.subr.bf16.mxu0 0
      %2406 = vmatpush2.bf16.xpose.msra.mxu0 0
      %2407 = vmatprep.subr.bf16.mxu0 0
      %2408 = vmatpush2.bf16.xpose.msra.mxu0 0
      %2409 = vmatprep.subr.bf16.mxu0 0
      %2410 = vmatpush2.bf16.xpose.msra.mxu0 0
      %2411 = vmatprep.subr.bf16.mxu0 0
      %2412 = vmatpush2.bf16.xpose.msra.mxu0 0
      %2413 = vmatprep.subr.bf16.mxu0 0
      %2414 = vmatpush2.bf16.xpose.msra.mxu0 0
      %2415 = vmatprep.subr.bf16.mxu0 0
      %2416 = vmatpush2.bf16.xpose.msra.mxu0 0
      %2417 = vmatprep.subr.bf16.mxu0 0
      %2418 = vmatpush2.bf16.xpose.msra.mxu0 0
      %2419 = vmatprep.mubr.bf16.mxu0 0
      %2420 = vmatmul.mubr.bf16.gmra.mxu0 %v2382
      %v2421 = vpop.f32.mrf.mxu0
      %v2422 = vadd.f32 0.0, %v2421
      %v2423 = vpop.f32.mrf.mxu0
      %v2424 = vpop.f32.mrf.mxu0
      %v2425 = vpop.f32.mrf.mxu0
      %2426 = vdwg.mxu0
      %2428 = vrot.lane.b32.xlu0 %v1219, 120
      %v2429 = vpop.permute.xlu0 %2428
      %2430 = vrot.lane.b32.xlu0 %v1227, 120
      %v2431 = vpop.permute.xlu0 %2430
      %v2433 = vsel %vm1228, %v2429, 0
      %v2436 = vsel %vm1228, %v2431, 0
      %2438 = vmatprep.subr.bf16.mxu0 0
      %2439 = vmatpush1.bf16.xpose.msra.mxu0 0
      %2440 = vmatprep.subr.bf16.mxu0 0
      %2441 = vmatpush1.bf16.xpose.msra.mxu0 0
      %2442 = vmatprep.subr.bf16.mxu0 0
      %2443 = vmatpush1.bf16.xpose.msra.mxu0 0
      %2444 = vmatprep.subr.bf16.mxu0 0
      %2445 = vmatpush1.bf16.xpose.msra.mxu0 0
      %2446 = vmatprep.subr.bf16.mxu0 0
      %2447 = vmatpush1.bf16.xpose.msra.mxu0 0
      %2448 = vmatprep.subr.bf16.mxu0 0
      %2449 = vmatpush1.bf16.xpose.msra.mxu0 0
      %2450 = vmatprep.subr.bf16.mxu0 0
      %2451 = vmatpush1.bf16.xpose.msra.mxu0 0
      %2452 = vmatprep.subr.bf16.mxu0 0
      %2453 = vmatpush1.bf16.xpose.msra.mxu0 %v2436
      %2454 = vmatprep.subr.bf16.mxu0 0
      %2455 = vmatpush2.bf16.xpose.msra.mxu0 0
      %2456 = vmatprep.subr.bf16.mxu0 0
      %2457 = vmatpush2.bf16.xpose.msra.mxu0 0
      %2458 = vmatprep.subr.bf16.mxu0 0
      %2459 = vmatpush2.bf16.xpose.msra.mxu0 0
      %2460 = vmatprep.subr.bf16.mxu0 0
      %2461 = vmatpush2.bf16.xpose.msra.mxu0 0
      %2462 = vmatprep.subr.bf16.mxu0 0
      %2463 = vmatpush2.bf16.xpose.msra.mxu0 0
      %2464 = vmatprep.subr.bf16.mxu0 0
      %2465 = vmatpush2.bf16.xpose.msra.mxu0 0
      %2466 = vmatprep.subr.bf16.mxu0 0
      %2467 = vmatpush2.bf16.xpose.msra.mxu0 0
      %2468 = vmatprep.subr.bf16.mxu0 0
      %2469 = vmatpush2.bf16.xpose.msra.mxu0 0
      %2470 = vmatprep.mubr.bf16.mxu0 0
      %2471 = vmatmul.mubr.bf16.gmra.mxu0 %v2433
      %v2472 = vpop.f32.mrf.mxu0
      %v2473 = vadd.f32 0.0, %v2472
      %v2474 = vpop.f32.mrf.mxu0
      %v2475 = vpop.f32.mrf.mxu0
      %v2476 = vpop.f32.mrf.mxu0
      %2477 = vdwg.mxu0
      %v2478 = vsel %vm1597, %v2116, -inf
      %2479 = vmax.xlane.f32.xlu0 %v2478
      %v2480 = vpop.xlane.xlu0 %2479
      %v2481 = vsel %vm1597, %v2167, -inf
      %2482 = vmax.xlane.f32.xlu0 %v2481
      %v2483 = vpop.xlane.xlu0 %2482
      %v2484 = vsel %vm1597, %v2218, -inf
      %2485 = vmax.xlane.f32.xlu0 %v2484
      %v2486 = vpop.xlane.xlu0 %2485
      %v2487 = vsel %vm1597, %v2269, -inf
      %2488 = vmax.xlane.f32.xlu0 %v2487
      %v2489 = vpop.xlane.xlu0 %2488
      %v2490 = vsel %vm1597, %v2320, -inf
      %2491 = vmax.xlane.f32.xlu0 %v2490
      %v2492 = vpop.xlane.xlu0 %2491
      %v2493 = vsel %vm1597, %v2371, -inf
      %2494 = vmax.xlane.f32.xlu0 %v2493
      %v2495 = vpop.xlane.xlu0 %2494
      %v2496 = vsel %vm1597, %v2422, -inf
      %2497 = vmax.xlane.f32.xlu0 %v2496
      %v2498 = vpop.xlane.xlu0 %2497
      %v2499 = vsel %vm1597, %v2473, -inf
      %2500 = vmax.xlane.f32.xlu0 %v2499
      %v2501 = vpop.xlane.xlu0 %2500
      %v2502 = vsub.f32 %v2116, %v2480
      %v2503 = vsub.f32 %v2167, %v2483
      %v2504 = vsub.f32 %v2218, %v2486
      %v2505 = vsub.f32 %v2269, %v2489
      %v2506 = vsub.f32 %v2320, %v2492
      %v2507 = vsub.f32 %v2371, %v2495
      %v2508 = vsub.f32 %v2422, %v2498
      %v2509 = vsub.f32 %v2473, %v2501
      %v2510 = vmul.f32 %v2502, 1.442695
      %v2511 = vpow.pop %v2510
      %v2512 = vmul.f32 %v2503, 1.442695
      %v2513 = vpow.pop %v2512
      %v2514 = vmul.f32 %v2504, 1.442695
      %v2515 = vpow.pop %v2514
      %v2516 = vmul.f32 %v2505, 1.442695
      %v2517 = vpow.pop %v2516
      %v2518 = vmul.f32 %v2506, 1.442695
      %v2519 = vpow.pop %v2518
      %v2520 = vmul.f32 %v2507, 1.442695
      %v2521 = vpow.pop %v2520
      %v2522 = vmul.f32 %v2508, 1.442695
      %v2523 = vpow.pop %v2522
      %v2524 = vmul.f32 %v2509, 1.442695
      %v2525 = vpow.pop %v2524
      %v2526 = vsel %vm1597, %v2511, 0.0
      %2527 = vadd.xlane.f32.xlu0 %v2526
      %v2528 = vpop.xlane.xlu0 %2527
      %v2529 = vsel %vm1597, %v2513, 0.0
      %2530 = vadd.xlane.f32.xlu0 %v2529
      %v2531 = vpop.xlane.xlu0 %2530
      %v2532 = vsel %vm1597, %v2515, 0.0
      %2533 = vadd.xlane.f32.xlu0 %v2532
      %v2534 = vpop.xlane.xlu0 %2533
      %v2535 = vsel %vm1597, %v2517, 0.0
      %2536 = vadd.xlane.f32.xlu0 %v2535
      %v2537 = vpop.xlane.xlu0 %2536
      %v2538 = vsel %vm1597, %v2519, 0.0
      %2539 = vadd.xlane.f32.xlu0 %v2538
      %v2540 = vpop.xlane.xlu0 %2539
      %v2541 = vsel %vm1597, %v2521, 0.0
      %2542 = vadd.xlane.f32.xlu0 %v2541
      %v2543 = vpop.xlane.xlu0 %2542
      %v2544 = vsel %vm1597, %v2523, 0.0
      %2545 = vadd.xlane.f32.xlu0 %v2544
      %v2546 = vpop.xlane.xlu0 %2545
      %v2547 = vsel %vm1597, %v2525, 0.0
      %2548 = vadd.xlane.f32.xlu0 %v2547
      %v2549 = vpop.xlane.xlu0 %2548
      %v2550 = vrcp.pop %v2528
      %v2551 = vrcp.pop %v2531
      %v2552 = vrcp.pop %v2534
      %v2553 = vrcp.pop %v2537
      %v2554 = vrcp.pop %v2540
      %v2555 = vrcp.pop %v2543
      %v2556 = vrcp.pop %v2546
      %v2557 = vrcp.pop %v2549
      %v2558 = vmul.f32 %v2511, %v2550
      %v2559 = vmul.f32 %v2513, %v2551
      %v2560 = vmul.f32 %v2515, %v2552
      %v2561 = vmul.f32 %v2517, %v2553
      %v2562 = vmul.f32 %v2519, %v2554
      %v2563 = vmul.f32 %v2521, %v2555
      %v2564 = vmul.f32 %v2523, %v2556
      %v2565 = vmul.f32 %v2525, %v2557
      %v2566 = vpack.c.bf16 %v2558, %v2558
      %v2567 = vpack.c.bf16 %v2559, %v2559
      %v2568 = vpack.c.bf16 %v2560, %v2560
      %v2569 = vpack.c.bf16 %v2561, %v2561
      %v2570 = vpack.c.bf16 %v2562, %v2562
      %v2571 = vpack.c.bf16 %v2563, %v2563
      %v2572 = vpack.c.bf16 %v2564, %v2564
      %v2573 = vpack.c.bf16 %v2565, %v2565
      %2574 = vrot.lane.b32.xlu0 %v1220, 88
      %v2575 = vpop.permute.xlu0 %2574
      %v2578 = vsel %vm1597, %v2566, 0
      %2580 = vmatprep.subr.bf16.mxu0 0
      %2581 = vmatpush1.bf16.msra.mxu0 0
      %2582 = vmatprep.subr.bf16.mxu0 0
      %2583 = vmatpush1.bf16.msra.mxu0 0
      %2584 = vmatprep.subr.bf16.mxu0 0
      %2585 = vmatpush1.bf16.msra.mxu0 0
      %2586 = vmatprep.subr.bf16.mxu0 0
      %2587 = vmatpush1.bf16.msra.mxu0 0
      %2588 = vmatprep.subr.bf16.mxu0 0
      %2589 = vmatpush1.bf16.msra.mxu0 0
      %2590 = vmatprep.subr.bf16.mxu0 0
      %2591 = vmatpush1.bf16.msra.mxu0 0
      %2592 = vmatprep.subr.bf16.mxu0 0
      %2593 = vmatpush1.bf16.msra.mxu0 0
      %2594 = vmatprep.subr.bf16.mxu0 0
      %2595 = vmatpush1.bf16.msra.mxu0 %v2575
      %2596 = vmatprep.subr.bf16.mxu0 0
      %2597 = vmatpush2.bf16.msra.mxu0 0
      %2598 = vmatprep.subr.bf16.mxu0 0
      %2599 = vmatpush2.bf16.msra.mxu0 0
      %2600 = vmatprep.subr.bf16.mxu0 0
      %2601 = vmatpush2.bf16.msra.mxu0 0
      %2602 = vmatprep.subr.bf16.mxu0 0
      %2603 = vmatpush2.bf16.msra.mxu0 0
      %2604 = vmatprep.subr.bf16.mxu0 0
      %2605 = vmatpush2.bf16.msra.mxu0 0
      %2606 = vmatprep.subr.bf16.mxu0 0
      %2607 = vmatpush2.bf16.msra.mxu0 0
      %2608 = vmatprep.subr.bf16.mxu0 0
      %2609 = vmatpush2.bf16.msra.mxu0 0
      %2610 = vmatprep.subr.bf16.mxu0 0
      %2611 = vmatpush2.bf16.msra.mxu0 0
      %2612 = vmatprep.mubr.bf16.mxu0 0
      %2613 = vmatmul.mubr.bf16.gmra.mxu0 %v2578
      %v2614 = vpop.f32.mrf.mxu0
      %v2615 = vadd.f32 0.0, %v2614
      %v2616 = vpop.f32.mrf.mxu0
      %v2617 = vpop.f32.mrf.mxu0
      %v2618 = vpop.f32.mrf.mxu0
      %2619 = vdwg.mxu0
      %2620 = vrot.lane.b32.xlu0 %v1221, 88
      %v2621 = vpop.permute.xlu0 %2620
      %v2624 = vsel %vm1597, %v2567, 0
      %2626 = vmatprep.subr.bf16.mxu0 0
      %2627 = vmatpush1.bf16.msra.mxu0 0
      %2628 = vmatprep.subr.bf16.mxu0 0
      %2629 = vmatpush1.bf16.msra.mxu0 0
      %2630 = vmatprep.subr.bf16.mxu0 0
      %2631 = vmatpush1.bf16.msra.mxu0 0
      %2632 = vmatprep.subr.bf16.mxu0 0
      %2633 = vmatpush1.bf16.msra.mxu0 0
      %2634 = vmatprep.subr.bf16.mxu0 0
      %2635 = vmatpush1.bf16.msra.mxu0 0
      %2636 = vmatprep.subr.bf16.mxu0 0
      %2637 = vmatpush1.bf16.msra.mxu0 0
      %2638 = vmatprep.subr.bf16.mxu0 0
      %2639 = vmatpush1.bf16.msra.mxu0 0
      %2640 = vmatprep.subr.bf16.mxu0 0
      %2641 = vmatpush1.bf16.msra.mxu0 %v2621
      %2642 = vmatprep.subr.bf16.mxu0 0
      %2643 = vmatpush2.bf16.msra.mxu0 0
      %2644 = vmatprep.subr.bf16.mxu0 0
      %2645 = vmatpush2.bf16.msra.mxu0 0
      %2646 = vmatprep.subr.bf16.mxu0 0
      %2647 = vmatpush2.bf16.msra.mxu0 0
      %2648 = vmatprep.subr.bf16.mxu0 0
      %2649 = vmatpush2.bf16.msra.mxu0 0
      %2650 = vmatprep.subr.bf16.mxu0 0
      %2651 = vmatpush2.bf16.msra.mxu0 0
      %2652 = vmatprep.subr.bf16.mxu0 0
      %2653 = vmatpush2.bf16.msra.mxu0 0
      %2654 = vmatprep.subr.bf16.mxu0 0
      %2655 = vmatpush2.bf16.msra.mxu0 0
      %2656 = vmatprep.subr.bf16.mxu0 0
      %2657 = vmatpush2.bf16.msra.mxu0 0
      %2658 = vmatprep.mubr.bf16.mxu0 0
      %2659 = vmatmul.mubr.bf16.gmra.mxu0 %v2624
      %v2660 = vpop.f32.mrf.mxu0
      %v2661 = vadd.f32 0.0, %v2660
      %v2662 = vpop.f32.mrf.mxu0
      %v2663 = vpop.f32.mrf.mxu0
      %v2664 = vpop.f32.mrf.mxu0
      %2665 = vdwg.mxu0
      %2666 = vrot.lane.b32.xlu0 %v1222, 88
      %v2667 = vpop.permute.xlu0 %2666
      %v2670 = vsel %vm1597, %v2568, 0
      %2672 = vmatprep.subr.bf16.mxu0 0
      %2673 = vmatpush1.bf16.msra.mxu0 0
      %2674 = vmatprep.subr.bf16.mxu0 0
      %2675 = vmatpush1.bf16.msra.mxu0 0
      %2676 = vmatprep.subr.bf16.mxu0 0
      %2677 = vmatpush1.bf16.msra.mxu0 0
      %2678 = vmatprep.subr.bf16.mxu0 0
      %2679 = vmatpush1.bf16.msra.mxu0 0
      %2680 = vmatprep.subr.bf16.mxu0 0
      %2681 = vmatpush1.bf16.msra.mxu0 0
      %2682 = vmatprep.subr.bf16.mxu0 0
      %2683 = vmatpush1.bf16.msra.mxu0 0
      %2684 = vmatprep.subr.bf16.mxu0 0
      %2685 = vmatpush1.bf16.msra.mxu0 0
      %2686 = vmatprep.subr.bf16.mxu0 0
      %2687 = vmatpush1.bf16.msra.mxu0 %v2667
      %2688 = vmatprep.subr.bf16.mxu0 0
      %2689 = vmatpush2.bf16.msra.mxu0 0
      %2690 = vmatprep.subr.bf16.mxu0 0
      %2691 = vmatpush2.bf16.msra.mxu0 0
      %2692 = vmatprep.subr.bf16.mxu0 0
      %2693 = vmatpush2.bf16.msra.mxu0 0
      %2694 = vmatprep.subr.bf16.mxu0 0
      %2695 = vmatpush2.bf16.msra.mxu0 0
      %2696 = vmatprep.subr.bf16.mxu0 0
      %2697 = vmatpush2.bf16.msra.mxu0 0
      %2698 = vmatprep.subr.bf16.mxu0 0
      %2699 = vmatpush2.bf16.msra.mxu0 0
      %2700 = vmatprep.subr.bf16.mxu0 0
      %2701 = vmatpush2.bf16.msra.mxu0 0
      %2702 = vmatprep.subr.bf16.mxu0 0
      %2703 = vmatpush2.bf16.msra.mxu0 0
      %2704 = vmatprep.mubr.bf16.mxu0 0
      %2705 = vmatmul.mubr.bf16.gmra.mxu0 %v2670
      %v2706 = vpop.f32.mrf.mxu0
      %v2707 = vadd.f32 0.0, %v2706
      %v2708 = vpop.f32.mrf.mxu0
      %v2709 = vpop.f32.mrf.mxu0
      %v2710 = vpop.f32.mrf.mxu0
      %2711 = vdwg.mxu0
      %2712 = vrot.lane.b32.xlu0 %v1223, 88
      %v2713 = vpop.permute.xlu0 %2712
      %v2716 = vsel %vm1597, %v2569, 0
      %2718 = vmatprep.subr.bf16.mxu0 0
      %2719 = vmatpush1.bf16.msra.mxu0 0
      %2720 = vmatprep.subr.bf16.mxu0 0
      %2721 = vmatpush1.bf16.msra.mxu0 0
      %2722 = vmatprep.subr.bf16.mxu0 0
      %2723 = vmatpush1.bf16.msra.mxu0 0
      %2724 = vmatprep.subr.bf16.mxu0 0
      %2725 = vmatpush1.bf16.msra.mxu0 0
      %2726 = vmatprep.subr.bf16.mxu0 0
      %2727 = vmatpush1.bf16.msra.mxu0 0
      %2728 = vmatprep.subr.bf16.mxu0 0
      %2729 = vmatpush1.bf16.msra.mxu0 0
      %2730 = vmatprep.subr.bf16.mxu0 0
      %2731 = vmatpush1.bf16.msra.mxu0 0
      %2732 = vmatprep.subr.bf16.mxu0 0
      %2733 = vmatpush1.bf16.msra.mxu0 %v2713
      %2734 = vmatprep.subr.bf16.mxu0 0
      %2735 = vmatpush2.bf16.msra.mxu0 0
      %2736 = vmatprep.subr.bf16.mxu0 0
      %2737 = vmatpush2.bf16.msra.mxu0 0
      %2738 = vmatprep.subr.bf16.mxu0 0
      %2739 = vmatpush2.bf16.msra.mxu0 0
      %2740 = vmatprep.subr.bf16.mxu0 0
      %2741 = vmatpush2.bf16.msra.mxu0 0
      %2742 = vmatprep.subr.bf16.mxu0 0
      %2743 = vmatpush2.bf16.msra.mxu0 0
      %2744 = vmatprep.subr.bf16.mxu0 0
      %2745 = vmatpush2.bf16.msra.mxu0 0
      %2746 = vmatprep.subr.bf16.mxu0 0
      %2747 = vmatpush2.bf16.msra.mxu0 0
      %2748 = vmatprep.subr.bf16.mxu0 0
      %2749 = vmatpush2.bf16.msra.mxu0 0
      %2750 = vmatprep.mubr.bf16.mxu0 0
      %2751 = vmatmul.mubr.bf16.gmra.mxu0 %v2716
      %v2752 = vpop.f32.mrf.mxu0
      %v2753 = vadd.f32 0.0, %v2752
      %v2754 = vpop.f32.mrf.mxu0
      %v2755 = vpop.f32.mrf.mxu0
      %v2756 = vpop.f32.mrf.mxu0
      %2757 = vdwg.mxu0
      %2758 = vrot.lane.b32.xlu0 %v1224, 88
      %v2759 = vpop.permute.xlu0 %2758
      %v2762 = vsel %vm1597, %v2570, 0
      %2764 = vmatprep.subr.bf16.mxu0 0
      %2765 = vmatpush1.bf16.msra.mxu0 0
      %2766 = vmatprep.subr.bf16.mxu0 0
      %2767 = vmatpush1.bf16.msra.mxu0 0
      %2768 = vmatprep.subr.bf16.mxu0 0
      %2769 = vmatpush1.bf16.msra.mxu0 0
      %2770 = vmatprep.subr.bf16.mxu0 0
      %2771 = vmatpush1.bf16.msra.mxu0 0
      %2772 = vmatprep.subr.bf16.mxu0 0
      %2773 = vmatpush1.bf16.msra.mxu0 0
      %2774 = vmatprep.subr.bf16.mxu0 0
      %2775 = vmatpush1.bf16.msra.mxu0 0
      %2776 = vmatprep.subr.bf16.mxu0 0
      %2777 = vmatpush1.bf16.msra.mxu0 0
      %2778 = vmatprep.subr.bf16.mxu0 0
      %2779 = vmatpush1.bf16.msra.mxu0 %v2759
      %2780 = vmatprep.subr.bf16.mxu0 0
      %2781 = vmatpush2.bf16.msra.mxu0 0
      %2782 = vmatprep.subr.bf16.mxu0 0
      %2783 = vmatpush2.bf16.msra.mxu0 0
      %2784 = vmatprep.subr.bf16.mxu0 0
      %2785 = vmatpush2.bf16.msra.mxu0 0
      %2786 = vmatprep.subr.bf16.mxu0 0
      %2787 = vmatpush2.bf16.msra.mxu0 0
      %2788 = vmatprep.subr.bf16.mxu0 0
      %2789 = vmatpush2.bf16.msra.mxu0 0
      %2790 = vmatprep.subr.bf16.mxu0 0
      %2791 = vmatpush2.bf16.msra.mxu0 0
      %2792 = vmatprep.subr.bf16.mxu0 0
      %2793 = vmatpush2.bf16.msra.mxu0 0
      %2794 = vmatprep.subr.bf16.mxu0 0
      %2795 = vmatpush2.bf16.msra.mxu0 0
      %2796 = vmatprep.mubr.bf16.mxu0 0
      %2797 = vmatmul.mubr.bf16.gmra.mxu0 %v2762
      %v2798 = vpop.f32.mrf.mxu0
      %v2799 = vadd.f32 0.0, %v2798
      %v2800 = vpop.f32.mrf.mxu0
      %v2801 = vpop.f32.mrf.mxu0
      %v2802 = vpop.f32.mrf.mxu0
      %2803 = vdwg.mxu0
      %2804 = vrot.lane.b32.xlu0 %v1225, 88
      %v2805 = vpop.permute.xlu0 %2804
      %v2808 = vsel %vm1597, %v2571, 0
      %2810 = vmatprep.subr.bf16.mxu0 0
      %2811 = vmatpush1.bf16.msra.mxu0 0
      %2812 = vmatprep.subr.bf16.mxu0 0
      %2813 = vmatpush1.bf16.msra.mxu0 0
      %2814 = vmatprep.subr.bf16.mxu0 0
      %2815 = vmatpush1.bf16.msra.mxu0 0
      %2816 = vmatprep.subr.bf16.mxu0 0
      %2817 = vmatpush1.bf16.msra.mxu0 0
      %2818 = vmatprep.subr.bf16.mxu0 0
      %2819 = vmatpush1.bf16.msra.mxu0 0
      %2820 = vmatprep.subr.bf16.mxu0 0
      %2821 = vmatpush1.bf16.msra.mxu0 0
      %2822 = vmatprep.subr.bf16.mxu0 0
      %2823 = vmatpush1.bf16.msra.mxu0 0
      %2824 = vmatprep.subr.bf16.mxu0 0
      %2825 = vmatpush1.bf16.msra.mxu0 %v2805
      %2826 = vmatprep.subr.bf16.mxu0 0
      %2827 = vmatpush2.bf16.msra.mxu0 0
      %2828 = vmatprep.subr.bf16.mxu0 0
      %2829 = vmatpush2.bf16.msra.mxu0 0
      %2830 = vmatprep.subr.bf16.mxu0 0
      %2831 = vmatpush2.bf16.msra.mxu0 0
      %2832 = vmatprep.subr.bf16.mxu0 0
      %2833 = vmatpush2.bf16.msra.mxu0 0
      %2834 = vmatprep.subr.bf16.mxu0 0
      %2835 = vmatpush2.bf16.msra.mxu0 0
      %2836 = vmatprep.subr.bf16.mxu0 0
      %2837 = vmatpush2.bf16.msra.mxu0 0
      %2838 = vmatprep.subr.bf16.mxu0 0
      %2839 = vmatpush2.bf16.msra.mxu0 0
      %2840 = vmatprep.subr.bf16.mxu0 0
      %2841 = vmatpush2.bf16.msra.mxu0 0
      %2842 = vmatprep.mubr.bf16.mxu0 0
      %2843 = vmatmul.mubr.bf16.gmra.mxu0 %v2808
      %v2844 = vpop.f32.mrf.mxu0
      %v2845 = vadd.f32 0.0, %v2844
      %v2846 = vpop.f32.mrf.mxu0
      %v2847 = vpop.f32.mrf.mxu0
      %v2848 = vpop.f32.mrf.mxu0
      %2849 = vdwg.mxu0
      %2850 = vrot.lane.b32.xlu0 %v1226, 88
      %v2851 = vpop.permute.xlu0 %2850
      %v2854 = vsel %vm1597, %v2572, 0
      %2856 = vmatprep.subr.bf16.mxu0 0
      %2857 = vmatpush1.bf16.msra.mxu0 0
      %2858 = vmatprep.subr.bf16.mxu0 0
      %2859 = vmatpush1.bf16.msra.mxu0 0
      %2860 = vmatprep.subr.bf16.mxu0 0
      %2861 = vmatpush1.bf16.msra.mxu0 0
      %2862 = vmatprep.subr.bf16.mxu0 0
      %2863 = vmatpush1.bf16.msra.mxu0 0
      %2864 = vmatprep.subr.bf16.mxu0 0
      %2865 = vmatpush1.bf16.msra.mxu0 0
      %2866 = vmatprep.subr.bf16.mxu0 0
      %2867 = vmatpush1.bf16.msra.mxu0 0
      %2868 = vmatprep.subr.bf16.mxu0 0
      %2869 = vmatpush1.bf16.msra.mxu0 0
      %2870 = vmatprep.subr.bf16.mxu0 0
      %2871 = vmatpush1.bf16.msra.mxu0 %v2851
      %2872 = vmatprep.subr.bf16.mxu0 0
      %2873 = vmatpush2.bf16.msra.mxu0 0
      %2874 = vmatprep.subr.bf16.mxu0 0
      %2875 = vmatpush2.bf16.msra.mxu0 0
      %2876 = vmatprep.subr.bf16.mxu0 0
      %2877 = vmatpush2.bf16.msra.mxu0 0
      %2878 = vmatprep.subr.bf16.mxu0 0
      %2879 = vmatpush2.bf16.msra.mxu0 0
      %2880 = vmatprep.subr.bf16.mxu0 0
      %2881 = vmatpush2.bf16.msra.mxu0 0
      %2882 = vmatprep.subr.bf16.mxu0 0
      %2883 = vmatpush2.bf16.msra.mxu0 0
      %2884 = vmatprep.subr.bf16.mxu0 0
      %2885 = vmatpush2.bf16.msra.mxu0 0
      %2886 = vmatprep.subr.bf16.mxu0 0
      %2887 = vmatpush2.bf16.msra.mxu0 0
      %2888 = vmatprep.mubr.bf16.mxu0 0
      %2889 = vmatmul.mubr.bf16.gmra.mxu0 %v2854
      %v2890 = vpop.f32.mrf.mxu0
      %v2891 = vadd.f32 0.0, %v2890
      %v2892 = vpop.f32.mrf.mxu0
      %v2893 = vpop.f32.mrf.mxu0
      %v2894 = vpop.f32.mrf.mxu0
      %2895 = vdwg.mxu0
      %2896 = vrot.lane.b32.xlu0 %v1227, 88
      %v2897 = vpop.permute.xlu0 %2896
      %v2900 = vsel %vm1597, %v2573, 0
      %2902 = vmatprep.subr.bf16.mxu0 0
      %2903 = vmatpush1.bf16.msra.mxu0 0
      %2904 = vmatprep.subr.bf16.mxu0 0
      %2905 = vmatpush1.bf16.msra.mxu0 0
      %2906 = vmatprep.subr.bf16.mxu0 0
      %2907 = vmatpush1.bf16.msra.mxu0 0
      %2908 = vmatprep.subr.bf16.mxu0 0
      %2909 = vmatpush1.bf16.msra.mxu0 0
      %2910 = vmatprep.subr.bf16.mxu0 0
      %2911 = vmatpush1.bf16.msra.mxu0 0
      %2912 = vmatprep.subr.bf16.mxu0 0
      %2913 = vmatpush1.bf16.msra.mxu0 0
      %2914 = vmatprep.subr.bf16.mxu0 0
      %2915 = vmatpush1.bf16.msra.mxu0 0
      %2916 = vmatprep.subr.bf16.mxu0 0
      %2917 = vmatpush1.bf16.msra.mxu0 %v2897
      %2918 = vmatprep.subr.bf16.mxu0 0
      %2919 = vmatpush2.bf16.msra.mxu0 0
      %2920 = vmatprep.subr.bf16.mxu0 0
      %2921 = vmatpush2.bf16.msra.mxu0 0
      %2922 = vmatprep.subr.bf16.mxu0 0
      %2923 = vmatpush2.bf16.msra.mxu0 0
      %2924 = vmatprep.subr.bf16.mxu0 0
      %2925 = vmatpush2.bf16.msra.mxu0 0
      %2926 = vmatprep.subr.bf16.mxu0 0
      %2927 = vmatpush2.bf16.msra.mxu0 0
      %2928 = vmatprep.subr.bf16.mxu0 0
      %2929 = vmatpush2.bf16.msra.mxu0 0
      %2930 = vmatprep.subr.bf16.mxu0 0
      %2931 = vmatpush2.bf16.msra.mxu0 0
      %2932 = vmatprep.subr.bf16.mxu0 0
      %2933 = vmatpush2.bf16.msra.mxu0 0
      %2934 = vmatprep.mubr.bf16.mxu0 0
      %2935 = vmatmul.mubr.bf16.gmra.mxu0 %v2900
      %v2936 = vpop.f32.mrf.mxu0
      %v2937 = vadd.f32 0.0, %v2936
      %v2938 = vpop.f32.mrf.mxu0
      %v2939 = vpop.f32.mrf.mxu0
      %v2940 = vpop.f32.mrf.mxu0
      %2941 = vdwg.mxu0
      %2942 = vrot.lane.b32.xlu0 %v1212, 112
      %v2943 = vpop.permute.xlu0 %2942
      %2944 = vrot.lane.b32.xlu0 %v1220, 112
      %v2945 = vpop.permute.xlu0 %2944
      %v2947 = vsel %vm1228, %v2943, 0
      %v2950 = vsel %vm1228, %v2945, 0
      %2952 = vmatprep.subr.bf16.mxu0 0
      %2953 = vmatpush1.bf16.xpose.msra.mxu0 0
      %2954 = vmatprep.subr.bf16.mxu0 0
      %2955 = vmatpush1.bf16.xpose.msra.mxu0 0
      %2956 = vmatprep.subr.bf16.mxu0 0
      %2957 = vmatpush1.bf16.xpose.msra.mxu0 0
      %2958 = vmatprep.subr.bf16.mxu0 0
      %2959 = vmatpush1.bf16.xpose.msra.mxu0 0
      %2960 = vmatprep.subr.bf16.mxu0 0
      %2961 = vmatpush1.bf16.xpose.msra.mxu0 0
      %2962 = vmatprep.subr.bf16.mxu0 0
      %2963 = vmatpush1.bf16.xpose.msra.mxu0 0
      %2964 = vmatprep.subr.bf16.mxu0 0
      %2965 = vmatpush1.bf16.xpose.msra.mxu0 0
      %2966 = vmatprep.subr.bf16.mxu0 0
      %2967 = vmatpush1.bf16.xpose.msra.mxu0 %v2950
      %2968 = vmatprep.subr.bf16.mxu0 0
      %2969 = vmatpush2.bf16.xpose.msra.mxu0 0
      %2970 = vmatprep.subr.bf16.mxu0 0
      %2971 = vmatpush2.bf16.xpose.msra.mxu0 0
      %2972 = vmatprep.subr.bf16.mxu0 0
      %2973 = vmatpush2.bf16.xpose.msra.mxu0 0
      %2974 = vmatprep.subr.bf16.mxu0 0
      %2975 = vmatpush2.bf16.xpose.msra.mxu0 0
      %2976 = vmatprep.subr.bf16.mxu0 0
      %2977 = vmatpush2.bf16.xpose.msra.mxu0 0
      %2978 = vmatprep.subr.bf16.mxu0 0
      %2979 = vmatpush2.bf16.xpose.msra.mxu0 0
      %2980 = vmatprep.subr.bf16.mxu0 0
      %2981 = vmatpush2.bf16.xpose.msra.mxu0 0
      %2982 = vmatprep.subr.bf16.mxu0 0
      %2983 = vmatpush2.bf16.xpose.msra.mxu0 0
      %2984 = vmatprep.mubr.bf16.mxu0 0
      %2985 = vmatmul.mubr.bf16.gmra.mxu0 %v2947
      %v2986 = vpop.f32.mrf.mxu0
      %v2987 = vadd.f32 0.0, %v2986
      %v2988 = vpop.f32.mrf.mxu0
      %v2989 = vpop.f32.mrf.mxu0
      %v2990 = vpop.f32.mrf.mxu0
      %2991 = vdwg.mxu0
      %2992 = vrot.lane.b32.xlu0 %v1213, 112
      %v2993 = vpop.permute.xlu0 %2992
      %2994 = vrot.lane.b32.xlu0 %v1221, 112
      %v2995 = vpop.permute.xlu0 %2994
      %v2997 = vsel %vm1228, %v2993, 0
      %v3000 = vsel %vm1228, %v2995, 0
      %3002 = vmatprep.subr.bf16.mxu0 0
      %3003 = vmatpush1.bf16.xpose.msra.mxu0 0
      %3004 = vmatprep.subr.bf16.mxu0 0
      %3005 = vmatpush1.bf16.xpose.msra.mxu0 0
      %3006 = vmatprep.subr.bf16.mxu0 0
      %3007 = vmatpush1.bf16.xpose.msra.mxu0 0
      %3008 = vmatprep.subr.bf16.mxu0 0
      %3009 = vmatpush1.bf16.xpose.msra.mxu0 0
      %3010 = vmatprep.subr.bf16.mxu0 0
      %3011 = vmatpush1.bf16.xpose.msra.mxu0 0
      %3012 = vmatprep.subr.bf16.mxu0 0
      %3013 = vmatpush1.bf16.xpose.msra.mxu0 0
      %3014 = vmatprep.subr.bf16.mxu0 0
      %3015 = vmatpush1.bf16.xpose.msra.mxu0 0
      %3016 = vmatprep.subr.bf16.mxu0 0
      %3017 = vmatpush1.bf16.xpose.msra.mxu0 %v3000
      %3018 = vmatprep.subr.bf16.mxu0 0
      %3019 = vmatpush2.bf16.xpose.msra.mxu0 0
      %3020 = vmatprep.subr.bf16.mxu0 0
      %3021 = vmatpush2.bf16.xpose.msra.mxu0 0
      %3022 = vmatprep.subr.bf16.mxu0 0
      %3023 = vmatpush2.bf16.xpose.msra.mxu0 0
      %3024 = vmatprep.subr.bf16.mxu0 0
      %3025 = vmatpush2.bf16.xpose.msra.mxu0 0
      %3026 = vmatprep.subr.bf16.mxu0 0
      %3027 = vmatpush2.bf16.xpose.msra.mxu0 0
      %3028 = vmatprep.subr.bf16.mxu0 0
      %3029 = vmatpush2.bf16.xpose.msra.mxu0 0
      %3030 = vmatprep.subr.bf16.mxu0 0
      %3031 = vmatpush2.bf16.xpose.msra.mxu0 0
      %3032 = vmatprep.subr.bf16.mxu0 0
      %3033 = vmatpush2.bf16.xpose.msra.mxu0 0
      %3034 = vmatprep.mubr.bf16.mxu0 0
      %3035 = vmatmul.mubr.bf16.gmra.mxu0 %v2997
      %v3036 = vpop.f32.mrf.mxu0
      %v3037 = vadd.f32 0.0, %v3036
      %v3038 = vpop.f32.mrf.mxu0
      %v3039 = vpop.f32.mrf.mxu0
      %v3040 = vpop.f32.mrf.mxu0
      %3041 = vdwg.mxu0
      %3042 = vrot.lane.b32.xlu0 %v1214, 112
      %v3043 = vpop.permute.xlu0 %3042
      %3044 = vrot.lane.b32.xlu0 %v1222, 112
      %v3045 = vpop.permute.xlu0 %3044
      %v3047 = vsel %vm1228, %v3043, 0
      %v3050 = vsel %vm1228, %v3045, 0
      %3052 = vmatprep.subr.bf16.mxu0 0
      %3053 = vmatpush1.bf16.xpose.msra.mxu0 0
      %3054 = vmatprep.subr.bf16.mxu0 0
      %3055 = vmatpush1.bf16.xpose.msra.mxu0 0
      %3056 = vmatprep.subr.bf16.mxu0 0
      %3057 = vmatpush1.bf16.xpose.msra.mxu0 0
      %3058 = vmatprep.subr.bf16.mxu0 0
      %3059 = vmatpush1.bf16.xpose.msra.mxu0 0
      %3060 = vmatprep.subr.bf16.mxu0 0
      %3061 = vmatpush1.bf16.xpose.msra.mxu0 0
      %3062 = vmatprep.subr.bf16.mxu0 0
      %3063 = vmatpush1.bf16.xpose.msra.mxu0 0
      %3064 = vmatprep.subr.bf16.mxu0 0
      %3065 = vmatpush1.bf16.xpose.msra.mxu0 0
      %3066 = vmatprep.subr.bf16.mxu0 0
      %3067 = vmatpush1.bf16.xpose.msra.mxu0 %v3050
      %3068 = vmatprep.subr.bf16.mxu0 0
      %3069 = vmatpush2.bf16.xpose.msra.mxu0 0
      %3070 = vmatprep.subr.bf16.mxu0 0
      %3071 = vmatpush2.bf16.xpose.msra.mxu0 0
      %3072 = vmatprep.subr.bf16.mxu0 0
      %3073 = vmatpush2.bf16.xpose.msra.mxu0 0
      %3074 = vmatprep.subr.bf16.mxu0 0
      %3075 = vmatpush2.bf16.xpose.msra.mxu0 0
      %3076 = vmatprep.subr.bf16.mxu0 0
      %3077 = vmatpush2.bf16.xpose.msra.mxu0 0
      %3078 = vmatprep.subr.bf16.mxu0 0
      %3079 = vmatpush2.bf16.xpose.msra.mxu0 0
      %3080 = vmatprep.subr.bf16.mxu0 0
      %3081 = vmatpush2.bf16.xpose.msra.mxu0 0
      %3082 = vmatprep.subr.bf16.mxu0 0
      %3083 = vmatpush2.bf16.xpose.msra.mxu0 0
      %3084 = vmatprep.mubr.bf16.mxu0 0
      %3085 = vmatmul.mubr.bf16.gmra.mxu0 %v3047
      %v3086 = vpop.f32.mrf.mxu0
      %v3087 = vadd.f32 0.0, %v3086
      %v3088 = vpop.f32.mrf.mxu0
      %v3089 = vpop.f32.mrf.mxu0
      %v3090 = vpop.f32.mrf.mxu0
      %3091 = vdwg.mxu0
      %3092 = vrot.lane.b32.xlu0 %v1215, 112
      %v3093 = vpop.permute.xlu0 %3092
      %3094 = vrot.lane.b32.xlu0 %v1223, 112
      %v3095 = vpop.permute.xlu0 %3094
      %v3097 = vsel %vm1228, %v3093, 0
      %v3100 = vsel %vm1228, %v3095, 0
      %3102 = vmatprep.subr.bf16.mxu0 0
      %3103 = vmatpush1.bf16.xpose.msra.mxu0 0
      %3104 = vmatprep.subr.bf16.mxu0 0
      %3105 = vmatpush1.bf16.xpose.msra.mxu0 0
      %3106 = vmatprep.subr.bf16.mxu0 0
      %3107 = vmatpush1.bf16.xpose.msra.mxu0 0
      %3108 = vmatprep.subr.bf16.mxu0 0
      %3109 = vmatpush1.bf16.xpose.msra.mxu0 0
      %3110 = vmatprep.subr.bf16.mxu0 0
      %3111 = vmatpush1.bf16.xpose.msra.mxu0 0
      %3112 = vmatprep.subr.bf16.mxu0 0
      %3113 = vmatpush1.bf16.xpose.msra.mxu0 0
      %3114 = vmatprep.subr.bf16.mxu0 0
      %3115 = vmatpush1.bf16.xpose.msra.mxu0 0
      %3116 = vmatprep.subr.bf16.mxu0 0
      %3117 = vmatpush1.bf16.xpose.msra.mxu0 %v3100
      %3118 = vmatprep.subr.bf16.mxu0 0
      %3119 = vmatpush2.bf16.xpose.msra.mxu0 0
      %3120 = vmatprep.subr.bf16.mxu0 0
      %3121 = vmatpush2.bf16.xpose.msra.mxu0 0
      %3122 = vmatprep.subr.bf16.mxu0 0
      %3123 = vmatpush2.bf16.xpose.msra.mxu0 0
      %3124 = vmatprep.subr.bf16.mxu0 0
      %3125 = vmatpush2.bf16.xpose.msra.mxu0 0
      %3126 = vmatprep.subr.bf16.mxu0 0
      %3127 = vmatpush2.bf16.xpose.msra.mxu0 0
      %3128 = vmatprep.subr.bf16.mxu0 0
      %3129 = vmatpush2.bf16.xpose.msra.mxu0 0
      %3130 = vmatprep.subr.bf16.mxu0 0
      %3131 = vmatpush2.bf16.xpose.msra.mxu0 0
      %3132 = vmatprep.subr.bf16.mxu0 0
      %3133 = vmatpush2.bf16.xpose.msra.mxu0 0
      %3134 = vmatprep.mubr.bf16.mxu0 0
      %3135 = vmatmul.mubr.bf16.gmra.mxu0 %v3097
      %v3136 = vpop.f32.mrf.mxu0
      %v3137 = vadd.f32 0.0, %v3136
      %v3138 = vpop.f32.mrf.mxu0
      %v3139 = vpop.f32.mrf.mxu0
      %v3140 = vpop.f32.mrf.mxu0
      %3141 = vdwg.mxu0
      %3142 = vrot.lane.b32.xlu0 %v1216, 112
      %v3143 = vpop.permute.xlu0 %3142
      %3144 = vrot.lane.b32.xlu0 %v1224, 112
      %v3145 = vpop.permute.xlu0 %3144
      %v3147 = vsel %vm1228, %v3143, 0
      %v3150 = vsel %vm1228, %v3145, 0
      %3152 = vmatprep.subr.bf16.mxu0 0
      %3153 = vmatpush1.bf16.xpose.msra.mxu0 0
      %3154 = vmatprep.subr.bf16.mxu0 0
      %3155 = vmatpush1.bf16.xpose.msra.mxu0 0
      %3156 = vmatprep.subr.bf16.mxu0 0
      %3157 = vmatpush1.bf16.xpose.msra.mxu0 0
      %3158 = vmatprep.subr.bf16.mxu0 0
      %3159 = vmatpush1.bf16.xpose.msra.mxu0 0
      %3160 = vmatprep.subr.bf16.mxu0 0
      %3161 = vmatpush1.bf16.xpose.msra.mxu0 0
      %3162 = vmatprep.subr.bf16.mxu0 0
      %3163 = vmatpush1.bf16.xpose.msra.mxu0 0
      %3164 = vmatprep.subr.bf16.mxu0 0
      %3165 = vmatpush1.bf16.xpose.msra.mxu0 0
      %3166 = vmatprep.subr.bf16.mxu0 0
      %3167 = vmatpush1.bf16.xpose.msra.mxu0 %v3150
      %3168 = vmatprep.subr.bf16.mxu0 0
      %3169 = vmatpush2.bf16.xpose.msra.mxu0 0
      %3170 = vmatprep.subr.bf16.mxu0 0
      %3171 = vmatpush2.bf16.xpose.msra.mxu0 0
      %3172 = vmatprep.subr.bf16.mxu0 0
      %3173 = vmatpush2.bf16.xpose.msra.mxu0 0
      %3174 = vmatprep.subr.bf16.mxu0 0
      %3175 = vmatpush2.bf16.xpose.msra.mxu0 0
      %3176 = vmatprep.subr.bf16.mxu0 0
      %3177 = vmatpush2.bf16.xpose.msra.mxu0 0
      %3178 = vmatprep.subr.bf16.mxu0 0
      %3179 = vmatpush2.bf16.xpose.msra.mxu0 0
      %3180 = vmatprep.subr.bf16.mxu0 0
      %3181 = vmatpush2.bf16.xpose.msra.mxu0 0
      %3182 = vmatprep.subr.bf16.mxu0 0
      %3183 = vmatpush2.bf16.xpose.msra.mxu0 0
      %3184 = vmatprep.mubr.bf16.mxu0 0
      %3185 = vmatmul.mubr.bf16.gmra.mxu0 %v3147
      %v3186 = vpop.f32.mrf.mxu0
      %v3187 = vadd.f32 0.0, %v3186
      %v3188 = vpop.f32.mrf.mxu0
      %v3189 = vpop.f32.mrf.mxu0
      %v3190 = vpop.f32.mrf.mxu0
      %3191 = vdwg.mxu0
      %3192 = vrot.lane.b32.xlu0 %v1217, 112
      %v3193 = vpop.permute.xlu0 %3192
      %3194 = vrot.lane.b32.xlu0 %v1225, 112
      %v3195 = vpop.permute.xlu0 %3194
      %v3197 = vsel %vm1228, %v3193, 0
      %v3200 = vsel %vm1228, %v3195, 0
      %3202 = vmatprep.subr.bf16.mxu0 0
      %3203 = vmatpush1.bf16.xpose.msra.mxu0 0
      %3204 = vmatprep.subr.bf16.mxu0 0
      %3205 = vmatpush1.bf16.xpose.msra.mxu0 0
      %3206 = vmatprep.subr.bf16.mxu0 0
      %3207 = vmatpush1.bf16.xpose.msra.mxu0 0
      %3208 = vmatprep.subr.bf16.mxu0 0
      %3209 = vmatpush1.bf16.xpose.msra.mxu0 0
      %3210 = vmatprep.subr.bf16.mxu0 0
      %3211 = vmatpush1.bf16.xpose.msra.mxu0 0
      %3212 = vmatprep.subr.bf16.mxu0 0
      %3213 = vmatpush1.bf16.xpose.msra.mxu0 0
      %3214 = vmatprep.subr.bf16.mxu0 0
      %3215 = vmatpush1.bf16.xpose.msra.mxu0 0
      %3216 = vmatprep.subr.bf16.mxu0 0
      %3217 = vmatpush1.bf16.xpose.msra.mxu0 %v3200
      %3218 = vmatprep.subr.bf16.mxu0 0
      %3219 = vmatpush2.bf16.xpose.msra.mxu0 0
      %3220 = vmatprep.subr.bf16.mxu0 0
      %3221 = vmatpush2.bf16.xpose.msra.mxu0 0
      %3222 = vmatprep.subr.bf16.mxu0 0
      %3223 = vmatpush2.bf16.xpose.msra.mxu0 0
      %3224 = vmatprep.subr.bf16.mxu0 0
      %3225 = vmatpush2.bf16.xpose.msra.mxu0 0
      %3226 = vmatprep.subr.bf16.mxu0 0
      %3227 = vmatpush2.bf16.xpose.msra.mxu0 0
      %3228 = vmatprep.subr.bf16.mxu0 0
      %3229 = vmatpush2.bf16.xpose.msra.mxu0 0
      %3230 = vmatprep.subr.bf16.mxu0 0
      %3231 = vmatpush2.bf16.xpose.msra.mxu0 0
      %3232 = vmatprep.subr.bf16.mxu0 0
      %3233 = vmatpush2.bf16.xpose.msra.mxu0 0
      %3234 = vmatprep.mubr.bf16.mxu0 0
      %3235 = vmatmul.mubr.bf16.gmra.mxu0 %v3197
      %v3236 = vpop.f32.mrf.mxu0
      %v3237 = vadd.f32 0.0, %v3236
      %v3238 = vpop.f32.mrf.mxu0
      %v3239 = vpop.f32.mrf.mxu0
      %v3240 = vpop.f32.mrf.mxu0
      %3241 = vdwg.mxu0
      %3242 = vrot.lane.b32.xlu0 %v1218, 112
      %v3243 = vpop.permute.xlu0 %3242
      %3244 = vrot.lane.b32.xlu0 %v1226, 112
      %v3245 = vpop.permute.xlu0 %3244
      %v3247 = vsel %vm1228, %v3243, 0
      %v3250 = vsel %vm1228, %v3245, 0
      %3252 = vmatprep.subr.bf16.mxu0 0
      %3253 = vmatpush1.bf16.xpose.msra.mxu0 0
      %3254 = vmatprep.subr.bf16.mxu0 0
      %3255 = vmatpush1.bf16.xpose.msra.mxu0 0
      %3256 = vmatprep.subr.bf16.mxu0 0
      %3257 = vmatpush1.bf16.xpose.msra.mxu0 0
      %3258 = vmatprep.subr.bf16.mxu0 0
      %3259 = vmatpush1.bf16.xpose.msra.mxu0 0
      %3260 = vmatprep.subr.bf16.mxu0 0
      %3261 = vmatpush1.bf16.xpose.msra.mxu0 0
      %3262 = vmatprep.subr.bf16.mxu0 0
      %3263 = vmatpush1.bf16.xpose.msra.mxu0 0
      %3264 = vmatprep.subr.bf16.mxu0 0
      %3265 = vmatpush1.bf16.xpose.msra.mxu0 0
      %3266 = vmatprep.subr.bf16.mxu0 0
      %3267 = vmatpush1.bf16.xpose.msra.mxu0 %v3250
      %3268 = vmatprep.subr.bf16.mxu0 0
      %3269 = vmatpush2.bf16.xpose.msra.mxu0 0
      %3270 = vmatprep.subr.bf16.mxu0 0
      %3271 = vmatpush2.bf16.xpose.msra.mxu0 0
      %3272 = vmatprep.subr.bf16.mxu0 0
      %3273 = vmatpush2.bf16.xpose.msra.mxu0 0
      %3274 = vmatprep.subr.bf16.mxu0 0
      %3275 = vmatpush2.bf16.xpose.msra.mxu0 0
      %3276 = vmatprep.subr.bf16.mxu0 0
      %3277 = vmatpush2.bf16.xpose.msra.mxu0 0
      %3278 = vmatprep.subr.bf16.mxu0 0
      %3279 = vmatpush2.bf16.xpose.msra.mxu0 0
      %3280 = vmatprep.subr.bf16.mxu0 0
      %3281 = vmatpush2.bf16.xpose.msra.mxu0 0
      %3282 = vmatprep.subr.bf16.mxu0 0
      %3283 = vmatpush2.bf16.xpose.msra.mxu0 0
      %3284 = vmatprep.mubr.bf16.mxu0 0
      %3285 = vmatmul.mubr.bf16.gmra.mxu0 %v3247
      %v3286 = vpop.f32.mrf.mxu0
      %v3287 = vadd.f32 0.0, %v3286
      %v3288 = vpop.f32.mrf.mxu0
      %v3289 = vpop.f32.mrf.mxu0
      %v3290 = vpop.f32.mrf.mxu0
      %3291 = vdwg.mxu0
      %3292 = vrot.lane.b32.xlu0 %v1219, 112
      %v3293 = vpop.permute.xlu0 %3292
      %3294 = vrot.lane.b32.xlu0 %v1227, 112
      %v3295 = vpop.permute.xlu0 %3294
      %v3297 = vsel %vm1228, %v3293, 0
      %v3300 = vsel %vm1228, %v3295, 0
      %3302 = vmatprep.subr.bf16.mxu0 0
      %3303 = vmatpush1.bf16.xpose.msra.mxu0 0
      %3304 = vmatprep.subr.bf16.mxu0 0
      %3305 = vmatpush1.bf16.xpose.msra.mxu0 0
      %3306 = vmatprep.subr.bf16.mxu0 0
      %3307 = vmatpush1.bf16.xpose.msra.mxu0 0
      %3308 = vmatprep.subr.bf16.mxu0 0
      %3309 = vmatpush1.bf16.xpose.msra.mxu0 0
      %3310 = vmatprep.subr.bf16.mxu0 0
      %3311 = vmatpush1.bf16.xpose.msra.mxu0 0
      %3312 = vmatprep.subr.bf16.mxu0 0
      %3313 = vmatpush1.bf16.xpose.msra.mxu0 0
      %3314 = vmatprep.subr.bf16.mxu0 0
      %3315 = vmatpush1.bf16.xpose.msra.mxu0 0
      %3316 = vmatprep.subr.bf16.mxu0 0
      %3317 = vmatpush1.bf16.xpose.msra.mxu0 %v3300
      %3318 = vmatprep.subr.bf16.mxu0 0
      %3319 = vmatpush2.bf16.xpose.msra.mxu0 0
      %3320 = vmatprep.subr.bf16.mxu0 0
      %3321 = vmatpush2.bf16.xpose.msra.mxu0 0
      %3322 = vmatprep.subr.bf16.mxu0 0
      %3323 = vmatpush2.bf16.xpose.msra.mxu0 0
      %3324 = vmatprep.subr.bf16.mxu0 0
      %3325 = vmatpush2.bf16.xpose.msra.mxu0 0
      %3326 = vmatprep.subr.bf16.mxu0 0
      %3327 = vmatpush2.bf16.xpose.msra.mxu0 0
      %3328 = vmatprep.subr.bf16.mxu0 0
      %3329 = vmatpush2.bf16.xpose.msra.mxu0 0
      %3330 = vmatprep.subr.bf16.mxu0 0
      %3331 = vmatpush2.bf16.xpose.msra.mxu0 0
      %3332 = vmatprep.subr.bf16.mxu0 0
      %3333 = vmatpush2.bf16.xpose.msra.mxu0 0
      %3334 = vmatprep.mubr.bf16.mxu0 0
      %3335 = vmatmul.mubr.bf16.gmra.mxu0 %v3297
      %v3336 = vpop.f32.mrf.mxu0
      %v3337 = vadd.f32 0.0, %v3336
      %v3338 = vpop.f32.mrf.mxu0
      %v3339 = vpop.f32.mrf.mxu0
      %v3340 = vpop.f32.mrf.mxu0
      %3341 = vdwg.mxu0
      %v3342 = vsel %vm1597, %v2987, -inf
      %3343 = vmax.xlane.f32.xlu0 %v3342
      %v3344 = vpop.xlane.xlu0 %3343
      %v3345 = vsel %vm1597, %v3037, -inf
      %3346 = vmax.xlane.f32.xlu0 %v3345
      %v3347 = vpop.xlane.xlu0 %3346
      %v3348 = vsel %vm1597, %v3087, -inf
      %3349 = vmax.xlane.f32.xlu0 %v3348
      %v3350 = vpop.xlane.xlu0 %3349
      %v3351 = vsel %vm1597, %v3137, -inf
      %3352 = vmax.xlane.f32.xlu0 %v3351
      %v3353 = vpop.xlane.xlu0 %3352
      %v3354 = vsel %vm1597, %v3187, -inf
      %3355 = vmax.xlane.f32.xlu0 %v3354
      %v3356 = vpop.xlane.xlu0 %3355
      %v3357 = vsel %vm1597, %v3237, -inf
      %3358 = vmax.xlane.f32.xlu0 %v3357
      %v3359 = vpop.xlane.xlu0 %3358
      %v3360 = vsel %vm1597, %v3287, -inf
      %3361 = vmax.xlane.f32.xlu0 %v3360
      %v3362 = vpop.xlane.xlu0 %3361
      %v3363 = vsel %vm1597, %v3337, -inf
      %3364 = vmax.xlane.f32.xlu0 %v3363
      %v3365 = vpop.xlane.xlu0 %3364
      %v3366 = vsub.f32 %v2987, %v3344
      %v3367 = vsub.f32 %v3037, %v3347
      %v3368 = vsub.f32 %v3087, %v3350
      %v3369 = vsub.f32 %v3137, %v3353
      %v3370 = vsub.f32 %v3187, %v3356
      %v3371 = vsub.f32 %v3237, %v3359
      %v3372 = vsub.f32 %v3287, %v3362
      %v3373 = vsub.f32 %v3337, %v3365
      %v3374 = vmul.f32 %v3366, 1.442695
      %v3375 = vpow.pop %v3374
      %v3376 = vmul.f32 %v3367, 1.442695
      %v3377 = vpow.pop %v3376
      %v3378 = vmul.f32 %v3368, 1.442695
      %v3379 = vpow.pop %v3378
      %v3380 = vmul.f32 %v3369, 1.442695
      %v3381 = vpow.pop %v3380
      %v3382 = vmul.f32 %v3370, 1.442695
      %v3383 = vpow.pop %v3382
      %v3384 = vmul.f32 %v3371, 1.442695
      %v3385 = vpow.pop %v3384
      %v3386 = vmul.f32 %v3372, 1.442695
      %v3387 = vpow.pop %v3386
      %v3388 = vmul.f32 %v3373, 1.442695
      %v3389 = vpow.pop %v3388
      %v3390 = vsel %vm1597, %v3375, 0.0
      %3391 = vadd.xlane.f32.xlu0 %v3390
      %v3392 = vpop.xlane.xlu0 %3391
      %v3393 = vsel %vm1597, %v3377, 0.0
      %3394 = vadd.xlane.f32.xlu0 %v3393
      %v3395 = vpop.xlane.xlu0 %3394
      %v3396 = vsel %vm1597, %v3379, 0.0
      %3397 = vadd.xlane.f32.xlu0 %v3396
      %v3398 = vpop.xlane.xlu0 %3397
      %v3399 = vsel %vm1597, %v3381, 0.0
      %3400 = vadd.xlane.f32.xlu0 %v3399
      %v3401 = vpop.xlane.xlu0 %3400
      %v3402 = vsel %vm1597, %v3383, 0.0
      %3403 = vadd.xlane.f32.xlu0 %v3402
      %v3404 = vpop.xlane.xlu0 %3403
      %v3405 = vsel %vm1597, %v3385, 0.0
      %3406 = vadd.xlane.f32.xlu0 %v3405
      %v3407 = vpop.xlane.xlu0 %3406
      %v3408 = vsel %vm1597, %v3387, 0.0
      %3409 = vadd.xlane.f32.xlu0 %v3408
      %v3410 = vpop.xlane.xlu0 %3409
      %v3411 = vsel %vm1597, %v3389, 0.0
      %3412 = vadd.xlane.f32.xlu0 %v3411
      %v3413 = vpop.xlane.xlu0 %3412
      %v3414 = vrcp.pop %v3392
      %v3415 = vrcp.pop %v3395
      %v3416 = vrcp.pop %v3398
      %v3417 = vrcp.pop %v3401
      %v3418 = vrcp.pop %v3404
      %v3419 = vrcp.pop %v3407
      %v3420 = vrcp.pop %v3410
      %v3421 = vrcp.pop %v3413
      %v3422 = vmul.f32 %v3375, %v3414
      %v3423 = vmul.f32 %v3377, %v3415
      %v3424 = vmul.f32 %v3379, %v3416
      %v3425 = vmul.f32 %v3381, %v3417
      %v3426 = vmul.f32 %v3383, %v3418
      %v3427 = vmul.f32 %v3385, %v3419
      %v3428 = vmul.f32 %v3387, %v3420
      %v3429 = vmul.f32 %v3389, %v3421
      %v3430 = vpack.c.bf16 %v3422, %v3422
      %v3431 = vpack.c.bf16 %v3423, %v3423
      %v3432 = vpack.c.bf16 %v3424, %v3424
      %v3433 = vpack.c.bf16 %v3425, %v3425
      %v3434 = vpack.c.bf16 %v3426, %v3426
      %v3435 = vpack.c.bf16 %v3427, %v3427
      %v3436 = vpack.c.bf16 %v3428, %v3428
      %v3437 = vpack.c.bf16 %v3429, %v3429
      %3438 = vrot.lane.b32.xlu0 %v1220, 80
      %v3439 = vpop.permute.xlu0 %3438
      %v3442 = vsel %vm1597, %v3430, 0
      %3444 = vmatprep.subr.bf16.mxu0 0
      %3445 = vmatpush1.bf16.msra.mxu0 0
      %3446 = vmatprep.subr.bf16.mxu0 0
      %3447 = vmatpush1.bf16.msra.mxu0 0
      %3448 = vmatprep.subr.bf16.mxu0 0
      %3449 = vmatpush1.bf16.msra.mxu0 0
      %3450 = vmatprep.subr.bf16.mxu0 0
      %3451 = vmatpush1.bf16.msra.mxu0 0
      %3452 = vmatprep.subr.bf16.mxu0 0
      %3453 = vmatpush1.bf16.msra.mxu0 0
      %3454 = vmatprep.subr.bf16.mxu0 0
      %3455 = vmatpush1.bf16.msra.mxu0 0
      %3456 = vmatprep.subr.bf16.mxu0 0
      %3457 = vmatpush1.bf16.msra.mxu0 0
      %3458 = vmatprep.subr.bf16.mxu0 0
      %3459 = vmatpush1.bf16.msra.mxu0 %v3439
      %3460 = vmatprep.subr.bf16.mxu0 0
      %3461 = vmatpush2.bf16.msra.mxu0 0
      %3462 = vmatprep.subr.bf16.mxu0 0
      %3463 = vmatpush2.bf16.msra.mxu0 0
      %3464 = vmatprep.subr.bf16.mxu0 0
      %3465 = vmatpush2.bf16.msra.mxu0 0
      %3466 = vmatprep.subr.bf16.mxu0 0
      %3467 = vmatpush2.bf16.msra.mxu0 0
      %3468 = vmatprep.subr.bf16.mxu0 0
      %3469 = vmatpush2.bf16.msra.mxu0 0
      %3470 = vmatprep.subr.bf16.mxu0 0
      %3471 = vmatpush2.bf16.msra.mxu0 0
      %3472 = vmatprep.subr.bf16.mxu0 0
      %3473 = vmatpush2.bf16.msra.mxu0 0
      %3474 = vmatprep.subr.bf16.mxu0 0
      %3475 = vmatpush2.bf16.msra.mxu0 0
      %3476 = vmatprep.mubr.bf16.mxu0 0
      %3477 = vmatmul.mubr.bf16.gmra.mxu0 %v3442
      %v3478 = vpop.f32.mrf.mxu0
      %v3479 = vadd.f32 0.0, %v3478
      %v3480 = vpop.f32.mrf.mxu0
      %v3481 = vpop.f32.mrf.mxu0
      %v3482 = vpop.f32.mrf.mxu0
      %3483 = vdwg.mxu0
      %3484 = vrot.lane.b32.xlu0 %v1221, 80
      %v3485 = vpop.permute.xlu0 %3484
      %v3488 = vsel %vm1597, %v3431, 0
      %3490 = vmatprep.subr.bf16.mxu0 0
      %3491 = vmatpush1.bf16.msra.mxu0 0
      %3492 = vmatprep.subr.bf16.mxu0 0
      %3493 = vmatpush1.bf16.msra.mxu0 0
      %3494 = vmatprep.subr.bf16.mxu0 0
      %3495 = vmatpush1.bf16.msra.mxu0 0
      %3496 = vmatprep.subr.bf16.mxu0 0
      %3497 = vmatpush1.bf16.msra.mxu0 0
      %3498 = vmatprep.subr.bf16.mxu0 0
      %3499 = vmatpush1.bf16.msra.mxu0 0
      %3500 = vmatprep.subr.bf16.mxu0 0
      %3501 = vmatpush1.bf16.msra.mxu0 0
      %3502 = vmatprep.subr.bf16.mxu0 0
      %3503 = vmatpush1.bf16.msra.mxu0 0
      %3504 = vmatprep.subr.bf16.mxu0 0
      %3505 = vmatpush1.bf16.msra.mxu0 %v3485
      %3506 = vmatprep.subr.bf16.mxu0 0
      %3507 = vmatpush2.bf16.msra.mxu0 0
      %3508 = vmatprep.subr.bf16.mxu0 0
      %3509 = vmatpush2.bf16.msra.mxu0 0
      %3510 = vmatprep.subr.bf16.mxu0 0
      %3511 = vmatpush2.bf16.msra.mxu0 0
      %3512 = vmatprep.subr.bf16.mxu0 0
      %3513 = vmatpush2.bf16.msra.mxu0 0
      %3514 = vmatprep.subr.bf16.mxu0 0
      %3515 = vmatpush2.bf16.msra.mxu0 0
      %3516 = vmatprep.subr.bf16.mxu0 0
      %3517 = vmatpush2.bf16.msra.mxu0 0
      %3518 = vmatprep.subr.bf16.mxu0 0
      %3519 = vmatpush2.bf16.msra.mxu0 0
      %3520 = vmatprep.subr.bf16.mxu0 0
      %3521 = vmatpush2.bf16.msra.mxu0 0
      %3522 = vmatprep.mubr.bf16.mxu0 0
      %3523 = vmatmul.mubr.bf16.gmra.mxu0 %v3488
      %v3524 = vpop.f32.mrf.mxu0
      %v3525 = vadd.f32 0.0, %v3524
      %v3526 = vpop.f32.mrf.mxu0
      %v3527 = vpop.f32.mrf.mxu0
      %v3528 = vpop.f32.mrf.mxu0
      %3529 = vdwg.mxu0
      %3530 = vrot.lane.b32.xlu0 %v1222, 80
      %v3531 = vpop.permute.xlu0 %3530
      %v3534 = vsel %vm1597, %v3432, 0
      %3536 = vmatprep.subr.bf16.mxu0 0
      %3537 = vmatpush1.bf16.msra.mxu0 0
      %3538 = vmatprep.subr.bf16.mxu0 0
      %3539 = vmatpush1.bf16.msra.mxu0 0
      %3540 = vmatprep.subr.bf16.mxu0 0
      %3541 = vmatpush1.bf16.msra.mxu0 0
      %3542 = vmatprep.subr.bf16.mxu0 0
      %3543 = vmatpush1.bf16.msra.mxu0 0
      %3544 = vmatprep.subr.bf16.mxu0 0
      %3545 = vmatpush1.bf16.msra.mxu0 0
      %3546 = vmatprep.subr.bf16.mxu0 0
      %3547 = vmatpush1.bf16.msra.mxu0 0
      %3548 = vmatprep.subr.bf16.mxu0 0
      %3549 = vmatpush1.bf16.msra.mxu0 0
      %3550 = vmatprep.subr.bf16.mxu0 0
      %3551 = vmatpush1.bf16.msra.mxu0 %v3531
      %3552 = vmatprep.subr.bf16.mxu0 0
      %3553 = vmatpush2.bf16.msra.mxu0 0
      %3554 = vmatprep.subr.bf16.mxu0 0
      %3555 = vmatpush2.bf16.msra.mxu0 0
      %3556 = vmatprep.subr.bf16.mxu0 0
      %3557 = vmatpush2.bf16.msra.mxu0 0
      %3558 = vmatprep.subr.bf16.mxu0 0
      %3559 = vmatpush2.bf16.msra.mxu0 0
      %3560 = vmatprep.subr.bf16.mxu0 0
      %3561 = vmatpush2.bf16.msra.mxu0 0
      %3562 = vmatprep.subr.bf16.mxu0 0
      %3563 = vmatpush2.bf16.msra.mxu0 0
      %3564 = vmatprep.subr.bf16.mxu0 0
      %3565 = vmatpush2.bf16.msra.mxu0 0
      %3566 = vmatprep.subr.bf16.mxu0 0
      %3567 = vmatpush2.bf16.msra.mxu0 0
      %3568 = vmatprep.mubr.bf16.mxu0 0
      %3569 = vmatmul.mubr.bf16.gmra.mxu0 %v3534
      %v3570 = vpop.f32.mrf.mxu0
      %v3571 = vadd.f32 0.0, %v3570
      %v3572 = vpop.f32.mrf.mxu0
      %v3573 = vpop.f32.mrf.mxu0
      %v3574 = vpop.f32.mrf.mxu0
      %3575 = vdwg.mxu0
      %3576 = vrot.lane.b32.xlu0 %v1223, 80
      %v3577 = vpop.permute.xlu0 %3576
      %v3580 = vsel %vm1597, %v3433, 0
      %3582 = vmatprep.subr.bf16.mxu0 0
      %3583 = vmatpush1.bf16.msra.mxu0 0
      %3584 = vmatprep.subr.bf16.mxu0 0
      %3585 = vmatpush1.bf16.msra.mxu0 0
      %3586 = vmatprep.subr.bf16.mxu0 0
      %3587 = vmatpush1.bf16.msra.mxu0 0
      %3588 = vmatprep.subr.bf16.mxu0 0
      %3589 = vmatpush1.bf16.msra.mxu0 0
      %3590 = vmatprep.subr.bf16.mxu0 0
      %3591 = vmatpush1.bf16.msra.mxu0 0
      %3592 = vmatprep.subr.bf16.mxu0 0
      %3593 = vmatpush1.bf16.msra.mxu0 0
      %3594 = vmatprep.subr.bf16.mxu0 0
      %3595 = vmatpush1.bf16.msra.mxu0 0
      %3596 = vmatprep.subr.bf16.mxu0 0
      %3597 = vmatpush1.bf16.msra.mxu0 %v3577
      %3598 = vmatprep.subr.bf16.mxu0 0
      %3599 = vmatpush2.bf16.msra.mxu0 0
      %3600 = vmatprep.subr.bf16.mxu0 0
      %3601 = vmatpush2.bf16.msra.mxu0 0
      %3602 = vmatprep.subr.bf16.mxu0 0
      %3603 = vmatpush2.bf16.msra.mxu0 0
      %3604 = vmatprep.subr.bf16.mxu0 0
      %3605 = vmatpush2.bf16.msra.mxu0 0
      %3606 = vmatprep.subr.bf16.mxu0 0
      %3607 = vmatpush2.bf16.msra.mxu0 0
      %3608 = vmatprep.subr.bf16.mxu0 0
      %3609 = vmatpush2.bf16.msra.mxu0 0
      %3610 = vmatprep.subr.bf16.mxu0 0
      %3611 = vmatpush2.bf16.msra.mxu0 0
      %3612 = vmatprep.subr.bf16.mxu0 0
      %3613 = vmatpush2.bf16.msra.mxu0 0
      %3614 = vmatprep.mubr.bf16.mxu0 0
      %3615 = vmatmul.mubr.bf16.gmra.mxu0 %v3580
      %v3616 = vpop.f32.mrf.mxu0
      %v3617 = vadd.f32 0.0, %v3616
      %v3618 = vpop.f32.mrf.mxu0
      %v3619 = vpop.f32.mrf.mxu0
      %v3620 = vpop.f32.mrf.mxu0
      %3621 = vdwg.mxu0
      %3622 = vrot.lane.b32.xlu0 %v1224, 80
      %v3623 = vpop.permute.xlu0 %3622
      %v3626 = vsel %vm1597, %v3434, 0
      %3628 = vmatprep.subr.bf16.mxu0 0
      %3629 = vmatpush1.bf16.msra.mxu0 0
      %3630 = vmatprep.subr.bf16.mxu0 0
      %3631 = vmatpush1.bf16.msra.mxu0 0
      %3632 = vmatprep.subr.bf16.mxu0 0
      %3633 = vmatpush1.bf16.msra.mxu0 0
      %3634 = vmatprep.subr.bf16.mxu0 0
      %3635 = vmatpush1.bf16.msra.mxu0 0
      %3636 = vmatprep.subr.bf16.mxu0 0
      %3637 = vmatpush1.bf16.msra.mxu0 0
      %3638 = vmatprep.subr.bf16.mxu0 0
      %3639 = vmatpush1.bf16.msra.mxu0 0
      %3640 = vmatprep.subr.bf16.mxu0 0
      %3641 = vmatpush1.bf16.msra.mxu0 0
      %3642 = vmatprep.subr.bf16.mxu0 0
      %3643 = vmatpush1.bf16.msra.mxu0 %v3623
      %3644 = vmatprep.subr.bf16.mxu0 0
      %3645 = vmatpush2.bf16.msra.mxu0 0
      %3646 = vmatprep.subr.bf16.mxu0 0
      %3647 = vmatpush2.bf16.msra.mxu0 0
      %3648 = vmatprep.subr.bf16.mxu0 0
      %3649 = vmatpush2.bf16.msra.mxu0 0
      %3650 = vmatprep.subr.bf16.mxu0 0
      %3651 = vmatpush2.bf16.msra.mxu0 0
      %3652 = vmatprep.subr.bf16.mxu0 0
      %3653 = vmatpush2.bf16.msra.mxu0 0
      %3654 = vmatprep.subr.bf16.mxu0 0
      %3655 = vmatpush2.bf16.msra.mxu0 0
      %3656 = vmatprep.subr.bf16.mxu0 0
      %3657 = vmatpush2.bf16.msra.mxu0 0
      %3658 = vmatprep.subr.bf16.mxu0 0
      %3659 = vmatpush2.bf16.msra.mxu0 0
      %3660 = vmatprep.mubr.bf16.mxu0 0
      %3661 = vmatmul.mubr.bf16.gmra.mxu0 %v3626
      %v3662 = vpop.f32.mrf.mxu0
      %v3663 = vadd.f32 0.0, %v3662
      %v3664 = vpop.f32.mrf.mxu0
      %v3665 = vpop.f32.mrf.mxu0
      %v3666 = vpop.f32.mrf.mxu0
      %3667 = vdwg.mxu0
      %3668 = vrot.lane.b32.xlu0 %v1225, 80
      %v3669 = vpop.permute.xlu0 %3668
      %v3672 = vsel %vm1597, %v3435, 0
      %3674 = vmatprep.subr.bf16.mxu0 0
      %3675 = vmatpush1.bf16.msra.mxu0 0
      %3676 = vmatprep.subr.bf16.mxu0 0
      %3677 = vmatpush1.bf16.msra.mxu0 0
      %3678 = vmatprep.subr.bf16.mxu0 0
      %3679 = vmatpush1.bf16.msra.mxu0 0
      %3680 = vmatprep.subr.bf16.mxu0 0
      %3681 = vmatpush1.bf16.msra.mxu0 0
      %3682 = vmatprep.subr.bf16.mxu0 0
      %3683 = vmatpush1.bf16.msra.mxu0 0
      %3684 = vmatprep.subr.bf16.mxu0 0
      %3685 = vmatpush1.bf16.msra.mxu0 0
      %3686 = vmatprep.subr.bf16.mxu0 0
      %3687 = vmatpush1.bf16.msra.mxu0 0
      %3688 = vmatprep.subr.bf16.mxu0 0
      %3689 = vmatpush1.bf16.msra.mxu0 %v3669
      %3690 = vmatprep.subr.bf16.mxu0 0
      %3691 = vmatpush2.bf16.msra.mxu0 0
      %3692 = vmatprep.subr.bf16.mxu0 0
      %3693 = vmatpush2.bf16.msra.mxu0 0
      %3694 = vmatprep.subr.bf16.mxu0 0
      %3695 = vmatpush2.bf16.msra.mxu0 0
      %3696 = vmatprep.subr.bf16.mxu0 0
      %3697 = vmatpush2.bf16.msra.mxu0 0
      %3698 = vmatprep.subr.bf16.mxu0 0
      %3699 = vmatpush2.bf16.msra.mxu0 0
      %3700 = vmatprep.subr.bf16.mxu0 0
      %3701 = vmatpush2.bf16.msra.mxu0 0
      %3702 = vmatprep.subr.bf16.mxu0 0
      %3703 = vmatpush2.bf16.msra.mxu0 0
      %3704 = vmatprep.subr.bf16.mxu0 0
      %3705 = vmatpush2.bf16.msra.mxu0 0
      %3706 = vmatprep.mubr.bf16.mxu0 0
      %3707 = vmatmul.mubr.bf16.gmra.mxu0 %v3672
      %v3708 = vpop.f32.mrf.mxu0
      %v3709 = vadd.f32 0.0, %v3708
      %v3710 = vpop.f32.mrf.mxu0
      %v3711 = vpop.f32.mrf.mxu0
      %v3712 = vpop.f32.mrf.mxu0
      %3713 = vdwg.mxu0
      %3714 = vrot.lane.b32.xlu0 %v1226, 80
      %v3715 = vpop.permute.xlu0 %3714
      %v3718 = vsel %vm1597, %v3436, 0
      %3720 = vmatprep.subr.bf16.mxu0 0
      %3721 = vmatpush1.bf16.msra.mxu0 0
      %3722 = vmatprep.subr.bf16.mxu0 0
      %3723 = vmatpush1.bf16.msra.mxu0 0
      %3724 = vmatprep.subr.bf16.mxu0 0
      %3725 = vmatpush1.bf16.msra.mxu0 0
      %3726 = vmatprep.subr.bf16.mxu0 0
      %3727 = vmatpush1.bf16.msra.mxu0 0
      %3728 = vmatprep.subr.bf16.mxu0 0
      %3729 = vmatpush1.bf16.msra.mxu0 0
      %3730 = vmatprep.subr.bf16.mxu0 0
      %3731 = vmatpush1.bf16.msra.mxu0 0
      %3732 = vmatprep.subr.bf16.mxu0 0
      %3733 = vmatpush1.bf16.msra.mxu0 0
      %3734 = vmatprep.subr.bf16.mxu0 0
      %3735 = vmatpush1.bf16.msra.mxu0 %v3715
      %3736 = vmatprep.subr.bf16.mxu0 0
      %3737 = vmatpush2.bf16.msra.mxu0 0
      %3738 = vmatprep.subr.bf16.mxu0 0
      %3739 = vmatpush2.bf16.msra.mxu0 0
      %3740 = vmatprep.subr.bf16.mxu0 0
      %3741 = vmatpush2.bf16.msra.mxu0 0
      %3742 = vmatprep.subr.bf16.mxu0 0
      %3743 = vmatpush2.bf16.msra.mxu0 0
      %3744 = vmatprep.subr.bf16.mxu0 0
      %3745 = vmatpush2.bf16.msra.mxu0 0
      %3746 = vmatprep.subr.bf16.mxu0 0
      %3747 = vmatpush2.bf16.msra.mxu0 0
      %3748 = vmatprep.subr.bf16.mxu0 0
      %3749 = vmatpush2.bf16.msra.mxu0 0
      %3750 = vmatprep.subr.bf16.mxu0 0
      %3751 = vmatpush2.bf16.msra.mxu0 0
      %3752 = vmatprep.mubr.bf16.mxu0 0
      %3753 = vmatmul.mubr.bf16.gmra.mxu0 %v3718
      %v3754 = vpop.f32.mrf.mxu0
      %v3755 = vadd.f32 0.0, %v3754
      %v3756 = vpop.f32.mrf.mxu0
      %v3757 = vpop.f32.mrf.mxu0
      %v3758 = vpop.f32.mrf.mxu0
      %3759 = vdwg.mxu0
      %3760 = vrot.lane.b32.xlu0 %v1227, 80
      %v3761 = vpop.permute.xlu0 %3760
      %v3764 = vsel %vm1597, %v3437, 0
      %3766 = vmatprep.subr.bf16.mxu0 0
      %3767 = vmatpush1.bf16.msra.mxu0 0
      %3768 = vmatprep.subr.bf16.mxu0 0
      %3769 = vmatpush1.bf16.msra.mxu0 0
      %3770 = vmatprep.subr.bf16.mxu0 0
      %3771 = vmatpush1.bf16.msra.mxu0 0
      %3772 = vmatprep.subr.bf16.mxu0 0
      %3773 = vmatpush1.bf16.msra.mxu0 0
      %3774 = vmatprep.subr.bf16.mxu0 0
      %3775 = vmatpush1.bf16.msra.mxu0 0
      %3776 = vmatprep.subr.bf16.mxu0 0
      %3777 = vmatpush1.bf16.msra.mxu0 0
      %3778 = vmatprep.subr.bf16.mxu0 0
      %3779 = vmatpush1.bf16.msra.mxu0 0
      %3780 = vmatprep.subr.bf16.mxu0 0
      %3781 = vmatpush1.bf16.msra.mxu0 %v3761
      %3782 = vmatprep.subr.bf16.mxu0 0
      %3783 = vmatpush2.bf16.msra.mxu0 0
      %3784 = vmatprep.subr.bf16.mxu0 0
      %3785 = vmatpush2.bf16.msra.mxu0 0
      %3786 = vmatprep.subr.bf16.mxu0 0
      %3787 = vmatpush2.bf16.msra.mxu0 0
      %3788 = vmatprep.subr.bf16.mxu0 0
      %3789 = vmatpush2.bf16.msra.mxu0 0
      %3790 = vmatprep.subr.bf16.mxu0 0
      %3791 = vmatpush2.bf16.msra.mxu0 0
      %3792 = vmatprep.subr.bf16.mxu0 0
      %3793 = vmatpush2.bf16.msra.mxu0 0
      %3794 = vmatprep.subr.bf16.mxu0 0
      %3795 = vmatpush2.bf16.msra.mxu0 0
      %3796 = vmatprep.subr.bf16.mxu0 0
      %3797 = vmatpush2.bf16.msra.mxu0 0
      %3798 = vmatprep.mubr.bf16.mxu0 0
      %3799 = vmatmul.mubr.bf16.gmra.mxu0 %v3764
      %v3800 = vpop.f32.mrf.mxu0
      %v3801 = vadd.f32 0.0, %v3800
      %v3802 = vpop.f32.mrf.mxu0
      %v3803 = vpop.f32.mrf.mxu0
      %v3804 = vpop.f32.mrf.mxu0
      %3805 = vdwg.mxu0
      %3806 = vrot.lane.b32.xlu0 %v1212, 104
      %v3807 = vpop.permute.xlu0 %3806
      %3808 = vrot.lane.b32.xlu0 %v1220, 104
      %v3809 = vpop.permute.xlu0 %3808
      %v3811 = vsel %vm1228, %v3807, 0
      %v3814 = vsel %vm1228, %v3809, 0
      %3816 = vmatprep.subr.bf16.mxu0 0
      %3817 = vmatpush1.bf16.xpose.msra.mxu0 0
      %3818 = vmatprep.subr.bf16.mxu0 0
      %3819 = vmatpush1.bf16.xpose.msra.mxu0 0
      %3820 = vmatprep.subr.bf16.mxu0 0
      %3821 = vmatpush1.bf16.xpose.msra.mxu0 0
      %3822 = vmatprep.subr.bf16.mxu0 0
      %3823 = vmatpush1.bf16.xpose.msra.mxu0 0
      %3824 = vmatprep.subr.bf16.mxu0 0
      %3825 = vmatpush1.bf16.xpose.msra.mxu0 0
      %3826 = vmatprep.subr.bf16.mxu0 0
      %3827 = vmatpush1.bf16.xpose.msra.mxu0 0
      %3828 = vmatprep.subr.bf16.mxu0 0
      %3829 = vmatpush1.bf16.xpose.msra.mxu0 0
      %3830 = vmatprep.subr.bf16.mxu0 0
      %3831 = vmatpush1.bf16.xpose.msra.mxu0 %v3814
      %3832 = vmatprep.subr.bf16.mxu0 0
      %3833 = vmatpush2.bf16.xpose.msra.mxu0 0
      %3834 = vmatprep.subr.bf16.mxu0 0
      %3835 = vmatpush2.bf16.xpose.msra.mxu0 0
      %3836 = vmatprep.subr.bf16.mxu0 0
      %3837 = vmatpush2.bf16.xpose.msra.mxu0 0
      %3838 = vmatprep.subr.bf16.mxu0 0
      %3839 = vmatpush2.bf16.xpose.msra.mxu0 0
      %3840 = vmatprep.subr.bf16.mxu0 0
      %3841 = vmatpush2.bf16.xpose.msra.mxu0 0
      %3842 = vmatprep.subr.bf16.mxu0 0
      %3843 = vmatpush2.bf16.xpose.msra.mxu0 0
      %3844 = vmatprep.subr.bf16.mxu0 0
      %3845 = vmatpush2.bf16.xpose.msra.mxu0 0
      %3846 = vmatprep.subr.bf16.mxu0 0
      %3847 = vmatpush2.bf16.xpose.msra.mxu0 0
      %3848 = vmatprep.mubr.bf16.mxu0 0
      %3849 = vmatmul.mubr.bf16.gmra.mxu0 %v3811
      %v3850 = vpop.f32.mrf.mxu0
      %v3851 = vadd.f32 0.0, %v3850
      %v3852 = vpop.f32.mrf.mxu0
      %v3853 = vpop.f32.mrf.mxu0
      %v3854 = vpop.f32.mrf.mxu0
      %3855 = vdwg.mxu0
      %3856 = vrot.lane.b32.xlu0 %v1213, 104
      %v3857 = vpop.permute.xlu0 %3856
      %3858 = vrot.lane.b32.xlu0 %v1221, 104
      %v3859 = vpop.permute.xlu0 %3858
      %v3861 = vsel %vm1228, %v3857, 0
      %v3864 = vsel %vm1228, %v3859, 0
      %3866 = vmatprep.subr.bf16.mxu0 0
      %3867 = vmatpush1.bf16.xpose.msra.mxu0 0
      %3868 = vmatprep.subr.bf16.mxu0 0
      %3869 = vmatpush1.bf16.xpose.msra.mxu0 0
      %3870 = vmatprep.subr.bf16.mxu0 0
      %3871 = vmatpush1.bf16.xpose.msra.mxu0 0
      %3872 = vmatprep.subr.bf16.mxu0 0
      %3873 = vmatpush1.bf16.xpose.msra.mxu0 0
      %3874 = vmatprep.subr.bf16.mxu0 0
      %3875 = vmatpush1.bf16.xpose.msra.mxu0 0
      %3876 = vmatprep.subr.bf16.mxu0 0
      %3877 = vmatpush1.bf16.xpose.msra.mxu0 0
      %3878 = vmatprep.subr.bf16.mxu0 0
      %3879 = vmatpush1.bf16.xpose.msra.mxu0 0
      %3880 = vmatprep.subr.bf16.mxu0 0
      %3881 = vmatpush1.bf16.xpose.msra.mxu0 %v3864
      %3882 = vmatprep.subr.bf16.mxu0 0
      %3883 = vmatpush2.bf16.xpose.msra.mxu0 0
      %3884 = vmatprep.subr.bf16.mxu0 0
      %3885 = vmatpush2.bf16.xpose.msra.mxu0 0
      %3886 = vmatprep.subr.bf16.mxu0 0
      %3887 = vmatpush2.bf16.xpose.msra.mxu0 0
      %3888 = vmatprep.subr.bf16.mxu0 0
      %3889 = vmatpush2.bf16.xpose.msra.mxu0 0
      %3890 = vmatprep.subr.bf16.mxu0 0
      %3891 = vmatpush2.bf16.xpose.msra.mxu0 0
      %3892 = vmatprep.subr.bf16.mxu0 0
      %3893 = vmatpush2.bf16.xpose.msra.mxu0 0
      %3894 = vmatprep.subr.bf16.mxu0 0
      %3895 = vmatpush2.bf16.xpose.msra.mxu0 0
      %3896 = vmatprep.subr.bf16.mxu0 0
      %3897 = vmatpush2.bf16.xpose.msra.mxu0 0
      %3898 = vmatprep.mubr.bf16.mxu0 0
      %3899 = vmatmul.mubr.bf16.gmra.mxu0 %v3861
      %v3900 = vpop.f32.mrf.mxu0
      %v3901 = vadd.f32 0.0, %v3900
      %v3902 = vpop.f32.mrf.mxu0
      %v3903 = vpop.f32.mrf.mxu0
      %v3904 = vpop.f32.mrf.mxu0
      %3905 = vdwg.mxu0
      %3906 = vrot.lane.b32.xlu0 %v1214, 104
      %v3907 = vpop.permute.xlu0 %3906
      %3908 = vrot.lane.b32.xlu0 %v1222, 104
      %v3909 = vpop.permute.xlu0 %3908
      %v3911 = vsel %vm1228, %v3907, 0
      %v3914 = vsel %vm1228, %v3909, 0
      %3916 = vmatprep.subr.bf16.mxu0 0
      %3917 = vmatpush1.bf16.xpose.msra.mxu0 0
      %3918 = vmatprep.subr.bf16.mxu0 0
      %3919 = vmatpush1.bf16.xpose.msra.mxu0 0
      %3920 = vmatprep.subr.bf16.mxu0 0
      %3921 = vmatpush1.bf16.xpose.msra.mxu0 0
      %3922 = vmatprep.subr.bf16.mxu0 0
      %3923 = vmatpush1.bf16.xpose.msra.mxu0 0
      %3924 = vmatprep.subr.bf16.mxu0 0
      %3925 = vmatpush1.bf16.xpose.msra.mxu0 0
      %3926 = vmatprep.subr.bf16.mxu0 0
      %3927 = vmatpush1.bf16.xpose.msra.mxu0 0
      %3928 = vmatprep.subr.bf16.mxu0 0
      %3929 = vmatpush1.bf16.xpose.msra.mxu0 0
      %3930 = vmatprep.subr.bf16.mxu0 0
      %3931 = vmatpush1.bf16.xpose.msra.mxu0 %v3914
      %3932 = vmatprep.subr.bf16.mxu0 0
      %3933 = vmatpush2.bf16.xpose.msra.mxu0 0
      %3934 = vmatprep.subr.bf16.mxu0 0
      %3935 = vmatpush2.bf16.xpose.msra.mxu0 0
      %3936 = vmatprep.subr.bf16.mxu0 0
      %3937 = vmatpush2.bf16.xpose.msra.mxu0 0
      %3938 = vmatprep.subr.bf16.mxu0 0
      %3939 = vmatpush2.bf16.xpose.msra.mxu0 0
      %3940 = vmatprep.subr.bf16.mxu0 0
      %3941 = vmatpush2.bf16.xpose.msra.mxu0 0
      %3942 = vmatprep.subr.bf16.mxu0 0
      %3943 = vmatpush2.bf16.xpose.msra.mxu0 0
      %3944 = vmatprep.subr.bf16.mxu0 0
      %3945 = vmatpush2.bf16.xpose.msra.mxu0 0
      %3946 = vmatprep.subr.bf16.mxu0 0
      %3947 = vmatpush2.bf16.xpose.msra.mxu0 0
      %3948 = vmatprep.mubr.bf16.mxu0 0
      %3949 = vmatmul.mubr.bf16.gmra.mxu0 %v3911
      %v3950 = vpop.f32.mrf.mxu0
      %v3951 = vadd.f32 0.0, %v3950
      %v3952 = vpop.f32.mrf.mxu0
      %v3953 = vpop.f32.mrf.mxu0
      %v3954 = vpop.f32.mrf.mxu0
      %3955 = vdwg.mxu0
      %3956 = vrot.lane.b32.xlu0 %v1215, 104
      %v3957 = vpop.permute.xlu0 %3956
      %3958 = vrot.lane.b32.xlu0 %v1223, 104
      %v3959 = vpop.permute.xlu0 %3958
      %v3961 = vsel %vm1228, %v3957, 0
      %v3964 = vsel %vm1228, %v3959, 0
      %3966 = vmatprep.subr.bf16.mxu0 0
      %3967 = vmatpush1.bf16.xpose.msra.mxu0 0
      %3968 = vmatprep.subr.bf16.mxu0 0
      %3969 = vmatpush1.bf16.xpose.msra.mxu0 0
      %3970 = vmatprep.subr.bf16.mxu0 0
      %3971 = vmatpush1.bf16.xpose.msra.mxu0 0
      %3972 = vmatprep.subr.bf16.mxu0 0
      %3973 = vmatpush1.bf16.xpose.msra.mxu0 0
      %3974 = vmatprep.subr.bf16.mxu0 0
      %3975 = vmatpush1.bf16.xpose.msra.mxu0 0
      %3976 = vmatprep.subr.bf16.mxu0 0
      %3977 = vmatpush1.bf16.xpose.msra.mxu0 0
      %3978 = vmatprep.subr.bf16.mxu0 0
      %3979 = vmatpush1.bf16.xpose.msra.mxu0 0
      %3980 = vmatprep.subr.bf16.mxu0 0
      %3981 = vmatpush1.bf16.xpose.msra.mxu0 %v3964
      %3982 = vmatprep.subr.bf16.mxu0 0
      %3983 = vmatpush2.bf16.xpose.msra.mxu0 0
      %3984 = vmatprep.subr.bf16.mxu0 0
      %3985 = vmatpush2.bf16.xpose.msra.mxu0 0
      %3986 = vmatprep.subr.bf16.mxu0 0
      %3987 = vmatpush2.bf16.xpose.msra.mxu0 0
      %3988 = vmatprep.subr.bf16.mxu0 0
      %3989 = vmatpush2.bf16.xpose.msra.mxu0 0
      %3990 = vmatprep.subr.bf16.mxu0 0
      %3991 = vmatpush2.bf16.xpose.msra.mxu0 0
      %3992 = vmatprep.subr.bf16.mxu0 0
      %3993 = vmatpush2.bf16.xpose.msra.mxu0 0
      %3994 = vmatprep.subr.bf16.mxu0 0
      %3995 = vmatpush2.bf16.xpose.msra.mxu0 0
      %3996 = vmatprep.subr.bf16.mxu0 0
      %3997 = vmatpush2.bf16.xpose.msra.mxu0 0
      %3998 = vmatprep.mubr.bf16.mxu0 0
      %3999 = vmatmul.mubr.bf16.gmra.mxu0 %v3961
      %v4000 = vpop.f32.mrf.mxu0
      %v4001 = vadd.f32 0.0, %v4000
      %v4002 = vpop.f32.mrf.mxu0
      %v4003 = vpop.f32.mrf.mxu0
      %v4004 = vpop.f32.mrf.mxu0
      %4005 = vdwg.mxu0
      %4006 = vrot.lane.b32.xlu0 %v1216, 104
      %v4007 = vpop.permute.xlu0 %4006
      %4008 = vrot.lane.b32.xlu0 %v1224, 104
      %v4009 = vpop.permute.xlu0 %4008
      %v4011 = vsel %vm1228, %v4007, 0
      %v4014 = vsel %vm1228, %v4009, 0
      %4016 = vmatprep.subr.bf16.mxu0 0
      %4017 = vmatpush1.bf16.xpose.msra.mxu0 0
      %4018 = vmatprep.subr.bf16.mxu0 0
      %4019 = vmatpush1.bf16.xpose.msra.mxu0 0
      %4020 = vmatprep.subr.bf16.mxu0 0
      %4021 = vmatpush1.bf16.xpose.msra.mxu0 0
      %4022 = vmatprep.subr.bf16.mxu0 0
      %4023 = vmatpush1.bf16.xpose.msra.mxu0 0
      %4024 = vmatprep.subr.bf16.mxu0 0
      %4025 = vmatpush1.bf16.xpose.msra.mxu0 0
      %4026 = vmatprep.subr.bf16.mxu0 0
      %4027 = vmatpush1.bf16.xpose.msra.mxu0 0
      %4028 = vmatprep.subr.bf16.mxu0 0
      %4029 = vmatpush1.bf16.xpose.msra.mxu0 0
      %4030 = vmatprep.subr.bf16.mxu0 0
      %4031 = vmatpush1.bf16.xpose.msra.mxu0 %v4014
      %4032 = vmatprep.subr.bf16.mxu0 0
      %4033 = vmatpush2.bf16.xpose.msra.mxu0 0
      %4034 = vmatprep.subr.bf16.mxu0 0
      %4035 = vmatpush2.bf16.xpose.msra.mxu0 0
      %4036 = vmatprep.subr.bf16.mxu0 0
      %4037 = vmatpush2.bf16.xpose.msra.mxu0 0
      %4038 = vmatprep.subr.bf16.mxu0 0
      %4039 = vmatpush2.bf16.xpose.msra.mxu0 0
      %4040 = vmatprep.subr.bf16.mxu0 0
      %4041 = vmatpush2.bf16.xpose.msra.mxu0 0
      %4042 = vmatprep.subr.bf16.mxu0 0
      %4043 = vmatpush2.bf16.xpose.msra.mxu0 0
      %4044 = vmatprep.subr.bf16.mxu0 0
      %4045 = vmatpush2.bf16.xpose.msra.mxu0 0
      %4046 = vmatprep.subr.bf16.mxu0 0
      %4047 = vmatpush2.bf16.xpose.msra.mxu0 0
      %4048 = vmatprep.mubr.bf16.mxu0 0
      %4049 = vmatmul.mubr.bf16.gmra.mxu0 %v4011
      %v4050 = vpop.f32.mrf.mxu0
      %v4051 = vadd.f32 0.0, %v4050
      %v4052 = vpop.f32.mrf.mxu0
      %v4053 = vpop.f32.mrf.mxu0
      %v4054 = vpop.f32.mrf.mxu0
      %4055 = vdwg.mxu0
      %4056 = vrot.lane.b32.xlu0 %v1217, 104
      %v4057 = vpop.permute.xlu0 %4056
      %4058 = vrot.lane.b32.xlu0 %v1225, 104
      %v4059 = vpop.permute.xlu0 %4058
      %v4061 = vsel %vm1228, %v4057, 0
      %v4064 = vsel %vm1228, %v4059, 0
      %4066 = vmatprep.subr.bf16.mxu0 0
      %4067 = vmatpush1.bf16.xpose.msra.mxu0 0
      %4068 = vmatprep.subr.bf16.mxu0 0
      %4069 = vmatpush1.bf16.xpose.msra.mxu0 0
      %4070 = vmatprep.subr.bf16.mxu0 0
      %4071 = vmatpush1.bf16.xpose.msra.mxu0 0
      %4072 = vmatprep.subr.bf16.mxu0 0
      %4073 = vmatpush1.bf16.xpose.msra.mxu0 0
      %4074 = vmatprep.subr.bf16.mxu0 0
      %4075 = vmatpush1.bf16.xpose.msra.mxu0 0
      %4076 = vmatprep.subr.bf16.mxu0 0
      %4077 = vmatpush1.bf16.xpose.msra.mxu0 0
      %4078 = vmatprep.subr.bf16.mxu0 0
      %4079 = vmatpush1.bf16.xpose.msra.mxu0 0
      %4080 = vmatprep.subr.bf16.mxu0 0
      %4081 = vmatpush1.bf16.xpose.msra.mxu0 %v4064
      %4082 = vmatprep.subr.bf16.mxu0 0
      %4083 = vmatpush2.bf16.xpose.msra.mxu0 0
      %4084 = vmatprep.subr.bf16.mxu0 0
      %4085 = vmatpush2.bf16.xpose.msra.mxu0 0
      %4086 = vmatprep.subr.bf16.mxu0 0
      %4087 = vmatpush2.bf16.xpose.msra.mxu0 0
      %4088 = vmatprep.subr.bf16.mxu0 0
      %4089 = vmatpush2.bf16.xpose.msra.mxu0 0
      %4090 = vmatprep.subr.bf16.mxu0 0
      %4091 = vmatpush2.bf16.xpose.msra.mxu0 0
      %4092 = vmatprep.subr.bf16.mxu0 0
      %4093 = vmatpush2.bf16.xpose.msra.mxu0 0
      %4094 = vmatprep.subr.bf16.mxu0 0
      %4095 = vmatpush2.bf16.xpose.msra.mxu0 0
      %4096 = vmatprep.subr.bf16.mxu0 0
      %4097 = vmatpush2.bf16.xpose.msra.mxu0 0
      %4098 = vmatprep.mubr.bf16.mxu0 0
      %4099 = vmatmul.mubr.bf16.gmra.mxu0 %v4061
      %v4100 = vpop.f32.mrf.mxu0
      %v4101 = vadd.f32 0.0, %v4100
      %v4102 = vpop.f32.mrf.mxu0
      %v4103 = vpop.f32.mrf.mxu0
      %v4104 = vpop.f32.mrf.mxu0
      %4105 = vdwg.mxu0
      %4106 = vrot.lane.b32.xlu0 %v1218, 104
      %v4107 = vpop.permute.xlu0 %4106
      %4108 = vrot.lane.b32.xlu0 %v1226, 104
      %v4109 = vpop.permute.xlu0 %4108
      %v4111 = vsel %vm1228, %v4107, 0
      %v4114 = vsel %vm1228, %v4109, 0
      %4116 = vmatprep.subr.bf16.mxu0 0
      %4117 = vmatpush1.bf16.xpose.msra.mxu0 0
      %4118 = vmatprep.subr.bf16.mxu0 0
      %4119 = vmatpush1.bf16.xpose.msra.mxu0 0
      %4120 = vmatprep.subr.bf16.mxu0 0
      %4121 = vmatpush1.bf16.xpose.msra.mxu0 0
      %4122 = vmatprep.subr.bf16.mxu0 0
      %4123 = vmatpush1.bf16.xpose.msra.mxu0 0
      %4124 = vmatprep.subr.bf16.mxu0 0
      %4125 = vmatpush1.bf16.xpose.msra.mxu0 0
      %4126 = vmatprep.subr.bf16.mxu0 0
      %4127 = vmatpush1.bf16.xpose.msra.mxu0 0
      %4128 = vmatprep.subr.bf16.mxu0 0
      %4129 = vmatpush1.bf16.xpose.msra.mxu0 0
      %4130 = vmatprep.subr.bf16.mxu0 0
      %4131 = vmatpush1.bf16.xpose.msra.mxu0 %v4114
      %4132 = vmatprep.subr.bf16.mxu0 0
      %4133 = vmatpush2.bf16.xpose.msra.mxu0 0
      %4134 = vmatprep.subr.bf16.mxu0 0
      %4135 = vmatpush2.bf16.xpose.msra.mxu0 0
      %4136 = vmatprep.subr.bf16.mxu0 0
      %4137 = vmatpush2.bf16.xpose.msra.mxu0 0
      %4138 = vmatprep.subr.bf16.mxu0 0
      %4139 = vmatpush2.bf16.xpose.msra.mxu0 0
      %4140 = vmatprep.subr.bf16.mxu0 0
      %4141 = vmatpush2.bf16.xpose.msra.mxu0 0
      %4142 = vmatprep.subr.bf16.mxu0 0
      %4143 = vmatpush2.bf16.xpose.msra.mxu0 0
      %4144 = vmatprep.subr.bf16.mxu0 0
      %4145 = vmatpush2.bf16.xpose.msra.mxu0 0
      %4146 = vmatprep.subr.bf16.mxu0 0
      %4147 = vmatpush2.bf16.xpose.msra.mxu0 0
      %4148 = vmatprep.mubr.bf16.mxu0 0
      %4149 = vmatmul.mubr.bf16.gmra.mxu0 %v4111
      %v4150 = vpop.f32.mrf.mxu0
      %v4151 = vadd.f32 0.0, %v4150
      %v4152 = vpop.f32.mrf.mxu0
      %v4153 = vpop.f32.mrf.mxu0
      %v4154 = vpop.f32.mrf.mxu0
      %4155 = vdwg.mxu0
      %4156 = vrot.lane.b32.xlu0 %v1219, 104
      %v4157 = vpop.permute.xlu0 %4156
      %4158 = vrot.lane.b32.xlu0 %v1227, 104
      %v4159 = vpop.permute.xlu0 %4158
      %v4161 = vsel %vm1228, %v4157, 0
      %v4164 = vsel %vm1228, %v4159, 0
      %4166 = vmatprep.subr.bf16.mxu0 0
      %4167 = vmatpush1.bf16.xpose.msra.mxu0 0
      %4168 = vmatprep.subr.bf16.mxu0 0
      %4169 = vmatpush1.bf16.xpose.msra.mxu0 0
      %4170 = vmatprep.subr.bf16.mxu0 0
      %4171 = vmatpush1.bf16.xpose.msra.mxu0 0
      %4172 = vmatprep.subr.bf16.mxu0 0
      %4173 = vmatpush1.bf16.xpose.msra.mxu0 0
      %4174 = vmatprep.subr.bf16.mxu0 0
      %4175 = vmatpush1.bf16.xpose.msra.mxu0 0
      %4176 = vmatprep.subr.bf16.mxu0 0
      %4177 = vmatpush1.bf16.xpose.msra.mxu0 0
      %4178 = vmatprep.subr.bf16.mxu0 0
      %4179 = vmatpush1.bf16.xpose.msra.mxu0 0
      %4180 = vmatprep.subr.bf16.mxu0 0
      %4181 = vmatpush1.bf16.xpose.msra.mxu0 %v4164
      %4182 = vmatprep.subr.bf16.mxu0 0
      %4183 = vmatpush2.bf16.xpose.msra.mxu0 0
      %4184 = vmatprep.subr.bf16.mxu0 0
      %4185 = vmatpush2.bf16.xpose.msra.mxu0 0
      %4186 = vmatprep.subr.bf16.mxu0 0
      %4187 = vmatpush2.bf16.xpose.msra.mxu0 0
      %4188 = vmatprep.subr.bf16.mxu0 0
      %4189 = vmatpush2.bf16.xpose.msra.mxu0 0
      %4190 = vmatprep.subr.bf16.mxu0 0
      %4191 = vmatpush2.bf16.xpose.msra.mxu0 0
      %4192 = vmatprep.subr.bf16.mxu0 0
      %4193 = vmatpush2.bf16.xpose.msra.mxu0 0
      %4194 = vmatprep.subr.bf16.mxu0 0
      %4195 = vmatpush2.bf16.xpose.msra.mxu0 0
      %4196 = vmatprep.subr.bf16.mxu0 0
      %4197 = vmatpush2.bf16.xpose.msra.mxu0 0
      %4198 = vmatprep.mubr.bf16.mxu0 0
      %4199 = vmatmul.mubr.bf16.gmra.mxu0 %v4161
      %v4200 = vpop.f32.mrf.mxu0
      %v4201 = vadd.f32 0.0, %v4200
      %v4202 = vpop.f32.mrf.mxu0
      %v4203 = vpop.f32.mrf.mxu0
      %v4204 = vpop.f32.mrf.mxu0
      %4205 = vdwg.mxu0
      %v4206 = vsel %vm1597, %v3851, -inf
      %4207 = vmax.xlane.f32.xlu0 %v4206
      %v4208 = vpop.xlane.xlu0 %4207
      %v4209 = vsel %vm1597, %v3901, -inf
      %4210 = vmax.xlane.f32.xlu0 %v4209
      %v4211 = vpop.xlane.xlu0 %4210
      %v4212 = vsel %vm1597, %v3951, -inf
      %4213 = vmax.xlane.f32.xlu0 %v4212
      %v4214 = vpop.xlane.xlu0 %4213
      %v4215 = vsel %vm1597, %v4001, -inf
      %4216 = vmax.xlane.f32.xlu0 %v4215
      %v4217 = vpop.xlane.xlu0 %4216
      %v4218 = vsel %vm1597, %v4051, -inf
      %4219 = vmax.xlane.f32.xlu0 %v4218
      %v4220 = vpop.xlane.xlu0 %4219
      %v4221 = vsel %vm1597, %v4101, -inf
      %4222 = vmax.xlane.f32.xlu0 %v4221
      %v4223 = vpop.xlane.xlu0 %4222
      %v4224 = vsel %vm1597, %v4151, -inf
      %4225 = vmax.xlane.f32.xlu0 %v4224
      %v4226 = vpop.xlane.xlu0 %4225
      %v4227 = vsel %vm1597, %v4201, -inf
      %4228 = vmax.xlane.f32.xlu0 %v4227
      %v4229 = vpop.xlane.xlu0 %4228
      %v4230 = vsub.f32 %v3851, %v4208
      %v4231 = vsub.f32 %v3901, %v4211
      %v4232 = vsub.f32 %v3951, %v4214
      %v4233 = vsub.f32 %v4001, %v4217
      %v4234 = vsub.f32 %v4051, %v4220
      %v4235 = vsub.f32 %v4101, %v4223
      %v4236 = vsub.f32 %v4151, %v4226
      %v4237 = vsub.f32 %v4201, %v4229
      %v4238 = vmul.f32 %v4230, 1.442695
      %v4239 = vpow.pop %v4238
      %v4240 = vmul.f32 %v4231, 1.442695
      %v4241 = vpow.pop %v4240
      %v4242 = vmul.f32 %v4232, 1.442695
      %v4243 = vpow.pop %v4242
      %v4244 = vmul.f32 %v4233, 1.442695
      %v4245 = vpow.pop %v4244
      %v4246 = vmul.f32 %v4234, 1.442695
      %v4247 = vpow.pop %v4246
      %v4248 = vmul.f32 %v4235, 1.442695
      %v4249 = vpow.pop %v4248
      %v4250 = vmul.f32 %v4236, 1.442695
      %v4251 = vpow.pop %v4250
      %v4252 = vmul.f32 %v4237, 1.442695
      %v4253 = vpow.pop %v4252
      %v4254 = vsel %vm1597, %v4239, 0.0
      %4255 = vadd.xlane.f32.xlu0 %v4254
      %v4256 = vpop.xlane.xlu0 %4255
      %v4257 = vsel %vm1597, %v4241, 0.0
      %4258 = vadd.xlane.f32.xlu0 %v4257
      %v4259 = vpop.xlane.xlu0 %4258
      %v4260 = vsel %vm1597, %v4243, 0.0
      %4261 = vadd.xlane.f32.xlu0 %v4260
      %v4262 = vpop.xlane.xlu0 %4261
      %v4263 = vsel %vm1597, %v4245, 0.0
      %4264 = vadd.xlane.f32.xlu0 %v4263
      %v4265 = vpop.xlane.xlu0 %4264
      %v4266 = vsel %vm1597, %v4247, 0.0
      %4267 = vadd.xlane.f32.xlu0 %v4266
      %v4268 = vpop.xlane.xlu0 %4267
      %v4269 = vsel %vm1597, %v4249, 0.0
      %4270 = vadd.xlane.f32.xlu0 %v4269
      %v4271 = vpop.xlane.xlu0 %4270
      %v4272 = vsel %vm1597, %v4251, 0.0
      %4273 = vadd.xlane.f32.xlu0 %v4272
      %v4274 = vpop.xlane.xlu0 %4273
      %v4275 = vsel %vm1597, %v4253, 0.0
      %4276 = vadd.xlane.f32.xlu0 %v4275
      %v4277 = vpop.xlane.xlu0 %4276
      %v4278 = vrcp.pop %v4256
      %v4279 = vrcp.pop %v4259
      %v4280 = vrcp.pop %v4262
      %v4281 = vrcp.pop %v4265
      %v4282 = vrcp.pop %v4268
      %v4283 = vrcp.pop %v4271
      %v4284 = vrcp.pop %v4274
      %v4285 = vrcp.pop %v4277
      %v4286 = vmul.f32 %v4239, %v4278
      %v4287 = vmul.f32 %v4241, %v4279
      %v4288 = vmul.f32 %v4243, %v4280
      %v4289 = vmul.f32 %v4245, %v4281
      %v4290 = vmul.f32 %v4247, %v4282
      %v4291 = vmul.f32 %v4249, %v4283
      %v4292 = vmul.f32 %v4251, %v4284
      %v4293 = vmul.f32 %v4253, %v4285
      %v4294 = vpack.c.bf16 %v4286, %v4286
      %v4295 = vpack.c.bf16 %v4287, %v4287
      %v4296 = vpack.c.bf16 %v4288, %v4288
      %v4297 = vpack.c.bf16 %v4289, %v4289
      %v4298 = vpack.c.bf16 %v4290, %v4290
      %v4299 = vpack.c.bf16 %v4291, %v4291
      %v4300 = vpack.c.bf16 %v4292, %v4292
      %v4301 = vpack.c.bf16 %v4293, %v4293
      %4302 = vrot.lane.b32.xlu0 %v1220, 72
      %v4303 = vpop.permute.xlu0 %4302
      %v4306 = vsel %vm1597, %v4294, 0
      %4308 = vmatprep.subr.bf16.mxu0 0
      %4309 = vmatpush1.bf16.msra.mxu0 0
      %4310 = vmatprep.subr.bf16.mxu0 0
      %4311 = vmatpush1.bf16.msra.mxu0 0
      %4312 = vmatprep.subr.bf16.mxu0 0
      %4313 = vmatpush1.bf16.msra.mxu0 0
      %4314 = vmatprep.subr.bf16.mxu0 0
      %4315 = vmatpush1.bf16.msra.mxu0 0
      %4316 = vmatprep.subr.bf16.mxu0 0
      %4317 = vmatpush1.bf16.msra.mxu0 0
      %4318 = vmatprep.subr.bf16.mxu0 0
      %4319 = vmatpush1.bf16.msra.mxu0 0
      %4320 = vmatprep.subr.bf16.mxu0 0
      %4321 = vmatpush1.bf16.msra.mxu0 0
      %4322 = vmatprep.subr.bf16.mxu0 0
      %4323 = vmatpush1.bf16.msra.mxu0 %v4303
      %4324 = vmatprep.subr.bf16.mxu0 0
      %4325 = vmatpush2.bf16.msra.mxu0 0
      %4326 = vmatprep.subr.bf16.mxu0 0
      %4327 = vmatpush2.bf16.msra.mxu0 0
      %4328 = vmatprep.subr.bf16.mxu0 0
      %4329 = vmatpush2.bf16.msra.mxu0 0
      %4330 = vmatprep.subr.bf16.mxu0 0
      %4331 = vmatpush2.bf16.msra.mxu0 0
      %4332 = vmatprep.subr.bf16.mxu0 0
      %4333 = vmatpush2.bf16.msra.mxu0 0
      %4334 = vmatprep.subr.bf16.mxu0 0
      %4335 = vmatpush2.bf16.msra.mxu0 0
      %4336 = vmatprep.subr.bf16.mxu0 0
      %4337 = vmatpush2.bf16.msra.mxu0 0
      %4338 = vmatprep.subr.bf16.mxu0 0
      %4339 = vmatpush2.bf16.msra.mxu0 0
      %4340 = vmatprep.mubr.bf16.mxu0 0
      %4341 = vmatmul.mubr.bf16.gmra.mxu0 %v4306
      %v4342 = vpop.f32.mrf.mxu0
      %v4343 = vadd.f32 0.0, %v4342
      %v4344 = vpop.f32.mrf.mxu0
      %v4345 = vpop.f32.mrf.mxu0
      %v4346 = vpop.f32.mrf.mxu0
      %4347 = vdwg.mxu0
      %4348 = vrot.lane.b32.xlu0 %v1221, 72
      %v4349 = vpop.permute.xlu0 %4348
      %v4352 = vsel %vm1597, %v4295, 0
      %4354 = vmatprep.subr.bf16.mxu0 0
      %4355 = vmatpush1.bf16.msra.mxu0 0
      %4356 = vmatprep.subr.bf16.mxu0 0
      %4357 = vmatpush1.bf16.msra.mxu0 0
      %4358 = vmatprep.subr.bf16.mxu0 0
      %4359 = vmatpush1.bf16.msra.mxu0 0
      %4360 = vmatprep.subr.bf16.mxu0 0
      %4361 = vmatpush1.bf16.msra.mxu0 0
      %4362 = vmatprep.subr.bf16.mxu0 0
      %4363 = vmatpush1.bf16.msra.mxu0 0
      %4364 = vmatprep.subr.bf16.mxu0 0
      %4365 = vmatpush1.bf16.msra.mxu0 0
      %4366 = vmatprep.subr.bf16.mxu0 0
      %4367 = vmatpush1.bf16.msra.mxu0 0
      %4368 = vmatprep.subr.bf16.mxu0 0
      %4369 = vmatpush1.bf16.msra.mxu0 %v4349
      %4370 = vmatprep.subr.bf16.mxu0 0
      %4371 = vmatpush2.bf16.msra.mxu0 0
      %4372 = vmatprep.subr.bf16.mxu0 0
      %4373 = vmatpush2.bf16.msra.mxu0 0
      %4374 = vmatprep.subr.bf16.mxu0 0
      %4375 = vmatpush2.bf16.msra.mxu0 0
      %4376 = vmatprep.subr.bf16.mxu0 0
      %4377 = vmatpush2.bf16.msra.mxu0 0
      %4378 = vmatprep.subr.bf16.mxu0 0
      %4379 = vmatpush2.bf16.msra.mxu0 0
      %4380 = vmatprep.subr.bf16.mxu0 0
      %4381 = vmatpush2.bf16.msra.mxu0 0
      %4382 = vmatprep.subr.bf16.mxu0 0
      %4383 = vmatpush2.bf16.msra.mxu0 0
      %4384 = vmatprep.subr.bf16.mxu0 0
      %4385 = vmatpush2.bf16.msra.mxu0 0
      %4386 = vmatprep.mubr.bf16.mxu0 0
      %4387 = vmatmul.mubr.bf16.gmra.mxu0 %v4352
      %v4388 = vpop.f32.mrf.mxu0
      %v4389 = vadd.f32 0.0, %v4388
      %v4390 = vpop.f32.mrf.mxu0
      %v4391 = vpop.f32.mrf.mxu0
      %v4392 = vpop.f32.mrf.mxu0
      %4393 = vdwg.mxu0
      %4394 = vrot.lane.b32.xlu0 %v1222, 72
      %v4395 = vpop.permute.xlu0 %4394
      %v4398 = vsel %vm1597, %v4296, 0
      %4400 = vmatprep.subr.bf16.mxu0 0
      %4401 = vmatpush1.bf16.msra.mxu0 0
      %4402 = vmatprep.subr.bf16.mxu0 0
      %4403 = vmatpush1.bf16.msra.mxu0 0
      %4404 = vmatprep.subr.bf16.mxu0 0
      %4405 = vmatpush1.bf16.msra.mxu0 0
      %4406 = vmatprep.subr.bf16.mxu0 0
      %4407 = vmatpush1.bf16.msra.mxu0 0
      %4408 = vmatprep.subr.bf16.mxu0 0
      %4409 = vmatpush1.bf16.msra.mxu0 0
      %4410 = vmatprep.subr.bf16.mxu0 0
      %4411 = vmatpush1.bf16.msra.mxu0 0
      %4412 = vmatprep.subr.bf16.mxu0 0
      %4413 = vmatpush1.bf16.msra.mxu0 0
      %4414 = vmatprep.subr.bf16.mxu0 0
      %4415 = vmatpush1.bf16.msra.mxu0 %v4395
      %4416 = vmatprep.subr.bf16.mxu0 0
      %4417 = vmatpush2.bf16.msra.mxu0 0
      %4418 = vmatprep.subr.bf16.mxu0 0
      %4419 = vmatpush2.bf16.msra.mxu0 0
      %4420 = vmatprep.subr.bf16.mxu0 0
      %4421 = vmatpush2.bf16.msra.mxu0 0
      %4422 = vmatprep.subr.bf16.mxu0 0
      %4423 = vmatpush2.bf16.msra.mxu0 0
      %4424 = vmatprep.subr.bf16.mxu0 0
      %4425 = vmatpush2.bf16.msra.mxu0 0
      %4426 = vmatprep.subr.bf16.mxu0 0
      %4427 = vmatpush2.bf16.msra.mxu0 0
      %4428 = vmatprep.subr.bf16.mxu0 0
      %4429 = vmatpush2.bf16.msra.mxu0 0
      %4430 = vmatprep.subr.bf16.mxu0 0
      %4431 = vmatpush2.bf16.msra.mxu0 0
      %4432 = vmatprep.mubr.bf16.mxu0 0
      %4433 = vmatmul.mubr.bf16.gmra.mxu0 %v4398
      %v4434 = vpop.f32.mrf.mxu0
      %v4435 = vadd.f32 0.0, %v4434
      %v4436 = vpop.f32.mrf.mxu0
      %v4437 = vpop.f32.mrf.mxu0
      %v4438 = vpop.f32.mrf.mxu0
      %4439 = vdwg.mxu0
      %4440 = vrot.lane.b32.xlu0 %v1223, 72
      %v4441 = vpop.permute.xlu0 %4440
      %v4444 = vsel %vm1597, %v4297, 0
      %4446 = vmatprep.subr.bf16.mxu0 0
      %4447 = vmatpush1.bf16.msra.mxu0 0
      %4448 = vmatprep.subr.bf16.mxu0 0
      %4449 = vmatpush1.bf16.msra.mxu0 0
      %4450 = vmatprep.subr.bf16.mxu0 0
      %4451 = vmatpush1.bf16.msra.mxu0 0
      %4452 = vmatprep.subr.bf16.mxu0 0
      %4453 = vmatpush1.bf16.msra.mxu0 0
      %4454 = vmatprep.subr.bf16.mxu0 0
      %4455 = vmatpush1.bf16.msra.mxu0 0
      %4456 = vmatprep.subr.bf16.mxu0 0
      %4457 = vmatpush1.bf16.msra.mxu0 0
      %4458 = vmatprep.subr.bf16.mxu0 0
      %4459 = vmatpush1.bf16.msra.mxu0 0
      %4460 = vmatprep.subr.bf16.mxu0 0
      %4461 = vmatpush1.bf16.msra.mxu0 %v4441
      %4462 = vmatprep.subr.bf16.mxu0 0
      %4463 = vmatpush2.bf16.msra.mxu0 0
      %4464 = vmatprep.subr.bf16.mxu0 0
      %4465 = vmatpush2.bf16.msra.mxu0 0
      %4466 = vmatprep.subr.bf16.mxu0 0
      %4467 = vmatpush2.bf16.msra.mxu0 0
      %4468 = vmatprep.subr.bf16.mxu0 0
      %4469 = vmatpush2.bf16.msra.mxu0 0
      %4470 = vmatprep.subr.bf16.mxu0 0
      %4471 = vmatpush2.bf16.msra.mxu0 0
      %4472 = vmatprep.subr.bf16.mxu0 0
      %4473 = vmatpush2.bf16.msra.mxu0 0
      %4474 = vmatprep.subr.bf16.mxu0 0
      %4475 = vmatpush2.bf16.msra.mxu0 0
      %4476 = vmatprep.subr.bf16.mxu0 0
      %4477 = vmatpush2.bf16.msra.mxu0 0
      %4478 = vmatprep.mubr.bf16.mxu0 0
      %4479 = vmatmul.mubr.bf16.gmra.mxu0 %v4444
      %v4480 = vpop.f32.mrf.mxu0
      %v4481 = vadd.f32 0.0, %v4480
      %v4482 = vpop.f32.mrf.mxu0
      %v4483 = vpop.f32.mrf.mxu0
      %v4484 = vpop.f32.mrf.mxu0
      %4485 = vdwg.mxu0
      %4486 = vrot.lane.b32.xlu0 %v1224, 72
      %v4487 = vpop.permute.xlu0 %4486
      %v4490 = vsel %vm1597, %v4298, 0
      %4492 = vmatprep.subr.bf16.mxu0 0
      %4493 = vmatpush1.bf16.msra.mxu0 0
      %4494 = vmatprep.subr.bf16.mxu0 0
      %4495 = vmatpush1.bf16.msra.mxu0 0
      %4496 = vmatprep.subr.bf16.mxu0 0
      %4497 = vmatpush1.bf16.msra.mxu0 0
      %4498 = vmatprep.subr.bf16.mxu0 0
      %4499 = vmatpush1.bf16.msra.mxu0 0
      %4500 = vmatprep.subr.bf16.mxu0 0
      %4501 = vmatpush1.bf16.msra.mxu0 0
      %4502 = vmatprep.subr.bf16.mxu0 0
      %4503 = vmatpush1.bf16.msra.mxu0 0
      %4504 = vmatprep.subr.bf16.mxu0 0
      %4505 = vmatpush1.bf16.msra.mxu0 0
      %4506 = vmatprep.subr.bf16.mxu0 0
      %4507 = vmatpush1.bf16.msra.mxu0 %v4487
      %4508 = vmatprep.subr.bf16.mxu0 0
      %4509 = vmatpush2.bf16.msra.mxu0 0
      %4510 = vmatprep.subr.bf16.mxu0 0
      %4511 = vmatpush2.bf16.msra.mxu0 0
      %4512 = vmatprep.subr.bf16.mxu0 0
      %4513 = vmatpush2.bf16.msra.mxu0 0
      %4514 = vmatprep.subr.bf16.mxu0 0
      %4515 = vmatpush2.bf16.msra.mxu0 0
      %4516 = vmatprep.subr.bf16.mxu0 0
      %4517 = vmatpush2.bf16.msra.mxu0 0
      %4518 = vmatprep.subr.bf16.mxu0 0
      %4519 = vmatpush2.bf16.msra.mxu0 0
      %4520 = vmatprep.subr.bf16.mxu0 0
      %4521 = vmatpush2.bf16.msra.mxu0 0
      %4522 = vmatprep.subr.bf16.mxu0 0
      %4523 = vmatpush2.bf16.msra.mxu0 0
      %4524 = vmatprep.mubr.bf16.mxu0 0
      %4525 = vmatmul.mubr.bf16.gmra.mxu0 %v4490
      %v4526 = vpop.f32.mrf.mxu0
      %v4527 = vadd.f32 0.0, %v4526
      %v4528 = vpop.f32.mrf.mxu0
      %v4529 = vpop.f32.mrf.mxu0
      %v4530 = vpop.f32.mrf.mxu0
      %4531 = vdwg.mxu0
      %4532 = vrot.lane.b32.xlu0 %v1225, 72
      %v4533 = vpop.permute.xlu0 %4532
      %v4536 = vsel %vm1597, %v4299, 0
      %4538 = vmatprep.subr.bf16.mxu0 0
      %4539 = vmatpush1.bf16.msra.mxu0 0
      %4540 = vmatprep.subr.bf16.mxu0 0
      %4541 = vmatpush1.bf16.msra.mxu0 0
      %4542 = vmatprep.subr.bf16.mxu0 0
      %4543 = vmatpush1.bf16.msra.mxu0 0
      %4544 = vmatprep.subr.bf16.mxu0 0
      %4545 = vmatpush1.bf16.msra.mxu0 0
      %4546 = vmatprep.subr.bf16.mxu0 0
      %4547 = vmatpush1.bf16.msra.mxu0 0
      %4548 = vmatprep.subr.bf16.mxu0 0
      %4549 = vmatpush1.bf16.msra.mxu0 0
      %4550 = vmatprep.subr.bf16.mxu0 0
      %4551 = vmatpush1.bf16.msra.mxu0 0
      %4552 = vmatprep.subr.bf16.mxu0 0
      %4553 = vmatpush1.bf16.msra.mxu0 %v4533
      %4554 = vmatprep.subr.bf16.mxu0 0
      %4555 = vmatpush2.bf16.msra.mxu0 0
      %4556 = vmatprep.subr.bf16.mxu0 0
      %4557 = vmatpush2.bf16.msra.mxu0 0
      %4558 = vmatprep.subr.bf16.mxu0 0
      %4559 = vmatpush2.bf16.msra.mxu0 0
      %4560 = vmatprep.subr.bf16.mxu0 0
      %4561 = vmatpush2.bf16.msra.mxu0 0
      %4562 = vmatprep.subr.bf16.mxu0 0
      %4563 = vmatpush2.bf16.msra.mxu0 0
      %4564 = vmatprep.subr.bf16.mxu0 0
      %4565 = vmatpush2.bf16.msra.mxu0 0
      %4566 = vmatprep.subr.bf16.mxu0 0
      %4567 = vmatpush2.bf16.msra.mxu0 0
      %4568 = vmatprep.subr.bf16.mxu0 0
      %4569 = vmatpush2.bf16.msra.mxu0 0
      %4570 = vmatprep.mubr.bf16.mxu0 0
      %4571 = vmatmul.mubr.bf16.gmra.mxu0 %v4536
      %v4572 = vpop.f32.mrf.mxu0
      %v4573 = vadd.f32 0.0, %v4572
      %v4574 = vpop.f32.mrf.mxu0
      %v4575 = vpop.f32.mrf.mxu0
      %v4576 = vpop.f32.mrf.mxu0
      %4577 = vdwg.mxu0
      %4578 = vrot.lane.b32.xlu0 %v1226, 72
      %v4579 = vpop.permute.xlu0 %4578
      %v4582 = vsel %vm1597, %v4300, 0
      %4584 = vmatprep.subr.bf16.mxu0 0
      %4585 = vmatpush1.bf16.msra.mxu0 0
      %4586 = vmatprep.subr.bf16.mxu0 0
      %4587 = vmatpush1.bf16.msra.mxu0 0
      %4588 = vmatprep.subr.bf16.mxu0 0
      %4589 = vmatpush1.bf16.msra.mxu0 0
      %4590 = vmatprep.subr.bf16.mxu0 0
      %4591 = vmatpush1.bf16.msra.mxu0 0
      %4592 = vmatprep.subr.bf16.mxu0 0
      %4593 = vmatpush1.bf16.msra.mxu0 0
      %4594 = vmatprep.subr.bf16.mxu0 0
      %4595 = vmatpush1.bf16.msra.mxu0 0
      %4596 = vmatprep.subr.bf16.mxu0 0
      %4597 = vmatpush1.bf16.msra.mxu0 0
      %4598 = vmatprep.subr.bf16.mxu0 0
      %4599 = vmatpush1.bf16.msra.mxu0 %v4579
      %4600 = vmatprep.subr.bf16.mxu0 0
      %4601 = vmatpush2.bf16.msra.mxu0 0
      %4602 = vmatprep.subr.bf16.mxu0 0
      %4603 = vmatpush2.bf16.msra.mxu0 0
      %4604 = vmatprep.subr.bf16.mxu0 0
      %4605 = vmatpush2.bf16.msra.mxu0 0
      %4606 = vmatprep.subr.bf16.mxu0 0
      %4607 = vmatpush2.bf16.msra.mxu0 0
      %4608 = vmatprep.subr.bf16.mxu0 0
      %4609 = vmatpush2.bf16.msra.mxu0 0
      %4610 = vmatprep.subr.bf16.mxu0 0
      %4611 = vmatpush2.bf16.msra.mxu0 0
      %4612 = vmatprep.subr.bf16.mxu0 0
      %4613 = vmatpush2.bf16.msra.mxu0 0
      %4614 = vmatprep.subr.bf16.mxu0 0
      %4615 = vmatpush2.bf16.msra.mxu0 0
      %4616 = vmatprep.mubr.bf16.mxu0 0
      %4617 = vmatmul.mubr.bf16.gmra.mxu0 %v4582
      %v4618 = vpop.f32.mrf.mxu0
      %v4619 = vadd.f32 0.0, %v4618
      %v4620 = vpop.f32.mrf.mxu0
      %v4621 = vpop.f32.mrf.mxu0
      %v4622 = vpop.f32.mrf.mxu0
      %4623 = vdwg.mxu0
      %4624 = vrot.lane.b32.xlu0 %v1227, 72
      %v4625 = vpop.permute.xlu0 %4624
      %v4628 = vsel %vm1597, %v4301, 0
      %4630 = vmatprep.subr.bf16.mxu0 0
      %4631 = vmatpush1.bf16.msra.mxu0 0
      %4632 = vmatprep.subr.bf16.mxu0 0
      %4633 = vmatpush1.bf16.msra.mxu0 0
      %4634 = vmatprep.subr.bf16.mxu0 0
      %4635 = vmatpush1.bf16.msra.mxu0 0
      %4636 = vmatprep.subr.bf16.mxu0 0
      %4637 = vmatpush1.bf16.msra.mxu0 0
      %4638 = vmatprep.subr.bf16.mxu0 0
      %4639 = vmatpush1.bf16.msra.mxu0 0
      %4640 = vmatprep.subr.bf16.mxu0 0
      %4641 = vmatpush1.bf16.msra.mxu0 0
      %4642 = vmatprep.subr.bf16.mxu0 0
      %4643 = vmatpush1.bf16.msra.mxu0 0
      %4644 = vmatprep.subr.bf16.mxu0 0
      %4645 = vmatpush1.bf16.msra.mxu0 %v4625
      %4646 = vmatprep.subr.bf16.mxu0 0
      %4647 = vmatpush2.bf16.msra.mxu0 0
      %4648 = vmatprep.subr.bf16.mxu0 0
      %4649 = vmatpush2.bf16.msra.mxu0 0
      %4650 = vmatprep.subr.bf16.mxu0 0
      %4651 = vmatpush2.bf16.msra.mxu0 0
      %4652 = vmatprep.subr.bf16.mxu0 0
      %4653 = vmatpush2.bf16.msra.mxu0 0
      %4654 = vmatprep.subr.bf16.mxu0 0
      %4655 = vmatpush2.bf16.msra.mxu0 0
      %4656 = vmatprep.subr.bf16.mxu0 0
      %4657 = vmatpush2.bf16.msra.mxu0 0
      %4658 = vmatprep.subr.bf16.mxu0 0
      %4659 = vmatpush2.bf16.msra.mxu0 0
      %4660 = vmatprep.subr.bf16.mxu0 0
      %4661 = vmatpush2.bf16.msra.mxu0 0
      %4662 = vmatprep.mubr.bf16.mxu0 0
      %4663 = vmatmul.mubr.bf16.gmra.mxu0 %v4628
      %v4664 = vpop.f32.mrf.mxu0
      %v4665 = vadd.f32 0.0, %v4664
      %v4666 = vpop.f32.mrf.mxu0
      %v4667 = vpop.f32.mrf.mxu0
      %v4668 = vpop.f32.mrf.mxu0
      %4669 = vdwg.mxu0
      %4678 = vrot.lane.b32.xlu0 %v2615, 8
      %v4679 = vpop.permute.xlu0 %4678
      %4680 = vrot.lane.b32.xlu0 %v2661, 8
      %v4681 = vpop.permute.xlu0 %4680
      %4682 = vrot.lane.b32.xlu0 %v2707, 8
      %v4683 = vpop.permute.xlu0 %4682
      %4684 = vrot.lane.b32.xlu0 %v2753, 8
      %v4685 = vpop.permute.xlu0 %4684
      %4686 = vrot.lane.b32.xlu0 %v2799, 8
      %v4687 = vpop.permute.xlu0 %4686
      %4688 = vrot.lane.b32.xlu0 %v2845, 8
      %v4689 = vpop.permute.xlu0 %4688
      %4690 = vrot.lane.b32.xlu0 %v2891, 8
      %v4691 = vpop.permute.xlu0 %4690
      %4692 = vrot.lane.b32.xlu0 %v2937, 8
      %v4693 = vpop.permute.xlu0 %4692
      %4710 = vrot.lane.b32.xlu0 %v3479, 16
      %v4711 = vpop.permute.xlu0 %4710
      %4712 = vrot.lane.b32.xlu0 %v3525, 16
      %v4713 = vpop.permute.xlu0 %4712
      %4714 = vrot.lane.b32.xlu0 %v3571, 16
      %v4715 = vpop.permute.xlu0 %4714
      %4716 = vrot.lane.b32.xlu0 %v3617, 16
      %v4717 = vpop.permute.xlu0 %4716
      %4718 = vrot.lane.b32.xlu0 %v3663, 16
      %v4719 = vpop.permute.xlu0 %4718
      %4720 = vrot.lane.b32.xlu0 %v3709, 16
      %v4721 = vpop.permute.xlu0 %4720
      %4722 = vrot.lane.b32.xlu0 %v3755, 16
      %v4723 = vpop.permute.xlu0 %4722
      %4724 = vrot.lane.b32.xlu0 %v3801, 16
      %v4725 = vpop.permute.xlu0 %4724
      %4742 = vrot.lane.b32.xlu0 %v4343, 24
      %v4743 = vpop.permute.xlu0 %4742
      %4744 = vrot.lane.b32.xlu0 %v4389, 24
      %v4745 = vpop.permute.xlu0 %4744
      %4746 = vrot.lane.b32.xlu0 %v4435, 24
      %v4747 = vpop.permute.xlu0 %4746
      %4748 = vrot.lane.b32.xlu0 %v4481, 24
      %v4749 = vpop.permute.xlu0 %4748
      %4750 = vrot.lane.b32.xlu0 %v4527, 24
      %v4751 = vpop.permute.xlu0 %4750
      %4752 = vrot.lane.b32.xlu0 %v4573, 24
      %v4753 = vpop.permute.xlu0 %4752
      %4754 = vrot.lane.b32.xlu0 %v4619, 24
      %v4755 = vpop.permute.xlu0 %4754
      %4756 = vrot.lane.b32.xlu0 %v4665, 24
      %v4757 = vpop.permute.xlu0 %4756
      %v4766 = vsel %vm1228, %v1736, %v4679
      %v4767 = vsel %vm1228, %v1783, %v4681
      %v4768 = vsel %vm1228, %v1830, %v4683
      %v4769 = vsel %vm1228, %v1877, %v4685
      %v4770 = vsel %vm1228, %v1924, %v4687
      %v4771 = vsel %vm1228, %v1971, %v4689
      %v4772 = vsel %vm1228, %v2018, %v4691
      %v4773 = vsel %vm1228, %v2065, %v4693
      %v4774 = vsel %vm1597, %v4766, %v4711
      %v4775 = vsel %vm1597, %v4767, %v4713
      %v4776 = vsel %vm1597, %v4768, %v4715
      %v4777 = vsel %vm1597, %v4769, %v4717
      %v4778 = vsel %vm1597, %v4770, %v4719
      %v4779 = vsel %vm1597, %v4771, %v4721
      %v4780 = vsel %vm1597, %v4772, %v4723
      %v4781 = vsel %vm1597, %v4773, %v4725
      %vm4782 = vcmask 195584
      %v4783 = vsel %vm4782, %v4774, %v4743
      %v4784 = vsel %vm4782, %v4775, %v4745
      %v4785 = vsel %vm4782, %v4776, %v4747
      %v4786 = vsel %vm4782, %v4777, %v4749
      %v4787 = vsel %vm4782, %v4778, %v4751
      %v4788 = vsel %vm4782, %v4779, %v4753
      %v4789 = vsel %vm4782, %v4780, %v4755
      %v4790 = vsel %vm4782, %v4781, %v4757
      %v4791 = vpack.c.bf16 %v4784, %v4783
      %v4792 = vpack.c.bf16 %v4786, %v4785
      %v4793 = vpack.c.bf16 %v4788, %v4787
      %v4794 = vpack.c.bf16 %v4790, %v4789
      %v4795 = vld [vmem:[%s10] sm:$0xf]
      %v4796 = vld [vmem:[%s10 + $0x4] sm:$0xf]
      %v4797 = vld [vmem:[%s10 + $0x8] sm:$0xf]
      %v4798 = vld [vmem:[%s10 + $0xc] sm:$0xf]
      %v4803 = vunpack.c.l.b16 %v4795
      %v4804 = vunpack.c.l.b16 %v4796
      %v4805 = vunpack.c.l.b16 %v4797
      %v4806 = vunpack.c.l.b16 %v4798
      %v4807 = vpack.c.b16 %v4804, %v4803
      %v4808 = vpack.c.b16 %v4806, %v4805
      %v4812 = vsel %vm574, %v4791, 0
      %v4815 = vsel %vm574, %v4792, 0
      %v4818 = vsel %vm574, %v4793, 0
      %v4821 = vsel %vm574, %v4794, 0
      %4823 = vmatprep.subr.bf16.mxu0 0
      %4824 = vmatpush1.bf16.msra.mxu0 0
      %4825 = vmatprep.subr.bf16.mxu0 0
      %4826 = vmatpush1.bf16.msra.mxu0 0
      %4827 = vmatprep.subr.bf16.mxu0 0
      %4828 = vmatpush1.bf16.msra.mxu0 0
      %4829 = vmatprep.subr.bf16.mxu0 0
      %4830 = vmatpush1.bf16.msra.mxu0 0
      %4831 = vmatprep.subr.bf16.mxu0 0
      %4832 = vmatpush1.bf16.msra.mxu0 0
      %4833 = vmatprep.subr.bf16.mxu0 0
      %4834 = vmatpush1.bf16.msra.mxu0 0
      %4835 = vmatprep.subr.bf16.mxu0 0
      %4836 = vmatpush1.bf16.msra.mxu0 %v4808
      %4837 = vmatprep.subr.bf16.mxu0 0
      %4838 = vmatpush1.bf16.msra.mxu0 %v4807
      %4839 = vmatprep.subr.bf16.mxu0 0
      %4840 = vmatpush2.bf16.msra.mxu0 0
      %4841 = vmatprep.subr.bf16.mxu0 0
      %4842 = vmatpush2.bf16.msra.mxu0 0
      %4843 = vmatprep.subr.bf16.mxu0 0
      %4844 = vmatpush2.bf16.msra.mxu0 0
      %4845 = vmatprep.subr.bf16.mxu0 0
      %4846 = vmatpush2.bf16.msra.mxu0 0
      %4847 = vmatprep.subr.bf16.mxu0 0
      %4848 = vmatpush2.bf16.msra.mxu0 0
      %4849 = vmatprep.subr.bf16.mxu0 0
      %4850 = vmatpush2.bf16.msra.mxu0 0
      %4851 = vmatprep.subr.bf16.mxu0 0
      %4852 = vmatpush2.bf16.msra.mxu0 0
      %4853 = vmatprep.subr.bf16.mxu0 0
      %4854 = vmatpush2.bf16.msra.mxu0 0
      %4855 = vmatprep.mubr.bf16.mxu0 0
      %4856 = vmatmul.mubr.bf16.gmra.mxu0 %v4812
      %v4857 = vpop.f32.mrf.mxu0
      %v4858 = vadd.f32 0.0, %v4857
      %v4859 = vpop.f32.mrf.mxu0
      %v4860 = vpop.f32.mrf.mxu0
      %v4861 = vadd.f32 0.0, %v4860
      %v4862 = vpop.f32.mrf.mxu0
      %4863 = vmatprep.mubr.bf16.mxu0 0
      %4864 = vmatmul.mubr.bf16.gmra.mxu0 %v4815
      %v4865 = vpop.f32.mrf.mxu0
      %v4866 = vadd.f32 0.0, %v4865
      %v4867 = vpop.f32.mrf.mxu0
      %v4868 = vpop.f32.mrf.mxu0
      %v4869 = vadd.f32 0.0, %v4868
      %v4870 = vpop.f32.mrf.mxu0
      %4871 = vmatprep.mubr.bf16.mxu0 0
      %4872 = vmatmul.mubr.bf16.gmra.mxu0 %v4818
      %v4873 = vpop.f32.mrf.mxu0
      %v4874 = vadd.f32 0.0, %v4873
      %v4875 = vpop.f32.mrf.mxu0
      %v4876 = vpop.f32.mrf.mxu0
      %v4877 = vadd.f32 0.0, %v4876
      %v4878 = vpop.f32.mrf.mxu0
      %4879 = vmatprep.mubr.bf16.mxu0 0
      %4880 = vmatmul.mubr.bf16.gmra.mxu0 %v4821
      %v4881 = vpop.f32.mrf.mxu0
      %v4882 = vadd.f32 0.0, %v4881
      %v4883 = vpop.f32.mrf.mxu0
      %v4884 = vpop.f32.mrf.mxu0
      %v4885 = vadd.f32 0.0, %v4884
      %v4886 = vpop.f32.mrf.mxu0
      %4887 = vdwg.mxu0
      %v4888 = vadd.f32 %v548, %v4858
      %v4889 = vadd.f32 %v549, %v4861
      %v4890 = vadd.f32 %v550, %v4866
      %v4891 = vadd.f32 %v551, %v4869
      %v4892 = vadd.f32 %v552, %v4874
      %v4893 = vadd.f32 %v553, %v4877
      %v4894 = vadd.f32 %v554, %v4882
      %v4895 = vadd.f32 %v555, %v4885
      %v4896 = vld [vmem:[%s11] sm:$0x1]
      %v4898 = vlaneseq
      %v4899 = vshrl.u32 %v4898, 7
      %v4900 = vsub.s32 0, %v4899
      %v4901 = vrot.slane %v4896, %v4900
      %v4903 = vadd.f32 %v4888, %v4901
      %v4904 = vadd.f32 %v4889, %v4901
      %v4905 = vadd.f32 %v4890, %v4901
      %v4906 = vadd.f32 %v4891, %v4901
      %v4907 = vadd.f32 %v4892, %v4901
      %v4908 = vadd.f32 %v4893, %v4901
      %v4909 = vadd.f32 %v4894, %v4901
      %v4910 = vadd.f32 %v4895, %v4901
      %v4911 = vld [vmem:[%s6] sm:$0x1]
      %v4912 = vld [vmem:[%s7] sm:$0x1]
      %v4913 = vsel %vm574, %v4903, 0.0
      %4914 = vadd.xlane.f32.xlu0 %v4913
      %v4915 = vpop.xlane.xlu0 %4914
      %v4916 = vsel %vm574, %v4904, 0.0
      %4917 = vadd.xlane.f32.xlu0 %v4916
      %v4918 = vpop.xlane.xlu0 %4917
      %v4919 = vsel %vm574, %v4905, 0.0
      %4920 = vadd.xlane.f32.xlu0 %v4919
      %v4921 = vpop.xlane.xlu0 %4920
      %v4922 = vsel %vm574, %v4906, 0.0
      %4923 = vadd.xlane.f32.xlu0 %v4922
      %v4924 = vpop.xlane.xlu0 %4923
      %v4925 = vsel %vm574, %v4907, 0.0
      %4926 = vadd.xlane.f32.xlu0 %v4925
      %v4927 = vpop.xlane.xlu0 %4926
      %v4928 = vsel %vm574, %v4908, 0.0
      %4929 = vadd.xlane.f32.xlu0 %v4928
      %v4930 = vpop.xlane.xlu0 %4929
      %v4931 = vsel %vm574, %v4909, 0.0
      %4932 = vadd.xlane.f32.xlu0 %v4931
      %v4933 = vpop.xlane.xlu0 %4932
      %v4934 = vsel %vm574, %v4910, 0.0
      %4935 = vadd.xlane.f32.xlu0 %v4934
      %v4936 = vpop.xlane.xlu0 %4935
      %v4937 = vmul.f32 %v4915, %v599
      %v4938 = vmul.f32 %v4918, %v599
      %v4939 = vmul.f32 %v4921, %v599
      %v4940 = vmul.f32 %v4924, %v599
      %v4941 = vmul.f32 %v4927, %v599
      %v4942 = vmul.f32 %v4930, %v599
      %v4943 = vmul.f32 %v4933, %v599
      %v4944 = vmul.f32 %v4936, %v599
      %v4945 = vsub.f32 %v4903, %v4937
      %v4946 = vsub.f32 %v4904, %v4938
      %v4947 = vsub.f32 %v4905, %v4939
      %v4948 = vsub.f32 %v4906, %v4940
      %v4949 = vsub.f32 %v4907, %v4941
      %v4950 = vsub.f32 %v4908, %v4942
      %v4951 = vsub.f32 %v4909, %v4943
      %v4952 = vsub.f32 %v4910, %v4944
      %v4953 = vmul.f32 %v4945, %v4945
      %v4954 = vmul.f32 %v4946, %v4946
      %v4955 = vmul.f32 %v4947, %v4947
      %v4956 = vmul.f32 %v4948, %v4948
      %v4957 = vmul.f32 %v4949, %v4949
      %v4958 = vmul.f32 %v4950, %v4950
      %v4959 = vmul.f32 %v4951, %v4951
      %v4960 = vmul.f32 %v4952, %v4952
      %v4961 = vsel %vm574, %v4953, 0.0
      %4962 = vadd.xlane.f32.xlu0 %v4961
      %v4963 = vpop.xlane.xlu0 %4962
      %v4964 = vsel %vm574, %v4954, 0.0
      %4965 = vadd.xlane.f32.xlu0 %v4964
      %v4966 = vpop.xlane.xlu0 %4965
      %v4967 = vsel %vm574, %v4955, 0.0
      %4968 = vadd.xlane.f32.xlu0 %v4967
      %v4969 = vpop.xlane.xlu0 %4968
      %v4970 = vsel %vm574, %v4956, 0.0
      %4971 = vadd.xlane.f32.xlu0 %v4970
      %v4972 = vpop.xlane.xlu0 %4971
      %v4973 = vsel %vm574, %v4957, 0.0
      %4974 = vadd.xlane.f32.xlu0 %v4973
      %v4975 = vpop.xlane.xlu0 %4974
      %v4976 = vsel %vm574, %v4958, 0.0
      %4977 = vadd.xlane.f32.xlu0 %v4976
      %v4978 = vpop.xlane.xlu0 %4977
      %v4979 = vsel %vm574, %v4959, 0.0
      %4980 = vadd.xlane.f32.xlu0 %v4979
      %v4981 = vpop.xlane.xlu0 %4980
      %v4982 = vsel %vm574, %v4960, 0.0
      %4983 = vadd.xlane.f32.xlu0 %v4982
      %v4984 = vpop.xlane.xlu0 %4983
      %v4985 = vmul.f32 %v4963, %v599
      %v4986 = vmul.f32 %v4966, %v599
      %v4987 = vmul.f32 %v4969, %v599
      %v4988 = vmul.f32 %v4972, %v599
      %v4989 = vmul.f32 %v4975, %v599
      %v4990 = vmul.f32 %v4978, %v599
      %v4991 = vmul.f32 %v4981, %v599
      %v4992 = vmul.f32 %v4984, %v599
      %v4993 = vadd.f32 %v4985, 1e-05
      %v4994 = vadd.f32 %v4986, 1e-05
      %v4995 = vadd.f32 %v4987, 1e-05
      %v4996 = vadd.f32 %v4988, 1e-05
      %v4997 = vadd.f32 %v4989, 1e-05
      %v4998 = vadd.f32 %v4990, 1e-05
      %v4999 = vadd.f32 %v4991, 1e-05
      %v5000 = vadd.f32 %v4992, 1e-05
      %v5001 = vrsqrt.pop %v4993
      %v5002 = vrsqrt.pop %v4994
      %v5003 = vrsqrt.pop %v4995
      %v5004 = vrsqrt.pop %v4996
      %v5005 = vrsqrt.pop %v4997
      %v5006 = vrsqrt.pop %v4998
      %v5007 = vrsqrt.pop %v4999
      %v5008 = vrsqrt.pop %v5000
      %v5009 = vmul.f32 %v4945, %v5001
      %v5010 = vmul.f32 %v4946, %v5002
      %v5011 = vmul.f32 %v4947, %v5003
      %v5012 = vmul.f32 %v4948, %v5004
      %v5013 = vmul.f32 %v4949, %v5005
      %v5014 = vmul.f32 %v4950, %v5006
      %v5015 = vmul.f32 %v4951, %v5007
      %v5016 = vmul.f32 %v4952, %v5008
      %v5018 = vlaneseq
      %v5019 = vshrl.u32 %v5018, 7
      %v5020 = vsub.s32 0, %v5019
      %v5021 = vrot.slane %v4911, %v5020
      %v5023 = vmul.f32 %v5009, %v5021
      %v5024 = vmul.f32 %v5010, %v5021
      %v5025 = vmul.f32 %v5011, %v5021
      %v5026 = vmul.f32 %v5012, %v5021
      %v5027 = vmul.f32 %v5013, %v5021
      %v5028 = vmul.f32 %v5014, %v5021
      %v5029 = vmul.f32 %v5015, %v5021
      %v5030 = vmul.f32 %v5016, %v5021
      %v5032 = vlaneseq
      %v5033 = vshrl.u32 %v5032, 7
      %v5034 = vsub.s32 0, %v5033
      %v5035 = vrot.slane %v4912, %v5034
      %v5037 = vadd.f32 %v5023, %v5035
      %v5038 = vadd.f32 %v5024, %v5035
      %v5039 = vadd.f32 %v5025, %v5035
      %v5040 = vadd.f32 %v5026, %v5035
      %v5041 = vadd.f32 %v5027, %v5035
      %v5042 = vadd.f32 %v5028, %v5035
      %v5043 = vadd.f32 %v5029, %v5035
      %v5044 = vadd.f32 %v5030, %v5035
      %v5045 = vpack.c.bf16 %v5038, %v5037
      %v5046 = vpack.c.bf16 %v5040, %v5039
      %v5047 = vpack.c.bf16 %v5042, %v5041
      %v5048 = vpack.c.bf16 %v5044, %v5043
      %v5049 = vld [vmem:[%s12] sm:$0xf]
      %v5050 = vld [vmem:[%s12 + $0x4] sm:$0xf]
      %v5051 = vld [vmem:[%s12 + $0x8] sm:$0xf]
      %v5052 = vld [vmem:[%s12 + $0xc] sm:$0xf]
      %v5053 = vld [vmem:[%s13] sm:$0x1]
      %v5055 = vlaneseq
      %v5056 = vshrl.u32 %v5055, 7
      %v5057 = vsub.s32 0, %v5056
      %v5058 = vrot.slane %v5053, %v5057
      %v5064 = vunpack.c.l.b16 %v5049
      %v5065 = vunpack.c.l.b16 %v5050
      %v5066 = vunpack.c.l.b16 %v5051
      %v5067 = vunpack.c.l.b16 %v5052
      %v5068 = vpack.c.b16 %v5065, %v5064
      %v5069 = vpack.c.b16 %v5067, %v5066
      %v5073 = vsel %vm574, %v5045, 0
      %v5076 = vsel %vm574, %v5046, 0
      %v5079 = vsel %vm574, %v5047, 0
      %v5082 = vsel %vm574, %v5048, 0
      %5084 = vmatprep.subr.bf16.mxu0 0
      %5085 = vmatpush1.bf16.msra.mxu0 0
      %5086 = vmatprep.subr.bf16.mxu0 0
      %5087 = vmatpush1.bf16.msra.mxu0 0
      %5088 = vmatprep.subr.bf16.mxu0 0
      %5089 = vmatpush1.bf16.msra.mxu0 0
      %5090 = vmatprep.subr.bf16.mxu0 0
      %5091 = vmatpush1.bf16.msra.mxu0 0
      %5092 = vmatprep.subr.bf16.mxu0 0
      %5093 = vmatpush1.bf16.msra.mxu0 0
      %5094 = vmatprep.subr.bf16.mxu0 0
      %5095 = vmatpush1.bf16.msra.mxu0 0
      %5096 = vmatprep.subr.bf16.mxu0 0
      %5097 = vmatpush1.bf16.msra.mxu0 %v5069
      %5098 = vmatprep.subr.bf16.mxu0 0
      %5099 = vmatpush1.bf16.msra.mxu0 %v5068
      %5100 = vmatprep.subr.bf16.mxu0 0
      %5101 = vmatpush2.bf16.msra.mxu0 0
      %5102 = vmatprep.subr.bf16.mxu0 0
      %5103 = vmatpush2.bf16.msra.mxu0 0
      %5104 = vmatprep.subr.bf16.mxu0 0
      %5105 = vmatpush2.bf16.msra.mxu0 0
      %5106 = vmatprep.subr.bf16.mxu0 0
      %5107 = vmatpush2.bf16.msra.mxu0 0
      %5108 = vmatprep.subr.bf16.mxu0 0
      %5109 = vmatpush2.bf16.msra.mxu0 0
      %5110 = vmatprep.subr.bf16.mxu0 0
      %5111 = vmatpush2.bf16.msra.mxu0 0
      %5112 = vmatprep.subr.bf16.mxu0 0
      %5113 = vmatpush2.bf16.msra.mxu0 0
      %5114 = vmatprep.subr.bf16.mxu0 0
      %5115 = vmatpush2.bf16.msra.mxu0 0
      %5116 = vmatprep.mubr.bf16.mxu0 0
      %5117 = vmatmul.mubr.bf16.gmra.mxu0 %v5073
      %v5118 = vpop.f32.mrf.mxu0
      %v5119 = vadd.f32 %v5058, %v5118
      %v5120 = vpop.f32.mrf.mxu0
      %v5121 = vpop.f32.mrf.mxu0
      %v5122 = vadd.f32 %v5058, %v5121
      %v5123 = vpop.f32.mrf.mxu0
      %5124 = vmatprep.mubr.bf16.mxu0 0
      %5125 = vmatmul.mubr.bf16.gmra.mxu0 %v5076
      %v5126 = vpop.f32.mrf.mxu0
      %v5127 = vadd.f32 %v5058, %v5126
      %v5128 = vpop.f32.mrf.mxu0
      %v5129 = vpop.f32.mrf.mxu0
      %v5130 = vadd.f32 %v5058, %v5129
      %v5131 = vpop.f32.mrf.mxu0
      %5132 = vmatprep.mubr.bf16.mxu0 0
      %5133 = vmatmul.mubr.bf16.gmra.mxu0 %v5079
      %v5134 = vpop.f32.mrf.mxu0
      %v5135 = vadd.f32 %v5058, %v5134
      %v5136 = vpop.f32.mrf.mxu0
      %v5137 = vpop.f32.mrf.mxu0
      %v5138 = vadd.f32 %v5058, %v5137
      %v5139 = vpop.f32.mrf.mxu0
      %5140 = vmatprep.mubr.bf16.mxu0 0
      %5141 = vmatmul.mubr.bf16.gmra.mxu0 %v5082
      %v5142 = vpop.f32.mrf.mxu0
      %v5143 = vadd.f32 %v5058, %v5142
      %v5144 = vpop.f32.mrf.mxu0
      %v5145 = vpop.f32.mrf.mxu0
      %v5146 = vadd.f32 %v5058, %v5145
      %v5147 = vpop.f32.mrf.mxu0
      %5148 = vdwg.mxu0
      %v5149 = vmul.f32 %v5119, 1.702
      %v5150 = vmul.f32 %v5122, 1.702
      %v5151 = vmul.f32 %v5127, 1.702
      %v5152 = vmul.f32 %v5130, 1.702
      %v5153 = vmul.f32 %v5135, 1.702
      %v5154 = vmul.f32 %v5138, 1.702
      %v5155 = vmul.f32 %v5143, 1.702
      %v5156 = vmul.f32 %v5146, 1.702
      %v5157 = vxor.u32 %v5149, 2147483648
      %v5158 = vxor.u32 %v5150, 2147483648
      %v5159 = vxor.u32 %v5151, 2147483648
      %v5160 = vxor.u32 %v5152, 2147483648
      %v5161 = vxor.u32 %v5153, 2147483648
      %v5162 = vxor.u32 %v5154, 2147483648
      %v5163 = vxor.u32 %v5155, 2147483648
      %v5164 = vxor.u32 %v5156, 2147483648
      %v5165 = vmul.f32 %v5157, 1.442695
      %v5166 = vpow.pop %v5165
      %v5167 = vmul.f32 %v5158, 1.442695
      %v5168 = vpow.pop %v5167
      %v5169 = vmul.f32 %v5159, 1.442695
      %v5170 = vpow.pop %v5169
      %v5171 = vmul.f32 %v5160, 1.442695
      %v5172 = vpow.pop %v5171
      %v5173 = vmul.f32 %v5161, 1.442695
      %v5174 = vpow.pop %v5173
      %v5175 = vmul.f32 %v5162, 1.442695
      %v5176 = vpow.pop %v5175
      %v5177 = vmul.f32 %v5163, 1.442695
      %v5178 = vpow.pop %v5177
      %v5179 = vmul.f32 %v5164, 1.442695
      %v5180 = vpow.pop %v5179
      %v5181 = vadd.f32 %v5166, 1.0
      %v5182 = vadd.f32 %v5168, 1.0
      %v5183 = vadd.f32 %v5170, 1.0
      %v5184 = vadd.f32 %v5172, 1.0
      %v5185 = vadd.f32 %v5174, 1.0
      %v5186 = vadd.f32 %v5176, 1.0
      %v5187 = vadd.f32 %v5178, 1.0
      %v5188 = vadd.f32 %v5180, 1.0
      %v5189 = vrcp.pop %v5181
      %v5190 = vmul.f32 1.0, %v5189
      %v5191 = vrcp.pop %v5182
      %v5192 = vmul.f32 1.0, %v5191
      %v5193 = vrcp.pop %v5183
      %v5194 = vmul.f32 1.0, %v5193
      %v5195 = vrcp.pop %v5184
      %v5196 = vmul.f32 1.0, %v5195
      %v5197 = vrcp.pop %v5185
      %v5198 = vmul.f32 1.0, %v5197
      %v5199 = vrcp.pop %v5186
      %v5200 = vmul.f32 1.0, %v5199
      %v5201 = vrcp.pop %v5187
      %v5202 = vmul.f32 1.0, %v5201
      %v5203 = vrcp.pop %v5188
      %v5204 = vmul.f32 1.0, %v5203
      %v5205 = vmul.f32 %v5119, %v5190
      %v5206 = vmul.f32 %v5122, %v5192
      %v5207 = vmul.f32 %v5127, %v5194
      %v5208 = vmul.f32 %v5130, %v5196
      %v5209 = vmul.f32 %v5135, %v5198
      %v5210 = vmul.f32 %v5138, %v5200
      %v5211 = vmul.f32 %v5143, %v5202
      %v5212 = vmul.f32 %v5146, %v5204
      %v5213 = vpack.c.bf16 %v5206, %v5205
      %v5214 = vpack.c.bf16 %v5208, %v5207
      %v5215 = vpack.c.bf16 %v5210, %v5209
      %v5216 = vpack.c.bf16 %v5212, %v5211
      %v5217 = vld [vmem:[%s14] sm:$0xf]
      %v5218 = vld [vmem:[%s14 + $0x4] sm:$0xf]
      %v5219 = vld [vmem:[%s14 + $0x8] sm:$0xf]
      %v5220 = vld [vmem:[%s14 + $0xc] sm:$0xf]
      %v5221 = vld [vmem:[%s14 + $0x10] sm:$0xf]
      %v5222 = vld [vmem:[%s14 + $0x14] sm:$0xf]
      %v5223 = vld [vmem:[%s14 + $0x18] sm:$0xf]
      %v5224 = vld [vmem:[%s14 + $0x1c] sm:$0xf]
      %v5225 = vld [vmem:[%s14 + $0x20] sm:$0xf]
      %v5226 = vld [vmem:[%s14 + $0x24] sm:$0xf]
      %v5227 = vld [vmem:[%s14 + $0x28] sm:$0xf]
      %v5228 = vld [vmem:[%s14 + $0x2c] sm:$0xf]
      %v5229 = vld [vmem:[%s14 + $0x30] sm:$0xf]
      %v5230 = vld [vmem:[%s14 + $0x34] sm:$0xf]
      %v5231 = vld [vmem:[%s14 + $0x38] sm:$0xf]
      %v5232 = vld [vmem:[%s14 + $0x3c] sm:$0xf]
      %v5233 = vld [vmem:[%s15] sm:$0x1]
      %v5235 = vlaneseq
      %v5236 = vshrl.u32 %v5235, 7
      %v5237 = vsub.s32 0, %v5236
      %v5238 = vrot.slane %v5233, %v5237
      %v5256 = vunpack.c.l.b16 %v5217
      %v5257 = vunpack.c.l.b16 %v5218
      %v5258 = vunpack.c.l.b16 %v5219
      %v5259 = vunpack.c.l.b16 %v5220
      %v5260 = vunpack.c.l.b16 %v5221
      %v5261 = vunpack.c.l.b16 %v5222
      %v5262 = vunpack.c.l.b16 %v5223
      %v5263 = vunpack.c.l.b16 %v5224
      %v5264 = vunpack.c.l.b16 %v5225
      %v5265 = vunpack.c.l.b16 %v5226
      %v5266 = vunpack.c.l.b16 %v5227
      %v5267 = vunpack.c.l.b16 %v5228
      %v5268 = vunpack.c.l.b16 %v5229
      %v5269 = vunpack.c.l.b16 %v5230
      %v5270 = vunpack.c.l.b16 %v5231
      %v5271 = vunpack.c.l.b16 %v5232
      %v5272 = vpack.c.b16 %v5257, %v5256
      %v5273 = vpack.c.b16 %v5259, %v5258
      %v5274 = vpack.c.b16 %v5261, %v5260
      %v5275 = vpack.c.b16 %v5263, %v5262
      %v5276 = vpack.c.b16 %v5265, %v5264
      %v5277 = vpack.c.b16 %v5267, %v5266
      %v5278 = vpack.c.b16 %v5269, %v5268
      %v5279 = vpack.c.b16 %v5271, %v5270
      %5288 = vmatprep.subr.bf16.mxu0 0
      %5289 = vmatpush1.bf16.msra.mxu0 %v5279
      %5290 = vmatprep.subr.bf16.mxu0 0
      %5291 = vmatpush1.bf16.msra.mxu0 %v5278
      %5292 = vmatprep.subr.bf16.mxu0 0
      %5293 = vmatpush1.bf16.msra.mxu0 %v5277
      %5294 = vmatprep.subr.bf16.mxu0 0
      %5295 = vmatpush1.bf16.msra.mxu0 %v5276
      %5296 = vmatprep.subr.bf16.mxu0 0
      %5297 = vmatpush1.bf16.msra.mxu0 %v5275
      %5298 = vmatprep.subr.bf16.mxu0 0
      %5299 = vmatpush1.bf16.msra.mxu0 %v5274
      %5300 = vmatprep.subr.bf16.mxu0 0
      %5301 = vmatpush1.bf16.msra.mxu0 %v5273
      %5302 = vmatprep.subr.bf16.mxu0 0
      %5303 = vmatpush1.bf16.msra.mxu0 %v5272
      %5304 = vmatprep.subr.bf16.mxu0 0
      %5305 = vmatpush2.bf16.msra.mxu0 0
      %5306 = vmatprep.subr.bf16.mxu0 0
      %5307 = vmatpush2.bf16.msra.mxu0 0
      %5308 = vmatprep.subr.bf16.mxu0 0
      %5309 = vmatpush2.bf16.msra.mxu0 0
      %5310 = vmatprep.subr.bf16.mxu0 0
      %5311 = vmatpush2.bf16.msra.mxu0 0
      %5312 = vmatprep.subr.bf16.mxu0 0
      %5313 = vmatpush2.bf16.msra.mxu0 0
      %5314 = vmatprep.subr.bf16.mxu0 0
      %5315 = vmatpush2.bf16.msra.mxu0 0
      %5316 = vmatprep.subr.bf16.mxu0 0
      %5317 = vmatpush2.bf16.msra.mxu0 0
      %5318 = vmatprep.subr.bf16.mxu0 0
      %5319 = vmatpush2.bf16.msra.mxu0 0
      %5320 = vmatprep.mubr.bf16.mxu0 0
      %5321 = vmatmul.mubr.bf16.gmra.mxu0 %v5213
      %v5322 = vpop.f32.mrf.mxu0
      %v5323 = vadd.f32 %v5238, %v5322
      %v5324 = vpop.f32.mrf.mxu0
      %v5325 = vpop.f32.mrf.mxu0
      %v5326 = vadd.f32 %v5238, %v5325
      %v5327 = vpop.f32.mrf.mxu0
      %5328 = vmatprep.mubr.bf16.mxu0 0
      %5329 = vmatmul.mubr.bf16.gmra.mxu0 %v5214
      %v5330 = vpop.f32.mrf.mxu0
      %v5331 = vadd.f32 %v5238, %v5330
      %v5332 = vpop.f32.mrf.mxu0
      %v5333 = vpop.f32.mrf.mxu0
      %v5334 = vadd.f32 %v5238, %v5333
      %v5335 = vpop.f32.mrf.mxu0
      %5336 = vmatprep.mubr.bf16.mxu0 0
      %5337 = vmatmul.mubr.bf16.gmra.mxu0 %v5215
      %v5338 = vpop.f32.mrf.mxu0
      %v5339 = vadd.f32 %v5238, %v5338
      %v5340 = vpop.f32.mrf.mxu0
      %v5341 = vpop.f32.mrf.mxu0
      %v5342 = vadd.f32 %v5238, %v5341
      %v5343 = vpop.f32.mrf.mxu0
      %5344 = vmatprep.mubr.bf16.mxu0 0
      %5345 = vmatmul.mubr.bf16.gmra.mxu0 %v5216
      %v5346 = vpop.f32.mrf.mxu0
      %v5347 = vadd.f32 %v5238, %v5346
      %v5348 = vpop.f32.mrf.mxu0
      %v5349 = vpop.f32.mrf.mxu0
      %v5350 = vadd.f32 %v5238, %v5349
      %v5351 = vpop.f32.mrf.mxu0
      %5352 = vdwg.mxu0
      %v5353 = vadd.f32 %v4903, %v5323
      %v5354 = vadd.f32 %v4904, %v5326
      %v5355 = vadd.f32 %v4905, %v5331
      %v5356 = vadd.f32 %v4906, %v5334
      %v5357 = vadd.f32 %v4907, %v5339
      %v5358 = vadd.f32 %v4908, %v5342
      %v5359 = vadd.f32 %v4909, %v5347
      %v5360 = vadd.f32 %v4910, %v5350
      %5361 = vst.msk [vmem:[%s545] sm:$0xff] %vm574, %v5353
      %5362 = vst.msk [vmem:[%s545 + $0x8] sm:$0xff] %vm574, %v5354
      %5363 = vst.msk [vmem:[%s545 + $0x10] sm:$0xff] %vm574, %v5355
      %5364 = vst.msk [vmem:[%s545 + $0x18] sm:$0xff] %vm574, %v5356
      %5365 = vst.msk [vmem:[%s545 + $0x20] sm:$0xff] %vm574, %v5357
      %5366 = vst.msk [vmem:[%s545 + $0x28] sm:$0xff] %vm574, %v5358
      %5367 = vst.msk [vmem:[%s545 + $0x30] sm:$0xff] %vm574, %v5359
      %5368 = vst.msk [vmem:[%s545 + $0x38] sm:$0xff] %vm574, %v5360
      %s5369 = smul.u32 8, %s27
      %p5370 = scmp.lt.s32.totalorder %s5369, 15
      %s5371 = scalar_select %p5370, %s5369, 15
      %s5372 = smul.addr %s5371, 8
      %s5373 = scalar_lea.vmem %s16, %s5372
      // Predicated region
      $region85: #{tpu_custom_call.1} parent=83 // pred_check
        %p5374 = pneg %p391
      $region86: #{tpu_custom_call.1} parent=83 // pred_check_branch
        %5376 = sbr.rel (%p5374) target = $region88
      $region87: #{tpu_custom_call.1} parent=83 // pred_region
        %s5377 = smul.u32 8, %s27
      $region88: #{tpu_custom_call.1} parent=83 // pred_fallthru
        _
    $region84: #{tpu_custom_call.1} parent=5 // pred_fallthru
      _
    %p5378 = scmp.le.s32.totalorder 2, %s22
    // Predicated region
    $region89: #{tpu_custom_call.1} parent=5 // pred_check
      %p5379 = pneg %p5378
    $region90: #{tpu_custom_call.1} parent=5 // pred_check_branch
      %5381 = sbr.rel (%p5379) target = $region92
    $region91: #{tpu_custom_call.1} parent=5 // pred_region
      %s5382 = ssub.s32 %s22, 2
      // Predicated region
      $region93: #{tpu_custom_call.1} parent=91 // pred_check
        %p5383 = pneg %p397
      $region94: #{tpu_custom_call.1} parent=91 // pred_check_branch
        %5385 = sbr.rel (%p5383) target = $region96
      $region95: #{tpu_custom_call.1} parent=91 // pred_region
        %s5386 = smul.u32 8, %s28
        %p5387 = scmp.lt.s32.totalorder %s5386, 15
        %s5388 = scalar_select %p5387, %s5386, 15
        %s5389 = smul.addr %s5388, 8
        %s5390 = scalar_lea.vmem %s16, %s5389
      $region96: #{tpu_custom_call.1} parent=91 // pred_fallthru
        _
    $region92: #{tpu_custom_call.1} parent=5 // pred_fallthru
      _
  $region6: #{tpu_custom_call.1} parent=0 // loop_footer
    %s26 = sadd.s32 1, %s22
  $region7: #{tpu_custom_call.1} parent=0 // loop_footer_branch
    %21 = sbr.rel target = $region3
  $region8: #{tpu_custom_call.1} parent=0 // loop_exit
    _

</llo_original>
